<compile_context>
chip_gen: v7x
topology: tpu7x:2x2x1
jax: 0.10.0
libtpu: 0.0.40
codegen_flags: <defaults>
</compile_context>

<pallas_src>
import functools

import jax
import jax.numpy as jnp
from jax.experimental import pallas as pl
from jax.experimental.pallas import tpu as pltpu

# ---- hyperparameters from Train.py ------------------------------------------
INPUT_SIZE = 64
ENCODING_SIZE = 512
HIDDEN_SIZE = 512
POS_DIM = 3                              # assumed dimensionality of positions
IMG_FEATS = INPUT_SIZE * INPUT_SIZE * 3  # 12288
OUT_DIM = INPUT_SIZE * INPUT_SIZE * 3    # 12288
MP = 8                                   # batch padded to sublane multiple

# tile sizes: 2 MB bf16 weight tiles, double-buffered = 4 MB → fits the scoped
# VMEM default on v5e (16 MiB), v6e (32 MiB) and v7x (32 MiB of 64 MiB).
TK_IN = 4096    # enc_fc1 reduction tiling  (12288 = 3 * 4096)
TN_IN = 256     # enc_fc1 output tiling     (512   = 2 * 256) → 2 parallel blocks
TN_OUT = 2048   # dec_out output tiling     (12288 = 6 * 2048)


# ---- kernel 1: enc_fc1 (big-K weight-streaming matmul + bias + ReLU) ---------
def _enc_fc1_kernel(x_ref, w_ref, b_ref, o_ref, acc_ref):
    k = pl.program_id(1)

    @pl.when(k == 0)
    def _():
        acc_ref[...] = jnp.zeros_like(acc_ref)

    acc_ref[...] += jnp.dot(x_ref[...], w_ref[...],
                            preferred_element_type=jnp.float32)

    @pl.when(k == pl.num_programs(1) - 1)
    def _():
        o_ref[...] = jnp.maximum(acc_ref[...] + b_ref[...], 0.0).astype(o_ref.dtype)


def enc_fc1(x_bf16, w_bf16, bias2d):
    M, K = x_bf16.shape            # (8, 12288)
    _, N = w_bf16.shape            # (12288, 512)
    grid = (N // TN_IN, K // TK_IN)
    cost = pl.CostEstimate(
        flops=2 * M * K * N,
        transcendentals=0,
        bytes_accessed=(M * K + K * N) * 2 + M * N * (4 + 2))
    return pl.pallas_call(
        _enc_fc1_kernel,
        out_shape=jax.ShapeDtypeStruct((M, N), jnp.bfloat16),
        grid_spec=pltpu.PrefetchScalarGridSpec(
            num_scalar_prefetch=0,
            grid=grid,
            in_specs=[
                pl.BlockSpec((M, TK_IN), lambda j, k: (0, k)),
                pl.BlockSpec((TK_IN, TN_IN), lambda j, k: (k, j)),
                pl.BlockSpec((M, TN_IN), lambda j, k: (0, j)),
            ],
            out_specs=pl.BlockSpec((M, TN_IN), lambda j, k: (0, j)),
            scratch_shapes=[pltpu.VMEM((M, TN_IN), jnp.float32)],
        ),
        compiler_params=pltpu.CompilerParams(
            dimension_semantics=("parallel", "arbitrary")),
        cost_estimate=cost,
    )(x_bf16, w_bf16, bias2d)


# ---- kernel 2: fused enc_fc2 + dec_fc1 + dec_fc2 (all weights resident) ------
def _mid_kernel(h_ref, w2_ref, b2_ref, w3_ref, b3_ref, w4_ref, b4_ref, o_ref):
    lat = jnp.maximum(
        jnp.dot(h_ref[...], w2_ref[...], preferred_element_type=jnp.float32)
        + b2_ref[...], 0.0)
    d1 = jnp.maximum(
        jnp.dot(lat.astype(jnp.bfloat16), w3_ref[...],
                preferred_element_type=jnp.float32) + b3_ref[...], 0.0)
    d2 = jnp.maximum(
        jnp.dot(d1.astype(jnp.bfloat16), w4_ref[...],
                preferred_element_type=jnp.float32) + b4_ref[...], 0.0)
    o_ref[...] = d2.astype(o_ref.dtype)


def mid_layers(h, w2, b2, w3, b3_2d, w4, b4):
    M = h.shape[0]
    N = w4.shape[1]
    cost = pl.CostEstimate(
        flops=2 * M * 512 * 512 * 3,
        transcendentals=0,
        bytes_accessed=3 * 512 * 512 * 2 + 2 * M * 512 * 2)
    # no grid: every operand lives whole in VMEM (~1.6 MB), kernel runs once.
    return pl.pallas_call(
        _mid_kernel,
        out_shape=jax.ShapeDtypeStruct((M, N), jnp.bfloat16),
        cost_estimate=cost,
    )(h, w2, b2, w3, b3_2d, w4, b4)


# ---- kernel 3: dec_out (weight-streaming over N, no reduction axis) ----------
def _dec_out_kernel(x_ref, w_ref, b_ref, o_ref):
    o_ref[...] = (jnp.dot(x_ref[...], w_ref[...],
                          preferred_element_type=jnp.float32)
                  + b_ref[...]).astype(o_ref.dtype)


def dec_out(x_bf16, w_bf16, b_row):
    M, K = x_bf16.shape            # (8, 512)
    _, N = w_bf16.shape            # (512, 12288)
    grid = (N // TN_OUT,)
    cost = pl.CostEstimate(
        flops=2 * M * K * N,
        transcendentals=0,
        bytes_accessed=(M * K + K * N) * 2 + M * N * 4)
    return pl.pallas_call(
        _dec_out_kernel,
        out_shape=jax.ShapeDtypeStruct((M, N), jnp.float32),
        grid_spec=pltpu.PrefetchScalarGridSpec(
            num_scalar_prefetch=0,
            grid=grid,
            in_specs=[
                pl.BlockSpec((M, K), lambda j: (0, 0)),
                pl.BlockSpec((K, TN_OUT), lambda j: (0, j)),
                pl.BlockSpec((1, TN_OUT), lambda j: (0, j)),
            ],
            out_specs=pl.BlockSpec((M, TN_OUT), lambda j: (0, j)),
        ),
        compiler_params=pltpu.CompilerParams(
            dimension_semantics=("parallel",)),
        cost_estimate=cost,
    )(x_bf16, w_bf16, b_row)


# ---- deterministic parameter init + ONE-TIME packing -------------------------
def _dense_init(key, fan_in, fan_out):
    kw, kb = jax.random.split(key)
    scale = 1.0 / jnp.sqrt(jnp.float32(fan_in))
    w = jax.random.uniform(kw, (fan_in, fan_out), jnp.float32, -scale, scale)
    b = jax.random.uniform(kb, (fan_out,), jnp.float32, -scale, scale)
    return w, b


def init_params(key):
    # TODO(synk): the Encoder/Decoder class bodies are not present in Train.py;
    # the constructor signatures imply an MLP encoder (flattened image +
    # viewing position -> hidden_size latent) and a 2-hidden-layer MLP decoder
    # (latent + desired position -> input_size**2 * 3), implemented here.
    keys = jax.random.split(key, 5)
    w1, b1 = _dense_init(keys[0], IMG_FEATS + POS_DIM, ENCODING_SIZE)
    w2, b2 = _dense_init(keys[1], ENCODING_SIZE, HIDDEN_SIZE)
    w3, b3 = _dense_init(keys[2], HIDDEN_SIZE + POS_DIM, 512)
    w4, b4 = _dense_init(keys[3], 512, 512)
    w5, b5 = _dense_init(keys[4], 512, OUT_DIM)
    return {
        # split position rows out of the concat-matmuls; cast streamed weights
        # to bf16 once here (not per forward call).
        "enc_fc1_w_img": w1[:IMG_FEATS].astype(jnp.bfloat16),   # (12288, 512)
        "enc_fc1_w_pos": w1[IMG_FEATS:],                        # (3, 512) f32
        "enc_fc1_b": b1.reshape(1, -1),
        "enc_fc2_w": w2.astype(jnp.bfloat16),
        "enc_fc2_b": b2.reshape(1, -1),
        "dec_fc1_w_lat": w3[:HIDDEN_SIZE].astype(jnp.bfloat16),
        "dec_fc1_w_pos": w3[HIDDEN_SIZE:],                      # (3, 512) f32
        "dec_fc1_b": b3.reshape(1, -1),
        "dec_fc2_w": w4.astype(jnp.bfloat16),
        "dec_fc2_b": b4.reshape(1, -1),
        "dec_out_w": w5.astype(jnp.bfloat16),                   # (512, 12288)
        "dec_out_b": b5.reshape(1, -1),
    }


# ---- forward pass -------------------------------------------------------------
@jax.jit
def encoder_decoder_forward(params, inputs, im_positions, desired_positions):
    B = inputs.shape[0]
    # pad the batch to 8 ONCE; keep every intermediate at (8, N); slice at end.
    x = inputs.reshape(B, -1)                                   # NCHW flatten
    x_p = jnp.zeros((MP, IMG_FEATS), jnp.bfloat16).at[:B].set(
        x.astype(jnp.bfloat16))
    imp_p = jnp.zeros((MP, POS_DIM), jnp.float32).at[:B].set(im_positions)
    dp_p = jnp.zeros((MP, POS_DIM), jnp.float32).at[:B].set(desired_positions)

    # position contributions folded into per-row biases (tiny plain-JAX matmul)
    b1_2d = imp_p @ params["enc_fc1_w_pos"] + params["enc_fc1_b"]   # (8, 512)
    b3_2d = dp_p @ params["dec_fc1_w_pos"] + params["dec_fc1_b"]    # (8, 512)

    h = enc_fc1(x_p, params["enc_fc1_w_img"], b1_2d)                # (8, 512) bf16
    d2 = mid_layers(h,
                    params["enc_fc2_w"], params["enc_fc2_b"],
                    params["dec_fc1_w_lat"], b3_2d,
                    params["dec_fc2_w"], params["dec_fc2_b"])       # (8, 512) bf16
    out = dec_out(d2, params["dec_out_w"], params["dec_out_b"])     # (8, 12288) f32
    return out[:B]


def reference_forward(params, inputs, im_positions, desired_positions):
    """Plain-JAX reference with the same bf16-weight / f32-accumulate math."""
    def lin(x, w_bf16, b2d, relu):
        y = jnp.dot(x.astype(jnp.bfloat16).astype(jnp.float32),
                    w_bf16.astype(jnp.float32),
                    precision=jax.lax.Precision.HIGHEST) + b2d
        return jnp.maximum(y, 0.0) if relu else y

    B = inputs.shape[0]
    x = inputs.reshape(B, -1)
    b1_2d = im_positions @ params["enc_fc1_w_pos"] + params["enc_fc1_b"]
    b3_2d = desired_positions @ params["dec_fc1_w_pos"] + params["dec_fc1_b"]
    h = lin(x, params["enc_fc1_w_img"], b1_2d, True)
    lat = lin(h, params["enc_fc2_w"], params["enc_fc2_b"], True)
    d1 = lin(lat, params["dec_fc1_w_lat"], b3_2d, True)
    d2 = lin(d1, params["dec_fc2_w"], params["dec_fc2_b"], True)
    return lin(d2, params["dec_out_w"], params["dec_out_b"], False)


# ---- main ----------------------------------------------------------------------
if __name__ == "__main__":
    key = jax.random.PRNGKey(0)
    k_param, k_in, k_imp, k_dp = jax.random.split(key, 4)

    params = init_params(k_param)

    B = 2
    inputs = jax.random.normal(k_in, (B, 3, INPUT_SIZE, INPUT_SIZE), jnp.float32)
    im_positions = jax.random.normal(k_imp, (B, POS_DIM), jnp.float32)
    desired_positions = jax.random.normal(k_dp, (B, POS_DIM), jnp.float32)

    out = encoder_decoder_forward(params, inputs, im_positions, desired_positions)
    out = jax.block_until_ready(out)
    assert out.shape == (B, OUT_DIM), out.shape
    assert bool(jnp.all(jnp.isfinite(out)))

    ref = reference_forward(params, inputs, im_positions, desired_positions)
    ref = jax.block_until_ready(ref)
    max_err = float(jnp.max(jnp.abs(out - ref)))
    assert jnp.allclose(out, ref, rtol=1e-2, atol=1e-2), max_err

    print("KERNEL_OK")
</pallas_src>

<mosaic_0001>
module attributes {stable_mosaic.version = 11 : i64} {
  func.func @_enc_fc1_kernel(%arg0: i32, %arg1: i32, %arg2: memref<8x4096xbf16, #tpu.memory_space<vmem>>, %arg3: memref<4096x256xbf16, #tpu.memory_space<vmem>>, %arg4: memref<8x256xf32, #tpu.memory_space<vmem>>, %arg5: memref<8x256xbf16, #tpu.memory_space<vmem>>, %arg6: memref<8x256xf32, #tpu.memory_space<vmem>>) attributes {dimension_semantics = [#tpu.dimension_semantics<parallel>, #tpu.dimension_semantics<arbitrary>], iteration_bounds = array<i64: 2, 3>, scalar_prefetch = 0 : i64, scratch_operands = 1 : i64, tpu.core_type = #tpu.core_type<tc>, window_params = [{transform_indices = @transform_0, window_bounds = array<i64: 8, 4096>}, {transform_indices = @transform_1, window_bounds = array<i64: 4096, 256>}, {transform_indices = @transform_2, window_bounds = array<i64: 8, 256>}, {transform_indices = @transform_3, window_bounds = array<i64: 8, 256>}]} {
    %c0_i32 = arith.constant 0 : i32
    %0 = arith.cmpi eq, %arg1, %c0_i32 : i32
    %1 = arith.extui %0 : i1 to i32
    %c0_i32_0 = arith.constant 0 : i32
    %2 = arith.cmpi ne, %1, %c0_i32_0 : i32
    scf.if %2 {
      %cst_9 = arith.constant 0.000000e+00 : f32
      %12 = vector.broadcast %cst_9 : f32 to vector<8x256xf32>
      %c0_10 = arith.constant 0 : index
      %c0_11 = arith.constant 0 : index
      %13 = vector.load %arg6[%c0_10, %c0_11] : memref<8x256xf32, #tpu.memory_space<vmem>>, vector<8x256xf32>
      tpu.vector_store %arg6[%c0_10, %c0_11], %12 {strides = array<i32>} : memref<8x256xf32, #tpu.memory_space<vmem>>, vector<8x256xf32>,
    } else {
    }
    %c0 = arith.constant 0 : index
    %c0_1 = arith.constant 0 : index
    %3 = vector.load %arg6[%c0, %c0_1] : memref<8x256xf32, #tpu.memory_space<vmem>>, vector<8x256xf32>
    %c0_2 = arith.constant 0 : index
    %c0_3 = arith.constant 0 : index
    %4 = vector.load %arg2[%c0_2, %c0_3] : memref<8x4096xbf16, #tpu.memory_space<vmem>>, vector<8x4096xbf16>
    %c0_4 = arith.constant 0 : index
    %c0_5 = arith.constant 0 : index
    %5 = vector.load %arg3[%c0_4, %c0_5] : memref<4096x256xbf16, #tpu.memory_space<vmem>>, vector<4096x256xbf16>
    %cst = arith.constant dense<0.000000e+00> : vector<8x256xf32>
    %6 = tpu.matmul %4, %5, %cst {dimension_numbers = #tpu.dot_dimension_numbers<[1], [0], [0], [1], [0, 0, 1, 1], [], []>} : vector<8x4096xbf16>, vector<4096x256xbf16>, vector<8x256xf32> -> vector<8x256xf32>
    %7 = arith.addf %3, %6 : vector<8x256xf32>
    %c0_6 = arith.constant 0 : index
    %c0_7 = arith.constant 0 : index
    %8 = vector.load %arg6[%c0_6, %c0_7] : memref<8x256xf32, #tpu.memory_space<vmem>>, vector<8x256xf32>
    tpu.vector_store %arg6[%c0_6, %c0_7], %7 {strides = array<i32>} : memref<8x256xf32, #tpu.memory_space<vmem>>, vector<8x256xf32>,
    %c2_i32 = arith.constant 2 : i32
    %9 = arith.cmpi eq, %arg1, %c2_i32 : i32
    %10 = arith.extui %9 : i1 to i32
    %c0_i32_8 = arith.constant 0 : i32
    %11 = arith.cmpi ne, %10, %c0_i32_8 : i32
    scf.if %11 {
      %c0_9 = arith.constant 0 : index
      %c0_10 = arith.constant 0 : index
      %12 = vector.load %arg6[%c0_9, %c0_10] : memref<8x256xf32, #tpu.memory_space<vmem>>, vector<8x256xf32>
      %c0_11 = arith.constant 0 : index
      %c0_12 = arith.constant 0 : index
      %13 = vector.load %arg4[%c0_11, %c0_12] : memref<8x256xf32, #tpu.memory_space<vmem>>, vector<8x256xf32>
      %14 = arith.addf %12, %13 : vector<8x256xf32>
      %cst_13 = arith.constant 0.000000e+00 : f32
      %15 = vector.broadcast %cst_13 : f32 to vector<8x256xf32>
      %16 = arith.maximumf %14, %15 : vector<8x256xf32>
      %17 = arith.truncf %16 : vector<8x256xf32> to vector<8x256xbf16>
      %c0_14 = arith.constant 0 : index
      %c0_15 = arith.constant 0 : index
      %18 = vector.load %arg5[%c0_14, %c0_15] : memref<8x256xbf16, #tpu.memory_space<vmem>>, vector<8x256xbf16>
      tpu.vector_store %arg5[%c0_14, %c0_15], %17 {strides = array<i32>} : memref<8x256xbf16, #tpu.memory_space<vmem>>, vector<8x256xbf16>,
    } else {
    }
    return
  }
  func.func @transform_0(%arg0: i32, %arg1: i32) -> (i32, i32) {
    %c0_i32 = arith.constant 0 : i32
    %c0_i32_0 = arith.constant 0 : i32
    return %c0_i32, %arg1 : i32, i32
  }
  func.func @transform_1(%arg0: i32, %arg1: i32) -> (i32, i32) {
    %c0_i32 = arith.constant 0 : i32
    return %arg1, %arg0 : i32, i32
  }
  func.func @transform_2(%arg0: i32, %arg1: i32) -> (i32, i32) {
    %c0_i32 = arith.constant 0 : i32
    %c0_i32_0 = arith.constant 0 : i32
    return %c0_i32, %arg0 : i32, i32
  }
  func.func @transform_3(%arg0: i32, %arg1: i32) -> (i32, i32) {
    %c0_i32 = arith.constant 0 : i32
    %c0_i32_0 = arith.constant 0 : i32
    return %c0_i32, %arg0 : i32, i32
  }
}

module attributes {stable_mosaic.version = 11 : i64} {
  func.func @_mid_kernel(%arg0: memref<8x512xbf16, #tpu.memory_space<vmem>>, %arg1: memref<512x512xbf16, #tpu.memory_space<vmem>>, %arg2: memref<1x512xf32, #tpu.memory_space<vmem>>, %arg3: memref<512x512xbf16, #tpu.memory_space<vmem>>, %arg4: memref<8x512xf32, #tpu.memory_space<vmem>>, %arg5: memref<512x512xbf16, #tpu.memory_space<vmem>>, %arg6: memref<1x512xf32, #tpu.memory_space<vmem>>, %arg7: memref<8x512xbf16, #tpu.memory_space<vmem>>) attributes {dimension_semantics = [], scalar_prefetch = 0 : i64, scratch_operands = 0 : i64, tpu.core_type = #tpu.core_type<tc>} {
    %c0 = arith.constant 0 : index
    %c0_0 = arith.constant 0 : index
    %0 = vector.load %arg0[%c0, %c0_0] : memref<8x512xbf16, #tpu.memory_space<vmem>>, vector<8x512xbf16>
    %c0_1 = arith.constant 0 : index
    %c0_2 = arith.constant 0 : index
    %1 = vector.load %arg1[%c0_1, %c0_2] : memref<512x512xbf16, #tpu.memory_space<vmem>>, vector<512x512xbf16>
    %cst = arith.constant dense<0.000000e+00> : vector<8x512xf32>
    %2 = tpu.matmul %0, %1, %cst {dimension_numbers = #tpu.dot_dimension_numbers<[1], [0], [0], [1], [0, 0, 1, 1], [], []>} : vector<8x512xbf16>, vector<512x512xbf16>, vector<8x512xf32> -> vector<8x512xf32>
    %c0_3 = arith.constant 0 : index
    %c0_4 = arith.constant 0 : index
    %3 = vector.load %arg2[%c0_3, %c0_4] : memref<1x512xf32, #tpu.memory_space<vmem>>, vector<1x512xf32>
    %4 = vector.broadcast %3 : vector<1x512xf32> to vector<8x512xf32>
    %5 = arith.addf %2, %4 : vector<8x512xf32>
    %cst_5 = arith.constant 0.000000e+00 : f32
    %6 = vector.broadcast %cst_5 : f32 to vector<8x512xf32>
    %7 = arith.maximumf %5, %6 : vector<8x512xf32>
    %8 = arith.truncf %7 : vector<8x512xf32> to vector<8x512xbf16>
    %c0_6 = arith.constant 0 : index
    %c0_7 = arith.constant 0 : index
    %9 = vector.load %arg3[%c0_6, %c0_7] : memref<512x512xbf16, #tpu.memory_space<vmem>>, vector<512x512xbf16>
    %cst_8 = arith.constant dense<0.000000e+00> : vector<8x512xf32>
    %10 = tpu.matmul %8, %9, %cst_8 {dimension_numbers = #tpu.dot_dimension_numbers<[1], [0], [0], [1], [0, 0, 1, 1], [], []>} : vector<8x512xbf16>, vector<512x512xbf16>, vector<8x512xf32> -> vector<8x512xf32>
    %c0_9 = arith.constant 0 : index
    %c0_10 = arith.constant 0 : index
    %11 = vector.load %arg4[%c0_9, %c0_10] : memref<8x512xf32, #tpu.memory_space<vmem>>, vector<8x512xf32>
    %12 = arith.addf %10, %11 : vector<8x512xf32>
    %cst_11 = arith.constant 0.000000e+00 : f32
    %13 = vector.broadcast %cst_11 : f32 to vector<8x512xf32>
    %14 = arith.maximumf %12, %13 : vector<8x512xf32>
    %15 = arith.truncf %14 : vector<8x512xf32> to vector<8x512xbf16>
    %c0_12 = arith.constant 0 : index
    %c0_13 = arith.constant 0 : index
    %16 = vector.load %arg5[%c0_12, %c0_13] : memref<512x512xbf16, #tpu.memory_space<vmem>>, vector<512x512xbf16>
    %cst_14 = arith.constant dense<0.000000e+00> : vector<8x512xf32>
    %17 = tpu.matmul %15, %16, %cst_14 {dimension_numbers = #tpu.dot_dimension_numbers<[1], [0], [0], [1], [0, 0, 1, 1], [], []>} : vector<8x512xbf16>, vector<512x512xbf16>, vector<8x512xf32> -> vector<8x512xf32>
    %c0_15 = arith.constant 0 : index
    %c0_16 = arith.constant 0 : index
    %18 = vector.load %arg6[%c0_15, %c0_16] : memref<1x512xf32, #tpu.memory_space<vmem>>, vector<1x512xf32>
    %19 = vector.broadcast %18 : vector<1x512xf32> to vector<8x512xf32>
    %20 = arith.addf %17, %19 : vector<8x512xf32>
    %cst_17 = arith.constant 0.000000e+00 : f32
    %21 = vector.broadcast %cst_17 : f32 to vector<8x512xf32>
    %22 = arith.maximumf %20, %21 : vector<8x512xf32>
    %23 = arith.truncf %22 : vector<8x512xf32> to vector<8x512xbf16>
    %c0_18 = arith.constant 0 : index
    %c0_19 = arith.constant 0 : index
    %24 = vector.load %arg7[%c0_18, %c0_19] : memref<8x512xbf16, #tpu.memory_space<vmem>>, vector<8x512xbf16>
    tpu.vector_store %arg7[%c0_18, %c0_19], %23 {strides = array<i32>} : memref<8x512xbf16, #tpu.memory_space<vmem>>, vector<8x512xbf16>,
    return
  }
}

module attributes {stable_mosaic.version = 11 : i64} {
  func.func @_dec_out_kernel(%arg0: i32, %arg1: memref<8x512xbf16, #tpu.memory_space<vmem>>, %arg2: memref<512x2048xbf16, #tpu.memory_space<vmem>>, %arg3: memref<1x2048xf32, #tpu.memory_space<vmem>>, %arg4: memref<8x2048xf32, #tpu.memory_space<vmem>>) attributes {dimension_semantics = [#tpu.dimension_semantics<parallel>], iteration_bounds = array<i64: 6>, scalar_prefetch = 0 : i64, scratch_operands = 0 : i64, tpu.core_type = #tpu.core_type<tc>, window_params = [{pipeline_mode = #tpu.pipeline_mode<synchronous>, transform_indices = @transform_0, window_bounds = array<i64: 8, 512>}, {transform_indices = @transform_1, window_bounds = array<i64: 512, 2048>}, {transform_indices = @transform_2, window_bounds = array<i64: 1, 2048>}, {transform_indices = @transform_3, window_bounds = array<i64: 8, 2048>}]} {
    %c0 = arith.constant 0 : index
    %c0_0 = arith.constant 0 : index
    %0 = vector.load %arg1[%c0, %c0_0] : memref<8x512xbf16, #tpu.memory_space<vmem>>, vector<8x512xbf16>
    %c0_1 = arith.constant 0 : index
    %c0_2 = arith.constant 0 : index
    %1 = vector.load %arg2[%c0_1, %c0_2] : memref<512x2048xbf16, #tpu.memory_space<vmem>>, vector<512x2048xbf16>
    %cst = arith.constant dense<0.000000e+00> : vector<8x2048xf32>
    %2 = tpu.matmul %0, %1, %cst {dimension_numbers = #tpu.dot_dimension_numbers<[1], [0], [0], [1], [0, 0, 1, 1], [], []>} : vector<8x512xbf16>, vector<512x2048xbf16>, vector<8x2048xf32> -> vector<8x2048xf32>
    %c0_3 = arith.constant 0 : index
    %c0_4 = arith.constant 0 : index
    %3 = vector.load %arg3[%c0_3, %c0_4] : memref<1x2048xf32, #tpu.memory_space<vmem>>, vector<1x2048xf32>
    %4 = vector.broadcast %3 : vector<1x2048xf32> to vector<8x2048xf32>
    %5 = arith.addf %2, %4 : vector<8x2048xf32>
    %c0_5 = arith.constant 0 : index
    %c0_6 = arith.constant 0 : index
    %6 = vector.load %arg4[%c0_5, %c0_6] : memref<8x2048xf32, #tpu.memory_space<vmem>>, vector<8x2048xf32>
    tpu.vector_store %arg4[%c0_5, %c0_6], %5 {strides = array<i32>} : memref<8x2048xf32, #tpu.memory_space<vmem>>, vector<8x2048xf32>,
    return
  }
  func.func @transform_0(%arg0: i32) -> (i32, i32) {
    %c0_i32 = arith.constant 0 : i32
    %c0_i32_0 = arith.constant 0 : i32
    %c0_i32_1 = arith.constant 0 : i32
    return %c0_i32, %c0_i32_0 : i32, i32
  }
  func.func @transform_1(%arg0: i32) -> (i32, i32) {
    %c0_i32 = arith.constant 0 : i32
    %c0_i32_0 = arith.constant 0 : i32
    return %c0_i32, %arg0 : i32, i32
  }
  func.func @transform_2(%arg0: i32) -> (i32, i32) {
    %c0_i32 = arith.constant 0 : i32
    %c0_i32_0 = arith.constant 0 : i32
    return %c0_i32, %arg0 : i32, i32
  }
  func.func @transform_3(%arg0: i32) -> (i32, i32) {
    %c0_i32 = arith.constant 0 : i32
    %c0_i32_0 = arith.constant 0 : i32
    return %c0_i32, %arg0 : i32, i32
  }
}

</mosaic_0001>

<llo_original>
// kernel: encoder_decoder_forward.4
$region0: #{encoder_decoder_forward.4}
  #allocation0 [shape = 'u32[]', space=smem, size = 0x4, offset = 0x4, fixed_abs, tag = 'smem constant byte address 0x4 - core index']
  #allocation1 [shape = 'u32[144,128]{1,0:T(1,128)}', space=vmem, size = 0x12000, scoped, tag = 'internal scratch']
  %s0 = inlined_call_operand.vmem [shape: bf16[8,512], index: 0, kind: input, shape index: {}]
  %s1 = inlined_call_operand.vmem [shape: bf16[512,512], index: 1, kind: input, shape index: {}]
  %s2 = inlined_call_operand.vmem [shape: f32[1,512], index: 2, kind: input, shape index: {}]
  %s3 = inlined_call_operand.hbm [shape: bf16[512,512], index: 3, kind: input, shape index: {}]
  %s4 = inlined_call_operand.vmem [shape: f32[8,512], index: 4, kind: input, shape index: {}]
  %s5 = inlined_call_operand.hbm [shape: bf16[512,512], index: 5, kind: input, shape index: {}]
  %s6 = inlined_call_operand.vmem [shape: f32[1,512], index: 6, kind: input, shape index: {}]
  %s7 = inlined_call_operand.vmem [shape: bf16[8,512], index: 7, kind: output, shape index: {}]
  %s8 = sld [smem:[#allocation0]]
  $region46: #{encoder_decoder_forward.4} parent=0
    _
  %s10 = ssub.s32 1, %s8
  %s11 = scalar_select 0, %s10, %s8
  $region1: #{encoder_decoder_forward.4} parent=0
    #allocation2 [shape = 'u8[524288]{0}', space=vmem, size = 0x80000, scoped, tag = 'input window, operand 3, single buffered']
    #allocation3 [shape = 's32[1]{0}', space=sflag, size = 0x4, scoped, tag = 'scoped memory for encoder_decoder_forward.4']
    #allocation4 [shape = 'u8[524288]{0}', space=vmem, size = 0x80000, scoped, tag = 'input window, operand 5, single buffered']
    #allocation5 [shape = 's32[1]{0}', space=sflag, size = 0x4, scoped, tag = 'scoped memory for encoder_decoder_forward.4']
    %12 = vsyncpa [#allocation3], 0
    %13 = vsyncpa [#allocation5], 0
    // Predicated region
    $region2: #{encoder_decoder_forward.4} parent=1 // pred_check
      _
    $region3: #{encoder_decoder_forward.4} parent=1 // pred_check_branch
      %15 = sbr.rel (0) target = $region5
    $region4: #{encoder_decoder_forward.4} parent=1 // pred_region
      _
    $region5: #{encoder_decoder_forward.4} parent=1 // pred_fallthru
      _
    // Predicated region
    $region6: #{encoder_decoder_forward.4} parent=1 // pred_check
      _
    $region7: #{encoder_decoder_forward.4} parent=1 // pred_check_branch
      %17 = sbr.rel (0) target = $region9
    $region8: #{encoder_decoder_forward.4} parent=1 // pred_region
      _
    $region9: #{encoder_decoder_forward.4} parent=1 // pred_fallthru
      _
    // Predicated region
    $region10: #{encoder_decoder_forward.4} parent=1 // pred_check
      _
    $region11: #{encoder_decoder_forward.4} parent=1 // pred_check_branch
      %19 = sbr.rel (0) target = $region13
    $region12: #{encoder_decoder_forward.4} parent=1 // pred_region
      _
    $region13: #{encoder_decoder_forward.4} parent=1 // pred_fallthru
      _
    // Predicated region
    $region14: #{encoder_decoder_forward.4} parent=1 // pred_check
      _
    $region15: #{encoder_decoder_forward.4} parent=1 // pred_check_branch
      %21 = sbr.rel (0) target = $region17
    $region16: #{encoder_decoder_forward.4} parent=1 // pred_region
      %s23 = ssub.s32 16384, 16384
      %24 = vsyncadd [#allocation3], %s23
      %s25 = sshll.u32 [#allocation2], 4
      %s26 = int_to_ptr.vmem [resolvable:$true] %s25
      %31 = dma.hbm_to_vmem [thread:$0]  %s3, 16384, %s26, [#allocation3], 256, 256, 16
    $region17: #{encoder_decoder_forward.4} parent=1 // pred_fallthru
      _
    // Predicated region
    $region18: #{encoder_decoder_forward.4} parent=1 // pred_check
      _
    $region19: #{encoder_decoder_forward.4} parent=1 // pred_check_branch
      %33 = sbr.rel (0) target = $region21
    $region20: #{encoder_decoder_forward.4} parent=1 // pred_region
      _
    $region21: #{encoder_decoder_forward.4} parent=1 // pred_fallthru
      _
    // Predicated region
    $region22: #{encoder_decoder_forward.4} parent=1 // pred_check
      _
    $region23: #{encoder_decoder_forward.4} parent=1 // pred_check_branch
      %35 = sbr.rel (0) target = $region25
    $region24: #{encoder_decoder_forward.4} parent=1 // pred_region
      %s37 = ssub.s32 16384, 16384
      %38 = vsyncadd [#allocation5], %s37
      %s39 = sshll.u32 [#allocation4], 4
      %s40 = int_to_ptr.vmem [resolvable:$true] %s39
      %45 = dma.hbm_to_vmem [thread:$0]  %s5, 16384, %s40, [#allocation5], 256, 256, 16
    $region25: #{encoder_decoder_forward.4} parent=1 // pred_fallthru
      _
    // Predicated region
    $region26: #{encoder_decoder_forward.4} parent=1 // pred_check
      _
    $region27: #{encoder_decoder_forward.4} parent=1 // pred_check_branch
      %47 = sbr.rel (0) target = $region29
    $region28: #{encoder_decoder_forward.4} parent=1 // pred_region
      _
    $region29: #{encoder_decoder_forward.4} parent=1 // pred_fallthru
      _
    // Predicated region
    $region30: #{encoder_decoder_forward.4} parent=1 // pred_check
      _
    $region31: #{encoder_decoder_forward.4} parent=1 // pred_check_branch
      %49 = sbr.rel (0) target = $region33
    $region32: #{encoder_decoder_forward.4} parent=1 // pred_region
      %50 = dma.done [#allocation3], 16384
    $region33: #{encoder_decoder_forward.4} parent=1 // pred_fallthru
      _
    // Predicated region
    $region34: #{encoder_decoder_forward.4} parent=1 // pred_check
      _
    $region35: #{encoder_decoder_forward.4} parent=1 // pred_check_branch
      %52 = sbr.rel (0) target = $region37
    $region36: #{encoder_decoder_forward.4} parent=1 // pred_region
      %53 = dma.done [#allocation5], 16384
    $region37: #{encoder_decoder_forward.4} parent=1 // pred_fallthru
      _
    %v54 = vld [vmem:[%s0] sm:$0xff]
    %v55 = vld [vmem:[%s0 + $0x8] sm:$0xff]
    %v56 = vld [vmem:[%s1] sm:$0xff]
    %v57 = vld [vmem:[%s1 + $0x8] sm:$0xff]
    %v58 = vld [vmem:[%s1 + $0x10] sm:$0xff]
    %v59 = vld [vmem:[%s1 + $0x18] sm:$0xff]
    %v60 = vld [vmem:[%s1 + $0x20] sm:$0xff]
    %v61 = vld [vmem:[%s1 + $0x28] sm:$0xff]
    %v62 = vld [vmem:[%s1 + $0x30] sm:$0xff]
    %v63 = vld [vmem:[%s1 + $0x38] sm:$0xff]
    %v64 = vld [vmem:[%s1 + $0x40] sm:$0xff]
    %v65 = vld [vmem:[%s1 + $0x48] sm:$0xff]
    %v66 = vld [vmem:[%s1 + $0x50] sm:$0xff]
    %v67 = vld [vmem:[%s1 + $0x58] sm:$0xff]
    %v68 = vld [vmem:[%s1 + $0x60] sm:$0xff]
    %v69 = vld [vmem:[%s1 + $0x68] sm:$0xff]
    %v70 = vld [vmem:[%s1 + $0x70] sm:$0xff]
    %v71 = vld [vmem:[%s1 + $0x78] sm:$0xff]
    %v72 = vld [vmem:[%s1 + $0x80] sm:$0xff]
    %v73 = vld [vmem:[%s1 + $0x88] sm:$0xff]
    %v74 = vld [vmem:[%s1 + $0x90] sm:$0xff]
    %v75 = vld [vmem:[%s1 + $0x98] sm:$0xff]
    %v76 = vld [vmem:[%s1 + $0xa0] sm:$0xff]
    %v77 = vld [vmem:[%s1 + $0xa8] sm:$0xff]
    %v78 = vld [vmem:[%s1 + $0xb0] sm:$0xff]
    %v79 = vld [vmem:[%s1 + $0xb8] sm:$0xff]
    %v80 = vld [vmem:[%s1 + $0xc0] sm:$0xff]
    %v81 = vld [vmem:[%s1 + $0xc8] sm:$0xff]
    %v82 = vld [vmem:[%s1 + $0xd0] sm:$0xff]
    %v83 = vld [vmem:[%s1 + $0xd8] sm:$0xff]
    %v84 = vld [vmem:[%s1 + $0xe0] sm:$0xff]
    %v85 = vld [vmem:[%s1 + $0xe8] sm:$0xff]
    %v86 = vld [vmem:[%s1 + $0xf0] sm:$0xff]
    %v87 = vld [vmem:[%s1 + $0xf8] sm:$0xff]
    %v88 = vld [vmem:[%s1 + $0x100] sm:$0xff]
    %v89 = vld [vmem:[%s1 + $0x108] sm:$0xff]
    %v90 = vld [vmem:[%s1 + $0x110] sm:$0xff]
    %v91 = vld [vmem:[%s1 + $0x118] sm:$0xff]
    %v92 = vld [vmem:[%s1 + $0x120] sm:$0xff]
    %v93 = vld [vmem:[%s1 + $0x128] sm:$0xff]
    %v94 = vld [vmem:[%s1 + $0x130] sm:$0xff]
    %v95 = vld [vmem:[%s1 + $0x138] sm:$0xff]
    %v96 = vld [vmem:[%s1 + $0x140] sm:$0xff]
    %v97 = vld [vmem:[%s1 + $0x148] sm:$0xff]
    %v98 = vld [vmem:[%s1 + $0x150] sm:$0xff]
    %v99 = vld [vmem:[%s1 + $0x158] sm:$0xff]
    %v100 = vld [vmem:[%s1 + $0x160] sm:$0xff]
    %v101 = vld [vmem:[%s1 + $0x168] sm:$0xff]
    %v102 = vld [vmem:[%s1 + $0x170] sm:$0xff]
    %v103 = vld [vmem:[%s1 + $0x178] sm:$0xff]
    %v104 = vld [vmem:[%s1 + $0x180] sm:$0xff]
    %v105 = vld [vmem:[%s1 + $0x188] sm:$0xff]
    %v106 = vld [vmem:[%s1 + $0x190] sm:$0xff]
    %v107 = vld [vmem:[%s1 + $0x198] sm:$0xff]
    %v108 = vld [vmem:[%s1 + $0x1a0] sm:$0xff]
    %v109 = vld [vmem:[%s1 + $0x1a8] sm:$0xff]
    %v110 = vld [vmem:[%s1 + $0x1b0] sm:$0xff]
    %v111 = vld [vmem:[%s1 + $0x1b8] sm:$0xff]
    %v112 = vld [vmem:[%s1 + $0x1c0] sm:$0xff]
    %v113 = vld [vmem:[%s1 + $0x1c8] sm:$0xff]
    %v114 = vld [vmem:[%s1 + $0x1d0] sm:$0xff]
    %v115 = vld [vmem:[%s1 + $0x1d8] sm:$0xff]
    %v116 = vld [vmem:[%s1 + $0x1e0] sm:$0xff]
    %v117 = vld [vmem:[%s1 + $0x1e8] sm:$0xff]
    %v118 = vld [vmem:[%s1 + $0x1f0] sm:$0xff]
    %v119 = vld [vmem:[%s1 + $0x1f8] sm:$0xff]
    %v120 = vld [vmem:[%s1 + $0x200] sm:$0xff]
    %v121 = vld [vmem:[%s1 + $0x208] sm:$0xff]
    %v122 = vld [vmem:[%s1 + $0x210] sm:$0xff]
    %v123 = vld [vmem:[%s1 + $0x218] sm:$0xff]
    %v124 = vld [vmem:[%s1 + $0x220] sm:$0xff]
    %v125 = vld [vmem:[%s1 + $0x228] sm:$0xff]
    %v126 = vld [vmem:[%s1 + $0x230] sm:$0xff]
    %v127 = vld [vmem:[%s1 + $0x238] sm:$0xff]
    %v128 = vld [vmem:[%s1 + $0x240] sm:$0xff]
    %v129 = vld [vmem:[%s1 + $0x248] sm:$0xff]
    %v130 = vld [vmem:[%s1 + $0x250] sm:$0xff]
    %v131 = vld [vmem:[%s1 + $0x258] sm:$0xff]
    %v132 = vld [vmem:[%s1 + $0x260] sm:$0xff]
    %v133 = vld [vmem:[%s1 + $0x268] sm:$0xff]
    %v134 = vld [vmem:[%s1 + $0x270] sm:$0xff]
    %v135 = vld [vmem:[%s1 + $0x278] sm:$0xff]
    %v136 = vld [vmem:[%s1 + $0x280] sm:$0xff]
    %v137 = vld [vmem:[%s1 + $0x288] sm:$0xff]
    %v138 = vld [vmem:[%s1 + $0x290] sm:$0xff]
    %v139 = vld [vmem:[%s1 + $0x298] sm:$0xff]
    %v140 = vld [vmem:[%s1 + $0x2a0] sm:$0xff]
    %v141 = vld [vmem:[%s1 + $0x2a8] sm:$0xff]
    %v142 = vld [vmem:[%s1 + $0x2b0] sm:$0xff]
    %v143 = vld [vmem:[%s1 + $0x2b8] sm:$0xff]
    %v144 = vld [vmem:[%s1 + $0x2c0] sm:$0xff]
    %v145 = vld [vmem:[%s1 + $0x2c8] sm:$0xff]
    %v146 = vld [vmem:[%s1 + $0x2d0] sm:$0xff]
    %v147 = vld [vmem:[%s1 + $0x2d8] sm:$0xff]
    %v148 = vld [vmem:[%s1 + $0x2e0] sm:$0xff]
    %v149 = vld [vmem:[%s1 + $0x2e8] sm:$0xff]
    %v150 = vld [vmem:[%s1 + $0x2f0] sm:$0xff]
    %v151 = vld [vmem:[%s1 + $0x2f8] sm:$0xff]
    %v152 = vld [vmem:[%s1 + $0x300] sm:$0xff]
    %v153 = vld [vmem:[%s1 + $0x308] sm:$0xff]
    %v154 = vld [vmem:[%s1 + $0x310] sm:$0xff]
    %v155 = vld [vmem:[%s1 + $0x318] sm:$0xff]
    %v156 = vld [vmem:[%s1 + $0x320] sm:$0xff]
    %v157 = vld [vmem:[%s1 + $0x328] sm:$0xff]
    %v158 = vld [vmem:[%s1 + $0x330] sm:$0xff]
    %v159 = vld [vmem:[%s1 + $0x338] sm:$0xff]
    %v160 = vld [vmem:[%s1 + $0x340] sm:$0xff]
    %v161 = vld [vmem:[%s1 + $0x348] sm:$0xff]
    %v162 = vld [vmem:[%s1 + $0x350] sm:$0xff]
    %v163 = vld [vmem:[%s1 + $0x358] sm:$0xff]
    %v164 = vld [vmem:[%s1 + $0x360] sm:$0xff]
    %v165 = vld [vmem:[%s1 + $0x368] sm:$0xff]
    %v166 = vld [vmem:[%s1 + $0x370] sm:$0xff]
    %v167 = vld [vmem:[%s1 + $0x378] sm:$0xff]
    %v168 = vld [vmem:[%s1 + $0x380] sm:$0xff]
    %v169 = vld [vmem:[%s1 + $0x388] sm:$0xff]
    %v170 = vld [vmem:[%s1 + $0x390] sm:$0xff]
    %v171 = vld [vmem:[%s1 + $0x398] sm:$0xff]
    %v172 = vld [vmem:[%s1 + $0x3a0] sm:$0xff]
    %v173 = vld [vmem:[%s1 + $0x3a8] sm:$0xff]
    %v174 = vld [vmem:[%s1 + $0x3b0] sm:$0xff]
    %v175 = vld [vmem:[%s1 + $0x3b8] sm:$0xff]
    %v176 = vld [vmem:[%s1 + $0x3c0] sm:$0xff]
    %v177 = vld [vmem:[%s1 + $0x3c8] sm:$0xff]
    %v178 = vld [vmem:[%s1 + $0x3d0] sm:$0xff]
    %v179 = vld [vmem:[%s1 + $0x3d8] sm:$0xff]
    %v180 = vld [vmem:[%s1 + $0x3e0] sm:$0xff]
    %v181 = vld [vmem:[%s1 + $0x3e8] sm:$0xff]
    %v182 = vld [vmem:[%s1 + $0x3f0] sm:$0xff]
    %v183 = vld [vmem:[%s1 + $0x3f8] sm:$0xff]
    %v184 = vld [vmem:[%s2] sm:$0xf]
    %v186 = vlaneseq
    %v187 = vshrl.u32 %v186, 7
    %v188 = vsub.s32 0, %v187
    %v189 = vrot.slane %v184, %v188
    %v190 = vlaneseq
    %v191 = vshrl.u32 %v190, 7
    %v192 = vsub.s32 1, %v191
    %v193 = vrot.slane %v184, %v192
    %v194 = vlaneseq
    %v195 = vshrl.u32 %v194, 7
    %v196 = vsub.s32 2, %v195
    %v197 = vrot.slane %v184, %v196
    %v198 = vlaneseq
    %v199 = vshrl.u32 %v198, 7
    %v200 = vsub.s32 3, %v199
    %v201 = vrot.slane %v184, %v200
    %v208 = vunpack.c.l.b16 %v54
    %v209 = vunpack.c.h.b16 %v54
    %v210 = vunpack.c.l.b16 %v55
    %v211 = vunpack.c.h.b16 %v55
    %v212 = vpack.c.b16 %v208, %v208
    %v213 = vpack.c.b16 %v209, %v209
    %v214 = vpack.c.b16 %v210, %v210
    %v215 = vpack.c.b16 %v211, %v211
    %v348 = vunpack.c.l.b16 %v56
    %v349 = vunpack.c.h.b16 %v56
    %v350 = vunpack.c.l.b16 %v57
    %v351 = vunpack.c.h.b16 %v57
    %v352 = vunpack.c.l.b16 %v58
    %v353 = vunpack.c.h.b16 %v58
    %v354 = vunpack.c.l.b16 %v59
    %v355 = vunpack.c.h.b16 %v59
    %v356 = vunpack.c.l.b16 %v60
    %v357 = vunpack.c.h.b16 %v60
    %v358 = vunpack.c.l.b16 %v61
    %v359 = vunpack.c.h.b16 %v61
    %v360 = vunpack.c.l.b16 %v62
    %v361 = vunpack.c.h.b16 %v62
    %v362 = vunpack.c.l.b16 %v63
    %v363 = vunpack.c.h.b16 %v63
    %v364 = vunpack.c.l.b16 %v64
    %v365 = vunpack.c.h.b16 %v64
    %v366 = vunpack.c.l.b16 %v65
    %v367 = vunpack.c.h.b16 %v65
    %v368 = vunpack.c.l.b16 %v66
    %v369 = vunpack.c.h.b16 %v66
    %v370 = vunpack.c.l.b16 %v67
    %v371 = vunpack.c.h.b16 %v67
    %v372 = vunpack.c.l.b16 %v68
    %v373 = vunpack.c.h.b16 %v68
    %v374 = vunpack.c.l.b16 %v69
    %v375 = vunpack.c.h.b16 %v69
    %v376 = vunpack.c.l.b16 %v70
    %v377 = vunpack.c.h.b16 %v70
    %v378 = vunpack.c.l.b16 %v71
    %v379 = vunpack.c.h.b16 %v71
    %v380 = vunpack.c.l.b16 %v72
    %v381 = vunpack.c.h.b16 %v72
    %v382 = vunpack.c.l.b16 %v73
    %v383 = vunpack.c.h.b16 %v73
    %v384 = vunpack.c.l.b16 %v74
    %v385 = vunpack.c.h.b16 %v74
    %v386 = vunpack.c.l.b16 %v75
    %v387 = vunpack.c.h.b16 %v75
    %v388 = vunpack.c.l.b16 %v76
    %v389 = vunpack.c.h.b16 %v76
    %v390 = vunpack.c.l.b16 %v77
    %v391 = vunpack.c.h.b16 %v77
    %v392 = vunpack.c.l.b16 %v78
    %v393 = vunpack.c.h.b16 %v78
    %v394 = vunpack.c.l.b16 %v79
    %v395 = vunpack.c.h.b16 %v79
    %v396 = vunpack.c.l.b16 %v80
    %v397 = vunpack.c.h.b16 %v80
    %v398 = vunpack.c.l.b16 %v81
    %v399 = vunpack.c.h.b16 %v81
    %v400 = vunpack.c.l.b16 %v82
    %v401 = vunpack.c.h.b16 %v82
    %v402 = vunpack.c.l.b16 %v83
    %v403 = vunpack.c.h.b16 %v83
    %v404 = vunpack.c.l.b16 %v84
    %v405 = vunpack.c.h.b16 %v84
    %v406 = vunpack.c.l.b16 %v85
    %v407 = vunpack.c.h.b16 %v85
    %v408 = vunpack.c.l.b16 %v86
    %v409 = vunpack.c.h.b16 %v86
    %v410 = vunpack.c.l.b16 %v87
    %v411 = vunpack.c.h.b16 %v87
    %v412 = vunpack.c.l.b16 %v88
    %v413 = vunpack.c.h.b16 %v88
    %v414 = vunpack.c.l.b16 %v89
    %v415 = vunpack.c.h.b16 %v89
    %v416 = vunpack.c.l.b16 %v90
    %v417 = vunpack.c.h.b16 %v90
    %v418 = vunpack.c.l.b16 %v91
    %v419 = vunpack.c.h.b16 %v91
    %v420 = vunpack.c.l.b16 %v92
    %v421 = vunpack.c.h.b16 %v92
    %v422 = vunpack.c.l.b16 %v93
    %v423 = vunpack.c.h.b16 %v93
    %v424 = vunpack.c.l.b16 %v94
    %v425 = vunpack.c.h.b16 %v94
    %v426 = vunpack.c.l.b16 %v95
    %v427 = vunpack.c.h.b16 %v95
    %v428 = vunpack.c.l.b16 %v96
    %v429 = vunpack.c.h.b16 %v96
    %v430 = vunpack.c.l.b16 %v97
    %v431 = vunpack.c.h.b16 %v97
    %v432 = vunpack.c.l.b16 %v98
    %v433 = vunpack.c.h.b16 %v98
    %v434 = vunpack.c.l.b16 %v99
    %v435 = vunpack.c.h.b16 %v99
    %v436 = vunpack.c.l.b16 %v100
    %v437 = vunpack.c.h.b16 %v100
    %v438 = vunpack.c.l.b16 %v101
    %v439 = vunpack.c.h.b16 %v101
    %v440 = vunpack.c.l.b16 %v102
    %v441 = vunpack.c.h.b16 %v102
    %v442 = vunpack.c.l.b16 %v103
    %v443 = vunpack.c.h.b16 %v103
    %v444 = vunpack.c.l.b16 %v104
    %v445 = vunpack.c.h.b16 %v104
    %v446 = vunpack.c.l.b16 %v105
    %v447 = vunpack.c.h.b16 %v105
    %v448 = vunpack.c.l.b16 %v106
    %v449 = vunpack.c.h.b16 %v106
    %v450 = vunpack.c.l.b16 %v107
    %v451 = vunpack.c.h.b16 %v107
    %v452 = vunpack.c.l.b16 %v108
    %v453 = vunpack.c.h.b16 %v108
    %v454 = vunpack.c.l.b16 %v109
    %v455 = vunpack.c.h.b16 %v109
    %v456 = vunpack.c.l.b16 %v110
    %v457 = vunpack.c.h.b16 %v110
    %v458 = vunpack.c.l.b16 %v111
    %v459 = vunpack.c.h.b16 %v111
    %v460 = vunpack.c.l.b16 %v112
    %v461 = vunpack.c.h.b16 %v112
    %v462 = vunpack.c.l.b16 %v113
    %v463 = vunpack.c.h.b16 %v113
    %v464 = vunpack.c.l.b16 %v114
    %v465 = vunpack.c.h.b16 %v114
    %v466 = vunpack.c.l.b16 %v115
    %v467 = vunpack.c.h.b16 %v115
    %v468 = vunpack.c.l.b16 %v116
    %v469 = vunpack.c.h.b16 %v116
    %v470 = vunpack.c.l.b16 %v117
    %v471 = vunpack.c.h.b16 %v117
    %v472 = vunpack.c.l.b16 %v118
    %v473 = vunpack.c.h.b16 %v118
    %v474 = vunpack.c.l.b16 %v119
    %v475 = vunpack.c.h.b16 %v119
    %v476 = vunpack.c.l.b16 %v120
    %v477 = vunpack.c.h.b16 %v120
    %v478 = vunpack.c.l.b16 %v121
    %v479 = vunpack.c.h.b16 %v121
    %v480 = vunpack.c.l.b16 %v122
    %v481 = vunpack.c.h.b16 %v122
    %v482 = vunpack.c.l.b16 %v123
    %v483 = vunpack.c.h.b16 %v123
    %v484 = vunpack.c.l.b16 %v124
    %v485 = vunpack.c.h.b16 %v124
    %v486 = vunpack.c.l.b16 %v125
    %v487 = vunpack.c.h.b16 %v125
    %v488 = vunpack.c.l.b16 %v126
    %v489 = vunpack.c.h.b16 %v126
    %v490 = vunpack.c.l.b16 %v127
    %v491 = vunpack.c.h.b16 %v127
    %v492 = vunpack.c.l.b16 %v128
    %v493 = vunpack.c.h.b16 %v128
    %v494 = vunpack.c.l.b16 %v129
    %v495 = vunpack.c.h.b16 %v129
    %v496 = vunpack.c.l.b16 %v130
    %v497 = vunpack.c.h.b16 %v130
    %v498 = vunpack.c.l.b16 %v131
    %v499 = vunpack.c.h.b16 %v131
    %v500 = vunpack.c.l.b16 %v132
    %v501 = vunpack.c.h.b16 %v132
    %v502 = vunpack.c.l.b16 %v133
    %v503 = vunpack.c.h.b16 %v133
    %v504 = vunpack.c.l.b16 %v134
    %v505 = vunpack.c.h.b16 %v134
    %v506 = vunpack.c.l.b16 %v135
    %v507 = vunpack.c.h.b16 %v135
    %v508 = vunpack.c.l.b16 %v136
    %v509 = vunpack.c.h.b16 %v136
    %v510 = vunpack.c.l.b16 %v137
    %v511 = vunpack.c.h.b16 %v137
    %v512 = vunpack.c.l.b16 %v138
    %v513 = vunpack.c.h.b16 %v138
    %v514 = vunpack.c.l.b16 %v139
    %v515 = vunpack.c.h.b16 %v139
    %v516 = vunpack.c.l.b16 %v140
    %v517 = vunpack.c.h.b16 %v140
    %v518 = vunpack.c.l.b16 %v141
    %v519 = vunpack.c.h.b16 %v141
    %v520 = vunpack.c.l.b16 %v142
    %v521 = vunpack.c.h.b16 %v142
    %v522 = vunpack.c.l.b16 %v143
    %v523 = vunpack.c.h.b16 %v143
    %v524 = vunpack.c.l.b16 %v144
    %v525 = vunpack.c.h.b16 %v144
    %v526 = vunpack.c.l.b16 %v145
    %v527 = vunpack.c.h.b16 %v145
    %v528 = vunpack.c.l.b16 %v146
    %v529 = vunpack.c.h.b16 %v146
    %v530 = vunpack.c.l.b16 %v147
    %v531 = vunpack.c.h.b16 %v147
    %v532 = vunpack.c.l.b16 %v148
    %v533 = vunpack.c.h.b16 %v148
    %v534 = vunpack.c.l.b16 %v149
    %v535 = vunpack.c.h.b16 %v149
    %v536 = vunpack.c.l.b16 %v150
    %v537 = vunpack.c.h.b16 %v150
    %v538 = vunpack.c.l.b16 %v151
    %v539 = vunpack.c.h.b16 %v151
    %v540 = vunpack.c.l.b16 %v152
    %v541 = vunpack.c.h.b16 %v152
    %v542 = vunpack.c.l.b16 %v153
    %v543 = vunpack.c.h.b16 %v153
    %v544 = vunpack.c.l.b16 %v154
    %v545 = vunpack.c.h.b16 %v154
    %v546 = vunpack.c.l.b16 %v155
    %v547 = vunpack.c.h.b16 %v155
    %v548 = vunpack.c.l.b16 %v156
    %v549 = vunpack.c.h.b16 %v156
    %v550 = vunpack.c.l.b16 %v157
    %v551 = vunpack.c.h.b16 %v157
    %v552 = vunpack.c.l.b16 %v158
    %v553 = vunpack.c.h.b16 %v158
    %v554 = vunpack.c.l.b16 %v159
    %v555 = vunpack.c.h.b16 %v159
    %v556 = vunpack.c.l.b16 %v160
    %v557 = vunpack.c.h.b16 %v160
    %v558 = vunpack.c.l.b16 %v161
    %v559 = vunpack.c.h.b16 %v161
    %v560 = vunpack.c.l.b16 %v162
    %v561 = vunpack.c.h.b16 %v162
    %v562 = vunpack.c.l.b16 %v163
    %v563 = vunpack.c.h.b16 %v163
    %v564 = vunpack.c.l.b16 %v164
    %v565 = vunpack.c.h.b16 %v164
    %v566 = vunpack.c.l.b16 %v165
    %v567 = vunpack.c.h.b16 %v165
    %v568 = vunpack.c.l.b16 %v166
    %v569 = vunpack.c.h.b16 %v166
    %v570 = vunpack.c.l.b16 %v167
    %v571 = vunpack.c.h.b16 %v167
    %v572 = vunpack.c.l.b16 %v168
    %v573 = vunpack.c.h.b16 %v168
    %v574 = vunpack.c.l.b16 %v169
    %v575 = vunpack.c.h.b16 %v169
    %v576 = vunpack.c.l.b16 %v170
    %v577 = vunpack.c.h.b16 %v170
    %v578 = vunpack.c.l.b16 %v171
    %v579 = vunpack.c.h.b16 %v171
    %v580 = vunpack.c.l.b16 %v172
    %v581 = vunpack.c.h.b16 %v172
    %v582 = vunpack.c.l.b16 %v173
    %v583 = vunpack.c.h.b16 %v173
    %v584 = vunpack.c.l.b16 %v174
    %v585 = vunpack.c.h.b16 %v174
    %v586 = vunpack.c.l.b16 %v175
    %v587 = vunpack.c.h.b16 %v175
    %v588 = vunpack.c.l.b16 %v176
    %v589 = vunpack.c.h.b16 %v176
    %v590 = vunpack.c.l.b16 %v177
    %v591 = vunpack.c.h.b16 %v177
    %v592 = vunpack.c.l.b16 %v178
    %v593 = vunpack.c.h.b16 %v178
    %v594 = vunpack.c.l.b16 %v179
    %v595 = vunpack.c.h.b16 %v179
    %v596 = vunpack.c.l.b16 %v180
    %v597 = vunpack.c.h.b16 %v180
    %v598 = vunpack.c.l.b16 %v181
    %v599 = vunpack.c.h.b16 %v181
    %v600 = vunpack.c.l.b16 %v182
    %v601 = vunpack.c.h.b16 %v182
    %v602 = vunpack.c.l.b16 %v183
    %v603 = vunpack.c.h.b16 %v183
    %v604 = vpack.c.b16 %v352, %v348
    %v605 = vpack.c.b16 %v353, %v349
    %v606 = vpack.c.b16 %v354, %v350
    %v607 = vpack.c.b16 %v355, %v351
    %v608 = vpack.c.b16 %v360, %v356
    %v609 = vpack.c.b16 %v361, %v357
    %v610 = vpack.c.b16 %v362, %v358
    %v611 = vpack.c.b16 %v363, %v359
    %v612 = vpack.c.b16 %v368, %v364
    %v613 = vpack.c.b16 %v369, %v365
    %v614 = vpack.c.b16 %v370, %v366
    %v615 = vpack.c.b16 %v371, %v367
    %v616 = vpack.c.b16 %v376, %v372
    %v617 = vpack.c.b16 %v377, %v373
    %v618 = vpack.c.b16 %v378, %v374
    %v619 = vpack.c.b16 %v379, %v375
    %v620 = vpack.c.b16 %v384, %v380
    %v621 = vpack.c.b16 %v385, %v381
    %v622 = vpack.c.b16 %v386, %v382
    %v623 = vpack.c.b16 %v387, %v383
    %v624 = vpack.c.b16 %v392, %v388
    %v625 = vpack.c.b16 %v393, %v389
    %v626 = vpack.c.b16 %v394, %v390
    %v627 = vpack.c.b16 %v395, %v391
    %v628 = vpack.c.b16 %v400, %v396
    %v629 = vpack.c.b16 %v401, %v397
    %v630 = vpack.c.b16 %v402, %v398
    %v631 = vpack.c.b16 %v403, %v399
    %v632 = vpack.c.b16 %v408, %v404
    %v633 = vpack.c.b16 %v409, %v405
    %v634 = vpack.c.b16 %v410, %v406
    %v635 = vpack.c.b16 %v411, %v407
    %v636 = vpack.c.b16 %v416, %v412
    %v637 = vpack.c.b16 %v417, %v413
    %v638 = vpack.c.b16 %v418, %v414
    %v639 = vpack.c.b16 %v419, %v415
    %v640 = vpack.c.b16 %v424, %v420
    %v641 = vpack.c.b16 %v425, %v421
    %v642 = vpack.c.b16 %v426, %v422
    %v643 = vpack.c.b16 %v427, %v423
    %v644 = vpack.c.b16 %v432, %v428
    %v645 = vpack.c.b16 %v433, %v429
    %v646 = vpack.c.b16 %v434, %v430
    %v647 = vpack.c.b16 %v435, %v431
    %v648 = vpack.c.b16 %v440, %v436
    %v649 = vpack.c.b16 %v441, %v437
    %v650 = vpack.c.b16 %v442, %v438
    %v651 = vpack.c.b16 %v443, %v439
    %v652 = vpack.c.b16 %v448, %v444
    %v653 = vpack.c.b16 %v449, %v445
    %v654 = vpack.c.b16 %v450, %v446
    %v655 = vpack.c.b16 %v451, %v447
    %v656 = vpack.c.b16 %v456, %v452
    %v657 = vpack.c.b16 %v457, %v453
    %v658 = vpack.c.b16 %v458, %v454
    %v659 = vpack.c.b16 %v459, %v455
    %v660 = vpack.c.b16 %v464, %v460
    %v661 = vpack.c.b16 %v465, %v461
    %v662 = vpack.c.b16 %v466, %v462
    %v663 = vpack.c.b16 %v467, %v463
    %v664 = vpack.c.b16 %v472, %v468
    %v665 = vpack.c.b16 %v473, %v469
    %v666 = vpack.c.b16 %v474, %v470
    %v667 = vpack.c.b16 %v475, %v471
    %v668 = vpack.c.b16 %v480, %v476
    %v669 = vpack.c.b16 %v481, %v477
    %v670 = vpack.c.b16 %v482, %v478
    %v671 = vpack.c.b16 %v483, %v479
    %v672 = vpack.c.b16 %v488, %v484
    %v673 = vpack.c.b16 %v489, %v485
    %v674 = vpack.c.b16 %v490, %v486
    %v675 = vpack.c.b16 %v491, %v487
    %v676 = vpack.c.b16 %v496, %v492
    %v677 = vpack.c.b16 %v497, %v493
    %v678 = vpack.c.b16 %v498, %v494
    %v679 = vpack.c.b16 %v499, %v495
    %v680 = vpack.c.b16 %v504, %v500
    %v681 = vpack.c.b16 %v505, %v501
    %v682 = vpack.c.b16 %v506, %v502
    %v683 = vpack.c.b16 %v507, %v503
    %v684 = vpack.c.b16 %v512, %v508
    %v685 = vpack.c.b16 %v513, %v509
    %v686 = vpack.c.b16 %v514, %v510
    %v687 = vpack.c.b16 %v515, %v511
    %v688 = vpack.c.b16 %v520, %v516
    %v689 = vpack.c.b16 %v521, %v517
    %v690 = vpack.c.b16 %v522, %v518
    %v691 = vpack.c.b16 %v523, %v519
    %v692 = vpack.c.b16 %v528, %v524
    %v693 = vpack.c.b16 %v529, %v525
    %v694 = vpack.c.b16 %v530, %v526
    %v695 = vpack.c.b16 %v531, %v527
    %v696 = vpack.c.b16 %v536, %v532
    %v697 = vpack.c.b16 %v537, %v533
    %v698 = vpack.c.b16 %v538, %v534
    %v699 = vpack.c.b16 %v539, %v535
    %v700 = vpack.c.b16 %v544, %v540
    %v701 = vpack.c.b16 %v545, %v541
    %v702 = vpack.c.b16 %v546, %v542
    %v703 = vpack.c.b16 %v547, %v543
    %v704 = vpack.c.b16 %v552, %v548
    %v705 = vpack.c.b16 %v553, %v549
    %v706 = vpack.c.b16 %v554, %v550
    %v707 = vpack.c.b16 %v555, %v551
    %v708 = vpack.c.b16 %v560, %v556
    %v709 = vpack.c.b16 %v561, %v557
    %v710 = vpack.c.b16 %v562, %v558
    %v711 = vpack.c.b16 %v563, %v559
    %v712 = vpack.c.b16 %v568, %v564
    %v713 = vpack.c.b16 %v569, %v565
    %v714 = vpack.c.b16 %v570, %v566
    %v715 = vpack.c.b16 %v571, %v567
    %v716 = vpack.c.b16 %v576, %v572
    %v717 = vpack.c.b16 %v577, %v573
    %v718 = vpack.c.b16 %v578, %v574
    %v719 = vpack.c.b16 %v579, %v575
    %v720 = vpack.c.b16 %v584, %v580
    %v721 = vpack.c.b16 %v585, %v581
    %v722 = vpack.c.b16 %v586, %v582
    %v723 = vpack.c.b16 %v587, %v583
    %v724 = vpack.c.b16 %v592, %v588
    %v725 = vpack.c.b16 %v593, %v589
    %v726 = vpack.c.b16 %v594, %v590
    %v727 = vpack.c.b16 %v595, %v591
    %v728 = vpack.c.b16 %v600, %v596
    %v729 = vpack.c.b16 %v601, %v597
    %v730 = vpack.c.b16 %v602, %v598
    %v731 = vpack.c.b16 %v603, %v599
    %860 = vmatprep.subr.bf16.mxu0 %v605
    %861 = vmatpush1.bf16.msra.mxu0 %v604
    %862 = vmatprep.subr.bf16.mxu0 %v609
    %863 = vmatpush1.bf16.msra.mxu0 %v608
    %864 = vmatprep.subr.bf16.mxu0 %v613
    %865 = vmatpush1.bf16.msra.mxu0 %v612
    %866 = vmatprep.subr.bf16.mxu0 %v617
    %867 = vmatpush1.bf16.msra.mxu0 %v616
    %868 = vmatprep.subr.bf16.mxu0 %v621
    %869 = vmatpush1.bf16.msra.mxu0 %v620
    %870 = vmatprep.subr.bf16.mxu0 %v625
    %871 = vmatpush1.bf16.msra.mxu0 %v624
    %872 = vmatprep.subr.bf16.mxu0 %v629
    %873 = vmatpush1.bf16.msra.mxu0 %v628
    %874 = vmatprep.subr.bf16.mxu0 %v633
    %875 = vmatpush1.bf16.msra.mxu0 %v632
    %876 = vmatprep.subr.bf16.mxu0 %v637
    %877 = vmatpush1.bf16.msra.mxu0 %v636
    %878 = vmatprep.subr.bf16.mxu0 %v641
    %879 = vmatpush1.bf16.msra.mxu0 %v640
    %880 = vmatprep.subr.bf16.mxu0 %v645
    %881 = vmatpush1.bf16.msra.mxu0 %v644
    %882 = vmatprep.subr.bf16.mxu0 %v649
    %883 = vmatpush1.bf16.msra.mxu0 %v648
    %884 = vmatprep.subr.bf16.mxu0 %v653
    %885 = vmatpush1.bf16.msra.mxu0 %v652
    %886 = vmatprep.subr.bf16.mxu0 %v657
    %887 = vmatpush1.bf16.msra.mxu0 %v656
    %888 = vmatprep.subr.bf16.mxu0 %v661
    %889 = vmatpush1.bf16.msra.mxu0 %v660
    %890 = vmatprep.subr.bf16.mxu0 %v665
    %891 = vmatpush1.bf16.msra.mxu0 %v664
    %892 = vmatprep.mubr.bf16.mxu0 %v213
    %893 = vmatmul.mubr.bf16.gmra.mrb[0].mxu0 %v212
    %v894 = vpop.f32.mrb[0].mxu0
    %v895 = vadd.f32 %v189, %v894
    %v896 = vpop.f32.mrb[0].mxu0
    %v897 = vadd.f32 %v193, %v896
    %v898 = vpop.f32.mrb[0].mxu0
    %v899 = vpop.f32.mrb[0].mxu0
    %900 = vdwg.mxu0
    %901 = vmatprep.subr.bf16.mxu0 %v669
    %902 = vmatpush1.bf16.msra.mxu0 %v668
    %903 = vmatprep.subr.bf16.mxu0 %v673
    %904 = vmatpush1.bf16.msra.mxu0 %v672
    %905 = vmatprep.subr.bf16.mxu0 %v677
    %906 = vmatpush1.bf16.msra.mxu0 %v676
    %907 = vmatprep.subr.bf16.mxu0 %v681
    %908 = vmatpush1.bf16.msra.mxu0 %v680
    %909 = vmatprep.subr.bf16.mxu0 %v685
    %910 = vmatpush1.bf16.msra.mxu0 %v684
    %911 = vmatprep.subr.bf16.mxu0 %v689
    %912 = vmatpush1.bf16.msra.mxu0 %v688
    %913 = vmatprep.subr.bf16.mxu0 %v693
    %914 = vmatpush1.bf16.msra.mxu0 %v692
    %915 = vmatprep.subr.bf16.mxu0 %v697
    %916 = vmatpush1.bf16.msra.mxu0 %v696
    %917 = vmatprep.subr.bf16.mxu0 %v701
    %918 = vmatpush1.bf16.msra.mxu0 %v700
    %919 = vmatprep.subr.bf16.mxu0 %v705
    %920 = vmatpush1.bf16.msra.mxu0 %v704
    %921 = vmatprep.subr.bf16.mxu0 %v709
    %922 = vmatpush1.bf16.msra.mxu0 %v708
    %923 = vmatprep.subr.bf16.mxu0 %v713
    %924 = vmatpush1.bf16.msra.mxu0 %v712
    %925 = vmatprep.subr.bf16.mxu0 %v717
    %926 = vmatpush1.bf16.msra.mxu0 %v716
    %927 = vmatprep.subr.bf16.mxu0 %v721
    %928 = vmatpush1.bf16.msra.mxu0 %v720
    %929 = vmatprep.subr.bf16.mxu0 %v725
    %930 = vmatpush1.bf16.msra.mxu0 %v724
    %931 = vmatprep.subr.bf16.mxu0 %v729
    %932 = vmatpush1.bf16.msra.mxu0 %v728
    %933 = vmatprep.mubr.bf16.mxu0 %v215
    %934 = vmatmul.mubr.bf16.gmra.mrb[0].mxu0 %v214
    %v935 = vpop.f32.mrb[0].mxu0
    %v936 = vadd.f32 %v895, %v935
    %v937 = vpop.f32.mrb[0].mxu0
    %v938 = vadd.f32 %v897, %v937
    %v939 = vpop.f32.mrb[0].mxu0
    %v940 = vpop.f32.mrb[0].mxu0
    %941 = vdwg.mxu0
    %942 = vmatprep.subr.bf16.mxu0 %v607
    %943 = vmatpush1.bf16.msra.mxu0 %v606
    %944 = vmatprep.subr.bf16.mxu0 %v611
    %945 = vmatpush1.bf16.msra.mxu0 %v610
    %946 = vmatprep.subr.bf16.mxu0 %v615
    %947 = vmatpush1.bf16.msra.mxu0 %v614
    %948 = vmatprep.subr.bf16.mxu0 %v619
    %949 = vmatpush1.bf16.msra.mxu0 %v618
    %950 = vmatprep.subr.bf16.mxu0 %v623
    %951 = vmatpush1.bf16.msra.mxu0 %v622
    %952 = vmatprep.subr.bf16.mxu0 %v627
    %953 = vmatpush1.bf16.msra.mxu0 %v626
    %954 = vmatprep.subr.bf16.mxu0 %v631
    %955 = vmatpush1.bf16.msra.mxu0 %v630
    %956 = vmatprep.subr.bf16.mxu0 %v635
    %957 = vmatpush1.bf16.msra.mxu0 %v634
    %958 = vmatprep.subr.bf16.mxu0 %v639
    %959 = vmatpush1.bf16.msra.mxu0 %v638
    %960 = vmatprep.subr.bf16.mxu0 %v643
    %961 = vmatpush1.bf16.msra.mxu0 %v642
    %962 = vmatprep.subr.bf16.mxu0 %v647
    %963 = vmatpush1.bf16.msra.mxu0 %v646
    %964 = vmatprep.subr.bf16.mxu0 %v651
    %965 = vmatpush1.bf16.msra.mxu0 %v650
    %966 = vmatprep.subr.bf16.mxu0 %v655
    %967 = vmatpush1.bf16.msra.mxu0 %v654
    %968 = vmatprep.subr.bf16.mxu0 %v659
    %969 = vmatpush1.bf16.msra.mxu0 %v658
    %970 = vmatprep.subr.bf16.mxu0 %v663
    %971 = vmatpush1.bf16.msra.mxu0 %v662
    %972 = vmatprep.subr.bf16.mxu0 %v667
    %973 = vmatpush1.bf16.msra.mxu0 %v666
    %974 = vmatprep.mubr.bf16.mxu0 %v213
    %975 = vmatmul.mubr.bf16.gmra.mrb[0].mxu0 %v212
    %v976 = vpop.f32.mrb[0].mxu0
    %v977 = vadd.f32 %v197, %v976
    %v978 = vpop.f32.mrb[0].mxu0
    %v979 = vadd.f32 %v201, %v978
    %v980 = vpop.f32.mrb[0].mxu0
    %v981 = vpop.f32.mrb[0].mxu0
    %982 = vdwg.mxu0
    %983 = vmatprep.subr.bf16.mxu0 %v671
    %984 = vmatpush1.bf16.msra.mxu0 %v670
    %985 = vmatprep.subr.bf16.mxu0 %v675
    %986 = vmatpush1.bf16.msra.mxu0 %v674
    %987 = vmatprep.subr.bf16.mxu0 %v679
    %988 = vmatpush1.bf16.msra.mxu0 %v678
    %989 = vmatprep.subr.bf16.mxu0 %v683
    %990 = vmatpush1.bf16.msra.mxu0 %v682
    %991 = vmatprep.subr.bf16.mxu0 %v687
    %992 = vmatpush1.bf16.msra.mxu0 %v686
    %993 = vmatprep.subr.bf16.mxu0 %v691
    %994 = vmatpush1.bf16.msra.mxu0 %v690
    %995 = vmatprep.subr.bf16.mxu0 %v695
    %996 = vmatpush1.bf16.msra.mxu0 %v694
    %997 = vmatprep.subr.bf16.mxu0 %v699
    %998 = vmatpush1.bf16.msra.mxu0 %v698
    %999 = vmatprep.subr.bf16.mxu0 %v703
    %1000 = vmatpush1.bf16.msra.mxu0 %v702
    %1001 = vmatprep.subr.bf16.mxu0 %v707
    %1002 = vmatpush1.bf16.msra.mxu0 %v706
    %1003 = vmatprep.subr.bf16.mxu0 %v711
    %1004 = vmatpush1.bf16.msra.mxu0 %v710
    %1005 = vmatprep.subr.bf16.mxu0 %v715
    %1006 = vmatpush1.bf16.msra.mxu0 %v714
    %1007 = vmatprep.subr.bf16.mxu0 %v719
    %1008 = vmatpush1.bf16.msra.mxu0 %v718
    %1009 = vmatprep.subr.bf16.mxu0 %v723
    %1010 = vmatpush1.bf16.msra.mxu0 %v722
    %1011 = vmatprep.subr.bf16.mxu0 %v727
    %1012 = vmatpush1.bf16.msra.mxu0 %v726
    %1013 = vmatprep.subr.bf16.mxu0 %v731
    %1014 = vmatpush1.bf16.msra.mxu0 %v730
    %1015 = vmatprep.mubr.bf16.mxu0 %v215
    %1016 = vmatmul.mubr.bf16.gmra.mrb[0].mxu0 %v214
    %v1017 = vpop.f32.mrb[0].mxu0
    %v1018 = vadd.f32 %v977, %v1017
    %v1019 = vpop.f32.mrb[0].mxu0
    %v1020 = vadd.f32 %v979, %v1019
    %v1021 = vpop.f32.mrb[0].mxu0
    %v1022 = vpop.f32.mrb[0].mxu0
    %1023 = vdwg.mxu0
    %v1024 = vmax.f32 %v936, 0.0
    %v1025 = vmax.f32 %v938, 0.0
    %v1026 = vmax.f32 %v1018, 0.0
    %v1027 = vmax.f32 %v1020, 0.0
    %v1028 = vpack.c.bf16 %v1024, %v1024
    %v1029 = vpack.c.bf16 %v1025, %v1025
    %v1030 = vpack.c.bf16 %v1026, %v1026
    %v1031 = vpack.c.bf16 %v1027, %v1027
    %v1032 = vld [vmem:[#allocation2] sm:$0xff]
    %v1033 = vld [vmem:[#allocation2 + $0x8] sm:$0xff]
    %v1034 = vld [vmem:[#allocation2 + $0x10] sm:$0xff]
    %v1035 = vld [vmem:[#allocation2 + $0x18] sm:$0xff]
    %v1036 = vld [vmem:[#allocation2 + $0x20] sm:$0xff]
    %v1037 = vld [vmem:[#allocation2 + $0x28] sm:$0xff]
    %v1038 = vld [vmem:[#allocation2 + $0x30] sm:$0xff]
    %v1039 = vld [vmem:[#allocation2 + $0x38] sm:$0xff]
    %v1040 = vld [vmem:[#allocation2 + $0x40] sm:$0xff]
    %v1041 = vld [vmem:[#allocation2 + $0x48] sm:$0xff]
    %v1042 = vld [vmem:[#allocation2 + $0x50] sm:$0xff]
    %v1043 = vld [vmem:[#allocation2 + $0x58] sm:$0xff]
    %v1044 = vld [vmem:[#allocation2 + $0x60] sm:$0xff]
    %v1045 = vld [vmem:[#allocation2 + $0x68] sm:$0xff]
    %v1046 = vld [vmem:[#allocation2 + $0x70] sm:$0xff]
    %v1047 = vld [vmem:[#allocation2 + $0x78] sm:$0xff]
    %v1048 = vld [vmem:[#allocation2 + $0x80] sm:$0xff]
    %v1049 = vld [vmem:[#allocation2 + $0x88] sm:$0xff]
    %v1050 = vld [vmem:[#allocation2 + $0x90] sm:$0xff]
    %v1051 = vld [vmem:[#allocation2 + $0x98] sm:$0xff]
    %v1052 = vld [vmem:[#allocation2 + $0xa0] sm:$0xff]
    %v1053 = vld [vmem:[#allocation2 + $0xa8] sm:$0xff]
    %v1054 = vld [vmem:[#allocation2 + $0xb0] sm:$0xff]
    %v1055 = vld [vmem:[#allocation2 + $0xb8] sm:$0xff]
    %v1056 = vld [vmem:[#allocation2 + $0xc0] sm:$0xff]
    %v1057 = vld [vmem:[#allocation2 + $0xc8] sm:$0xff]
    %v1058 = vld [vmem:[#allocation2 + $0xd0] sm:$0xff]
    %v1059 = vld [vmem:[#allocation2 + $0xd8] sm:$0xff]
    %v1060 = vld [vmem:[#allocation2 + $0xe0] sm:$0xff]
    %v1061 = vld [vmem:[#allocation2 + $0xe8] sm:$0xff]
    %v1062 = vld [vmem:[#allocation2 + $0xf0] sm:$0xff]
    %v1063 = vld [vmem:[#allocation2 + $0xf8] sm:$0xff]
    %v1064 = vld [vmem:[#allocation2 + $0x100] sm:$0xff]
    %v1065 = vld [vmem:[#allocation2 + $0x108] sm:$0xff]
    %v1066 = vld [vmem:[#allocation2 + $0x110] sm:$0xff]
    %v1067 = vld [vmem:[#allocation2 + $0x118] sm:$0xff]
    %v1068 = vld [vmem:[#allocation2 + $0x120] sm:$0xff]
    %v1069 = vld [vmem:[#allocation2 + $0x128] sm:$0xff]
    %v1070 = vld [vmem:[#allocation2 + $0x130] sm:$0xff]
    %v1071 = vld [vmem:[#allocation2 + $0x138] sm:$0xff]
    %v1072 = vld [vmem:[#allocation2 + $0x140] sm:$0xff]
    %v1073 = vld [vmem:[#allocation2 + $0x148] sm:$0xff]
    %v1074 = vld [vmem:[#allocation2 + $0x150] sm:$0xff]
    %v1075 = vld [vmem:[#allocation2 + $0x158] sm:$0xff]
    %v1076 = vld [vmem:[#allocation2 + $0x160] sm:$0xff]
    %v1077 = vld [vmem:[#allocation2 + $0x168] sm:$0xff]
    %v1078 = vld [vmem:[#allocation2 + $0x170] sm:$0xff]
    %v1079 = vld [vmem:[#allocation2 + $0x178] sm:$0xff]
    %v1080 = vld [vmem:[#allocation2 + $0x180] sm:$0xff]
    %v1081 = vld [vmem:[#allocation2 + $0x188] sm:$0xff]
    %v1082 = vld [vmem:[#allocation2 + $0x190] sm:$0xff]
    %v1083 = vld [vmem:[#allocation2 + $0x198] sm:$0xff]
    %v1084 = vld [vmem:[#allocation2 + $0x1a0] sm:$0xff]
    %v1085 = vld [vmem:[#allocation2 + $0x1a8] sm:$0xff]
    %v1086 = vld [vmem:[#allocation2 + $0x1b0] sm:$0xff]
    %v1087 = vld [vmem:[#allocation2 + $0x1b8] sm:$0xff]
    %v1088 = vld [vmem:[#allocation2 + $0x1c0] sm:$0xff]
    %v1089 = vld [vmem:[#allocation2 + $0x1c8] sm:$0xff]
    %v1090 = vld [vmem:[#allocation2 + $0x1d0] sm:$0xff]
    %v1091 = vld [vmem:[#allocation2 + $0x1d8] sm:$0xff]
    %v1092 = vld [vmem:[#allocation2 + $0x1e0] sm:$0xff]
    %v1093 = vld [vmem:[#allocation2 + $0x1e8] sm:$0xff]
    %v1094 = vld [vmem:[#allocation2 + $0x1f0] sm:$0xff]
    %v1095 = vld [vmem:[#allocation2 + $0x1f8] sm:$0xff]
    %v1096 = vld [vmem:[#allocation2 + $0x200] sm:$0xff]
    %v1097 = vld [vmem:[#allocation2 + $0x208] sm:$0xff]
    %v1098 = vld [vmem:[#allocation2 + $0x210] sm:$0xff]
    %v1099 = vld [vmem:[#allocation2 + $0x218] sm:$0xff]
    %v1100 = vld [vmem:[#allocation2 + $0x220] sm:$0xff]
    %v1101 = vld [vmem:[#allocation2 + $0x228] sm:$0xff]
    %v1102 = vld [vmem:[#allocation2 + $0x230] sm:$0xff]
    %v1103 = vld [vmem:[#allocation2 + $0x238] sm:$0xff]
    %v1104 = vld [vmem:[#allocation2 + $0x240] sm:$0xff]
    %v1105 = vld [vmem:[#allocation2 + $0x248] sm:$0xff]
    %v1106 = vld [vmem:[#allocation2 + $0x250] sm:$0xff]
    %v1107 = vld [vmem:[#allocation2 + $0x258] sm:$0xff]
    %v1108 = vld [vmem:[#allocation2 + $0x260] sm:$0xff]
    %v1109 = vld [vmem:[#allocation2 + $0x268] sm:$0xff]
    %v1110 = vld [vmem:[#allocation2 + $0x270] sm:$0xff]
    %v1111 = vld [vmem:[#allocation2 + $0x278] sm:$0xff]
    %v1112 = vld [vmem:[#allocation2 + $0x280] sm:$0xff]
    %v1113 = vld [vmem:[#allocation2 + $0x288] sm:$0xff]
    %v1114 = vld [vmem:[#allocation2 + $0x290] sm:$0xff]
    %v1115 = vld [vmem:[#allocation2 + $0x298] sm:$0xff]
    %v1116 = vld [vmem:[#allocation2 + $0x2a0] sm:$0xff]
    %v1117 = vld [vmem:[#allocation2 + $0x2a8] sm:$0xff]
    %v1118 = vld [vmem:[#allocation2 + $0x2b0] sm:$0xff]
    %v1119 = vld [vmem:[#allocation2 + $0x2b8] sm:$0xff]
    %v1120 = vld [vmem:[#allocation2 + $0x2c0] sm:$0xff]
    %v1121 = vld [vmem:[#allocation2 + $0x2c8] sm:$0xff]
    %v1122 = vld [vmem:[#allocation2 + $0x2d0] sm:$0xff]
    %v1123 = vld [vmem:[#allocation2 + $0x2d8] sm:$0xff]
    %v1124 = vld [vmem:[#allocation2 + $0x2e0] sm:$0xff]
    %v1125 = vld [vmem:[#allocation2 + $0x2e8] sm:$0xff]
    %v1126 = vld [vmem:[#allocation2 + $0x2f0] sm:$0xff]
    %v1127 = vld [vmem:[#allocation2 + $0x2f8] sm:$0xff]
    %v1128 = vld [vmem:[#allocation2 + $0x300] sm:$0xff]
    %v1129 = vld [vmem:[#allocation2 + $0x308] sm:$0xff]
    %v1130 = vld [vmem:[#allocation2 + $0x310] sm:$0xff]
    %v1131 = vld [vmem:[#allocation2 + $0x318] sm:$0xff]
    %v1132 = vld [vmem:[#allocation2 + $0x320] sm:$0xff]
    %v1133 = vld [vmem:[#allocation2 + $0x328] sm:$0xff]
    %v1134 = vld [vmem:[#allocation2 + $0x330] sm:$0xff]
    %v1135 = vld [vmem:[#allocation2 + $0x338] sm:$0xff]
    %v1136 = vld [vmem:[#allocation2 + $0x340] sm:$0xff]
    %v1137 = vld [vmem:[#allocation2 + $0x348] sm:$0xff]
    %v1138 = vld [vmem:[#allocation2 + $0x350] sm:$0xff]
    %v1139 = vld [vmem:[#allocation2 + $0x358] sm:$0xff]
    %v1140 = vld [vmem:[#allocation2 + $0x360] sm:$0xff]
    %v1141 = vld [vmem:[#allocation2 + $0x368] sm:$0xff]
    %v1142 = vld [vmem:[#allocation2 + $0x370] sm:$0xff]
    %v1143 = vld [vmem:[#allocation2 + $0x378] sm:$0xff]
    %v1144 = vld [vmem:[#allocation2 + $0x380] sm:$0xff]
    %v1145 = vld [vmem:[#allocation2 + $0x388] sm:$0xff]
    %v1146 = vld [vmem:[#allocation2 + $0x390] sm:$0xff]
    %v1147 = vld [vmem:[#allocation2 + $0x398] sm:$0xff]
    %v1148 = vld [vmem:[#allocation2 + $0x3a0] sm:$0xff]
    %v1149 = vld [vmem:[#allocation2 + $0x3a8] sm:$0xff]
    %v1150 = vld [vmem:[#allocation2 + $0x3b0] sm:$0xff]
    %v1151 = vld [vmem:[#allocation2 + $0x3b8] sm:$0xff]
    %v1152 = vld [vmem:[#allocation2 + $0x3c0] sm:$0xff]
    %v1153 = vld [vmem:[#allocation2 + $0x3c8] sm:$0xff]
    %v1154 = vld [vmem:[#allocation2 + $0x3d0] sm:$0xff]
    %v1155 = vld [vmem:[#allocation2 + $0x3d8] sm:$0xff]
    %v1156 = vld [vmem:[#allocation2 + $0x3e0] sm:$0xff]
    %v1157 = vld [vmem:[#allocation2 + $0x3e8] sm:$0xff]
    %v1158 = vld [vmem:[#allocation2 + $0x3f0] sm:$0xff]
    %v1159 = vld [vmem:[#allocation2 + $0x3f8] sm:$0xff]
    %v1160 = vld [vmem:[%s4] sm:$0xff]
    %v1161 = vld [vmem:[%s4 + $0x8] sm:$0xff]
    %v1162 = vld [vmem:[%s4 + $0x10] sm:$0xff]
    %v1163 = vld [vmem:[%s4 + $0x18] sm:$0xff]
    %v1292 = vunpack.c.l.b16 %v1032
    %v1293 = vunpack.c.h.b16 %v1032
    %v1294 = vunpack.c.l.b16 %v1033
    %v1295 = vunpack.c.h.b16 %v1033
    %v1296 = vunpack.c.l.b16 %v1034
    %v1297 = vunpack.c.h.b16 %v1034
    %v1298 = vunpack.c.l.b16 %v1035
    %v1299 = vunpack.c.h.b16 %v1035
    %v1300 = vunpack.c.l.b16 %v1036
    %v1301 = vunpack.c.h.b16 %v1036
    %v1302 = vunpack.c.l.b16 %v1037
    %v1303 = vunpack.c.h.b16 %v1037
    %v1304 = vunpack.c.l.b16 %v1038
    %v1305 = vunpack.c.h.b16 %v1038
    %v1306 = vunpack.c.l.b16 %v1039
    %v1307 = vunpack.c.h.b16 %v1039
    %v1308 = vunpack.c.l.b16 %v1040
    %v1309 = vunpack.c.h.b16 %v1040
    %v1310 = vunpack.c.l.b16 %v1041
    %v1311 = vunpack.c.h.b16 %v1041
    %v1312 = vunpack.c.l.b16 %v1042
    %v1313 = vunpack.c.h.b16 %v1042
    %v1314 = vunpack.c.l.b16 %v1043
    %v1315 = vunpack.c.h.b16 %v1043
    %v1316 = vunpack.c.l.b16 %v1044
    %v1317 = vunpack.c.h.b16 %v1044
    %v1318 = vunpack.c.l.b16 %v1045
    %v1319 = vunpack.c.h.b16 %v1045
    %v1320 = vunpack.c.l.b16 %v1046
    %v1321 = vunpack.c.h.b16 %v1046
    %v1322 = vunpack.c.l.b16 %v1047
    %v1323 = vunpack.c.h.b16 %v1047
    %v1324 = vunpack.c.l.b16 %v1048
    %v1325 = vunpack.c.h.b16 %v1048
    %v1326 = vunpack.c.l.b16 %v1049
    %v1327 = vunpack.c.h.b16 %v1049
    %v1328 = vunpack.c.l.b16 %v1050
    %v1329 = vunpack.c.h.b16 %v1050
    %v1330 = vunpack.c.l.b16 %v1051
    %v1331 = vunpack.c.h.b16 %v1051
    %v1332 = vunpack.c.l.b16 %v1052
    %v1333 = vunpack.c.h.b16 %v1052
    %v1334 = vunpack.c.l.b16 %v1053
    %v1335 = vunpack.c.h.b16 %v1053
    %v1336 = vunpack.c.l.b16 %v1054
    %v1337 = vunpack.c.h.b16 %v1054
    %v1338 = vunpack.c.l.b16 %v1055
    %v1339 = vunpack.c.h.b16 %v1055
    %v1340 = vunpack.c.l.b16 %v1056
    %v1341 = vunpack.c.h.b16 %v1056
    %v1342 = vunpack.c.l.b16 %v1057
    %v1343 = vunpack.c.h.b16 %v1057
    %v1344 = vunpack.c.l.b16 %v1058
    %v1345 = vunpack.c.h.b16 %v1058
    %v1346 = vunpack.c.l.b16 %v1059
    %v1347 = vunpack.c.h.b16 %v1059
    %v1348 = vunpack.c.l.b16 %v1060
    %v1349 = vunpack.c.h.b16 %v1060
    %v1350 = vunpack.c.l.b16 %v1061
    %v1351 = vunpack.c.h.b16 %v1061
    %v1352 = vunpack.c.l.b16 %v1062
    %v1353 = vunpack.c.h.b16 %v1062
    %v1354 = vunpack.c.l.b16 %v1063
    %v1355 = vunpack.c.h.b16 %v1063
    %v1356 = vunpack.c.l.b16 %v1064
    %v1357 = vunpack.c.h.b16 %v1064
    %v1358 = vunpack.c.l.b16 %v1065
    %v1359 = vunpack.c.h.b16 %v1065
    %v1360 = vunpack.c.l.b16 %v1066
    %v1361 = vunpack.c.h.b16 %v1066
    %v1362 = vunpack.c.l.b16 %v1067
    %v1363 = vunpack.c.h.b16 %v1067
    %v1364 = vunpack.c.l.b16 %v1068
    %v1365 = vunpack.c.h.b16 %v1068
    %v1366 = vunpack.c.l.b16 %v1069
    %v1367 = vunpack.c.h.b16 %v1069
    %v1368 = vunpack.c.l.b16 %v1070
    %v1369 = vunpack.c.h.b16 %v1070
    %v1370 = vunpack.c.l.b16 %v1071
    %v1371 = vunpack.c.h.b16 %v1071
    %v1372 = vunpack.c.l.b16 %v1072
    %v1373 = vunpack.c.h.b16 %v1072
    %v1374 = vunpack.c.l.b16 %v1073
    %v1375 = vunpack.c.h.b16 %v1073
    %v1376 = vunpack.c.l.b16 %v1074
    %v1377 = vunpack.c.h.b16 %v1074
    %v1378 = vunpack.c.l.b16 %v1075
    %v1379 = vunpack.c.h.b16 %v1075
    %v1380 = vunpack.c.l.b16 %v1076
    %v1381 = vunpack.c.h.b16 %v1076
    %v1382 = vunpack.c.l.b16 %v1077
    %v1383 = vunpack.c.h.b16 %v1077
    %v1384 = vunpack.c.l.b16 %v1078
    %v1385 = vunpack.c.h.b16 %v1078
    %v1386 = vunpack.c.l.b16 %v1079
    %v1387 = vunpack.c.h.b16 %v1079
    %v1388 = vunpack.c.l.b16 %v1080
    %v1389 = vunpack.c.h.b16 %v1080
    %v1390 = vunpack.c.l.b16 %v1081
    %v1391 = vunpack.c.h.b16 %v1081
    %v1392 = vunpack.c.l.b16 %v1082
    %v1393 = vunpack.c.h.b16 %v1082
    %v1394 = vunpack.c.l.b16 %v1083
    %v1395 = vunpack.c.h.b16 %v1083
    %v1396 = vunpack.c.l.b16 %v1084
    %v1397 = vunpack.c.h.b16 %v1084
    %v1398 = vunpack.c.l.b16 %v1085
    %v1399 = vunpack.c.h.b16 %v1085
    %v1400 = vunpack.c.l.b16 %v1086
    %v1401 = vunpack.c.h.b16 %v1086
    %v1402 = vunpack.c.l.b16 %v1087
    %v1403 = vunpack.c.h.b16 %v1087
    %v1404 = vunpack.c.l.b16 %v1088
    %v1405 = vunpack.c.h.b16 %v1088
    %v1406 = vunpack.c.l.b16 %v1089
    %v1407 = vunpack.c.h.b16 %v1089
    %v1408 = vunpack.c.l.b16 %v1090
    %v1409 = vunpack.c.h.b16 %v1090
    %v1410 = vunpack.c.l.b16 %v1091
    %v1411 = vunpack.c.h.b16 %v1091
    %v1412 = vunpack.c.l.b16 %v1092
    %v1413 = vunpack.c.h.b16 %v1092
    %v1414 = vunpack.c.l.b16 %v1093
    %v1415 = vunpack.c.h.b16 %v1093
    %v1416 = vunpack.c.l.b16 %v1094
    %v1417 = vunpack.c.h.b16 %v1094
    %v1418 = vunpack.c.l.b16 %v1095
    %v1419 = vunpack.c.h.b16 %v1095
    %v1420 = vunpack.c.l.b16 %v1096
    %v1421 = vunpack.c.h.b16 %v1096
    %v1422 = vunpack.c.l.b16 %v1097
    %v1423 = vunpack.c.h.b16 %v1097
    %v1424 = vunpack.c.l.b16 %v1098
    %v1425 = vunpack.c.h.b16 %v1098
    %v1426 = vunpack.c.l.b16 %v1099
    %v1427 = vunpack.c.h.b16 %v1099
    %v1428 = vunpack.c.l.b16 %v1100
    %v1429 = vunpack.c.h.b16 %v1100
    %v1430 = vunpack.c.l.b16 %v1101
    %v1431 = vunpack.c.h.b16 %v1101
    %v1432 = vunpack.c.l.b16 %v1102
    %v1433 = vunpack.c.h.b16 %v1102
    %v1434 = vunpack.c.l.b16 %v1103
    %v1435 = vunpack.c.h.b16 %v1103
    %v1436 = vunpack.c.l.b16 %v1104
    %v1437 = vunpack.c.h.b16 %v1104
    %v1438 = vunpack.c.l.b16 %v1105
    %v1439 = vunpack.c.h.b16 %v1105
    %v1440 = vunpack.c.l.b16 %v1106
    %v1441 = vunpack.c.h.b16 %v1106
    %v1442 = vunpack.c.l.b16 %v1107
    %v1443 = vunpack.c.h.b16 %v1107
    %v1444 = vunpack.c.l.b16 %v1108
    %v1445 = vunpack.c.h.b16 %v1108
    %v1446 = vunpack.c.l.b16 %v1109
    %v1447 = vunpack.c.h.b16 %v1109
    %v1448 = vunpack.c.l.b16 %v1110
    %v1449 = vunpack.c.h.b16 %v1110
    %v1450 = vunpack.c.l.b16 %v1111
    %v1451 = vunpack.c.h.b16 %v1111
    %v1452 = vunpack.c.l.b16 %v1112
    %v1453 = vunpack.c.h.b16 %v1112
    %v1454 = vunpack.c.l.b16 %v1113
    %v1455 = vunpack.c.h.b16 %v1113
    %v1456 = vunpack.c.l.b16 %v1114
    %v1457 = vunpack.c.h.b16 %v1114
    %v1458 = vunpack.c.l.b16 %v1115
    %v1459 = vunpack.c.h.b16 %v1115
    %v1460 = vunpack.c.l.b16 %v1116
    %v1461 = vunpack.c.h.b16 %v1116
    %v1462 = vunpack.c.l.b16 %v1117
    %v1463 = vunpack.c.h.b16 %v1117
    %v1464 = vunpack.c.l.b16 %v1118
    %v1465 = vunpack.c.h.b16 %v1118
    %v1466 = vunpack.c.l.b16 %v1119
    %v1467 = vunpack.c.h.b16 %v1119
    %v1468 = vunpack.c.l.b16 %v1120
    %v1469 = vunpack.c.h.b16 %v1120
    %v1470 = vunpack.c.l.b16 %v1121
    %v1471 = vunpack.c.h.b16 %v1121
    %v1472 = vunpack.c.l.b16 %v1122
    %v1473 = vunpack.c.h.b16 %v1122
    %v1474 = vunpack.c.l.b16 %v1123
    %v1475 = vunpack.c.h.b16 %v1123
    %v1476 = vunpack.c.l.b16 %v1124
    %v1477 = vunpack.c.h.b16 %v1124
    %v1478 = vunpack.c.l.b16 %v1125
    %v1479 = vunpack.c.h.b16 %v1125
    %v1480 = vunpack.c.l.b16 %v1126
    %v1481 = vunpack.c.h.b16 %v1126
    %v1482 = vunpack.c.l.b16 %v1127
    %v1483 = vunpack.c.h.b16 %v1127
    %v1484 = vunpack.c.l.b16 %v1128
    %v1485 = vunpack.c.h.b16 %v1128
    %v1486 = vunpack.c.l.b16 %v1129
    %v1487 = vunpack.c.h.b16 %v1129
    %v1488 = vunpack.c.l.b16 %v1130
    %v1489 = vunpack.c.h.b16 %v1130
    %v1490 = vunpack.c.l.b16 %v1131
    %v1491 = vunpack.c.h.b16 %v1131
    %v1492 = vunpack.c.l.b16 %v1132
    %v1493 = vunpack.c.h.b16 %v1132
    %v1494 = vunpack.c.l.b16 %v1133
    %v1495 = vunpack.c.h.b16 %v1133
    %v1496 = vunpack.c.l.b16 %v1134
    %v1497 = vunpack.c.h.b16 %v1134
    %v1498 = vunpack.c.l.b16 %v1135
    %v1499 = vunpack.c.h.b16 %v1135
    %v1500 = vunpack.c.l.b16 %v1136
    %v1501 = vunpack.c.h.b16 %v1136
    %v1502 = vunpack.c.l.b16 %v1137
    %v1503 = vunpack.c.h.b16 %v1137
    %v1504 = vunpack.c.l.b16 %v1138
    %v1505 = vunpack.c.h.b16 %v1138
    %v1506 = vunpack.c.l.b16 %v1139
    %v1507 = vunpack.c.h.b16 %v1139
    %v1508 = vunpack.c.l.b16 %v1140
    %v1509 = vunpack.c.h.b16 %v1140
    %v1510 = vunpack.c.l.b16 %v1141
    %v1511 = vunpack.c.h.b16 %v1141
    %v1512 = vunpack.c.l.b16 %v1142
    %v1513 = vunpack.c.h.b16 %v1142
    %v1514 = vunpack.c.l.b16 %v1143
    %v1515 = vunpack.c.h.b16 %v1143
    %v1516 = vunpack.c.l.b16 %v1144
    %v1517 = vunpack.c.h.b16 %v1144
    %v1518 = vunpack.c.l.b16 %v1145
    %v1519 = vunpack.c.h.b16 %v1145
    %v1520 = vunpack.c.l.b16 %v1146
    %v1521 = vunpack.c.h.b16 %v1146
    %v1522 = vunpack.c.l.b16 %v1147
    %v1523 = vunpack.c.h.b16 %v1147
    %v1524 = vunpack.c.l.b16 %v1148
    %v1525 = vunpack.c.h.b16 %v1148
    %v1526 = vunpack.c.l.b16 %v1149
    %v1527 = vunpack.c.h.b16 %v1149
    %v1528 = vunpack.c.l.b16 %v1150
    %v1529 = vunpack.c.h.b16 %v1150
    %v1530 = vunpack.c.l.b16 %v1151
    %v1531 = vunpack.c.h.b16 %v1151
    %v1532 = vunpack.c.l.b16 %v1152
    %v1533 = vunpack.c.h.b16 %v1152
    %v1534 = vunpack.c.l.b16 %v1153
    %v1535 = vunpack.c.h.b16 %v1153
    %v1536 = vunpack.c.l.b16 %v1154
    %v1537 = vunpack.c.h.b16 %v1154
    %v1538 = vunpack.c.l.b16 %v1155
    %v1539 = vunpack.c.h.b16 %v1155
    %v1540 = vunpack.c.l.b16 %v1156
    %v1541 = vunpack.c.h.b16 %v1156
    %v1542 = vunpack.c.l.b16 %v1157
    %v1543 = vunpack.c.h.b16 %v1157
    %v1544 = vunpack.c.l.b16 %v1158
    %v1545 = vunpack.c.h.b16 %v1158
    %v1546 = vunpack.c.l.b16 %v1159
    %v1547 = vunpack.c.h.b16 %v1159
    %v1548 = vpack.c.b16 %v1296, %v1292
    %v1549 = vpack.c.b16 %v1297, %v1293
    %v1550 = vpack.c.b16 %v1298, %v1294
    %v1551 = vpack.c.b16 %v1299, %v1295
    %v1552 = vpack.c.b16 %v1304, %v1300
    %v1553 = vpack.c.b16 %v1305, %v1301
    %v1554 = vpack.c.b16 %v1306, %v1302
    %v1555 = vpack.c.b16 %v1307, %v1303
    %v1556 = vpack.c.b16 %v1312, %v1308
    %v1557 = vpack.c.b16 %v1313, %v1309
    %v1558 = vpack.c.b16 %v1314, %v1310
    %v1559 = vpack.c.b16 %v1315, %v1311
    %v1560 = vpack.c.b16 %v1320, %v1316
    %v1561 = vpack.c.b16 %v1321, %v1317
    %v1562 = vpack.c.b16 %v1322, %v1318
    %v1563 = vpack.c.b16 %v1323, %v1319
    %v1564 = vpack.c.b16 %v1328, %v1324
    %v1565 = vpack.c.b16 %v1329, %v1325
    %v1566 = vpack.c.b16 %v1330, %v1326
    %v1567 = vpack.c.b16 %v1331, %v1327
    %v1568 = vpack.c.b16 %v1336, %v1332
    %v1569 = vpack.c.b16 %v1337, %v1333
    %v1570 = vpack.c.b16 %v1338, %v1334
    %v1571 = vpack.c.b16 %v1339, %v1335
    %v1572 = vpack.c.b16 %v1344, %v1340
    %v1573 = vpack.c.b16 %v1345, %v1341
    %v1574 = vpack.c.b16 %v1346, %v1342
    %v1575 = vpack.c.b16 %v1347, %v1343
    %v1576 = vpack.c.b16 %v1352, %v1348
    %v1577 = vpack.c.b16 %v1353, %v1349
    %v1578 = vpack.c.b16 %v1354, %v1350
    %v1579 = vpack.c.b16 %v1355, %v1351
    %v1580 = vpack.c.b16 %v1360, %v1356
    %v1581 = vpack.c.b16 %v1361, %v1357
    %v1582 = vpack.c.b16 %v1362, %v1358
    %v1583 = vpack.c.b16 %v1363, %v1359
    %v1584 = vpack.c.b16 %v1368, %v1364
    %v1585 = vpack.c.b16 %v1369, %v1365
    %v1586 = vpack.c.b16 %v1370, %v1366
    %v1587 = vpack.c.b16 %v1371, %v1367
    %v1588 = vpack.c.b16 %v1376, %v1372
    %v1589 = vpack.c.b16 %v1377, %v1373
    %v1590 = vpack.c.b16 %v1378, %v1374
    %v1591 = vpack.c.b16 %v1379, %v1375
    %v1592 = vpack.c.b16 %v1384, %v1380
    %v1593 = vpack.c.b16 %v1385, %v1381
    %v1594 = vpack.c.b16 %v1386, %v1382
    %v1595 = vpack.c.b16 %v1387, %v1383
    %v1596 = vpack.c.b16 %v1392, %v1388
    %v1597 = vpack.c.b16 %v1393, %v1389
    %v1598 = vpack.c.b16 %v1394, %v1390
    %v1599 = vpack.c.b16 %v1395, %v1391
    %v1600 = vpack.c.b16 %v1400, %v1396
    %v1601 = vpack.c.b16 %v1401, %v1397
    %v1602 = vpack.c.b16 %v1402, %v1398
    %v1603 = vpack.c.b16 %v1403, %v1399
    %v1604 = vpack.c.b16 %v1408, %v1404
    %v1605 = vpack.c.b16 %v1409, %v1405
    %v1606 = vpack.c.b16 %v1410, %v1406
    %v1607 = vpack.c.b16 %v1411, %v1407
    %v1608 = vpack.c.b16 %v1416, %v1412
    %v1609 = vpack.c.b16 %v1417, %v1413
    %v1610 = vpack.c.b16 %v1418, %v1414
    %v1611 = vpack.c.b16 %v1419, %v1415
    %v1612 = vpack.c.b16 %v1424, %v1420
    %v1613 = vpack.c.b16 %v1425, %v1421
    %v1614 = vpack.c.b16 %v1426, %v1422
    %v1615 = vpack.c.b16 %v1427, %v1423
    %v1616 = vpack.c.b16 %v1432, %v1428
    %v1617 = vpack.c.b16 %v1433, %v1429
    %v1618 = vpack.c.b16 %v1434, %v1430
    %v1619 = vpack.c.b16 %v1435, %v1431
    %v1620 = vpack.c.b16 %v1440, %v1436
    %v1621 = vpack.c.b16 %v1441, %v1437
    %v1622 = vpack.c.b16 %v1442, %v1438
    %v1623 = vpack.c.b16 %v1443, %v1439
    %v1624 = vpack.c.b16 %v1448, %v1444
    %v1625 = vpack.c.b16 %v1449, %v1445
    %v1626 = vpack.c.b16 %v1450, %v1446
    %v1627 = vpack.c.b16 %v1451, %v1447
    %v1628 = vpack.c.b16 %v1456, %v1452
    %v1629 = vpack.c.b16 %v1457, %v1453
    %v1630 = vpack.c.b16 %v1458, %v1454
    %v1631 = vpack.c.b16 %v1459, %v1455
    %v1632 = vpack.c.b16 %v1464, %v1460
    %v1633 = vpack.c.b16 %v1465, %v1461
    %v1634 = vpack.c.b16 %v1466, %v1462
    %v1635 = vpack.c.b16 %v1467, %v1463
    %v1636 = vpack.c.b16 %v1472, %v1468
    %v1637 = vpack.c.b16 %v1473, %v1469
    %v1638 = vpack.c.b16 %v1474, %v1470
    %v1639 = vpack.c.b16 %v1475, %v1471
    %v1640 = vpack.c.b16 %v1480, %v1476
    %v1641 = vpack.c.b16 %v1481, %v1477
    %v1642 = vpack.c.b16 %v1482, %v1478
    %v1643 = vpack.c.b16 %v1483, %v1479
    %v1644 = vpack.c.b16 %v1488, %v1484
    %v1645 = vpack.c.b16 %v1489, %v1485
    %v1646 = vpack.c.b16 %v1490, %v1486
    %v1647 = vpack.c.b16 %v1491, %v1487
    %v1648 = vpack.c.b16 %v1496, %v1492
    %v1649 = vpack.c.b16 %v1497, %v1493
    %v1650 = vpack.c.b16 %v1498, %v1494
    %v1651 = vpack.c.b16 %v1499, %v1495
    %v1652 = vpack.c.b16 %v1504, %v1500
    %v1653 = vpack.c.b16 %v1505, %v1501
    %v1654 = vpack.c.b16 %v1506, %v1502
    %v1655 = vpack.c.b16 %v1507, %v1503
    %v1656 = vpack.c.b16 %v1512, %v1508
    %v1657 = vpack.c.b16 %v1513, %v1509
    %v1658 = vpack.c.b16 %v1514, %v1510
    %v1659 = vpack.c.b16 %v1515, %v1511
    %v1660 = vpack.c.b16 %v1520, %v1516
    %v1661 = vpack.c.b16 %v1521, %v1517
    %v1662 = vpack.c.b16 %v1522, %v1518
    %v1663 = vpack.c.b16 %v1523, %v1519
    %v1664 = vpack.c.b16 %v1528, %v1524
    %v1665 = vpack.c.b16 %v1529, %v1525
    %v1666 = vpack.c.b16 %v1530, %v1526
    %v1667 = vpack.c.b16 %v1531, %v1527
    %v1668 = vpack.c.b16 %v1536, %v1532
    %v1669 = vpack.c.b16 %v1537, %v1533
    %v1670 = vpack.c.b16 %v1538, %v1534
    %v1671 = vpack.c.b16 %v1539, %v1535
    %v1672 = vpack.c.b16 %v1544, %v1540
    %v1673 = vpack.c.b16 %v1545, %v1541
    %v1674 = vpack.c.b16 %v1546, %v1542
    %v1675 = vpack.c.b16 %v1547, %v1543
    %1804 = vmatprep.subr.bf16.mxu0 %v1549
    %1805 = vmatpush1.bf16.msra.mxu0 %v1548
    %1806 = vmatprep.subr.bf16.mxu0 %v1553
    %1807 = vmatpush1.bf16.msra.mxu0 %v1552
    %1808 = vmatprep.subr.bf16.mxu0 %v1557
    %1809 = vmatpush1.bf16.msra.mxu0 %v1556
    %1810 = vmatprep.subr.bf16.mxu0 %v1561
    %1811 = vmatpush1.bf16.msra.mxu0 %v1560
    %1812 = vmatprep.subr.bf16.mxu0 %v1565
    %1813 = vmatpush1.bf16.msra.mxu0 %v1564
    %1814 = vmatprep.subr.bf16.mxu0 %v1569
    %1815 = vmatpush1.bf16.msra.mxu0 %v1568
    %1816 = vmatprep.subr.bf16.mxu0 %v1573
    %1817 = vmatpush1.bf16.msra.mxu0 %v1572
    %1818 = vmatprep.subr.bf16.mxu0 %v1577
    %1819 = vmatpush1.bf16.msra.mxu0 %v1576
    %1820 = vmatprep.subr.bf16.mxu0 %v1581
    %1821 = vmatpush1.bf16.msra.mxu0 %v1580
    %1822 = vmatprep.subr.bf16.mxu0 %v1585
    %1823 = vmatpush1.bf16.msra.mxu0 %v1584
    %1824 = vmatprep.subr.bf16.mxu0 %v1589
    %1825 = vmatpush1.bf16.msra.mxu0 %v1588
    %1826 = vmatprep.subr.bf16.mxu0 %v1593
    %1827 = vmatpush1.bf16.msra.mxu0 %v1592
    %1828 = vmatprep.subr.bf16.mxu0 %v1597
    %1829 = vmatpush1.bf16.msra.mxu0 %v1596
    %1830 = vmatprep.subr.bf16.mxu0 %v1601
    %1831 = vmatpush1.bf16.msra.mxu0 %v1600
    %1832 = vmatprep.subr.bf16.mxu0 %v1605
    %1833 = vmatpush1.bf16.msra.mxu0 %v1604
    %1834 = vmatprep.subr.bf16.mxu0 %v1609
    %1835 = vmatpush1.bf16.msra.mxu0 %v1608
    %1836 = vmatprep.mubr.bf16.mxu0 %v1029
    %1837 = vmatmul.mubr.bf16.gmra.mrb[0].mxu0 %v1028
    %v1838 = vpop.f32.mrb[0].mxu0
    %v1839 = vadd.f32 %v1160, %v1838
    %v1840 = vpop.f32.mrb[0].mxu0
    %v1841 = vadd.f32 %v1161, %v1840
    %v1842 = vpop.f32.mrb[0].mxu0
    %v1843 = vpop.f32.mrb[0].mxu0
    %1844 = vdwg.mxu0
    %1845 = vmatprep.subr.bf16.mxu0 %v1613
    %1846 = vmatpush1.bf16.msra.mxu0 %v1612
    %1847 = vmatprep.subr.bf16.mxu0 %v1617
    %1848 = vmatpush1.bf16.msra.mxu0 %v1616
    %1849 = vmatprep.subr.bf16.mxu0 %v1621
    %1850 = vmatpush1.bf16.msra.mxu0 %v1620
    %1851 = vmatprep.subr.bf16.mxu0 %v1625
    %1852 = vmatpush1.bf16.msra.mxu0 %v1624
    %1853 = vmatprep.subr.bf16.mxu0 %v1629
    %1854 = vmatpush1.bf16.msra.mxu0 %v1628
    %1855 = vmatprep.subr.bf16.mxu0 %v1633
    %1856 = vmatpush1.bf16.msra.mxu0 %v1632
    %1857 = vmatprep.subr.bf16.mxu0 %v1637
    %1858 = vmatpush1.bf16.msra.mxu0 %v1636
    %1859 = vmatprep.subr.bf16.mxu0 %v1641
    %1860 = vmatpush1.bf16.msra.mxu0 %v1640
    %1861 = vmatprep.subr.bf16.mxu0 %v1645
    %1862 = vmatpush1.bf16.msra.mxu0 %v1644
    %1863 = vmatprep.subr.bf16.mxu0 %v1649
    %1864 = vmatpush1.bf16.msra.mxu0 %v1648
    %1865 = vmatprep.subr.bf16.mxu0 %v1653
    %1866 = vmatpush1.bf16.msra.mxu0 %v1652
    %1867 = vmatprep.subr.bf16.mxu0 %v1657
    %1868 = vmatpush1.bf16.msra.mxu0 %v1656
    %1869 = vmatprep.subr.bf16.mxu0 %v1661
    %1870 = vmatpush1.bf16.msra.mxu0 %v1660
    %1871 = vmatprep.subr.bf16.mxu0 %v1665
    %1872 = vmatpush1.bf16.msra.mxu0 %v1664
    %1873 = vmatprep.subr.bf16.mxu0 %v1669
    %1874 = vmatpush1.bf16.msra.mxu0 %v1668
    %1875 = vmatprep.subr.bf16.mxu0 %v1673
    %1876 = vmatpush1.bf16.msra.mxu0 %v1672
    %1877 = vmatprep.mubr.bf16.mxu0 %v1031
    %1878 = vmatmul.mubr.bf16.gmra.mrb[0].mxu0 %v1030
    %v1879 = vpop.f32.mrb[0].mxu0
    %v1880 = vadd.f32 %v1839, %v1879
    %v1881 = vpop.f32.mrb[0].mxu0
    %v1882 = vadd.f32 %v1841, %v1881
    %v1883 = vpop.f32.mrb[0].mxu0
    %v1884 = vpop.f32.mrb[0].mxu0
    %1885 = vdwg.mxu0
    %1886 = vmatprep.subr.bf16.mxu0 %v1551
    %1887 = vmatpush1.bf16.msra.mxu0 %v1550
    %1888 = vmatprep.subr.bf16.mxu0 %v1555
    %1889 = vmatpush1.bf16.msra.mxu0 %v1554
    %1890 = vmatprep.subr.bf16.mxu0 %v1559
    %1891 = vmatpush1.bf16.msra.mxu0 %v1558
    %1892 = vmatprep.subr.bf16.mxu0 %v1563
    %1893 = vmatpush1.bf16.msra.mxu0 %v1562
    %1894 = vmatprep.subr.bf16.mxu0 %v1567
    %1895 = vmatpush1.bf16.msra.mxu0 %v1566
    %1896 = vmatprep.subr.bf16.mxu0 %v1571
    %1897 = vmatpush1.bf16.msra.mxu0 %v1570
    %1898 = vmatprep.subr.bf16.mxu0 %v1575
    %1899 = vmatpush1.bf16.msra.mxu0 %v1574
    %1900 = vmatprep.subr.bf16.mxu0 %v1579
    %1901 = vmatpush1.bf16.msra.mxu0 %v1578
    %1902 = vmatprep.subr.bf16.mxu0 %v1583
    %1903 = vmatpush1.bf16.msra.mxu0 %v1582
    %1904 = vmatprep.subr.bf16.mxu0 %v1587
    %1905 = vmatpush1.bf16.msra.mxu0 %v1586
    %1906 = vmatprep.subr.bf16.mxu0 %v1591
    %1907 = vmatpush1.bf16.msra.mxu0 %v1590
    %1908 = vmatprep.subr.bf16.mxu0 %v1595
    %1909 = vmatpush1.bf16.msra.mxu0 %v1594
    %1910 = vmatprep.subr.bf16.mxu0 %v1599
    %1911 = vmatpush1.bf16.msra.mxu0 %v1598
    %1912 = vmatprep.subr.bf16.mxu0 %v1603
    %1913 = vmatpush1.bf16.msra.mxu0 %v1602
    %1914 = vmatprep.subr.bf16.mxu0 %v1607
    %1915 = vmatpush1.bf16.msra.mxu0 %v1606
    %1916 = vmatprep.subr.bf16.mxu0 %v1611
    %1917 = vmatpush1.bf16.msra.mxu0 %v1610
    %1918 = vmatprep.mubr.bf16.mxu0 %v1029
    %1919 = vmatmul.mubr.bf16.gmra.mrb[0].mxu0 %v1028
    %v1920 = vpop.f32.mrb[0].mxu0
    %v1921 = vadd.f32 %v1162, %v1920
    %v1922 = vpop.f32.mrb[0].mxu0
    %v1923 = vadd.f32 %v1163, %v1922
    %v1924 = vpop.f32.mrb[0].mxu0
    %v1925 = vpop.f32.mrb[0].mxu0
    %1926 = vdwg.mxu0
    %1927 = vmatprep.subr.bf16.mxu0 %v1615
    %1928 = vmatpush1.bf16.msra.mxu0 %v1614
    %1929 = vmatprep.subr.bf16.mxu0 %v1619
    %1930 = vmatpush1.bf16.msra.mxu0 %v1618
    %1931 = vmatprep.subr.bf16.mxu0 %v1623
    %1932 = vmatpush1.bf16.msra.mxu0 %v1622
    %1933 = vmatprep.subr.bf16.mxu0 %v1627
    %1934 = vmatpush1.bf16.msra.mxu0 %v1626
    %1935 = vmatprep.subr.bf16.mxu0 %v1631
    %1936 = vmatpush1.bf16.msra.mxu0 %v1630
    %1937 = vmatprep.subr.bf16.mxu0 %v1635
    %1938 = vmatpush1.bf16.msra.mxu0 %v1634
    %1939 = vmatprep.subr.bf16.mxu0 %v1639
    %1940 = vmatpush1.bf16.msra.mxu0 %v1638
    %1941 = vmatprep.subr.bf16.mxu0 %v1643
    %1942 = vmatpush1.bf16.msra.mxu0 %v1642
    %1943 = vmatprep.subr.bf16.mxu0 %v1647
    %1944 = vmatpush1.bf16.msra.mxu0 %v1646
    %1945 = vmatprep.subr.bf16.mxu0 %v1651
    %1946 = vmatpush1.bf16.msra.mxu0 %v1650
    %1947 = vmatprep.subr.bf16.mxu0 %v1655
    %1948 = vmatpush1.bf16.msra.mxu0 %v1654
    %1949 = vmatprep.subr.bf16.mxu0 %v1659
    %1950 = vmatpush1.bf16.msra.mxu0 %v1658
    %1951 = vmatprep.subr.bf16.mxu0 %v1663
    %1952 = vmatpush1.bf16.msra.mxu0 %v1662
    %1953 = vmatprep.subr.bf16.mxu0 %v1667
    %1954 = vmatpush1.bf16.msra.mxu0 %v1666
    %1955 = vmatprep.subr.bf16.mxu0 %v1671
    %1956 = vmatpush1.bf16.msra.mxu0 %v1670
    %1957 = vmatprep.subr.bf16.mxu0 %v1675
    %1958 = vmatpush1.bf16.msra.mxu0 %v1674
    %1959 = vmatprep.mubr.bf16.mxu0 %v1031
    %1960 = vmatmul.mubr.bf16.gmra.mrb[0].mxu0 %v1030
    %v1961 = vpop.f32.mrb[0].mxu0
    %v1962 = vadd.f32 %v1921, %v1961
    %v1963 = vpop.f32.mrb[0].mxu0
    %v1964 = vadd.f32 %v1923, %v1963
    %v1965 = vpop.f32.mrb[0].mxu0
    %v1966 = vpop.f32.mrb[0].mxu0
    %1967 = vdwg.mxu0
    %v1968 = vmax.f32 %v1880, 0.0
    %v1969 = vmax.f32 %v1882, 0.0
    %v1970 = vmax.f32 %v1962, 0.0
    %v1971 = vmax.f32 %v1964, 0.0
    %v1972 = vpack.c.bf16 %v1968, %v1968
    %v1973 = vpack.c.bf16 %v1969, %v1969
    %v1974 = vpack.c.bf16 %v1970, %v1970
    %v1975 = vpack.c.bf16 %v1971, %v1971
    %v1976 = vld [vmem:[#allocation4] sm:$0xff]
    %v1977 = vld [vmem:[#allocation4 + $0x8] sm:$0xff]
    %v1978 = vld [vmem:[#allocation4 + $0x10] sm:$0xff]
    %v1979 = vld [vmem:[#allocation4 + $0x18] sm:$0xff]
    %v1980 = vld [vmem:[#allocation4 + $0x20] sm:$0xff]
    %v1981 = vld [vmem:[#allocation4 + $0x28] sm:$0xff]
    %v1982 = vld [vmem:[#allocation4 + $0x30] sm:$0xff]
    %v1983 = vld [vmem:[#allocation4 + $0x38] sm:$0xff]
    %v1984 = vld [vmem:[#allocation4 + $0x40] sm:$0xff]
    %v1985 = vld [vmem:[#allocation4 + $0x48] sm:$0xff]
    %v1986 = vld [vmem:[#allocation4 + $0x50] sm:$0xff]
    %v1987 = vld [vmem:[#allocation4 + $0x58] sm:$0xff]
    %v1988 = vld [vmem:[#allocation4 + $0x60] sm:$0xff]
    %v1989 = vld [vmem:[#allocation4 + $0x68] sm:$0xff]
    %v1990 = vld [vmem:[#allocation4 + $0x70] sm:$0xff]
    %v1991 = vld [vmem:[#allocation4 + $0x78] sm:$0xff]
    %v1992 = vld [vmem:[#allocation4 + $0x80] sm:$0xff]
    %v1993 = vld [vmem:[#allocation4 + $0x88] sm:$0xff]
    %v1994 = vld [vmem:[#allocation4 + $0x90] sm:$0xff]
    %v1995 = vld [vmem:[#allocation4 + $0x98] sm:$0xff]
    %v1996 = vld [vmem:[#allocation4 + $0xa0] sm:$0xff]
    %v1997 = vld [vmem:[#allocation4 + $0xa8] sm:$0xff]
    %v1998 = vld [vmem:[#allocation4 + $0xb0] sm:$0xff]
    %v1999 = vld [vmem:[#allocation4 + $0xb8] sm:$0xff]
    %v2000 = vld [vmem:[#allocation4 + $0xc0] sm:$0xff]
    %v2001 = vld [vmem:[#allocation4 + $0xc8] sm:$0xff]
    %v2002 = vld [vmem:[#allocation4 + $0xd0] sm:$0xff]
    %v2003 = vld [vmem:[#allocation4 + $0xd8] sm:$0xff]
    %v2004 = vld [vmem:[#allocation4 + $0xe0] sm:$0xff]
    %v2005 = vld [vmem:[#allocation4 + $0xe8] sm:$0xff]
    %v2006 = vld [vmem:[#allocation4 + $0xf0] sm:$0xff]
    %v2007 = vld [vmem:[#allocation4 + $0xf8] sm:$0xff]
    %v2008 = vld [vmem:[#allocation4 + $0x100] sm:$0xff]
    %v2009 = vld [vmem:[#allocation4 + $0x108] sm:$0xff]
    %v2010 = vld [vmem:[#allocation4 + $0x110] sm:$0xff]
    %v2011 = vld [vmem:[#allocation4 + $0x118] sm:$0xff]
    %v2012 = vld [vmem:[#allocation4 + $0x120] sm:$0xff]
    %v2013 = vld [vmem:[#allocation4 + $0x128] sm:$0xff]
    %v2014 = vld [vmem:[#allocation4 + $0x130] sm:$0xff]
    %v2015 = vld [vmem:[#allocation4 + $0x138] sm:$0xff]
    %v2016 = vld [vmem:[#allocation4 + $0x140] sm:$0xff]
    %v2017 = vld [vmem:[#allocation4 + $0x148] sm:$0xff]
    %v2018 = vld [vmem:[#allocation4 + $0x150] sm:$0xff]
    %v2019 = vld [vmem:[#allocation4 + $0x158] sm:$0xff]
    %v2020 = vld [vmem:[#allocation4 + $0x160] sm:$0xff]
    %v2021 = vld [vmem:[#allocation4 + $0x168] sm:$0xff]
    %v2022 = vld [vmem:[#allocation4 + $0x170] sm:$0xff]
    %v2023 = vld [vmem:[#allocation4 + $0x178] sm:$0xff]
    %v2024 = vld [vmem:[#allocation4 + $0x180] sm:$0xff]
    %v2025 = vld [vmem:[#allocation4 + $0x188] sm:$0xff]
    %v2026 = vld [vmem:[#allocation4 + $0x190] sm:$0xff]
    %v2027 = vld [vmem:[#allocation4 + $0x198] sm:$0xff]
    %v2028 = vld [vmem:[#allocation4 + $0x1a0] sm:$0xff]
    %v2029 = vld [vmem:[#allocation4 + $0x1a8] sm:$0xff]
    %v2030 = vld [vmem:[#allocation4 + $0x1b0] sm:$0xff]
    %v2031 = vld [vmem:[#allocation4 + $0x1b8] sm:$0xff]
    %v2032 = vld [vmem:[#allocation4 + $0x1c0] sm:$0xff]
    %v2033 = vld [vmem:[#allocation4 + $0x1c8] sm:$0xff]
    %v2034 = vld [vmem:[#allocation4 + $0x1d0] sm:$0xff]
    %v2035 = vld [vmem:[#allocation4 + $0x1d8] sm:$0xff]
    %v2036 = vld [vmem:[#allocation4 + $0x1e0] sm:$0xff]
    %v2037 = vld [vmem:[#allocation4 + $0x1e8] sm:$0xff]
    %v2038 = vld [vmem:[#allocation4 + $0x1f0] sm:$0xff]
    %v2039 = vld [vmem:[#allocation4 + $0x1f8] sm:$0xff]
    %v2040 = vld [vmem:[#allocation4 + $0x200] sm:$0xff]
    %v2041 = vld [vmem:[#allocation4 + $0x208] sm:$0xff]
    %v2042 = vld [vmem:[#allocation4 + $0x210] sm:$0xff]
    %v2043 = vld [vmem:[#allocation4 + $0x218] sm:$0xff]
    %v2044 = vld [vmem:[#allocation4 + $0x220] sm:$0xff]
    %v2045 = vld [vmem:[#allocation4 + $0x228] sm:$0xff]
    %v2046 = vld [vmem:[#allocation4 + $0x230] sm:$0xff]
    %v2047 = vld [vmem:[#allocation4 + $0x238] sm:$0xff]
    %v2048 = vld [vmem:[#allocation4 + $0x240] sm:$0xff]
    %v2049 = vld [vmem:[#allocation4 + $0x248] sm:$0xff]
    %v2050 = vld [vmem:[#allocation4 + $0x250] sm:$0xff]
    %v2051 = vld [vmem:[#allocation4 + $0x258] sm:$0xff]
    %v2052 = vld [vmem:[#allocation4 + $0x260] sm:$0xff]
    %v2053 = vld [vmem:[#allocation4 + $0x268] sm:$0xff]
    %v2054 = vld [vmem:[#allocation4 + $0x270] sm:$0xff]
    %v2055 = vld [vmem:[#allocation4 + $0x278] sm:$0xff]
    %v2056 = vld [vmem:[#allocation4 + $0x280] sm:$0xff]
    %v2057 = vld [vmem:[#allocation4 + $0x288] sm:$0xff]
    %v2058 = vld [vmem:[#allocation4 + $0x290] sm:$0xff]
    %v2059 = vld [vmem:[#allocation4 + $0x298] sm:$0xff]
    %v2060 = vld [vmem:[#allocation4 + $0x2a0] sm:$0xff]
    %v2061 = vld [vmem:[#allocation4 + $0x2a8] sm:$0xff]
    %v2062 = vld [vmem:[#allocation4 + $0x2b0] sm:$0xff]
    %v2063 = vld [vmem:[#allocation4 + $0x2b8] sm:$0xff]
    %v2064 = vld [vmem:[#allocation4 + $0x2c0] sm:$0xff]
    %v2065 = vld [vmem:[#allocation4 + $0x2c8] sm:$0xff]
    %v2066 = vld [vmem:[#allocation4 + $0x2d0] sm:$0xff]
    %v2067 = vld [vmem:[#allocation4 + $0x2d8] sm:$0xff]
    %v2068 = vld [vmem:[#allocation4 + $0x2e0] sm:$0xff]
    %v2069 = vld [vmem:[#allocation4 + $0x2e8] sm:$0xff]
    %v2070 = vld [vmem:[#allocation4 + $0x2f0] sm:$0xff]
    %v2071 = vld [vmem:[#allocation4 + $0x2f8] sm:$0xff]
    %v2072 = vld [vmem:[#allocation4 + $0x300] sm:$0xff]
    %v2073 = vld [vmem:[#allocation4 + $0x308] sm:$0xff]
    %v2074 = vld [vmem:[#allocation4 + $0x310] sm:$0xff]
    %v2075 = vld [vmem:[#allocation4 + $0x318] sm:$0xff]
    %v2076 = vld [vmem:[#allocation4 + $0x320] sm:$0xff]
    %v2077 = vld [vmem:[#allocation4 + $0x328] sm:$0xff]
    %v2078 = vld [vmem:[#allocation4 + $0x330] sm:$0xff]
    %v2079 = vld [vmem:[#allocation4 + $0x338] sm:$0xff]
    %v2080 = vld [vmem:[#allocation4 + $0x340] sm:$0xff]
    %v2081 = vld [vmem:[#allocation4 + $0x348] sm:$0xff]
    %v2082 = vld [vmem:[#allocation4 + $0x350] sm:$0xff]
    %v2083 = vld [vmem:[#allocation4 + $0x358] sm:$0xff]
    %v2084 = vld [vmem:[#allocation4 + $0x360] sm:$0xff]
    %v2085 = vld [vmem:[#allocation4 + $0x368] sm:$0xff]
    %v2086 = vld [vmem:[#allocation4 + $0x370] sm:$0xff]
    %v2087 = vld [vmem:[#allocation4 + $0x378] sm:$0xff]
    %v2088 = vld [vmem:[#allocation4 + $0x380] sm:$0xff]
    %v2089 = vld [vmem:[#allocation4 + $0x388] sm:$0xff]
    %v2090 = vld [vmem:[#allocation4 + $0x390] sm:$0xff]
    %v2091 = vld [vmem:[#allocation4 + $0x398] sm:$0xff]
    %v2092 = vld [vmem:[#allocation4 + $0x3a0] sm:$0xff]
    %v2093 = vld [vmem:[#allocation4 + $0x3a8] sm:$0xff]
    %v2094 = vld [vmem:[#allocation4 + $0x3b0] sm:$0xff]
    %v2095 = vld [vmem:[#allocation4 + $0x3b8] sm:$0xff]
    %v2096 = vld [vmem:[#allocation4 + $0x3c0] sm:$0xff]
    %v2097 = vld [vmem:[#allocation4 + $0x3c8] sm:$0xff]
    %v2098 = vld [vmem:[#allocation4 + $0x3d0] sm:$0xff]
    %v2099 = vld [vmem:[#allocation4 + $0x3d8] sm:$0xff]
    %v2100 = vld [vmem:[#allocation4 + $0x3e0] sm:$0xff]
    %v2101 = vld [vmem:[#allocation4 + $0x3e8] sm:$0xff]
    %v2102 = vld [vmem:[#allocation4 + $0x3f0] sm:$0xff]
    %v2103 = vld [vmem:[#allocation4 + $0x3f8] sm:$0xff]
    %v2104 = vld [vmem:[%s6] sm:$0xf]
    %v2106 = vlaneseq
    %v2107 = vshrl.u32 %v2106, 7
    %v2108 = vsub.s32 0, %v2107
    %v2109 = vrot.slane %v2104, %v2108
    %v2110 = vlaneseq
    %v2111 = vshrl.u32 %v2110, 7
    %v2112 = vsub.s32 1, %v2111
    %v2113 = vrot.slane %v2104, %v2112
    %v2114 = vlaneseq
    %v2115 = vshrl.u32 %v2114, 7
    %v2116 = vsub.s32 2, %v2115
    %v2117 = vrot.slane %v2104, %v2116
    %v2118 = vlaneseq
    %v2119 = vshrl.u32 %v2118, 7
    %v2120 = vsub.s32 3, %v2119
    %v2121 = vrot.slane %v2104, %v2120
    %v2254 = vunpack.c.l.b16 %v1976
    %v2255 = vunpack.c.h.b16 %v1976
    %v2256 = vunpack.c.l.b16 %v1977
    %v2257 = vunpack.c.h.b16 %v1977
    %v2258 = vunpack.c.l.b16 %v1978
    %v2259 = vunpack.c.h.b16 %v1978
    %v2260 = vunpack.c.l.b16 %v1979
    %v2261 = vunpack.c.h.b16 %v1979
    %v2262 = vunpack.c.l.b16 %v1980
    %v2263 = vunpack.c.h.b16 %v1980
    %v2264 = vunpack.c.l.b16 %v1981
    %v2265 = vunpack.c.h.b16 %v1981
    %v2266 = vunpack.c.l.b16 %v1982
    %v2267 = vunpack.c.h.b16 %v1982
    %v2268 = vunpack.c.l.b16 %v1983
    %v2269 = vunpack.c.h.b16 %v1983
    %v2270 = vunpack.c.l.b16 %v1984
    %v2271 = vunpack.c.h.b16 %v1984
    %v2272 = vunpack.c.l.b16 %v1985
    %v2273 = vunpack.c.h.b16 %v1985
    %v2274 = vunpack.c.l.b16 %v1986
    %v2275 = vunpack.c.h.b16 %v1986
    %v2276 = vunpack.c.l.b16 %v1987
    %v2277 = vunpack.c.h.b16 %v1987
    %v2278 = vunpack.c.l.b16 %v1988
    %v2279 = vunpack.c.h.b16 %v1988
    %v2280 = vunpack.c.l.b16 %v1989
    %v2281 = vunpack.c.h.b16 %v1989
    %v2282 = vunpack.c.l.b16 %v1990
    %v2283 = vunpack.c.h.b16 %v1990
    %v2284 = vunpack.c.l.b16 %v1991
    %v2285 = vunpack.c.h.b16 %v1991
    %v2286 = vunpack.c.l.b16 %v1992
    %v2287 = vunpack.c.h.b16 %v1992
    %v2288 = vunpack.c.l.b16 %v1993
    %v2289 = vunpack.c.h.b16 %v1993
    %v2290 = vunpack.c.l.b16 %v1994
    %v2291 = vunpack.c.h.b16 %v1994
    %v2292 = vunpack.c.l.b16 %v1995
    %v2293 = vunpack.c.h.b16 %v1995
    %v2294 = vunpack.c.l.b16 %v1996
    %v2295 = vunpack.c.h.b16 %v1996
    %v2296 = vunpack.c.l.b16 %v1997
    %v2297 = vunpack.c.h.b16 %v1997
    %v2298 = vunpack.c.l.b16 %v1998
    %v2299 = vunpack.c.h.b16 %v1998
    %v2300 = vunpack.c.l.b16 %v1999
    %v2301 = vunpack.c.h.b16 %v1999
    %v2302 = vunpack.c.l.b16 %v2000
    %v2303 = vunpack.c.h.b16 %v2000
    %v2304 = vunpack.c.l.b16 %v2001
    %v2305 = vunpack.c.h.b16 %v2001
    %v2306 = vunpack.c.l.b16 %v2002
    %v2307 = vunpack.c.h.b16 %v2002
    %v2308 = vunpack.c.l.b16 %v2003
    %v2309 = vunpack.c.h.b16 %v2003
    %v2310 = vunpack.c.l.b16 %v2004
    %v2311 = vunpack.c.h.b16 %v2004
    %v2312 = vunpack.c.l.b16 %v2005
    %v2313 = vunpack.c.h.b16 %v2005
    %v2314 = vunpack.c.l.b16 %v2006
    %v2315 = vunpack.c.h.b16 %v2006
    %v2316 = vunpack.c.l.b16 %v2007
    %v2317 = vunpack.c.h.b16 %v2007
    %v2318 = vunpack.c.l.b16 %v2008
    %v2319 = vunpack.c.h.b16 %v2008
    %v2320 = vunpack.c.l.b16 %v2009
    %v2321 = vunpack.c.h.b16 %v2009
    %v2322 = vunpack.c.l.b16 %v2010
    %v2323 = vunpack.c.h.b16 %v2010
    %v2324 = vunpack.c.l.b16 %v2011
    %v2325 = vunpack.c.h.b16 %v2011
    %v2326 = vunpack.c.l.b16 %v2012
    %v2327 = vunpack.c.h.b16 %v2012
    %v2328 = vunpack.c.l.b16 %v2013
    %v2329 = vunpack.c.h.b16 %v2013
    %v2330 = vunpack.c.l.b16 %v2014
    %v2331 = vunpack.c.h.b16 %v2014
    %v2332 = vunpack.c.l.b16 %v2015
    %v2333 = vunpack.c.h.b16 %v2015
    %v2334 = vunpack.c.l.b16 %v2016
    %v2335 = vunpack.c.h.b16 %v2016
    %v2336 = vunpack.c.l.b16 %v2017
    %v2337 = vunpack.c.h.b16 %v2017
    %v2338 = vunpack.c.l.b16 %v2018
    %v2339 = vunpack.c.h.b16 %v2018
    %v2340 = vunpack.c.l.b16 %v2019
    %v2341 = vunpack.c.h.b16 %v2019
    %v2342 = vunpack.c.l.b16 %v2020
    %v2343 = vunpack.c.h.b16 %v2020
    %v2344 = vunpack.c.l.b16 %v2021
    %v2345 = vunpack.c.h.b16 %v2021
    %v2346 = vunpack.c.l.b16 %v2022
    %v2347 = vunpack.c.h.b16 %v2022
    %v2348 = vunpack.c.l.b16 %v2023
    %v2349 = vunpack.c.h.b16 %v2023
    %v2350 = vunpack.c.l.b16 %v2024
    %v2351 = vunpack.c.h.b16 %v2024
    %v2352 = vunpack.c.l.b16 %v2025
    %v2353 = vunpack.c.h.b16 %v2025
    %v2354 = vunpack.c.l.b16 %v2026
    %v2355 = vunpack.c.h.b16 %v2026
    %v2356 = vunpack.c.l.b16 %v2027
    %v2357 = vunpack.c.h.b16 %v2027
    %v2358 = vunpack.c.l.b16 %v2028
    %v2359 = vunpack.c.h.b16 %v2028
    %v2360 = vunpack.c.l.b16 %v2029
    %v2361 = vunpack.c.h.b16 %v2029
    %v2362 = vunpack.c.l.b16 %v2030
    %v2363 = vunpack.c.h.b16 %v2030
    %v2364 = vunpack.c.l.b16 %v2031
    %v2365 = vunpack.c.h.b16 %v2031
    %v2366 = vunpack.c.l.b16 %v2032
    %v2367 = vunpack.c.h.b16 %v2032
    %v2368 = vunpack.c.l.b16 %v2033
    %v2369 = vunpack.c.h.b16 %v2033
    %v2370 = vunpack.c.l.b16 %v2034
    %v2371 = vunpack.c.h.b16 %v2034
    %v2372 = vunpack.c.l.b16 %v2035
    %v2373 = vunpack.c.h.b16 %v2035
    %v2374 = vunpack.c.l.b16 %v2036
    %v2375 = vunpack.c.h.b16 %v2036
    %v2376 = vunpack.c.l.b16 %v2037
    %v2377 = vunpack.c.h.b16 %v2037
    %v2378 = vunpack.c.l.b16 %v2038
    %v2379 = vunpack.c.h.b16 %v2038
    %v2380 = vunpack.c.l.b16 %v2039
    %v2381 = vunpack.c.h.b16 %v2039
    %v2382 = vunpack.c.l.b16 %v2040
    %v2383 = vunpack.c.h.b16 %v2040
    %v2384 = vunpack.c.l.b16 %v2041
    %v2385 = vunpack.c.h.b16 %v2041
    %v2386 = vunpack.c.l.b16 %v2042
    %v2387 = vunpack.c.h.b16 %v2042
    %v2388 = vunpack.c.l.b16 %v2043
    %v2389 = vunpack.c.h.b16 %v2043
    %v2390 = vunpack.c.l.b16 %v2044
    %v2391 = vunpack.c.h.b16 %v2044
    %v2392 = vunpack.c.l.b16 %v2045
    %v2393 = vunpack.c.h.b16 %v2045
    %v2394 = vunpack.c.l.b16 %v2046
    %v2395 = vunpack.c.h.b16 %v2046
    %v2396 = vunpack.c.l.b16 %v2047
    %v2397 = vunpack.c.h.b16 %v2047
    %v2398 = vunpack.c.l.b16 %v2048
    %v2399 = vunpack.c.h.b16 %v2048
    %v2400 = vunpack.c.l.b16 %v2049
    %v2401 = vunpack.c.h.b16 %v2049
    %v2402 = vunpack.c.l.b16 %v2050
    %v2403 = vunpack.c.h.b16 %v2050
    %v2404 = vunpack.c.l.b16 %v2051
    %v2405 = vunpack.c.h.b16 %v2051
    %v2406 = vunpack.c.l.b16 %v2052
    %v2407 = vunpack.c.h.b16 %v2052
    %v2408 = vunpack.c.l.b16 %v2053
    %v2409 = vunpack.c.h.b16 %v2053
    %v2410 = vunpack.c.l.b16 %v2054
    %v2411 = vunpack.c.h.b16 %v2054
    %v2412 = vunpack.c.l.b16 %v2055
    %v2413 = vunpack.c.h.b16 %v2055
    %v2414 = vunpack.c.l.b16 %v2056
    %v2415 = vunpack.c.h.b16 %v2056
    %v2416 = vunpack.c.l.b16 %v2057
    %v2417 = vunpack.c.h.b16 %v2057
    %v2418 = vunpack.c.l.b16 %v2058
    %v2419 = vunpack.c.h.b16 %v2058
    %v2420 = vunpack.c.l.b16 %v2059
    %v2421 = vunpack.c.h.b16 %v2059
    %v2422 = vunpack.c.l.b16 %v2060
    %v2423 = vunpack.c.h.b16 %v2060
    %v2424 = vunpack.c.l.b16 %v2061
    %v2425 = vunpack.c.h.b16 %v2061
    %v2426 = vunpack.c.l.b16 %v2062
    %v2427 = vunpack.c.h.b16 %v2062
    %v2428 = vunpack.c.l.b16 %v2063
    %v2429 = vunpack.c.h.b16 %v2063
    %v2430 = vunpack.c.l.b16 %v2064
    %v2431 = vunpack.c.h.b16 %v2064
    %v2432 = vunpack.c.l.b16 %v2065
    %v2433 = vunpack.c.h.b16 %v2065
    %v2434 = vunpack.c.l.b16 %v2066
    %v2435 = vunpack.c.h.b16 %v2066
    %v2436 = vunpack.c.l.b16 %v2067
    %v2437 = vunpack.c.h.b16 %v2067
    %v2438 = vunpack.c.l.b16 %v2068
    %v2439 = vunpack.c.h.b16 %v2068
    %v2440 = vunpack.c.l.b16 %v2069
    %v2441 = vunpack.c.h.b16 %v2069
    %v2442 = vunpack.c.l.b16 %v2070
    %v2443 = vunpack.c.h.b16 %v2070
    %v2444 = vunpack.c.l.b16 %v2071
    %v2445 = vunpack.c.h.b16 %v2071
    %v2446 = vunpack.c.l.b16 %v2072
    %v2447 = vunpack.c.h.b16 %v2072
    %v2448 = vunpack.c.l.b16 %v2073
    %v2449 = vunpack.c.h.b16 %v2073
    %v2450 = vunpack.c.l.b16 %v2074
    %v2451 = vunpack.c.h.b16 %v2074
    %v2452 = vunpack.c.l.b16 %v2075
    %v2453 = vunpack.c.h.b16 %v2075
    %v2454 = vunpack.c.l.b16 %v2076
    %v2455 = vunpack.c.h.b16 %v2076
    %v2456 = vunpack.c.l.b16 %v2077
    %v2457 = vunpack.c.h.b16 %v2077
    %v2458 = vunpack.c.l.b16 %v2078
    %v2459 = vunpack.c.h.b16 %v2078
    %v2460 = vunpack.c.l.b16 %v2079
    %v2461 = vunpack.c.h.b16 %v2079
    %v2462 = vunpack.c.l.b16 %v2080
    %v2463 = vunpack.c.h.b16 %v2080
    %v2464 = vunpack.c.l.b16 %v2081
    %v2465 = vunpack.c.h.b16 %v2081
    %v2466 = vunpack.c.l.b16 %v2082
    %v2467 = vunpack.c.h.b16 %v2082
    %v2468 = vunpack.c.l.b16 %v2083
    %v2469 = vunpack.c.h.b16 %v2083
    %v2470 = vunpack.c.l.b16 %v2084
    %v2471 = vunpack.c.h.b16 %v2084
    %v2472 = vunpack.c.l.b16 %v2085
    %v2473 = vunpack.c.h.b16 %v2085
    %v2474 = vunpack.c.l.b16 %v2086
    %v2475 = vunpack.c.h.b16 %v2086
    %v2476 = vunpack.c.l.b16 %v2087
    %v2477 = vunpack.c.h.b16 %v2087
    %v2478 = vunpack.c.l.b16 %v2088
    %v2479 = vunpack.c.h.b16 %v2088
    %v2480 = vunpack.c.l.b16 %v2089
    %v2481 = vunpack.c.h.b16 %v2089
    %v2482 = vunpack.c.l.b16 %v2090
    %v2483 = vunpack.c.h.b16 %v2090
    %v2484 = vunpack.c.l.b16 %v2091
    %v2485 = vunpack.c.h.b16 %v2091
    %v2486 = vunpack.c.l.b16 %v2092
    %v2487 = vunpack.c.h.b16 %v2092
    %v2488 = vunpack.c.l.b16 %v2093
    %v2489 = vunpack.c.h.b16 %v2093
    %v2490 = vunpack.c.l.b16 %v2094
    %v2491 = vunpack.c.h.b16 %v2094
    %v2492 = vunpack.c.l.b16 %v2095
    %v2493 = vunpack.c.h.b16 %v2095
    %v2494 = vunpack.c.l.b16 %v2096
    %v2495 = vunpack.c.h.b16 %v2096
    %v2496 = vunpack.c.l.b16 %v2097
    %v2497 = vunpack.c.h.b16 %v2097
    %v2498 = vunpack.c.l.b16 %v2098
    %v2499 = vunpack.c.h.b16 %v2098
    %v2500 = vunpack.c.l.b16 %v2099
    %v2501 = vunpack.c.h.b16 %v2099
    %v2502 = vunpack.c.l.b16 %v2100
    %v2503 = vunpack.c.h.b16 %v2100
    %v2504 = vunpack.c.l.b16 %v2101
    %v2505 = vunpack.c.h.b16 %v2101
    %v2506 = vunpack.c.l.b16 %v2102
    %v2507 = vunpack.c.h.b16 %v2102
    %v2508 = vunpack.c.l.b16 %v2103
    %v2509 = vunpack.c.h.b16 %v2103
    %v2510 = vpack.c.b16 %v2258, %v2254
    %v2511 = vpack.c.b16 %v2259, %v2255
    %v2512 = vpack.c.b16 %v2260, %v2256
    %v2513 = vpack.c.b16 %v2261, %v2257
    %v2514 = vpack.c.b16 %v2266, %v2262
    %v2515 = vpack.c.b16 %v2267, %v2263
    %v2516 = vpack.c.b16 %v2268, %v2264
    %v2517 = vpack.c.b16 %v2269, %v2265
    %v2518 = vpack.c.b16 %v2274, %v2270
    %v2519 = vpack.c.b16 %v2275, %v2271
    %v2520 = vpack.c.b16 %v2276, %v2272
    %v2521 = vpack.c.b16 %v2277, %v2273
    %v2522 = vpack.c.b16 %v2282, %v2278
    %v2523 = vpack.c.b16 %v2283, %v2279
    %v2524 = vpack.c.b16 %v2284, %v2280
    %v2525 = vpack.c.b16 %v2285, %v2281
    %v2526 = vpack.c.b16 %v2290, %v2286
    %v2527 = vpack.c.b16 %v2291, %v2287
    %v2528 = vpack.c.b16 %v2292, %v2288
    %v2529 = vpack.c.b16 %v2293, %v2289
    %v2530 = vpack.c.b16 %v2298, %v2294
    %v2531 = vpack.c.b16 %v2299, %v2295
    %v2532 = vpack.c.b16 %v2300, %v2296
    %v2533 = vpack.c.b16 %v2301, %v2297
    %v2534 = vpack.c.b16 %v2306, %v2302
    %v2535 = vpack.c.b16 %v2307, %v2303
    %v2536 = vpack.c.b16 %v2308, %v2304
    %v2537 = vpack.c.b16 %v2309, %v2305
    %v2538 = vpack.c.b16 %v2314, %v2310
    %v2539 = vpack.c.b16 %v2315, %v2311
    %v2540 = vpack.c.b16 %v2316, %v2312
    %v2541 = vpack.c.b16 %v2317, %v2313
    %v2542 = vpack.c.b16 %v2322, %v2318
    %v2543 = vpack.c.b16 %v2323, %v2319
    %v2544 = vpack.c.b16 %v2324, %v2320
    %v2545 = vpack.c.b16 %v2325, %v2321
    %v2546 = vpack.c.b16 %v2330, %v2326
    %v2547 = vpack.c.b16 %v2331, %v2327
    %v2548 = vpack.c.b16 %v2332, %v2328
    %v2549 = vpack.c.b16 %v2333, %v2329
    %v2550 = vpack.c.b16 %v2338, %v2334
    %v2551 = vpack.c.b16 %v2339, %v2335
    %v2552 = vpack.c.b16 %v2340, %v2336
    %v2553 = vpack.c.b16 %v2341, %v2337
    %v2554 = vpack.c.b16 %v2346, %v2342
    %v2555 = vpack.c.b16 %v2347, %v2343
    %v2556 = vpack.c.b16 %v2348, %v2344
    %v2557 = vpack.c.b16 %v2349, %v2345
    %v2558 = vpack.c.b16 %v2354, %v2350
    %v2559 = vpack.c.b16 %v2355, %v2351
    %v2560 = vpack.c.b16 %v2356, %v2352
    %v2561 = vpack.c.b16 %v2357, %v2353
    %v2562 = vpack.c.b16 %v2362, %v2358
    %v2563 = vpack.c.b16 %v2363, %v2359
    %v2564 = vpack.c.b16 %v2364, %v2360
    %v2565 = vpack.c.b16 %v2365, %v2361
    %v2566 = vpack.c.b16 %v2370, %v2366
    %v2567 = vpack.c.b16 %v2371, %v2367
    %v2568 = vpack.c.b16 %v2372, %v2368
    %v2569 = vpack.c.b16 %v2373, %v2369
    %v2570 = vpack.c.b16 %v2378, %v2374
    %v2571 = vpack.c.b16 %v2379, %v2375
    %v2572 = vpack.c.b16 %v2380, %v2376
    %v2573 = vpack.c.b16 %v2381, %v2377
    %v2574 = vpack.c.b16 %v2386, %v2382
    %v2575 = vpack.c.b16 %v2387, %v2383
    %v2576 = vpack.c.b16 %v2388, %v2384
    %v2577 = vpack.c.b16 %v2389, %v2385
    %v2578 = vpack.c.b16 %v2394, %v2390
    %v2579 = vpack.c.b16 %v2395, %v2391
    %v2580 = vpack.c.b16 %v2396, %v2392
    %v2581 = vpack.c.b16 %v2397, %v2393
    %v2582 = vpack.c.b16 %v2402, %v2398
    %v2583 = vpack.c.b16 %v2403, %v2399
    %v2584 = vpack.c.b16 %v2404, %v2400
    %v2585 = vpack.c.b16 %v2405, %v2401
    %v2586 = vpack.c.b16 %v2410, %v2406
    %v2587 = vpack.c.b16 %v2411, %v2407
    %v2588 = vpack.c.b16 %v2412, %v2408
    %v2589 = vpack.c.b16 %v2413, %v2409
    %v2590 = vpack.c.b16 %v2418, %v2414
    %v2591 = vpack.c.b16 %v2419, %v2415
    %v2592 = vpack.c.b16 %v2420, %v2416
    %v2593 = vpack.c.b16 %v2421, %v2417
    %v2594 = vpack.c.b16 %v2426, %v2422
    %v2595 = vpack.c.b16 %v2427, %v2423
    %v2596 = vpack.c.b16 %v2428, %v2424
    %v2597 = vpack.c.b16 %v2429, %v2425
    %v2598 = vpack.c.b16 %v2434, %v2430
    %v2599 = vpack.c.b16 %v2435, %v2431
    %v2600 = vpack.c.b16 %v2436, %v2432
    %v2601 = vpack.c.b16 %v2437, %v2433
    %v2602 = vpack.c.b16 %v2442, %v2438
    %v2603 = vpack.c.b16 %v2443, %v2439
    %v2604 = vpack.c.b16 %v2444, %v2440
    %v2605 = vpack.c.b16 %v2445, %v2441
    %v2606 = vpack.c.b16 %v2450, %v2446
    %v2607 = vpack.c.b16 %v2451, %v2447
    %v2608 = vpack.c.b16 %v2452, %v2448
    %v2609 = vpack.c.b16 %v2453, %v2449
    %v2610 = vpack.c.b16 %v2458, %v2454
    %v2611 = vpack.c.b16 %v2459, %v2455
    %v2612 = vpack.c.b16 %v2460, %v2456
    %v2613 = vpack.c.b16 %v2461, %v2457
    %v2614 = vpack.c.b16 %v2466, %v2462
    %v2615 = vpack.c.b16 %v2467, %v2463
    %v2616 = vpack.c.b16 %v2468, %v2464
    %v2617 = vpack.c.b16 %v2469, %v2465
    %v2618 = vpack.c.b16 %v2474, %v2470
    %v2619 = vpack.c.b16 %v2475, %v2471
    %v2620 = vpack.c.b16 %v2476, %v2472
    %v2621 = vpack.c.b16 %v2477, %v2473
    %v2622 = vpack.c.b16 %v2482, %v2478
    %v2623 = vpack.c.b16 %v2483, %v2479
    %v2624 = vpack.c.b16 %v2484, %v2480
    %v2625 = vpack.c.b16 %v2485, %v2481
    %v2626 = vpack.c.b16 %v2490, %v2486
    %v2627 = vpack.c.b16 %v2491, %v2487
    %v2628 = vpack.c.b16 %v2492, %v2488
    %v2629 = vpack.c.b16 %v2493, %v2489
    %v2630 = vpack.c.b16 %v2498, %v2494
    %v2631 = vpack.c.b16 %v2499, %v2495
    %v2632 = vpack.c.b16 %v2500, %v2496
    %v2633 = vpack.c.b16 %v2501, %v2497
    %v2634 = vpack.c.b16 %v2506, %v2502
    %v2635 = vpack.c.b16 %v2507, %v2503
    %v2636 = vpack.c.b16 %v2508, %v2504
    %v2637 = vpack.c.b16 %v2509, %v2505
    %2766 = vmatprep.subr.bf16.mxu0 %v2511
    %2767 = vmatpush1.bf16.msra.mxu0 %v2510
    %2768 = vmatprep.subr.bf16.mxu0 %v2515
    %2769 = vmatpush1.bf16.msra.mxu0 %v2514
    %2770 = vmatprep.subr.bf16.mxu0 %v2519
    %2771 = vmatpush1.bf16.msra.mxu0 %v2518
    %2772 = vmatprep.subr.bf16.mxu0 %v2523
    %2773 = vmatpush1.bf16.msra.mxu0 %v2522
    %2774 = vmatprep.subr.bf16.mxu0 %v2527
    %2775 = vmatpush1.bf16.msra.mxu0 %v2526
    %2776 = vmatprep.subr.bf16.mxu0 %v2531
    %2777 = vmatpush1.bf16.msra.mxu0 %v2530
    %2778 = vmatprep.subr.bf16.mxu0 %v2535
    %2779 = vmatpush1.bf16.msra.mxu0 %v2534
    %2780 = vmatprep.subr.bf16.mxu0 %v2539
    %2781 = vmatpush1.bf16.msra.mxu0 %v2538
    %2782 = vmatprep.subr.bf16.mxu0 %v2543
    %2783 = vmatpush1.bf16.msra.mxu0 %v2542
    %2784 = vmatprep.subr.bf16.mxu0 %v2547
    %2785 = vmatpush1.bf16.msra.mxu0 %v2546
    %2786 = vmatprep.subr.bf16.mxu0 %v2551
    %2787 = vmatpush1.bf16.msra.mxu0 %v2550
    %2788 = vmatprep.subr.bf16.mxu0 %v2555
    %2789 = vmatpush1.bf16.msra.mxu0 %v2554
    %2790 = vmatprep.subr.bf16.mxu0 %v2559
    %2791 = vmatpush1.bf16.msra.mxu0 %v2558
    %2792 = vmatprep.subr.bf16.mxu0 %v2563
    %2793 = vmatpush1.bf16.msra.mxu0 %v2562
    %2794 = vmatprep.subr.bf16.mxu0 %v2567
    %2795 = vmatpush1.bf16.msra.mxu0 %v2566
    %2796 = vmatprep.subr.bf16.mxu0 %v2571
    %2797 = vmatpush1.bf16.msra.mxu0 %v2570
    %2798 = vmatprep.mubr.bf16.mxu0 %v1973
    %2799 = vmatmul.mubr.bf16.gmra.mrb[0].mxu0 %v1972
    %v2800 = vpop.f32.mrb[0].mxu0
    %v2801 = vadd.f32 %v2109, %v2800
    %v2802 = vpop.f32.mrb[0].mxu0
    %v2803 = vadd.f32 %v2113, %v2802
    %v2804 = vpop.f32.mrb[0].mxu0
    %v2805 = vpop.f32.mrb[0].mxu0
    %2806 = vdwg.mxu0
    %2807 = vmatprep.subr.bf16.mxu0 %v2575
    %2808 = vmatpush1.bf16.msra.mxu0 %v2574
    %2809 = vmatprep.subr.bf16.mxu0 %v2579
    %2810 = vmatpush1.bf16.msra.mxu0 %v2578
    %2811 = vmatprep.subr.bf16.mxu0 %v2583
    %2812 = vmatpush1.bf16.msra.mxu0 %v2582
    %2813 = vmatprep.subr.bf16.mxu0 %v2587
    %2814 = vmatpush1.bf16.msra.mxu0 %v2586
    %2815 = vmatprep.subr.bf16.mxu0 %v2591
    %2816 = vmatpush1.bf16.msra.mxu0 %v2590
    %2817 = vmatprep.subr.bf16.mxu0 %v2595
    %2818 = vmatpush1.bf16.msra.mxu0 %v2594
    %2819 = vmatprep.subr.bf16.mxu0 %v2599
    %2820 = vmatpush1.bf16.msra.mxu0 %v2598
    %2821 = vmatprep.subr.bf16.mxu0 %v2603
    %2822 = vmatpush1.bf16.msra.mxu0 %v2602
    %2823 = vmatprep.subr.bf16.mxu0 %v2607
    %2824 = vmatpush1.bf16.msra.mxu0 %v2606
    %2825 = vmatprep.subr.bf16.mxu0 %v2611
    %2826 = vmatpush1.bf16.msra.mxu0 %v2610
    %2827 = vmatprep.subr.bf16.mxu0 %v2615
    %2828 = vmatpush1.bf16.msra.mxu0 %v2614
    %2829 = vmatprep.subr.bf16.mxu0 %v2619
    %2830 = vmatpush1.bf16.msra.mxu0 %v2618
    %2831 = vmatprep.subr.bf16.mxu0 %v2623
    %2832 = vmatpush1.bf16.msra.mxu0 %v2622
    %2833 = vmatprep.subr.bf16.mxu0 %v2627
    %2834 = vmatpush1.bf16.msra.mxu0 %v2626
    %2835 = vmatprep.subr.bf16.mxu0 %v2631
    %2836 = vmatpush1.bf16.msra.mxu0 %v2630
    %2837 = vmatprep.subr.bf16.mxu0 %v2635
    %2838 = vmatpush1.bf16.msra.mxu0 %v2634
    %2839 = vmatprep.mubr.bf16.mxu0 %v1975
    %2840 = vmatmul.mubr.bf16.gmra.mrb[0].mxu0 %v1974
    %v2841 = vpop.f32.mrb[0].mxu0
    %v2842 = vadd.f32 %v2801, %v2841
    %v2843 = vpop.f32.mrb[0].mxu0
    %v2844 = vadd.f32 %v2803, %v2843
    %v2845 = vpop.f32.mrb[0].mxu0
    %v2846 = vpop.f32.mrb[0].mxu0
    %2847 = vdwg.mxu0
    %2848 = vmatprep.subr.bf16.mxu0 %v2513
    %2849 = vmatpush1.bf16.msra.mxu0 %v2512
    %2850 = vmatprep.subr.bf16.mxu0 %v2517
    %2851 = vmatpush1.bf16.msra.mxu0 %v2516
    %2852 = vmatprep.subr.bf16.mxu0 %v2521
    %2853 = vmatpush1.bf16.msra.mxu0 %v2520
    %2854 = vmatprep.subr.bf16.mxu0 %v2525
    %2855 = vmatpush1.bf16.msra.mxu0 %v2524
    %2856 = vmatprep.subr.bf16.mxu0 %v2529
    %2857 = vmatpush1.bf16.msra.mxu0 %v2528
    %2858 = vmatprep.subr.bf16.mxu0 %v2533
    %2859 = vmatpush1.bf16.msra.mxu0 %v2532
    %2860 = vmatprep.subr.bf16.mxu0 %v2537
    %2861 = vmatpush1.bf16.msra.mxu0 %v2536
    %2862 = vmatprep.subr.bf16.mxu0 %v2541
    %2863 = vmatpush1.bf16.msra.mxu0 %v2540
    %2864 = vmatprep.subr.bf16.mxu0 %v2545
    %2865 = vmatpush1.bf16.msra.mxu0 %v2544
    %2866 = vmatprep.subr.bf16.mxu0 %v2549
    %2867 = vmatpush1.bf16.msra.mxu0 %v2548
    %2868 = vmatprep.subr.bf16.mxu0 %v2553
    %2869 = vmatpush1.bf16.msra.mxu0 %v2552
    %2870 = vmatprep.subr.bf16.mxu0 %v2557
    %2871 = vmatpush1.bf16.msra.mxu0 %v2556
    %2872 = vmatprep.subr.bf16.mxu0 %v2561
    %2873 = vmatpush1.bf16.msra.mxu0 %v2560
    %2874 = vmatprep.subr.bf16.mxu0 %v2565
    %2875 = vmatpush1.bf16.msra.mxu0 %v2564
    %2876 = vmatprep.subr.bf16.mxu0 %v2569
    %2877 = vmatpush1.bf16.msra.mxu0 %v2568
    %2878 = vmatprep.subr.bf16.mxu0 %v2573
    %2879 = vmatpush1.bf16.msra.mxu0 %v2572
    %2880 = vmatprep.mubr.bf16.mxu0 %v1973
    %2881 = vmatmul.mubr.bf16.gmra.mrb[0].mxu0 %v1972
    %v2882 = vpop.f32.mrb[0].mxu0
    %v2883 = vadd.f32 %v2117, %v2882
    %v2884 = vpop.f32.mrb[0].mxu0
    %v2885 = vadd.f32 %v2121, %v2884
    %v2886 = vpop.f32.mrb[0].mxu0
    %v2887 = vpop.f32.mrb[0].mxu0
    %2888 = vdwg.mxu0
    %2889 = vmatprep.subr.bf16.mxu0 %v2577
    %2890 = vmatpush1.bf16.msra.mxu0 %v2576
    %2891 = vmatprep.subr.bf16.mxu0 %v2581
    %2892 = vmatpush1.bf16.msra.mxu0 %v2580
    %2893 = vmatprep.subr.bf16.mxu0 %v2585
    %2894 = vmatpush1.bf16.msra.mxu0 %v2584
    %2895 = vmatprep.subr.bf16.mxu0 %v2589
    %2896 = vmatpush1.bf16.msra.mxu0 %v2588
    %2897 = vmatprep.subr.bf16.mxu0 %v2593
    %2898 = vmatpush1.bf16.msra.mxu0 %v2592
    %2899 = vmatprep.subr.bf16.mxu0 %v2597
    %2900 = vmatpush1.bf16.msra.mxu0 %v2596
    %2901 = vmatprep.subr.bf16.mxu0 %v2601
    %2902 = vmatpush1.bf16.msra.mxu0 %v2600
    %2903 = vmatprep.subr.bf16.mxu0 %v2605
    %2904 = vmatpush1.bf16.msra.mxu0 %v2604
    %2905 = vmatprep.subr.bf16.mxu0 %v2609
    %2906 = vmatpush1.bf16.msra.mxu0 %v2608
    %2907 = vmatprep.subr.bf16.mxu0 %v2613
    %2908 = vmatpush1.bf16.msra.mxu0 %v2612
    %2909 = vmatprep.subr.bf16.mxu0 %v2617
    %2910 = vmatpush1.bf16.msra.mxu0 %v2616
    %2911 = vmatprep.subr.bf16.mxu0 %v2621
    %2912 = vmatpush1.bf16.msra.mxu0 %v2620
    %2913 = vmatprep.subr.bf16.mxu0 %v2625
    %2914 = vmatpush1.bf16.msra.mxu0 %v2624
    %2915 = vmatprep.subr.bf16.mxu0 %v2629
    %2916 = vmatpush1.bf16.msra.mxu0 %v2628
    %2917 = vmatprep.subr.bf16.mxu0 %v2633
    %2918 = vmatpush1.bf16.msra.mxu0 %v2632
    %2919 = vmatprep.subr.bf16.mxu0 %v2637
    %2920 = vmatpush1.bf16.msra.mxu0 %v2636
    %2921 = vmatprep.mubr.bf16.mxu0 %v1975
    %2922 = vmatmul.mubr.bf16.gmra.mrb[0].mxu0 %v1974
    %v2923 = vpop.f32.mrb[0].mxu0
    %v2924 = vadd.f32 %v2883, %v2923
    %v2925 = vpop.f32.mrb[0].mxu0
    %v2926 = vadd.f32 %v2885, %v2925
    %v2927 = vpop.f32.mrb[0].mxu0
    %v2928 = vpop.f32.mrb[0].mxu0
    %2929 = vdwg.mxu0
    %v2930 = vmax.f32 %v2842, 0.0
    %v2931 = vmax.f32 %v2844, 0.0
    %v2932 = vmax.f32 %v2924, 0.0
    %v2933 = vmax.f32 %v2926, 0.0
    %v2934 = vpack.c.bf16 %v2930, %v2930
    %v2935 = vpack.c.bf16 %v2931, %v2931
    %v2936 = vpack.c.bf16 %v2932, %v2932
    %v2937 = vpack.c.bf16 %v2933, %v2933
    %v2942 = vunpack.c.l.b16 %v2934
    %v2943 = vunpack.c.l.b16 %v2935
    %v2944 = vunpack.c.l.b16 %v2936
    %v2945 = vunpack.c.l.b16 %v2937
    %v2946 = vpack.c.b16 %v2943, %v2942
    %v2947 = vpack.c.b16 %v2945, %v2944
    %2950 = vst [vmem:[%s7] sm:$0xff] %v2946
    %2951 = vst [vmem:[%s7 + $0x8] sm:$0xff] %v2947
    // Predicated region
    $region38: #{encoder_decoder_forward.4} parent=1 // pred_check
      _
    $region39: #{encoder_decoder_forward.4} parent=1 // pred_check_branch
      %2953 = sbr.rel (0) target = $region41
    $region40: #{encoder_decoder_forward.4} parent=1 // pred_region
      _
    $region41: #{encoder_decoder_forward.4} parent=1 // pred_fallthru
      _
    // Predicated region
    $region42: #{encoder_decoder_forward.4} parent=1 // pred_check
      _
    $region43: #{encoder_decoder_forward.4} parent=1 // pred_check_branch
      %2955 = sbr.rel (0) target = $region45
    $region44: #{encoder_decoder_forward.4} parent=1 // pred_region
      _
    $region45: #{encoder_decoder_forward.4} parent=1 // pred_fallthru
      _
    %2956 = vsyncpa [#allocation3], 1
    %2957 = vsyncpa [#allocation5], 1

// kernel: encoder_decoder_forward.3
$region0: #{encoder_decoder_forward.3}
  #allocation0 [shape = 'u32[]', space=smem, size = 0x4, offset = 0x4, fixed_abs, tag = 'smem constant byte address 0x4 - core index']
  #allocation1 [shape = 'u32[144,128]{1,0:T(1,128)}', space=vmem, size = 0x12000, scoped, tag = 'internal scratch']
  #allocation2 [shape = 'f32[8,256]{1,0:T(8,128)}', space=vmem, size = 0x2000, scoped, tag = 'scratch operand']
  %s0 = inlined_call_operand.vmem [shape: bf16[8,12288], index: 0, kind: input, shape index: {}]
  %s1 = inlined_call_operand.hbm [shape: bf16[12288,512], index: 1, kind: input, shape index: {}]
  %s2 = inlined_call_operand.vmem [shape: f32[8,512], index: 2, kind: input, shape index: {}]
  %s3 = inlined_call_operand.vmem [shape: bf16[8,512], index: 3, kind: output, shape index: {}]
  %s4 = sld [smem:[#allocation0]]
  $region57: #{encoder_decoder_forward.3} parent=0
    _
  %s6 = ssub.s32 1, %s4
  %s7 = scalar_select 0, %s6, %s4
  $region1: #{encoder_decoder_forward.3} parent=0
    #allocation3 [shape = 'u8[4194304]{0}', space=vmem, size = 0x400000, scoped, tag = 'input window, operand 1']
    #allocation4 [shape = 's32[2]{0}', space=sflag, size = 0x8, scoped, tag = 'scoped memory for encoder_decoder_forward.3']
    %8 = vsyncpa [#allocation4], 0
    %s9 = scalar_lea.sflag [#allocation4], 1
    %10 = vsyncpa %s9, 0
    loop: start=0, step=1, limit=8
    $region2: #{encoder_decoder_forward.3} parent=1 // loop_pre_header
      _
    $region3: #{encoder_decoder_forward.3} parent=1 // loop_header
      %s12 = sphi 0, %s16
      %p13 = scmp.ge.s32.totalorder %s12, 8
      %s19 = sphi 0, %s31
      %s20 = sphi 0, %s27
      %s21 = sphi 0, %s19
      %s22 = sphi 0, %s20
      %s23 = sphi 0, %s21
      %s24 = sphi 0, %s22
      %s34 = sphi 0, %s36
      %s37 = sphi 0, %s34
      %s38 = sphi 0, %s37
      %s54 = sphi 0, %s38
      %s62 = sphi 0, %s64
      %s65 = sphi 0, %s62
      %s66 = sphi 0, %s65
      %s82 = sphi 0, %s66
      %s88 = sphi 0, %s90
      %s91 = sphi 0, %s88
      %s92 = sphi 0, %s91
      %s108 = sphi 0, %s92
      %s114 = sphi 0, %s116
      %s117 = sphi 0, %s114
      %s118 = sphi 0, %s117
      %s134 = sphi 0, %s118
    $region4: #{encoder_decoder_forward.3} parent=1 // loop_header_branch
      %15 = sbr.rel (%p13) target = $region8
    $region5: #{encoder_decoder_forward.3} parent=1 // loop_body
      %s17 = ssub.s32 %s12, 1
      %s18 = ssub.s32 %s12, 2
      %s25 = sadd.s32 1, %s20
      %p26 = scmp.ge.s32.totalorder %s25, 3
      %s27 = scalar_select %p26, 0, %s25
      %s28 = sadd.s32 1, %s19
      %s29 = scalar_select %p26, %s28, %s19
      %p30 = scmp.ge.s32.totalorder %s29, 2
      %s31 = scalar_select %p30, 0, %s29
      %s32 = ssub.s32 %s20, %s27
      %p33 = scmp.eq.s32.totalorder %s32, 0
      %s35 = sadd.s32 %s34, 1
      %s36 = scalar_select %p33, %s34, %s35
      %p39 = pneg %p33
      %p40 = scmp.eq.s32.totalorder %s12, 5
      %p41 = por %p39, %p40
      %p42 = scmp.ne.s32.totalorder %s34, %s37
      %p43 = scmp.eq.s32.totalorder %s12, 0
      %p44 = por %p42, %p43
      %p45 = scmp.ne.s32.totalorder %s34, %s37
      %p46 = scmp.eq.s32.totalorder %s17, 5
      %p47 = por %p45, %p46
      %p48 = scmp.ne.s32.totalorder %s37, %s38
      %p49 = scmp.eq.s32.totalorder %s17, 0
      %p50 = por %p48, %p49
      %p51 = scmp.ne.s32.totalorder %s37, %s38
      %p52 = scmp.eq.s32.totalorder %s18, 5
      %p53 = por %p51, %p52
      %p55 = scmp.ne.s32.totalorder %s38, %s54
      %p56 = scmp.eq.s32.totalorder %s18, 0
      %p57 = por %p55, %p56
      %s58 = ssub.s32 %s20, %s27
      %s59 = ssub.s32 %s19, %s31
      %s60 = sor.u32 %s58, %s59
      %p61 = scmp.eq.s32.totalorder %s60, 0
      %s63 = sadd.s32 %s62, 1
      %s64 = scalar_select %p61, %s62, %s63
      %p67 = pneg %p61
      %p68 = scmp.eq.s32.totalorder %s12, 5
      %p69 = por %p67, %p68
      %p70 = scmp.ne.s32.totalorder %s62, %s65
      %p71 = scmp.eq.s32.totalorder %s12, 0
      %p72 = por %p70, %p71
      %p73 = scmp.ne.s32.totalorder %s62, %s65
      %p74 = scmp.eq.s32.totalorder %s17, 5
      %p75 = por %p73, %p74
      %p76 = scmp.ne.s32.totalorder %s65, %s66
      %p77 = scmp.eq.s32.totalorder %s17, 0
      %p78 = por %p76, %p77
      %p79 = scmp.ne.s32.totalorder %s65, %s66
      %p80 = scmp.eq.s32.totalorder %s18, 5
      %p81 = por %p79, %p80
      %p83 = scmp.ne.s32.totalorder %s66, %s82
      %p84 = scmp.eq.s32.totalorder %s18, 0
      %p85 = por %p83, %p84
      %s86 = ssub.s32 %s19, %s31
      %p87 = scmp.eq.s32.totalorder %s86, 0
      %s89 = sadd.s32 %s88, 1
      %s90 = scalar_select %p87, %s88, %s89
      %p93 = pneg %p87
      %p94 = scmp.eq.s32.totalorder %s12, 5
      %p95 = por %p93, %p94
      %p96 = scmp.ne.s32.totalorder %s88, %s91
      %p97 = scmp.eq.s32.totalorder %s12, 0
      %p98 = por %p96, %p97
      %p99 = scmp.ne.s32.totalorder %s88, %s91
      %p100 = scmp.eq.s32.totalorder %s17, 5
      %p101 = por %p99, %p100
      %p102 = scmp.ne.s32.totalorder %s91, %s92
      %p103 = scmp.eq.s32.totalorder %s17, 0
      %p104 = por %p102, %p103
      %p105 = scmp.ne.s32.totalorder %s91, %s92
      %p106 = scmp.eq.s32.totalorder %s18, 5
      %p107 = por %p105, %p106
      %p109 = scmp.ne.s32.totalorder %s92, %s108
      %p110 = scmp.eq.s32.totalorder %s18, 0
      %p111 = por %p109, %p110
      %s112 = ssub.s32 %s19, %s31
      %p113 = scmp.eq.s32.totalorder %s112, 0
      %s115 = sadd.s32 %s114, 1
      %s116 = scalar_select %p113, %s114, %s115
      %p119 = pneg %p113
      %p120 = scmp.eq.s32.totalorder %s12, 5
      %p121 = por %p119, %p120
      %p122 = scmp.ne.s32.totalorder %s114, %s117
      %p123 = scmp.eq.s32.totalorder %s12, 0
      %p124 = por %p122, %p123
      %p125 = scmp.ne.s32.totalorder %s114, %s117
      %p126 = scmp.eq.s32.totalorder %s17, 5
      %p127 = por %p125, %p126
      %p128 = scmp.ne.s32.totalorder %s117, %s118
      %p129 = scmp.eq.s32.totalorder %s17, 0
      %p130 = por %p128, %p129
      %p131 = scmp.ne.s32.totalorder %s117, %s118
      %p132 = scmp.eq.s32.totalorder %s18, 5
      %p133 = por %p131, %p132
      %p135 = scmp.ne.s32.totalorder %s118, %s134
      %p136 = scmp.eq.s32.totalorder %s18, 0
      %p137 = por %p135, %p136
      %p138 = scmp.le.s32.totalorder 1, %s12
      %p139 = scmp.lt.s32.totalorder %s12, 7
      %p140 = pnand %p138, %p139
      %p141 = pneg %p140
      // Predicated region
      $region9: #{encoder_decoder_forward.3} parent=5 // pred_check
        _
      $region10: #{encoder_decoder_forward.3} parent=5 // pred_check_branch
        %143 = sbr.rel (%p140) target = $region12
      $region11: #{encoder_decoder_forward.3} parent=5 // pred_region
        %s144 = ssub.s32 %s12, 1
      $region12: #{encoder_decoder_forward.3} parent=5 // pred_fallthru
        _
      %p145 = scmp.lt.s32.totalorder %s12, 6
      // Predicated region
      $region13: #{encoder_decoder_forward.3} parent=5 // pred_check
        %p146 = pneg %p145
      $region14: #{encoder_decoder_forward.3} parent=5 // pred_check_branch
        %148 = sbr.rel (%p146) target = $region16
      $region15: #{encoder_decoder_forward.3} parent=5 // pred_region
        // Predicated region
        $region17: #{encoder_decoder_forward.3} parent=15 // pred_check
          %p149 = pneg %p44
        $region18: #{encoder_decoder_forward.3} parent=15 // pred_check_branch
          %151 = sbr.rel (%p149) target = $region20
        $region19: #{encoder_decoder_forward.3} parent=15 // pred_region
          %s152 = smul.u32 32, %s20
          %p153 = scmp.lt.s32.totalorder %s152, 95
          %s154 = scalar_select %p153, %s152, 95
          %s155 = smul.addr %s154, 4
          %s156 = scalar_lea.vmem %s0, %s155
          %s157 = smul.u32 32, %s20
        $region20: #{encoder_decoder_forward.3} parent=15 // pred_fallthru
          _
        // Predicated region
        $region21: #{encoder_decoder_forward.3} parent=15 // pred_check
          %p158 = pneg %p72
        $region22: #{encoder_decoder_forward.3} parent=15 // pred_check_branch
          %160 = sbr.rel (%p158) target = $region24
        $region23: #{encoder_decoder_forward.3} parent=15 // pred_region
          %s161 = sand.u32 %s62, 1
          %s162 = scalar_lea.sflag [#allocation4], %s161
          %s163 = sand.u32 %s62, 1
          %s164 = smul.addr %s163, 4096
          %s165 = scalar_lea.vmem [#allocation3], %s164
          %s166 = smul.u32 512, %s20
          %s167 = smul.u32 2, %s19
          %s169 = ssub.s32 65536, 65536
          %170 = vsyncadd %s162, %s169
          %s171 = smul.addr %s166, 4
          %s172 = sadd.s32 %s167, %s171
          %s173 = smul.addr %s172, 64
          %s174 = scalar_lea.hbm %s1, %s173
          %s175 = sshll.u32 %s165, 4
          %s176 = int_to_ptr.vmem [resolvable:$true] %s175
          %181 = dma.hbm_to_vmem [thread:$0]  %s174, 65536, %s176, %s162, 256, 128, 8
        $region24: #{encoder_decoder_forward.3} parent=15 // pred_fallthru
          _
        // Predicated region
        $region25: #{encoder_decoder_forward.3} parent=15 // pred_check
          %p182 = pneg %p98
        $region26: #{encoder_decoder_forward.3} parent=15 // pred_check_branch
          %184 = sbr.rel (%p182) target = $region28
        $region27: #{encoder_decoder_forward.3} parent=15 // pred_region
          %s185 = smul.u32 2, %s19
          %p186 = scmp.lt.s32.totalorder %s185, 3
          %s187 = scalar_select %p186, %s185, 3
          %s188 = smul.addr %s187, 8
          %s189 = scalar_lea.vmem %s2, %s188
          %s190 = smul.u32 2, %s19
        $region28: #{encoder_decoder_forward.3} parent=15 // pred_fallthru
          _
      $region16: #{encoder_decoder_forward.3} parent=5 // pred_fallthru
        _
      %p191 = scmp.le.s32.totalorder 1, %s12
      %p192 = scmp.lt.s32.totalorder %s12, 7
      %p193 = pnand %p191, %p192
      %p194 = pneg %p193
      // Predicated region
      $region29: #{encoder_decoder_forward.3} parent=5 // pred_check
        _
      $region30: #{encoder_decoder_forward.3} parent=5 // pred_check_branch
        %196 = sbr.rel (%p193) target = $region32
      $region31: #{encoder_decoder_forward.3} parent=5 // pred_region
        %s197 = ssub.s32 %s12, 1
        %s198 = sand.u32 %s65, 1
        %s199 = scalar_lea.sflag [#allocation4], %s198
        %s200 = sand.u32 %s65, 1
        %s201 = smul.addr %s200, 4096
        %s202 = scalar_lea.vmem [#allocation3], %s201
        // Predicated region
        $region33: #{encoder_decoder_forward.3} parent=31 // pred_check
          %p203 = pneg %p78
        $region34: #{encoder_decoder_forward.3} parent=31 // pred_check_branch
          %205 = sbr.rel (%p203) target = $region36
        $region35: #{encoder_decoder_forward.3} parent=31 // pred_region
          %206 = dma.done %s199, 65536
        $region36: #{encoder_decoder_forward.3} parent=31 // pred_fallthru
          _
        %s207 = smul.u32 32, %s22
        %p208 = scmp.lt.s32.totalorder %s207, 95
        %s209 = scalar_select %p208, %s207, 95
        %s210 = smul.addr %s209, 4
        %s211 = scalar_lea.vmem %s0, %s210
        %p212 = pneg %p50
        %p213 = pneg %p47
        %s214 = sand.u32 %s65, 1
        %s215 = scalar_lea.sflag [#allocation4], %s214
        %s216 = sand.u32 %s65, 1
        %s217 = smul.addr %s216, 4096
        %s218 = scalar_lea.vmem [#allocation3], %s217
        %p219 = pneg %p78
        %p220 = pneg %p75
        %s221 = smul.u32 2, %s21
        %p222 = scmp.lt.s32.totalorder %s221, 3
        %s223 = scalar_select %p222, %s221, 3
        %s224 = smul.addr %s223, 8
        %s225 = scalar_lea.vmem %s2, %s224
        %p226 = pneg %p104
        %p227 = pneg %p101
        %p228 = pneg %p130
        %p229 = pneg %p127
        %s230 = smul.u32 2, %s21
        %p231 = scmp.lt.s32.totalorder %s230, 3
        %s232 = scalar_select %p231, %s230, 3
        %s233 = smul.addr %s232, 4
        %s234 = scalar_lea.vmem %s3, %s233
        %s235 = smul.u32 32, %s22
        %p236 = scmp.lt.s32.totalorder %s235, 95
        %s237 = scalar_select %p236, %s235, 95
        %s238 = smul.addr %s237, 4
        %s239 = scalar_lea.vmem %s0, %s238
        %s240 = smul.u32 32, %s22
        %s241 = smul.u32 512, %s22
        %s242 = smul.u32 2, %s21
        %s243 = smul.u32 2, %s21
        %p244 = scmp.lt.s32.totalorder %s243, 3
        %s245 = scalar_select %p244, %s243, 3
        %s246 = smul.addr %s245, 8
        %s247 = scalar_lea.vmem %s2, %s246
        %s248 = smul.u32 2, %s21
        %s249 = smul.u32 2, %s21
        %p250 = scmp.lt.s32.totalorder %s249, 3
        %s251 = scalar_select %p250, %s249, 3
        %s252 = smul.addr %s251, 4
        %s253 = scalar_lea.vmem %s3, %s252
        %s254 = smul.u32 2, %s21
        %p255 = scmp.eq.s32.totalorder %s22, 0
        // Predicated region
        $region37: #{encoder_decoder_forward.3} parent=31 // pred_check
          %p256 = pneg %p255
        $region38: #{encoder_decoder_forward.3} parent=31 // pred_check_branch
          %258 = sbr.rel (%p256) target = $region40
        $region39: #{encoder_decoder_forward.3} parent=31 // pred_region
          %259 = vst [vmem:[#allocation2] sm:$0xff] 0.0
          %260 = vst [vmem:[#allocation2 + $0x8] sm:$0xff] 0.0
        $region40: #{encoder_decoder_forward.3} parent=31 // pred_fallthru
          _
        %v261 = vld [vmem:[#allocation2] sm:$0xff]
        %v262 = vld [vmem:[#allocation2 + $0x8] sm:$0xff]
        %v263 = vld [vmem:[%s239] sm:$0xff]
        %v264 = vld [vmem:[%s239 + $0x8] sm:$0xff]
        %v265 = vld [vmem:[%s239 + $0x10] sm:$0xff]
        %v266 = vld [vmem:[%s239 + $0x18] sm:$0xff]
        %v267 = vld [vmem:[%s239 + $0x20] sm:$0xff]
        %v268 = vld [vmem:[%s239 + $0x28] sm:$0xff]
        %v269 = vld [vmem:[%s239 + $0x30] sm:$0xff]
        %v270 = vld [vmem:[%s239 + $0x38] sm:$0xff]
        %v271 = vld [vmem:[%s239 + $0x40] sm:$0xff]
        %v272 = vld [vmem:[%s239 + $0x48] sm:$0xff]
        %v273 = vld [vmem:[%s239 + $0x50] sm:$0xff]
        %v274 = vld [vmem:[%s239 + $0x58] sm:$0xff]
        %v275 = vld [vmem:[%s239 + $0x60] sm:$0xff]
        %v276 = vld [vmem:[%s239 + $0x68] sm:$0xff]
        %v277 = vld [vmem:[%s239 + $0x70] sm:$0xff]
        %v278 = vld [vmem:[%s239 + $0x78] sm:$0xff]
        %v279 = vld [vmem:[%s202] sm:$0xff]
        %v280 = vld [vmem:[%s202 + $0x8] sm:$0xff]
        %v281 = vld [vmem:[%s202 + $0x10] sm:$0xff]
        %v282 = vld [vmem:[%s202 + $0x18] sm:$0xff]
        %v283 = vld [vmem:[%s202 + $0x20] sm:$0xff]
        %v284 = vld [vmem:[%s202 + $0x28] sm:$0xff]
        %v285 = vld [vmem:[%s202 + $0x30] sm:$0xff]
        %v286 = vld [vmem:[%s202 + $0x38] sm:$0xff]
        %v287 = vld [vmem:[%s202 + $0x40] sm:$0xff]
        %v288 = vld [vmem:[%s202 + $0x48] sm:$0xff]
        %v289 = vld [vmem:[%s202 + $0x50] sm:$0xff]
        %v290 = vld [vmem:[%s202 + $0x58] sm:$0xff]
        %v291 = vld [vmem:[%s202 + $0x60] sm:$0xff]
        %v292 = vld [vmem:[%s202 + $0x68] sm:$0xff]
        %v293 = vld [vmem:[%s202 + $0x70] sm:$0xff]
        %v294 = vld [vmem:[%s202 + $0x78] sm:$0xff]
        %v295 = vld [vmem:[%s202 + $0x80] sm:$0xff]
        %v296 = vld [vmem:[%s202 + $0x88] sm:$0xff]
        %v297 = vld [vmem:[%s202 + $0x90] sm:$0xff]
        %v298 = vld [vmem:[%s202 + $0x98] sm:$0xff]
        %v299 = vld [vmem:[%s202 + $0xa0] sm:$0xff]
        %v300 = vld [vmem:[%s202 + $0xa8] sm:$0xff]
        %v301 = vld [vmem:[%s202 + $0xb0] sm:$0xff]
        %v302 = vld [vmem:[%s202 + $0xb8] sm:$0xff]
        %v303 = vld [vmem:[%s202 + $0xc0] sm:$0xff]
        %v304 = vld [vmem:[%s202 + $0xc8] sm:$0xff]
        %v305 = vld [vmem:[%s202 + $0xd0] sm:$0xff]
        %v306 = vld [vmem:[%s202 + $0xd8] sm:$0xff]
        %v307 = vld [vmem:[%s202 + $0xe0] sm:$0xff]
        %v308 = vld [vmem:[%s202 + $0xe8] sm:$0xff]
        %v309 = vld [vmem:[%s202 + $0xf0] sm:$0xff]
        %v310 = vld [vmem:[%s202 + $0xf8] sm:$0xff]
        %v311 = vld [vmem:[%s202 + $0x100] sm:$0xff]
        %v312 = vld [vmem:[%s202 + $0x108] sm:$0xff]
        %v313 = vld [vmem:[%s202 + $0x110] sm:$0xff]
        %v314 = vld [vmem:[%s202 + $0x118] sm:$0xff]
        %v315 = vld [vmem:[%s202 + $0x120] sm:$0xff]
        %v316 = vld [vmem:[%s202 + $0x128] sm:$0xff]
        %v317 = vld [vmem:[%s202 + $0x130] sm:$0xff]
        %v318 = vld [vmem:[%s202 + $0x138] sm:$0xff]
        %v319 = vld [vmem:[%s202 + $0x140] sm:$0xff]
        %v320 = vld [vmem:[%s202 + $0x148] sm:$0xff]
        %v321 = vld [vmem:[%s202 + $0x150] sm:$0xff]
        %v322 = vld [vmem:[%s202 + $0x158] sm:$0xff]
        %v323 = vld [vmem:[%s202 + $0x160] sm:$0xff]
        %v324 = vld [vmem:[%s202 + $0x168] sm:$0xff]
        %v325 = vld [vmem:[%s202 + $0x170] sm:$0xff]
        %v326 = vld [vmem:[%s202 + $0x178] sm:$0xff]
        %v327 = vld [vmem:[%s202 + $0x180] sm:$0xff]
        %v328 = vld [vmem:[%s202 + $0x188] sm:$0xff]
        %v329 = vld [vmem:[%s202 + $0x190] sm:$0xff]
        %v330 = vld [vmem:[%s202 + $0x198] sm:$0xff]
        %v331 = vld [vmem:[%s202 + $0x1a0] sm:$0xff]
        %v332 = vld [vmem:[%s202 + $0x1a8] sm:$0xff]
        %v333 = vld [vmem:[%s202 + $0x1b0] sm:$0xff]
        %v334 = vld [vmem:[%s202 + $0x1b8] sm:$0xff]
        %v335 = vld [vmem:[%s202 + $0x1c0] sm:$0xff]
        %v336 = vld [vmem:[%s202 + $0x1c8] sm:$0xff]
        %v337 = vld [vmem:[%s202 + $0x1d0] sm:$0xff]
        %v338 = vld [vmem:[%s202 + $0x1d8] sm:$0xff]
        %v339 = vld [vmem:[%s202 + $0x1e0] sm:$0xff]
        %v340 = vld [vmem:[%s202 + $0x1e8] sm:$0xff]
        %v341 = vld [vmem:[%s202 + $0x1f0] sm:$0xff]
        %v342 = vld [vmem:[%s202 + $0x1f8] sm:$0xff]
        %v343 = vld [vmem:[%s202 + $0x200] sm:$0xff]
        %v344 = vld [vmem:[%s202 + $0x208] sm:$0xff]
        %v345 = vld [vmem:[%s202 + $0x210] sm:$0xff]
        %v346 = vld [vmem:[%s202 + $0x218] sm:$0xff]
        %v347 = vld [vmem:[%s202 + $0x220] sm:$0xff]
        %v348 = vld [vmem:[%s202 + $0x228] sm:$0xff]
        %v349 = vld [vmem:[%s202 + $0x230] sm:$0xff]
        %v350 = vld [vmem:[%s202 + $0x238] sm:$0xff]
        %v351 = vld [vmem:[%s202 + $0x240] sm:$0xff]
        %v352 = vld [vmem:[%s202 + $0x248] sm:$0xff]
        %v353 = vld [vmem:[%s202 + $0x250] sm:$0xff]
        %v354 = vld [vmem:[%s202 + $0x258] sm:$0xff]
        %v355 = vld [vmem:[%s202 + $0x260] sm:$0xff]
        %v356 = vld [vmem:[%s202 + $0x268] sm:$0xff]
        %v357 = vld [vmem:[%s202 + $0x270] sm:$0xff]
        %v358 = vld [vmem:[%s202 + $0x278] sm:$0xff]
        %v359 = vld [vmem:[%s202 + $0x280] sm:$0xff]
        %v360 = vld [vmem:[%s202 + $0x288] sm:$0xff]
        %v361 = vld [vmem:[%s202 + $0x290] sm:$0xff]
        %v362 = vld [vmem:[%s202 + $0x298] sm:$0xff]
        %v363 = vld [vmem:[%s202 + $0x2a0] sm:$0xff]
        %v364 = vld [vmem:[%s202 + $0x2a8] sm:$0xff]
        %v365 = vld [vmem:[%s202 + $0x2b0] sm:$0xff]
        %v366 = vld [vmem:[%s202 + $0x2b8] sm:$0xff]
        %v367 = vld [vmem:[%s202 + $0x2c0] sm:$0xff]
        %v368 = vld [vmem:[%s202 + $0x2c8] sm:$0xff]
        %v369 = vld [vmem:[%s202 + $0x2d0] sm:$0xff]
        %v370 = vld [vmem:[%s202 + $0x2d8] sm:$0xff]
        %v371 = vld [vmem:[%s202 + $0x2e0] sm:$0xff]
        %v372 = vld [vmem:[%s202 + $0x2e8] sm:$0xff]
        %v373 = vld [vmem:[%s202 + $0x2f0] sm:$0xff]
        %v374 = vld [vmem:[%s202 + $0x2f8] sm:$0xff]
        %v375 = vld [vmem:[%s202 + $0x300] sm:$0xff]
        %v376 = vld [vmem:[%s202 + $0x308] sm:$0xff]
        %v377 = vld [vmem:[%s202 + $0x310] sm:$0xff]
        %v378 = vld [vmem:[%s202 + $0x318] sm:$0xff]
        %v379 = vld [vmem:[%s202 + $0x320] sm:$0xff]
        %v380 = vld [vmem:[%s202 + $0x328] sm:$0xff]
        %v381 = vld [vmem:[%s202 + $0x330] sm:$0xff]
        %v382 = vld [vmem:[%s202 + $0x338] sm:$0xff]
        %v383 = vld [vmem:[%s202 + $0x340] sm:$0xff]
        %v384 = vld [vmem:[%s202 + $0x348] sm:$0xff]
        %v385 = vld [vmem:[%s202 + $0x350] sm:$0xff]
        %v386 = vld [vmem:[%s202 + $0x358] sm:$0xff]
        %v387 = vld [vmem:[%s202 + $0x360] sm:$0xff]
        %v388 = vld [vmem:[%s202 + $0x368] sm:$0xff]
        %v389 = vld [vmem:[%s202 + $0x370] sm:$0xff]
        %v390 = vld [vmem:[%s202 + $0x378] sm:$0xff]
        %v391 = vld [vmem:[%s202 + $0x380] sm:$0xff]
        %v392 = vld [vmem:[%s202 + $0x388] sm:$0xff]
        %v393 = vld [vmem:[%s202 + $0x390] sm:$0xff]
        %v394 = vld [vmem:[%s202 + $0x398] sm:$0xff]
        %v395 = vld [vmem:[%s202 + $0x3a0] sm:$0xff]
        %v396 = vld [vmem:[%s202 + $0x3a8] sm:$0xff]
        %v397 = vld [vmem:[%s202 + $0x3b0] sm:$0xff]
        %v398 = vld [vmem:[%s202 + $0x3b8] sm:$0xff]
        %v399 = vld [vmem:[%s202 + $0x3c0] sm:$0xff]
        %v400 = vld [vmem:[%s202 + $0x3c8] sm:$0xff]
        %v401 = vld [vmem:[%s202 + $0x3d0] sm:$0xff]
        %v402 = vld [vmem:[%s202 + $0x3d8] sm:$0xff]
        %v403 = vld [vmem:[%s202 + $0x3e0] sm:$0xff]
        %v404 = vld [vmem:[%s202 + $0x3e8] sm:$0xff]
        %v405 = vld [vmem:[%s202 + $0x3f0] sm:$0xff]
        %v406 = vld [vmem:[%s202 + $0x3f8] sm:$0xff]
        %v407 = vld [vmem:[%s202 + $0x400] sm:$0xff]
        %v408 = vld [vmem:[%s202 + $0x408] sm:$0xff]
        %v409 = vld [vmem:[%s202 + $0x410] sm:$0xff]
        %v410 = vld [vmem:[%s202 + $0x418] sm:$0xff]
        %v411 = vld [vmem:[%s202 + $0x420] sm:$0xff]
        %v412 = vld [vmem:[%s202 + $0x428] sm:$0xff]
        %v413 = vld [vmem:[%s202 + $0x430] sm:$0xff]
        %v414 = vld [vmem:[%s202 + $0x438] sm:$0xff]
        %v415 = vld [vmem:[%s202 + $0x440] sm:$0xff]
        %v416 = vld [vmem:[%s202 + $0x448] sm:$0xff]
        %v417 = vld [vmem:[%s202 + $0x450] sm:$0xff]
        %v418 = vld [vmem:[%s202 + $0x458] sm:$0xff]
        %v419 = vld [vmem:[%s202 + $0x460] sm:$0xff]
        %v420 = vld [vmem:[%s202 + $0x468] sm:$0xff]
        %v421 = vld [vmem:[%s202 + $0x470] sm:$0xff]
        %v422 = vld [vmem:[%s202 + $0x478] sm:$0xff]
        %v423 = vld [vmem:[%s202 + $0x480] sm:$0xff]
        %v424 = vld [vmem:[%s202 + $0x488] sm:$0xff]
        %v425 = vld [vmem:[%s202 + $0x490] sm:$0xff]
        %v426 = vld [vmem:[%s202 + $0x498] sm:$0xff]
        %v427 = vld [vmem:[%s202 + $0x4a0] sm:$0xff]
        %v428 = vld [vmem:[%s202 + $0x4a8] sm:$0xff]
        %v429 = vld [vmem:[%s202 + $0x4b0] sm:$0xff]
        %v430 = vld [vmem:[%s202 + $0x4b8] sm:$0xff]
        %v431 = vld [vmem:[%s202 + $0x4c0] sm:$0xff]
        %v432 = vld [vmem:[%s202 + $0x4c8] sm:$0xff]
        %v433 = vld [vmem:[%s202 + $0x4d0] sm:$0xff]
        %v434 = vld [vmem:[%s202 + $0x4d8] sm:$0xff]
        %v435 = vld [vmem:[%s202 + $0x4e0] sm:$0xff]
        %v436 = vld [vmem:[%s202 + $0x4e8] sm:$0xff]
        %v437 = vld [vmem:[%s202 + $0x4f0] sm:$0xff]
        %v438 = vld [vmem:[%s202 + $0x4f8] sm:$0xff]
        %v439 = vld [vmem:[%s202 + $0x500] sm:$0xff]
        %v440 = vld [vmem:[%s202 + $0x508] sm:$0xff]
        %v441 = vld [vmem:[%s202 + $0x510] sm:$0xff]
        %v442 = vld [vmem:[%s202 + $0x518] sm:$0xff]
        %v443 = vld [vmem:[%s202 + $0x520] sm:$0xff]
        %v444 = vld [vmem:[%s202 + $0x528] sm:$0xff]
        %v445 = vld [vmem:[%s202 + $0x530] sm:$0xff]
        %v446 = vld [vmem:[%s202 + $0x538] sm:$0xff]
        %v447 = vld [vmem:[%s202 + $0x540] sm:$0xff]
        %v448 = vld [vmem:[%s202 + $0x548] sm:$0xff]
        %v449 = vld [vmem:[%s202 + $0x550] sm:$0xff]
        %v450 = vld [vmem:[%s202 + $0x558] sm:$0xff]
        %v451 = vld [vmem:[%s202 + $0x560] sm:$0xff]
        %v452 = vld [vmem:[%s202 + $0x568] sm:$0xff]
        %v453 = vld [vmem:[%s202 + $0x570] sm:$0xff]
        %v454 = vld [vmem:[%s202 + $0x578] sm:$0xff]
        %v455 = vld [vmem:[%s202 + $0x580] sm:$0xff]
        %v456 = vld [vmem:[%s202 + $0x588] sm:$0xff]
        %v457 = vld [vmem:[%s202 + $0x590] sm:$0xff]
        %v458 = vld [vmem:[%s202 + $0x598] sm:$0xff]
        %v459 = vld [vmem:[%s202 + $0x5a0] sm:$0xff]
        %v460 = vld [vmem:[%s202 + $0x5a8] sm:$0xff]
        %v461 = vld [vmem:[%s202 + $0x5b0] sm:$0xff]
        %v462 = vld [vmem:[%s202 + $0x5b8] sm:$0xff]
        %v463 = vld [vmem:[%s202 + $0x5c0] sm:$0xff]
        %v464 = vld [vmem:[%s202 + $0x5c8] sm:$0xff]
        %v465 = vld [vmem:[%s202 + $0x5d0] sm:$0xff]
        %v466 = vld [vmem:[%s202 + $0x5d8] sm:$0xff]
        %v467 = vld [vmem:[%s202 + $0x5e0] sm:$0xff]
        %v468 = vld [vmem:[%s202 + $0x5e8] sm:$0xff]
        %v469 = vld [vmem:[%s202 + $0x5f0] sm:$0xff]
        %v470 = vld [vmem:[%s202 + $0x5f8] sm:$0xff]
        %v471 = vld [vmem:[%s202 + $0x600] sm:$0xff]
        %v472 = vld [vmem:[%s202 + $0x608] sm:$0xff]
        %v473 = vld [vmem:[%s202 + $0x610] sm:$0xff]
        %v474 = vld [vmem:[%s202 + $0x618] sm:$0xff]
        %v475 = vld [vmem:[%s202 + $0x620] sm:$0xff]
        %v476 = vld [vmem:[%s202 + $0x628] sm:$0xff]
        %v477 = vld [vmem:[%s202 + $0x630] sm:$0xff]
        %v478 = vld [vmem:[%s202 + $0x638] sm:$0xff]
        %v479 = vld [vmem:[%s202 + $0x640] sm:$0xff]
        %v480 = vld [vmem:[%s202 + $0x648] sm:$0xff]
        %v481 = vld [vmem:[%s202 + $0x650] sm:$0xff]
        %v482 = vld [vmem:[%s202 + $0x658] sm:$0xff]
        %v483 = vld [vmem:[%s202 + $0x660] sm:$0xff]
        %v484 = vld [vmem:[%s202 + $0x668] sm:$0xff]
        %v485 = vld [vmem:[%s202 + $0x670] sm:$0xff]
        %v486 = vld [vmem:[%s202 + $0x678] sm:$0xff]
        %v487 = vld [vmem:[%s202 + $0x680] sm:$0xff]
        %v488 = vld [vmem:[%s202 + $0x688] sm:$0xff]
        %v489 = vld [vmem:[%s202 + $0x690] sm:$0xff]
        %v490 = vld [vmem:[%s202 + $0x698] sm:$0xff]
        %v491 = vld [vmem:[%s202 + $0x6a0] sm:$0xff]
        %v492 = vld [vmem:[%s202 + $0x6a8] sm:$0xff]
        %v493 = vld [vmem:[%s202 + $0x6b0] sm:$0xff]
        %v494 = vld [vmem:[%s202 + $0x6b8] sm:$0xff]
        %v495 = vld [vmem:[%s202 + $0x6c0] sm:$0xff]
        %v496 = vld [vmem:[%s202 + $0x6c8] sm:$0xff]
        %v497 = vld [vmem:[%s202 + $0x6d0] sm:$0xff]
        %v498 = vld [vmem:[%s202 + $0x6d8] sm:$0xff]
        %v499 = vld [vmem:[%s202 + $0x6e0] sm:$0xff]
        %v500 = vld [vmem:[%s202 + $0x6e8] sm:$0xff]
        %v501 = vld [vmem:[%s202 + $0x6f0] sm:$0xff]
        %v502 = vld [vmem:[%s202 + $0x6f8] sm:$0xff]
        %v503 = vld [vmem:[%s202 + $0x700] sm:$0xff]
        %v504 = vld [vmem:[%s202 + $0x708] sm:$0xff]
        %v505 = vld [vmem:[%s202 + $0x710] sm:$0xff]
        %v506 = vld [vmem:[%s202 + $0x718] sm:$0xff]
        %v507 = vld [vmem:[%s202 + $0x720] sm:$0xff]
        %v508 = vld [vmem:[%s202 + $0x728] sm:$0xff]
        %v509 = vld [vmem:[%s202 + $0x730] sm:$0xff]
        %v510 = vld [vmem:[%s202 + $0x738] sm:$0xff]
        %v511 = vld [vmem:[%s202 + $0x740] sm:$0xff]
        %v512 = vld [vmem:[%s202 + $0x748] sm:$0xff]
        %v513 = vld [vmem:[%s202 + $0x750] sm:$0xff]
        %v514 = vld [vmem:[%s202 + $0x758] sm:$0xff]
        %v515 = vld [vmem:[%s202 + $0x760] sm:$0xff]
        %v516 = vld [vmem:[%s202 + $0x768] sm:$0xff]
        %v517 = vld [vmem:[%s202 + $0x770] sm:$0xff]
        %v518 = vld [vmem:[%s202 + $0x778] sm:$0xff]
        %v519 = vld [vmem:[%s202 + $0x780] sm:$0xff]
        %v520 = vld [vmem:[%s202 + $0x788] sm:$0xff]
        %v521 = vld [vmem:[%s202 + $0x790] sm:$0xff]
        %v522 = vld [vmem:[%s202 + $0x798] sm:$0xff]
        %v523 = vld [vmem:[%s202 + $0x7a0] sm:$0xff]
        %v524 = vld [vmem:[%s202 + $0x7a8] sm:$0xff]
        %v525 = vld [vmem:[%s202 + $0x7b0] sm:$0xff]
        %v526 = vld [vmem:[%s202 + $0x7b8] sm:$0xff]
        %v527 = vld [vmem:[%s202 + $0x7c0] sm:$0xff]
        %v528 = vld [vmem:[%s202 + $0x7c8] sm:$0xff]
        %v529 = vld [vmem:[%s202 + $0x7d0] sm:$0xff]
        %v530 = vld [vmem:[%s202 + $0x7d8] sm:$0xff]
        %v531 = vld [vmem:[%s202 + $0x7e0] sm:$0xff]
        %v532 = vld [vmem:[%s202 + $0x7e8] sm:$0xff]
        %v533 = vld [vmem:[%s202 + $0x7f0] sm:$0xff]
        %v534 = vld [vmem:[%s202 + $0x7f8] sm:$0xff]
        %v535 = vld [vmem:[%s202 + $0x800] sm:$0xff]
        %v536 = vld [vmem:[%s202 + $0x808] sm:$0xff]
        %v537 = vld [vmem:[%s202 + $0x810] sm:$0xff]
        %v538 = vld [vmem:[%s202 + $0x818] sm:$0xff]
        %v539 = vld [vmem:[%s202 + $0x820] sm:$0xff]
        %v540 = vld [vmem:[%s202 + $0x828] sm:$0xff]
        %v541 = vld [vmem:[%s202 + $0x830] sm:$0xff]
        %v542 = vld [vmem:[%s202 + $0x838] sm:$0xff]
        %v543 = vld [vmem:[%s202 + $0x840] sm:$0xff]
        %v544 = vld [vmem:[%s202 + $0x848] sm:$0xff]
        %v545 = vld [vmem:[%s202 + $0x850] sm:$0xff]
        %v546 = vld [vmem:[%s202 + $0x858] sm:$0xff]
        %v547 = vld [vmem:[%s202 + $0x860] sm:$0xff]
        %v548 = vld [vmem:[%s202 + $0x868] sm:$0xff]
        %v549 = vld [vmem:[%s202 + $0x870] sm:$0xff]
        %v550 = vld [vmem:[%s202 + $0x878] sm:$0xff]
        %v551 = vld [vmem:[%s202 + $0x880] sm:$0xff]
        %v552 = vld [vmem:[%s202 + $0x888] sm:$0xff]
        %v553 = vld [vmem:[%s202 + $0x890] sm:$0xff]
        %v554 = vld [vmem:[%s202 + $0x898] sm:$0xff]
        %v555 = vld [vmem:[%s202 + $0x8a0] sm:$0xff]
        %v556 = vld [vmem:[%s202 + $0x8a8] sm:$0xff]
        %v557 = vld [vmem:[%s202 + $0x8b0] sm:$0xff]
        %v558 = vld [vmem:[%s202 + $0x8b8] sm:$0xff]
        %v559 = vld [vmem:[%s202 + $0x8c0] sm:$0xff]
        %v560 = vld [vmem:[%s202 + $0x8c8] sm:$0xff]
        %v561 = vld [vmem:[%s202 + $0x8d0] sm:$0xff]
        %v562 = vld [vmem:[%s202 + $0x8d8] sm:$0xff]
        %v563 = vld [vmem:[%s202 + $0x8e0] sm:$0xff]
        %v564 = vld [vmem:[%s202 + $0x8e8] sm:$0xff]
        %v565 = vld [vmem:[%s202 + $0x8f0] sm:$0xff]
        %v566 = vld [vmem:[%s202 + $0x8f8] sm:$0xff]
        %v567 = vld [vmem:[%s202 + $0x900] sm:$0xff]
        %v568 = vld [vmem:[%s202 + $0x908] sm:$0xff]
        %v569 = vld [vmem:[%s202 + $0x910] sm:$0xff]
        %v570 = vld [vmem:[%s202 + $0x918] sm:$0xff]
        %v571 = vld [vmem:[%s202 + $0x920] sm:$0xff]
        %v572 = vld [vmem:[%s202 + $0x928] sm:$0xff]
        %v573 = vld [vmem:[%s202 + $0x930] sm:$0xff]
        %v574 = vld [vmem:[%s202 + $0x938] sm:$0xff]
        %v575 = vld [vmem:[%s202 + $0x940] sm:$0xff]
        %v576 = vld [vmem:[%s202 + $0x948] sm:$0xff]
        %v577 = vld [vmem:[%s202 + $0x950] sm:$0xff]
        %v578 = vld [vmem:[%s202 + $0x958] sm:$0xff]
        %v579 = vld [vmem:[%s202 + $0x960] sm:$0xff]
        %v580 = vld [vmem:[%s202 + $0x968] sm:$0xff]
        %v581 = vld [vmem:[%s202 + $0x970] sm:$0xff]
        %v582 = vld [vmem:[%s202 + $0x978] sm:$0xff]
        %v583 = vld [vmem:[%s202 + $0x980] sm:$0xff]
        %v584 = vld [vmem:[%s202 + $0x988] sm:$0xff]
        %v585 = vld [vmem:[%s202 + $0x990] sm:$0xff]
        %v586 = vld [vmem:[%s202 + $0x998] sm:$0xff]
        %v587 = vld [vmem:[%s202 + $0x9a0] sm:$0xff]
        %v588 = vld [vmem:[%s202 + $0x9a8] sm:$0xff]
        %v589 = vld [vmem:[%s202 + $0x9b0] sm:$0xff]
        %v590 = vld [vmem:[%s202 + $0x9b8] sm:$0xff]
        %v591 = vld [vmem:[%s202 + $0x9c0] sm:$0xff]
        %v592 = vld [vmem:[%s202 + $0x9c8] sm:$0xff]
        %v593 = vld [vmem:[%s202 + $0x9d0] sm:$0xff]
        %v594 = vld [vmem:[%s202 + $0x9d8] sm:$0xff]
        %v595 = vld [vmem:[%s202 + $0x9e0] sm:$0xff]
        %v596 = vld [vmem:[%s202 + $0x9e8] sm:$0xff]
        %v597 = vld [vmem:[%s202 + $0x9f0] sm:$0xff]
        %v598 = vld [vmem:[%s202 + $0x9f8] sm:$0xff]
        %v599 = vld [vmem:[%s202 + $0xa00] sm:$0xff]
        %v600 = vld [vmem:[%s202 + $0xa08] sm:$0xff]
        %v601 = vld [vmem:[%s202 + $0xa10] sm:$0xff]
        %v602 = vld [vmem:[%s202 + $0xa18] sm:$0xff]
        %v603 = vld [vmem:[%s202 + $0xa20] sm:$0xff]
        %v604 = vld [vmem:[%s202 + $0xa28] sm:$0xff]
        %v605 = vld [vmem:[%s202 + $0xa30] sm:$0xff]
        %v606 = vld [vmem:[%s202 + $0xa38] sm:$0xff]
        %v607 = vld [vmem:[%s202 + $0xa40] sm:$0xff]
        %v608 = vld [vmem:[%s202 + $0xa48] sm:$0xff]
        %v609 = vld [vmem:[%s202 + $0xa50] sm:$0xff]
        %v610 = vld [vmem:[%s202 + $0xa58] sm:$0xff]
        %v611 = vld [vmem:[%s202 + $0xa60] sm:$0xff]
        %v612 = vld [vmem:[%s202 + $0xa68] sm:$0xff]
        %v613 = vld [vmem:[%s202 + $0xa70] sm:$0xff]
        %v614 = vld [vmem:[%s202 + $0xa78] sm:$0xff]
        %v615 = vld [vmem:[%s202 + $0xa80] sm:$0xff]
        %v616 = vld [vmem:[%s202 + $0xa88] sm:$0xff]
        %v617 = vld [vmem:[%s202 + $0xa90] sm:$0xff]
        %v618 = vld [vmem:[%s202 + $0xa98] sm:$0xff]
        %v619 = vld [vmem:[%s202 + $0xaa0] sm:$0xff]
        %v620 = vld [vmem:[%s202 + $0xaa8] sm:$0xff]
        %v621 = vld [vmem:[%s202 + $0xab0] sm:$0xff]
        %v622 = vld [vmem:[%s202 + $0xab8] sm:$0xff]
        %v623 = vld [vmem:[%s202 + $0xac0] sm:$0xff]
        %v624 = vld [vmem:[%s202 + $0xac8] sm:$0xff]
        %v625 = vld [vmem:[%s202 + $0xad0] sm:$0xff]
        %v626 = vld [vmem:[%s202 + $0xad8] sm:$0xff]
        %v627 = vld [vmem:[%s202 + $0xae0] sm:$0xff]
        %v628 = vld [vmem:[%s202 + $0xae8] sm:$0xff]
        %v629 = vld [vmem:[%s202 + $0xaf0] sm:$0xff]
        %v630 = vld [vmem:[%s202 + $0xaf8] sm:$0xff]
        %v631 = vld [vmem:[%s202 + $0xb00] sm:$0xff]
        %v632 = vld [vmem:[%s202 + $0xb08] sm:$0xff]
        %v633 = vld [vmem:[%s202 + $0xb10] sm:$0xff]
        %v634 = vld [vmem:[%s202 + $0xb18] sm:$0xff]
        %v635 = vld [vmem:[%s202 + $0xb20] sm:$0xff]
        %v636 = vld [vmem:[%s202 + $0xb28] sm:$0xff]
        %v637 = vld [vmem:[%s202 + $0xb30] sm:$0xff]
        %v638 = vld [vmem:[%s202 + $0xb38] sm:$0xff]
        %v639 = vld [vmem:[%s202 + $0xb40] sm:$0xff]
        %v640 = vld [vmem:[%s202 + $0xb48] sm:$0xff]
        %v641 = vld [vmem:[%s202 + $0xb50] sm:$0xff]
        %v642 = vld [vmem:[%s202 + $0xb58] sm:$0xff]
        %v643 = vld [vmem:[%s202 + $0xb60] sm:$0xff]
        %v644 = vld [vmem:[%s202 + $0xb68] sm:$0xff]
        %v645 = vld [vmem:[%s202 + $0xb70] sm:$0xff]
        %v646 = vld [vmem:[%s202 + $0xb78] sm:$0xff]
        %v647 = vld [vmem:[%s202 + $0xb80] sm:$0xff]
        %v648 = vld [vmem:[%s202 + $0xb88] sm:$0xff]
        %v649 = vld [vmem:[%s202 + $0xb90] sm:$0xff]
        %v650 = vld [vmem:[%s202 + $0xb98] sm:$0xff]
        %v651 = vld [vmem:[%s202 + $0xba0] sm:$0xff]
        %v652 = vld [vmem:[%s202 + $0xba8] sm:$0xff]
        %v653 = vld [vmem:[%s202 + $0xbb0] sm:$0xff]
        %v654 = vld [vmem:[%s202 + $0xbb8] sm:$0xff]
        %v655 = vld [vmem:[%s202 + $0xbc0] sm:$0xff]
        %v656 = vld [vmem:[%s202 + $0xbc8] sm:$0xff]
        %v657 = vld [vmem:[%s202 + $0xbd0] sm:$0xff]
        %v658 = vld [vmem:[%s202 + $0xbd8] sm:$0xff]
        %v659 = vld [vmem:[%s202 + $0xbe0] sm:$0xff]
        %v660 = vld [vmem:[%s202 + $0xbe8] sm:$0xff]
        %v661 = vld [vmem:[%s202 + $0xbf0] sm:$0xff]
        %v662 = vld [vmem:[%s202 + $0xbf8] sm:$0xff]
        %v663 = vld [vmem:[%s202 + $0xc00] sm:$0xff]
        %v664 = vld [vmem:[%s202 + $0xc08] sm:$0xff]
        %v665 = vld [vmem:[%s202 + $0xc10] sm:$0xff]
        %v666 = vld [vmem:[%s202 + $0xc18] sm:$0xff]
        %v667 = vld [vmem:[%s202 + $0xc20] sm:$0xff]
        %v668 = vld [vmem:[%s202 + $0xc28] sm:$0xff]
        %v669 = vld [vmem:[%s202 + $0xc30] sm:$0xff]
        %v670 = vld [vmem:[%s202 + $0xc38] sm:$0xff]
        %v671 = vld [vmem:[%s202 + $0xc40] sm:$0xff]
        %v672 = vld [vmem:[%s202 + $0xc48] sm:$0xff]
        %v673 = vld [vmem:[%s202 + $0xc50] sm:$0xff]
        %v674 = vld [vmem:[%s202 + $0xc58] sm:$0xff]
        %v675 = vld [vmem:[%s202 + $0xc60] sm:$0xff]
        %v676 = vld [vmem:[%s202 + $0xc68] sm:$0xff]
        %v677 = vld [vmem:[%s202 + $0xc70] sm:$0xff]
        %v678 = vld [vmem:[%s202 + $0xc78] sm:$0xff]
        %v679 = vld [vmem:[%s202 + $0xc80] sm:$0xff]
        %v680 = vld [vmem:[%s202 + $0xc88] sm:$0xff]
        %v681 = vld [vmem:[%s202 + $0xc90] sm:$0xff]
        %v682 = vld [vmem:[%s202 + $0xc98] sm:$0xff]
        %v683 = vld [vmem:[%s202 + $0xca0] sm:$0xff]
        %v684 = vld [vmem:[%s202 + $0xca8] sm:$0xff]
        %v685 = vld [vmem:[%s202 + $0xcb0] sm:$0xff]
        %v686 = vld [vmem:[%s202 + $0xcb8] sm:$0xff]
        %v687 = vld [vmem:[%s202 + $0xcc0] sm:$0xff]
        %v688 = vld [vmem:[%s202 + $0xcc8] sm:$0xff]
        %v689 = vld [vmem:[%s202 + $0xcd0] sm:$0xff]
        %v690 = vld [vmem:[%s202 + $0xcd8] sm:$0xff]
        %v691 = vld [vmem:[%s202 + $0xce0] sm:$0xff]
        %v692 = vld [vmem:[%s202 + $0xce8] sm:$0xff]
        %v693 = vld [vmem:[%s202 + $0xcf0] sm:$0xff]
        %v694 = vld [vmem:[%s202 + $0xcf8] sm:$0xff]
        %v695 = vld [vmem:[%s202 + $0xd00] sm:$0xff]
        %v696 = vld [vmem:[%s202 + $0xd08] sm:$0xff]
        %v697 = vld [vmem:[%s202 + $0xd10] sm:$0xff]
        %v698 = vld [vmem:[%s202 + $0xd18] sm:$0xff]
        %v699 = vld [vmem:[%s202 + $0xd20] sm:$0xff]
        %v700 = vld [vmem:[%s202 + $0xd28] sm:$0xff]
        %v701 = vld [vmem:[%s202 + $0xd30] sm:$0xff]
        %v702 = vld [vmem:[%s202 + $0xd38] sm:$0xff]
        %v703 = vld [vmem:[%s202 + $0xd40] sm:$0xff]
        %v704 = vld [vmem:[%s202 + $0xd48] sm:$0xff]
        %v705 = vld [vmem:[%s202 + $0xd50] sm:$0xff]
        %v706 = vld [vmem:[%s202 + $0xd58] sm:$0xff]
        %v707 = vld [vmem:[%s202 + $0xd60] sm:$0xff]
        %v708 = vld [vmem:[%s202 + $0xd68] sm:$0xff]
        %v709 = vld [vmem:[%s202 + $0xd70] sm:$0xff]
        %v710 = vld [vmem:[%s202 + $0xd78] sm:$0xff]
        %v711 = vld [vmem:[%s202 + $0xd80] sm:$0xff]
        %v712 = vld [vmem:[%s202 + $0xd88] sm:$0xff]
        %v713 = vld [vmem:[%s202 + $0xd90] sm:$0xff]
        %v714 = vld [vmem:[%s202 + $0xd98] sm:$0xff]
        %v715 = vld [vmem:[%s202 + $0xda0] sm:$0xff]
        %v716 = vld [vmem:[%s202 + $0xda8] sm:$0xff]
        %v717 = vld [vmem:[%s202 + $0xdb0] sm:$0xff]
        %v718 = vld [vmem:[%s202 + $0xdb8] sm:$0xff]
        %v719 = vld [vmem:[%s202 + $0xdc0] sm:$0xff]
        %v720 = vld [vmem:[%s202 + $0xdc8] sm:$0xff]
        %v721 = vld [vmem:[%s202 + $0xdd0] sm:$0xff]
        %v722 = vld [vmem:[%s202 + $0xdd8] sm:$0xff]
        %v723 = vld [vmem:[%s202 + $0xde0] sm:$0xff]
        %v724 = vld [vmem:[%s202 + $0xde8] sm:$0xff]
        %v725 = vld [vmem:[%s202 + $0xdf0] sm:$0xff]
        %v726 = vld [vmem:[%s202 + $0xdf8] sm:$0xff]
        %v727 = vld [vmem:[%s202 + $0xe00] sm:$0xff]
        %v728 = vld [vmem:[%s202 + $0xe08] sm:$0xff]
        %v729 = vld [vmem:[%s202 + $0xe10] sm:$0xff]
        %v730 = vld [vmem:[%s202 + $0xe18] sm:$0xff]
        %v731 = vld [vmem:[%s202 + $0xe20] sm:$0xff]
        %v732 = vld [vmem:[%s202 + $0xe28] sm:$0xff]
        %v733 = vld [vmem:[%s202 + $0xe30] sm:$0xff]
        %v734 = vld [vmem:[%s202 + $0xe38] sm:$0xff]
        %v735 = vld [vmem:[%s202 + $0xe40] sm:$0xff]
        %v736 = vld [vmem:[%s202 + $0xe48] sm:$0xff]
        %v737 = vld [vmem:[%s202 + $0xe50] sm:$0xff]
        %v738 = vld [vmem:[%s202 + $0xe58] sm:$0xff]
        %v739 = vld [vmem:[%s202 + $0xe60] sm:$0xff]
        %v740 = vld [vmem:[%s202 + $0xe68] sm:$0xff]
        %v741 = vld [vmem:[%s202 + $0xe70] sm:$0xff]
        %v742 = vld [vmem:[%s202 + $0xe78] sm:$0xff]
        %v743 = vld [vmem:[%s202 + $0xe80] sm:$0xff]
        %v744 = vld [vmem:[%s202 + $0xe88] sm:$0xff]
        %v745 = vld [vmem:[%s202 + $0xe90] sm:$0xff]
        %v746 = vld [vmem:[%s202 + $0xe98] sm:$0xff]
        %v747 = vld [vmem:[%s202 + $0xea0] sm:$0xff]
        %v748 = vld [vmem:[%s202 + $0xea8] sm:$0xff]
        %v749 = vld [vmem:[%s202 + $0xeb0] sm:$0xff]
        %v750 = vld [vmem:[%s202 + $0xeb8] sm:$0xff]
        %v751 = vld [vmem:[%s202 + $0xec0] sm:$0xff]
        %v752 = vld [vmem:[%s202 + $0xec8] sm:$0xff]
        %v753 = vld [vmem:[%s202 + $0xed0] sm:$0xff]
        %v754 = vld [vmem:[%s202 + $0xed8] sm:$0xff]
        %v755 = vld [vmem:[%s202 + $0xee0] sm:$0xff]
        %v756 = vld [vmem:[%s202 + $0xee8] sm:$0xff]
        %v757 = vld [vmem:[%s202 + $0xef0] sm:$0xff]
        %v758 = vld [vmem:[%s202 + $0xef8] sm:$0xff]
        %v759 = vld [vmem:[%s202 + $0xf00] sm:$0xff]
        %v760 = vld [vmem:[%s202 + $0xf08] sm:$0xff]
        %v761 = vld [vmem:[%s202 + $0xf10] sm:$0xff]
        %v762 = vld [vmem:[%s202 + $0xf18] sm:$0xff]
        %v763 = vld [vmem:[%s202 + $0xf20] sm:$0xff]
        %v764 = vld [vmem:[%s202 + $0xf28] sm:$0xff]
        %v765 = vld [vmem:[%s202 + $0xf30] sm:$0xff]
        %v766 = vld [vmem:[%s202 + $0xf38] sm:$0xff]
        %v767 = vld [vmem:[%s202 + $0xf40] sm:$0xff]
        %v768 = vld [vmem:[%s202 + $0xf48] sm:$0xff]
        %v769 = vld [vmem:[%s202 + $0xf50] sm:$0xff]
        %v770 = vld [vmem:[%s202 + $0xf58] sm:$0xff]
        %v771 = vld [vmem:[%s202 + $0xf60] sm:$0xff]
        %v772 = vld [vmem:[%s202 + $0xf68] sm:$0xff]
        %v773 = vld [vmem:[%s202 + $0xf70] sm:$0xff]
        %v774 = vld [vmem:[%s202 + $0xf78] sm:$0xff]
        %v775 = vld [vmem:[%s202 + $0xf80] sm:$0xff]
        %v776 = vld [vmem:[%s202 + $0xf88] sm:$0xff]
        %v777 = vld [vmem:[%s202 + $0xf90] sm:$0xff]
        %v778 = vld [vmem:[%s202 + $0xf98] sm:$0xff]
        %v779 = vld [vmem:[%s202 + $0xfa0] sm:$0xff]
        %v780 = vld [vmem:[%s202 + $0xfa8] sm:$0xff]
        %v781 = vld [vmem:[%s202 + $0xfb0] sm:$0xff]
        %v782 = vld [vmem:[%s202 + $0xfb8] sm:$0xff]
        %v783 = vld [vmem:[%s202 + $0xfc0] sm:$0xff]
        %v784 = vld [vmem:[%s202 + $0xfc8] sm:$0xff]
        %v785 = vld [vmem:[%s202 + $0xfd0] sm:$0xff]
        %v786 = vld [vmem:[%s202 + $0xfd8] sm:$0xff]
        %v787 = vld [vmem:[%s202 + $0xfe0] sm:$0xff]
        %v788 = vld [vmem:[%s202 + $0xfe8] sm:$0xff]
        %v789 = vld [vmem:[%s202 + $0xff0] sm:$0xff]
        %v790 = vld [vmem:[%s202 + $0xff8] sm:$0xff]
        %v807 = vunpack.c.l.b16 %v263
        %v808 = vunpack.c.h.b16 %v263
        %v809 = vunpack.c.l.b16 %v264
        %v810 = vunpack.c.h.b16 %v264
        %v811 = vunpack.c.l.b16 %v265
        %v812 = vunpack.c.h.b16 %v265
        %v813 = vunpack.c.l.b16 %v266
        %v814 = vunpack.c.h.b16 %v266
        %v815 = vunpack.c.l.b16 %v267
        %v816 = vunpack.c.h.b16 %v267
        %v817 = vunpack.c.l.b16 %v268
        %v818 = vunpack.c.h.b16 %v268
        %v819 = vunpack.c.l.b16 %v269
        %v820 = vunpack.c.h.b16 %v269
        %v821 = vunpack.c.l.b16 %v270
        %v822 = vunpack.c.h.b16 %v270
        %v823 = vunpack.c.l.b16 %v271
        %v824 = vunpack.c.h.b16 %v271
        %v825 = vunpack.c.l.b16 %v272
        %v826 = vunpack.c.h.b16 %v272
        %v827 = vunpack.c.l.b16 %v273
        %v828 = vunpack.c.h.b16 %v273
        %v829 = vunpack.c.l.b16 %v274
        %v830 = vunpack.c.h.b16 %v274
        %v831 = vunpack.c.l.b16 %v275
        %v832 = vunpack.c.h.b16 %v275
        %v833 = vunpack.c.l.b16 %v276
        %v834 = vunpack.c.h.b16 %v276
        %v835 = vunpack.c.l.b16 %v277
        %v836 = vunpack.c.h.b16 %v277
        %v837 = vunpack.c.l.b16 %v278
        %v838 = vunpack.c.h.b16 %v278
        %v839 = vpack.c.b16 %v807, %v807
        %v840 = vpack.c.b16 %v808, %v808
        %v841 = vpack.c.b16 %v809, %v809
        %v842 = vpack.c.b16 %v810, %v810
        %v843 = vpack.c.b16 %v811, %v811
        %v844 = vpack.c.b16 %v812, %v812
        %v845 = vpack.c.b16 %v813, %v813
        %v846 = vpack.c.b16 %v814, %v814
        %v847 = vpack.c.b16 %v815, %v815
        %v848 = vpack.c.b16 %v816, %v816
        %v849 = vpack.c.b16 %v817, %v817
        %v850 = vpack.c.b16 %v818, %v818
        %v851 = vpack.c.b16 %v819, %v819
        %v852 = vpack.c.b16 %v820, %v820
        %v853 = vpack.c.b16 %v821, %v821
        %v854 = vpack.c.b16 %v822, %v822
        %v855 = vpack.c.b16 %v823, %v823
        %v856 = vpack.c.b16 %v824, %v824
        %v857 = vpack.c.b16 %v825, %v825
        %v858 = vpack.c.b16 %v826, %v826
        %v859 = vpack.c.b16 %v827, %v827
        %v860 = vpack.c.b16 %v828, %v828
        %v861 = vpack.c.b16 %v829, %v829
        %v862 = vpack.c.b16 %v830, %v830
        %v863 = vpack.c.b16 %v831, %v831
        %v864 = vpack.c.b16 %v832, %v832
        %v865 = vpack.c.b16 %v833, %v833
        %v866 = vpack.c.b16 %v834, %v834
        %v867 = vpack.c.b16 %v835, %v835
        %v868 = vpack.c.b16 %v836, %v836
        %v869 = vpack.c.b16 %v837, %v837
        %v870 = vpack.c.b16 %v838, %v838
        %v1415 = vunpack.c.l.b16 %v279
        %v1416 = vunpack.c.h.b16 %v279
        %v1417 = vunpack.c.l.b16 %v280
        %v1418 = vunpack.c.h.b16 %v280
        %v1419 = vunpack.c.l.b16 %v281
        %v1420 = vunpack.c.h.b16 %v281
        %v1421 = vunpack.c.l.b16 %v282
        %v1422 = vunpack.c.h.b16 %v282
        %v1423 = vunpack.c.l.b16 %v283
        %v1424 = vunpack.c.h.b16 %v283
        %v1425 = vunpack.c.l.b16 %v284
        %v1426 = vunpack.c.h.b16 %v284
        %v1427 = vunpack.c.l.b16 %v285
        %v1428 = vunpack.c.h.b16 %v285
        %v1429 = vunpack.c.l.b16 %v286
        %v1430 = vunpack.c.h.b16 %v286
        %v1431 = vunpack.c.l.b16 %v287
        %v1432 = vunpack.c.h.b16 %v287
        %v1433 = vunpack.c.l.b16 %v288
        %v1434 = vunpack.c.h.b16 %v288
        %v1435 = vunpack.c.l.b16 %v289
        %v1436 = vunpack.c.h.b16 %v289
        %v1437 = vunpack.c.l.b16 %v290
        %v1438 = vunpack.c.h.b16 %v290
        %v1439 = vunpack.c.l.b16 %v291
        %v1440 = vunpack.c.h.b16 %v291
        %v1441 = vunpack.c.l.b16 %v292
        %v1442 = vunpack.c.h.b16 %v292
        %v1443 = vunpack.c.l.b16 %v293
        %v1444 = vunpack.c.h.b16 %v293
        %v1445 = vunpack.c.l.b16 %v294
        %v1446 = vunpack.c.h.b16 %v294
        %v1447 = vunpack.c.l.b16 %v295
        %v1448 = vunpack.c.h.b16 %v295
        %v1449 = vunpack.c.l.b16 %v296
        %v1450 = vunpack.c.h.b16 %v296
        %v1451 = vunpack.c.l.b16 %v297
        %v1452 = vunpack.c.h.b16 %v297
        %v1453 = vunpack.c.l.b16 %v298
        %v1454 = vunpack.c.h.b16 %v298
        %v1455 = vunpack.c.l.b16 %v299
        %v1456 = vunpack.c.h.b16 %v299
        %v1457 = vunpack.c.l.b16 %v300
        %v1458 = vunpack.c.h.b16 %v300
        %v1459 = vunpack.c.l.b16 %v301
        %v1460 = vunpack.c.h.b16 %v301
        %v1461 = vunpack.c.l.b16 %v302
        %v1462 = vunpack.c.h.b16 %v302
        %v1463 = vunpack.c.l.b16 %v303
        %v1464 = vunpack.c.h.b16 %v303
        %v1465 = vunpack.c.l.b16 %v304
        %v1466 = vunpack.c.h.b16 %v304
        %v1467 = vunpack.c.l.b16 %v305
        %v1468 = vunpack.c.h.b16 %v305
        %v1469 = vunpack.c.l.b16 %v306
        %v1470 = vunpack.c.h.b16 %v306
        %v1471 = vunpack.c.l.b16 %v307
        %v1472 = vunpack.c.h.b16 %v307
        %v1473 = vunpack.c.l.b16 %v308
        %v1474 = vunpack.c.h.b16 %v308
        %v1475 = vunpack.c.l.b16 %v309
        %v1476 = vunpack.c.h.b16 %v309
        %v1477 = vunpack.c.l.b16 %v310
        %v1478 = vunpack.c.h.b16 %v310
        %v1479 = vunpack.c.l.b16 %v311
        %v1480 = vunpack.c.h.b16 %v311
        %v1481 = vunpack.c.l.b16 %v312
        %v1482 = vunpack.c.h.b16 %v312
        %v1483 = vunpack.c.l.b16 %v313
        %v1484 = vunpack.c.h.b16 %v313
        %v1485 = vunpack.c.l.b16 %v314
        %v1486 = vunpack.c.h.b16 %v314
        %v1487 = vunpack.c.l.b16 %v315
        %v1488 = vunpack.c.h.b16 %v315
        %v1489 = vunpack.c.l.b16 %v316
        %v1490 = vunpack.c.h.b16 %v316
        %v1491 = vunpack.c.l.b16 %v317
        %v1492 = vunpack.c.h.b16 %v317
        %v1493 = vunpack.c.l.b16 %v318
        %v1494 = vunpack.c.h.b16 %v318
        %v1495 = vunpack.c.l.b16 %v319
        %v1496 = vunpack.c.h.b16 %v319
        %v1497 = vunpack.c.l.b16 %v320
        %v1498 = vunpack.c.h.b16 %v320
        %v1499 = vunpack.c.l.b16 %v321
        %v1500 = vunpack.c.h.b16 %v321
        %v1501 = vunpack.c.l.b16 %v322
        %v1502 = vunpack.c.h.b16 %v322
        %v1503 = vunpack.c.l.b16 %v323
        %v1504 = vunpack.c.h.b16 %v323
        %v1505 = vunpack.c.l.b16 %v324
        %v1506 = vunpack.c.h.b16 %v324
        %v1507 = vunpack.c.l.b16 %v325
        %v1508 = vunpack.c.h.b16 %v325
        %v1509 = vunpack.c.l.b16 %v326
        %v1510 = vunpack.c.h.b16 %v326
        %v1511 = vunpack.c.l.b16 %v327
        %v1512 = vunpack.c.h.b16 %v327
        %v1513 = vunpack.c.l.b16 %v328
        %v1514 = vunpack.c.h.b16 %v328
        %v1515 = vunpack.c.l.b16 %v329
        %v1516 = vunpack.c.h.b16 %v329
        %v1517 = vunpack.c.l.b16 %v330
        %v1518 = vunpack.c.h.b16 %v330
        %v1519 = vunpack.c.l.b16 %v331
        %v1520 = vunpack.c.h.b16 %v331
        %v1521 = vunpack.c.l.b16 %v332
        %v1522 = vunpack.c.h.b16 %v332
        %v1523 = vunpack.c.l.b16 %v333
        %v1524 = vunpack.c.h.b16 %v333
        %v1525 = vunpack.c.l.b16 %v334
        %v1526 = vunpack.c.h.b16 %v334
        %v1527 = vunpack.c.l.b16 %v335
        %v1528 = vunpack.c.h.b16 %v335
        %v1529 = vunpack.c.l.b16 %v336
        %v1530 = vunpack.c.h.b16 %v336
        %v1531 = vunpack.c.l.b16 %v337
        %v1532 = vunpack.c.h.b16 %v337
        %v1533 = vunpack.c.l.b16 %v338
        %v1534 = vunpack.c.h.b16 %v338
        %v1535 = vunpack.c.l.b16 %v339
        %v1536 = vunpack.c.h.b16 %v339
        %v1537 = vunpack.c.l.b16 %v340
        %v1538 = vunpack.c.h.b16 %v340
        %v1539 = vunpack.c.l.b16 %v341
        %v1540 = vunpack.c.h.b16 %v341
        %v1541 = vunpack.c.l.b16 %v342
        %v1542 = vunpack.c.h.b16 %v342
        %v1543 = vunpack.c.l.b16 %v343
        %v1544 = vunpack.c.h.b16 %v343
        %v1545 = vunpack.c.l.b16 %v344
        %v1546 = vunpack.c.h.b16 %v344
        %v1547 = vunpack.c.l.b16 %v345
        %v1548 = vunpack.c.h.b16 %v345
        %v1549 = vunpack.c.l.b16 %v346
        %v1550 = vunpack.c.h.b16 %v346
        %v1551 = vunpack.c.l.b16 %v347
        %v1552 = vunpack.c.h.b16 %v347
        %v1553 = vunpack.c.l.b16 %v348
        %v1554 = vunpack.c.h.b16 %v348
        %v1555 = vunpack.c.l.b16 %v349
        %v1556 = vunpack.c.h.b16 %v349
        %v1557 = vunpack.c.l.b16 %v350
        %v1558 = vunpack.c.h.b16 %v350
        %v1559 = vunpack.c.l.b16 %v351
        %v1560 = vunpack.c.h.b16 %v351
        %v1561 = vunpack.c.l.b16 %v352
        %v1562 = vunpack.c.h.b16 %v352
        %v1563 = vunpack.c.l.b16 %v353
        %v1564 = vunpack.c.h.b16 %v353
        %v1565 = vunpack.c.l.b16 %v354
        %v1566 = vunpack.c.h.b16 %v354
        %v1567 = vunpack.c.l.b16 %v355
        %v1568 = vunpack.c.h.b16 %v355
        %v1569 = vunpack.c.l.b16 %v356
        %v1570 = vunpack.c.h.b16 %v356
        %v1571 = vunpack.c.l.b16 %v357
        %v1572 = vunpack.c.h.b16 %v357
        %v1573 = vunpack.c.l.b16 %v358
        %v1574 = vunpack.c.h.b16 %v358
        %v1575 = vunpack.c.l.b16 %v359
        %v1576 = vunpack.c.h.b16 %v359
        %v1577 = vunpack.c.l.b16 %v360
        %v1578 = vunpack.c.h.b16 %v360
        %v1579 = vunpack.c.l.b16 %v361
        %v1580 = vunpack.c.h.b16 %v361
        %v1581 = vunpack.c.l.b16 %v362
        %v1582 = vunpack.c.h.b16 %v362
        %v1583 = vunpack.c.l.b16 %v363
        %v1584 = vunpack.c.h.b16 %v363
        %v1585 = vunpack.c.l.b16 %v364
        %v1586 = vunpack.c.h.b16 %v364
        %v1587 = vunpack.c.l.b16 %v365
        %v1588 = vunpack.c.h.b16 %v365
        %v1589 = vunpack.c.l.b16 %v366
        %v1590 = vunpack.c.h.b16 %v366
        %v1591 = vunpack.c.l.b16 %v367
        %v1592 = vunpack.c.h.b16 %v367
        %v1593 = vunpack.c.l.b16 %v368
        %v1594 = vunpack.c.h.b16 %v368
        %v1595 = vunpack.c.l.b16 %v369
        %v1596 = vunpack.c.h.b16 %v369
        %v1597 = vunpack.c.l.b16 %v370
        %v1598 = vunpack.c.h.b16 %v370
        %v1599 = vunpack.c.l.b16 %v371
        %v1600 = vunpack.c.h.b16 %v371
        %v1601 = vunpack.c.l.b16 %v372
        %v1602 = vunpack.c.h.b16 %v372
        %v1603 = vunpack.c.l.b16 %v373
        %v1604 = vunpack.c.h.b16 %v373
        %v1605 = vunpack.c.l.b16 %v374
        %v1606 = vunpack.c.h.b16 %v374
        %v1607 = vunpack.c.l.b16 %v375
        %v1608 = vunpack.c.h.b16 %v375
        %v1609 = vunpack.c.l.b16 %v376
        %v1610 = vunpack.c.h.b16 %v376
        %v1611 = vunpack.c.l.b16 %v377
        %v1612 = vunpack.c.h.b16 %v377
        %v1613 = vunpack.c.l.b16 %v378
        %v1614 = vunpack.c.h.b16 %v378
        %v1615 = vunpack.c.l.b16 %v379
        %v1616 = vunpack.c.h.b16 %v379
        %v1617 = vunpack.c.l.b16 %v380
        %v1618 = vunpack.c.h.b16 %v380
        %v1619 = vunpack.c.l.b16 %v381
        %v1620 = vunpack.c.h.b16 %v381
        %v1621 = vunpack.c.l.b16 %v382
        %v1622 = vunpack.c.h.b16 %v382
        %v1623 = vunpack.c.l.b16 %v383
        %v1624 = vunpack.c.h.b16 %v383
        %v1625 = vunpack.c.l.b16 %v384
        %v1626 = vunpack.c.h.b16 %v384
        %v1627 = vunpack.c.l.b16 %v385
        %v1628 = vunpack.c.h.b16 %v385
        %v1629 = vunpack.c.l.b16 %v386
        %v1630 = vunpack.c.h.b16 %v386
        %v1631 = vunpack.c.l.b16 %v387
        %v1632 = vunpack.c.h.b16 %v387
        %v1633 = vunpack.c.l.b16 %v388
        %v1634 = vunpack.c.h.b16 %v388
        %v1635 = vunpack.c.l.b16 %v389
        %v1636 = vunpack.c.h.b16 %v389
        %v1637 = vunpack.c.l.b16 %v390
        %v1638 = vunpack.c.h.b16 %v390
        %v1639 = vunpack.c.l.b16 %v391
        %v1640 = vunpack.c.h.b16 %v391
        %v1641 = vunpack.c.l.b16 %v392
        %v1642 = vunpack.c.h.b16 %v392
        %v1643 = vunpack.c.l.b16 %v393
        %v1644 = vunpack.c.h.b16 %v393
        %v1645 = vunpack.c.l.b16 %v394
        %v1646 = vunpack.c.h.b16 %v394
        %v1647 = vunpack.c.l.b16 %v395
        %v1648 = vunpack.c.h.b16 %v395
        %v1649 = vunpack.c.l.b16 %v396
        %v1650 = vunpack.c.h.b16 %v396
        %v1651 = vunpack.c.l.b16 %v397
        %v1652 = vunpack.c.h.b16 %v397
        %v1653 = vunpack.c.l.b16 %v398
        %v1654 = vunpack.c.h.b16 %v398
        %v1655 = vunpack.c.l.b16 %v399
        %v1656 = vunpack.c.h.b16 %v399
        %v1657 = vunpack.c.l.b16 %v400
        %v1658 = vunpack.c.h.b16 %v400
        %v1659 = vunpack.c.l.b16 %v401
        %v1660 = vunpack.c.h.b16 %v401
        %v1661 = vunpack.c.l.b16 %v402
        %v1662 = vunpack.c.h.b16 %v402
        %v1663 = vunpack.c.l.b16 %v403
        %v1664 = vunpack.c.h.b16 %v403
        %v1665 = vunpack.c.l.b16 %v404
        %v1666 = vunpack.c.h.b16 %v404
        %v1667 = vunpack.c.l.b16 %v405
        %v1668 = vunpack.c.h.b16 %v405
        %v1669 = vunpack.c.l.b16 %v406
        %v1670 = vunpack.c.h.b16 %v406
        %v1671 = vunpack.c.l.b16 %v407
        %v1672 = vunpack.c.h.b16 %v407
        %v1673 = vunpack.c.l.b16 %v408
        %v1674 = vunpack.c.h.b16 %v408
        %v1675 = vunpack.c.l.b16 %v409
        %v1676 = vunpack.c.h.b16 %v409
        %v1677 = vunpack.c.l.b16 %v410
        %v1678 = vunpack.c.h.b16 %v410
        %v1679 = vunpack.c.l.b16 %v411
        %v1680 = vunpack.c.h.b16 %v411
        %v1681 = vunpack.c.l.b16 %v412
        %v1682 = vunpack.c.h.b16 %v412
        %v1683 = vunpack.c.l.b16 %v413
        %v1684 = vunpack.c.h.b16 %v413
        %v1685 = vunpack.c.l.b16 %v414
        %v1686 = vunpack.c.h.b16 %v414
        %v1687 = vunpack.c.l.b16 %v415
        %v1688 = vunpack.c.h.b16 %v415
        %v1689 = vunpack.c.l.b16 %v416
        %v1690 = vunpack.c.h.b16 %v416
        %v1691 = vunpack.c.l.b16 %v417
        %v1692 = vunpack.c.h.b16 %v417
        %v1693 = vunpack.c.l.b16 %v418
        %v1694 = vunpack.c.h.b16 %v418
        %v1695 = vunpack.c.l.b16 %v419
        %v1696 = vunpack.c.h.b16 %v419
        %v1697 = vunpack.c.l.b16 %v420
        %v1698 = vunpack.c.h.b16 %v420
        %v1699 = vunpack.c.l.b16 %v421
        %v1700 = vunpack.c.h.b16 %v421
        %v1701 = vunpack.c.l.b16 %v422
        %v1702 = vunpack.c.h.b16 %v422
        %v1703 = vunpack.c.l.b16 %v423
        %v1704 = vunpack.c.h.b16 %v423
        %v1705 = vunpack.c.l.b16 %v424
        %v1706 = vunpack.c.h.b16 %v424
        %v1707 = vunpack.c.l.b16 %v425
        %v1708 = vunpack.c.h.b16 %v425
        %v1709 = vunpack.c.l.b16 %v426
        %v1710 = vunpack.c.h.b16 %v426
        %v1711 = vunpack.c.l.b16 %v427
        %v1712 = vunpack.c.h.b16 %v427
        %v1713 = vunpack.c.l.b16 %v428
        %v1714 = vunpack.c.h.b16 %v428
        %v1715 = vunpack.c.l.b16 %v429
        %v1716 = vunpack.c.h.b16 %v429
        %v1717 = vunpack.c.l.b16 %v430
        %v1718 = vunpack.c.h.b16 %v430
        %v1719 = vunpack.c.l.b16 %v431
        %v1720 = vunpack.c.h.b16 %v431
        %v1721 = vunpack.c.l.b16 %v432
        %v1722 = vunpack.c.h.b16 %v432
        %v1723 = vunpack.c.l.b16 %v433
        %v1724 = vunpack.c.h.b16 %v433
        %v1725 = vunpack.c.l.b16 %v434
        %v1726 = vunpack.c.h.b16 %v434
        %v1727 = vunpack.c.l.b16 %v435
        %v1728 = vunpack.c.h.b16 %v435
        %v1729 = vunpack.c.l.b16 %v436
        %v1730 = vunpack.c.h.b16 %v436
        %v1731 = vunpack.c.l.b16 %v437
        %v1732 = vunpack.c.h.b16 %v437
        %v1733 = vunpack.c.l.b16 %v438
        %v1734 = vunpack.c.h.b16 %v438
        %v1735 = vunpack.c.l.b16 %v439
        %v1736 = vunpack.c.h.b16 %v439
        %v1737 = vunpack.c.l.b16 %v440
        %v1738 = vunpack.c.h.b16 %v440
        %v1739 = vunpack.c.l.b16 %v441
        %v1740 = vunpack.c.h.b16 %v441
        %v1741 = vunpack.c.l.b16 %v442
        %v1742 = vunpack.c.h.b16 %v442
        %v1743 = vunpack.c.l.b16 %v443
        %v1744 = vunpack.c.h.b16 %v443
        %v1745 = vunpack.c.l.b16 %v444
        %v1746 = vunpack.c.h.b16 %v444
        %v1747 = vunpack.c.l.b16 %v445
        %v1748 = vunpack.c.h.b16 %v445
        %v1749 = vunpack.c.l.b16 %v446
        %v1750 = vunpack.c.h.b16 %v446
        %v1751 = vunpack.c.l.b16 %v447
        %v1752 = vunpack.c.h.b16 %v447
        %v1753 = vunpack.c.l.b16 %v448
        %v1754 = vunpack.c.h.b16 %v448
        %v1755 = vunpack.c.l.b16 %v449
        %v1756 = vunpack.c.h.b16 %v449
        %v1757 = vunpack.c.l.b16 %v450
        %v1758 = vunpack.c.h.b16 %v450
        %v1759 = vunpack.c.l.b16 %v451
        %v1760 = vunpack.c.h.b16 %v451
        %v1761 = vunpack.c.l.b16 %v452
        %v1762 = vunpack.c.h.b16 %v452
        %v1763 = vunpack.c.l.b16 %v453
        %v1764 = vunpack.c.h.b16 %v453
        %v1765 = vunpack.c.l.b16 %v454
        %v1766 = vunpack.c.h.b16 %v454
        %v1767 = vunpack.c.l.b16 %v455
        %v1768 = vunpack.c.h.b16 %v455
        %v1769 = vunpack.c.l.b16 %v456
        %v1770 = vunpack.c.h.b16 %v456
        %v1771 = vunpack.c.l.b16 %v457
        %v1772 = vunpack.c.h.b16 %v457
        %v1773 = vunpack.c.l.b16 %v458
        %v1774 = vunpack.c.h.b16 %v458
        %v1775 = vunpack.c.l.b16 %v459
        %v1776 = vunpack.c.h.b16 %v459
        %v1777 = vunpack.c.l.b16 %v460
        %v1778 = vunpack.c.h.b16 %v460
        %v1779 = vunpack.c.l.b16 %v461
        %v1780 = vunpack.c.h.b16 %v461
        %v1781 = vunpack.c.l.b16 %v462
        %v1782 = vunpack.c.h.b16 %v462
        %v1783 = vunpack.c.l.b16 %v463
        %v1784 = vunpack.c.h.b16 %v463
        %v1785 = vunpack.c.l.b16 %v464
        %v1786 = vunpack.c.h.b16 %v464
        %v1787 = vunpack.c.l.b16 %v465
        %v1788 = vunpack.c.h.b16 %v465
        %v1789 = vunpack.c.l.b16 %v466
        %v1790 = vunpack.c.h.b16 %v466
        %v1791 = vunpack.c.l.b16 %v467
        %v1792 = vunpack.c.h.b16 %v467
        %v1793 = vunpack.c.l.b16 %v468
        %v1794 = vunpack.c.h.b16 %v468
        %v1795 = vunpack.c.l.b16 %v469
        %v1796 = vunpack.c.h.b16 %v469
        %v1797 = vunpack.c.l.b16 %v470
        %v1798 = vunpack.c.h.b16 %v470
        %v1799 = vunpack.c.l.b16 %v471
        %v1800 = vunpack.c.h.b16 %v471
        %v1801 = vunpack.c.l.b16 %v472
        %v1802 = vunpack.c.h.b16 %v472
        %v1803 = vunpack.c.l.b16 %v473
        %v1804 = vunpack.c.h.b16 %v473
        %v1805 = vunpack.c.l.b16 %v474
        %v1806 = vunpack.c.h.b16 %v474
        %v1807 = vunpack.c.l.b16 %v475
        %v1808 = vunpack.c.h.b16 %v475
        %v1809 = vunpack.c.l.b16 %v476
        %v1810 = vunpack.c.h.b16 %v476
        %v1811 = vunpack.c.l.b16 %v477
        %v1812 = vunpack.c.h.b16 %v477
        %v1813 = vunpack.c.l.b16 %v478
        %v1814 = vunpack.c.h.b16 %v478
        %v1815 = vunpack.c.l.b16 %v479
        %v1816 = vunpack.c.h.b16 %v479
        %v1817 = vunpack.c.l.b16 %v480
        %v1818 = vunpack.c.h.b16 %v480
        %v1819 = vunpack.c.l.b16 %v481
        %v1820 = vunpack.c.h.b16 %v481
        %v1821 = vunpack.c.l.b16 %v482
        %v1822 = vunpack.c.h.b16 %v482
        %v1823 = vunpack.c.l.b16 %v483
        %v1824 = vunpack.c.h.b16 %v483
        %v1825 = vunpack.c.l.b16 %v484
        %v1826 = vunpack.c.h.b16 %v484
        %v1827 = vunpack.c.l.b16 %v485
        %v1828 = vunpack.c.h.b16 %v485
        %v1829 = vunpack.c.l.b16 %v486
        %v1830 = vunpack.c.h.b16 %v486
        %v1831 = vunpack.c.l.b16 %v487
        %v1832 = vunpack.c.h.b16 %v487
        %v1833 = vunpack.c.l.b16 %v488
        %v1834 = vunpack.c.h.b16 %v488
        %v1835 = vunpack.c.l.b16 %v489
        %v1836 = vunpack.c.h.b16 %v489
        %v1837 = vunpack.c.l.b16 %v490
        %v1838 = vunpack.c.h.b16 %v490
        %v1839 = vunpack.c.l.b16 %v491
        %v1840 = vunpack.c.h.b16 %v491
        %v1841 = vunpack.c.l.b16 %v492
        %v1842 = vunpack.c.h.b16 %v492
        %v1843 = vunpack.c.l.b16 %v493
        %v1844 = vunpack.c.h.b16 %v493
        %v1845 = vunpack.c.l.b16 %v494
        %v1846 = vunpack.c.h.b16 %v494
        %v1847 = vunpack.c.l.b16 %v495
        %v1848 = vunpack.c.h.b16 %v495
        %v1849 = vunpack.c.l.b16 %v496
        %v1850 = vunpack.c.h.b16 %v496
        %v1851 = vunpack.c.l.b16 %v497
        %v1852 = vunpack.c.h.b16 %v497
        %v1853 = vunpack.c.l.b16 %v498
        %v1854 = vunpack.c.h.b16 %v498
        %v1855 = vunpack.c.l.b16 %v499
        %v1856 = vunpack.c.h.b16 %v499
        %v1857 = vunpack.c.l.b16 %v500
        %v1858 = vunpack.c.h.b16 %v500
        %v1859 = vunpack.c.l.b16 %v501
        %v1860 = vunpack.c.h.b16 %v501
        %v1861 = vunpack.c.l.b16 %v502
        %v1862 = vunpack.c.h.b16 %v502
        %v1863 = vunpack.c.l.b16 %v503
        %v1864 = vunpack.c.h.b16 %v503
        %v1865 = vunpack.c.l.b16 %v504
        %v1866 = vunpack.c.h.b16 %v504
        %v1867 = vunpack.c.l.b16 %v505
        %v1868 = vunpack.c.h.b16 %v505
        %v1869 = vunpack.c.l.b16 %v506
        %v1870 = vunpack.c.h.b16 %v506
        %v1871 = vunpack.c.l.b16 %v507
        %v1872 = vunpack.c.h.b16 %v507
        %v1873 = vunpack.c.l.b16 %v508
        %v1874 = vunpack.c.h.b16 %v508
        %v1875 = vunpack.c.l.b16 %v509
        %v1876 = vunpack.c.h.b16 %v509
        %v1877 = vunpack.c.l.b16 %v510
        %v1878 = vunpack.c.h.b16 %v510
        %v1879 = vunpack.c.l.b16 %v511
        %v1880 = vunpack.c.h.b16 %v511
        %v1881 = vunpack.c.l.b16 %v512
        %v1882 = vunpack.c.h.b16 %v512
        %v1883 = vunpack.c.l.b16 %v513
        %v1884 = vunpack.c.h.b16 %v513
        %v1885 = vunpack.c.l.b16 %v514
        %v1886 = vunpack.c.h.b16 %v514
        %v1887 = vunpack.c.l.b16 %v515
        %v1888 = vunpack.c.h.b16 %v515
        %v1889 = vunpack.c.l.b16 %v516
        %v1890 = vunpack.c.h.b16 %v516
        %v1891 = vunpack.c.l.b16 %v517
        %v1892 = vunpack.c.h.b16 %v517
        %v1893 = vunpack.c.l.b16 %v518
        %v1894 = vunpack.c.h.b16 %v518
        %v1895 = vunpack.c.l.b16 %v519
        %v1896 = vunpack.c.h.b16 %v519
        %v1897 = vunpack.c.l.b16 %v520
        %v1898 = vunpack.c.h.b16 %v520
        %v1899 = vunpack.c.l.b16 %v521
        %v1900 = vunpack.c.h.b16 %v521
        %v1901 = vunpack.c.l.b16 %v522
        %v1902 = vunpack.c.h.b16 %v522
        %v1903 = vunpack.c.l.b16 %v523
        %v1904 = vunpack.c.h.b16 %v523
        %v1905 = vunpack.c.l.b16 %v524
        %v1906 = vunpack.c.h.b16 %v524
        %v1907 = vunpack.c.l.b16 %v525
        %v1908 = vunpack.c.h.b16 %v525
        %v1909 = vunpack.c.l.b16 %v526
        %v1910 = vunpack.c.h.b16 %v526
        %v1911 = vunpack.c.l.b16 %v527
        %v1912 = vunpack.c.h.b16 %v527
        %v1913 = vunpack.c.l.b16 %v528
        %v1914 = vunpack.c.h.b16 %v528
        %v1915 = vunpack.c.l.b16 %v529
        %v1916 = vunpack.c.h.b16 %v529
        %v1917 = vunpack.c.l.b16 %v530
        %v1918 = vunpack.c.h.b16 %v530
        %v1919 = vunpack.c.l.b16 %v531
        %v1920 = vunpack.c.h.b16 %v531
        %v1921 = vunpack.c.l.b16 %v532
        %v1922 = vunpack.c.h.b16 %v532
        %v1923 = vunpack.c.l.b16 %v533
        %v1924 = vunpack.c.h.b16 %v533
        %v1925 = vunpack.c.l.b16 %v534
        %v1926 = vunpack.c.h.b16 %v534
        %v1927 = vunpack.c.l.b16 %v535
        %v1928 = vunpack.c.h.b16 %v535
        %v1929 = vunpack.c.l.b16 %v536
        %v1930 = vunpack.c.h.b16 %v536
        %v1931 = vunpack.c.l.b16 %v537
        %v1932 = vunpack.c.h.b16 %v537
        %v1933 = vunpack.c.l.b16 %v538
        %v1934 = vunpack.c.h.b16 %v538
        %v1935 = vunpack.c.l.b16 %v539
        %v1936 = vunpack.c.h.b16 %v539
        %v1937 = vunpack.c.l.b16 %v540
        %v1938 = vunpack.c.h.b16 %v540
        %v1939 = vunpack.c.l.b16 %v541
        %v1940 = vunpack.c.h.b16 %v541
        %v1941 = vunpack.c.l.b16 %v542
        %v1942 = vunpack.c.h.b16 %v542
        %v1943 = vunpack.c.l.b16 %v543
        %v1944 = vunpack.c.h.b16 %v543
        %v1945 = vunpack.c.l.b16 %v544
        %v1946 = vunpack.c.h.b16 %v544
        %v1947 = vunpack.c.l.b16 %v545
        %v1948 = vunpack.c.h.b16 %v545
        %v1949 = vunpack.c.l.b16 %v546
        %v1950 = vunpack.c.h.b16 %v546
        %v1951 = vunpack.c.l.b16 %v547
        %v1952 = vunpack.c.h.b16 %v547
        %v1953 = vunpack.c.l.b16 %v548
        %v1954 = vunpack.c.h.b16 %v548
        %v1955 = vunpack.c.l.b16 %v549
        %v1956 = vunpack.c.h.b16 %v549
        %v1957 = vunpack.c.l.b16 %v550
        %v1958 = vunpack.c.h.b16 %v550
        %v1959 = vunpack.c.l.b16 %v551
        %v1960 = vunpack.c.h.b16 %v551
        %v1961 = vunpack.c.l.b16 %v552
        %v1962 = vunpack.c.h.b16 %v552
        %v1963 = vunpack.c.l.b16 %v553
        %v1964 = vunpack.c.h.b16 %v553
        %v1965 = vunpack.c.l.b16 %v554
        %v1966 = vunpack.c.h.b16 %v554
        %v1967 = vunpack.c.l.b16 %v555
        %v1968 = vunpack.c.h.b16 %v555
        %v1969 = vunpack.c.l.b16 %v556
        %v1970 = vunpack.c.h.b16 %v556
        %v1971 = vunpack.c.l.b16 %v557
        %v1972 = vunpack.c.h.b16 %v557
        %v1973 = vunpack.c.l.b16 %v558
        %v1974 = vunpack.c.h.b16 %v558
        %v1975 = vunpack.c.l.b16 %v559
        %v1976 = vunpack.c.h.b16 %v559
        %v1977 = vunpack.c.l.b16 %v560
        %v1978 = vunpack.c.h.b16 %v560
        %v1979 = vunpack.c.l.b16 %v561
        %v1980 = vunpack.c.h.b16 %v561
        %v1981 = vunpack.c.l.b16 %v562
        %v1982 = vunpack.c.h.b16 %v562
        %v1983 = vunpack.c.l.b16 %v563
        %v1984 = vunpack.c.h.b16 %v563
        %v1985 = vunpack.c.l.b16 %v564
        %v1986 = vunpack.c.h.b16 %v564
        %v1987 = vunpack.c.l.b16 %v565
        %v1988 = vunpack.c.h.b16 %v565
        %v1989 = vunpack.c.l.b16 %v566
        %v1990 = vunpack.c.h.b16 %v566
        %v1991 = vunpack.c.l.b16 %v567
        %v1992 = vunpack.c.h.b16 %v567
        %v1993 = vunpack.c.l.b16 %v568
        %v1994 = vunpack.c.h.b16 %v568
        %v1995 = vunpack.c.l.b16 %v569
        %v1996 = vunpack.c.h.b16 %v569
        %v1997 = vunpack.c.l.b16 %v570
        %v1998 = vunpack.c.h.b16 %v570
        %v1999 = vunpack.c.l.b16 %v571
        %v2000 = vunpack.c.h.b16 %v571
        %v2001 = vunpack.c.l.b16 %v572
        %v2002 = vunpack.c.h.b16 %v572
        %v2003 = vunpack.c.l.b16 %v573
        %v2004 = vunpack.c.h.b16 %v573
        %v2005 = vunpack.c.l.b16 %v574
        %v2006 = vunpack.c.h.b16 %v574
        %v2007 = vunpack.c.l.b16 %v575
        %v2008 = vunpack.c.h.b16 %v575
        %v2009 = vunpack.c.l.b16 %v576
        %v2010 = vunpack.c.h.b16 %v576
        %v2011 = vunpack.c.l.b16 %v577
        %v2012 = vunpack.c.h.b16 %v577
        %v2013 = vunpack.c.l.b16 %v578
        %v2014 = vunpack.c.h.b16 %v578
        %v2015 = vunpack.c.l.b16 %v579
        %v2016 = vunpack.c.h.b16 %v579
        %v2017 = vunpack.c.l.b16 %v580
        %v2018 = vunpack.c.h.b16 %v580
        %v2019 = vunpack.c.l.b16 %v581
        %v2020 = vunpack.c.h.b16 %v581
        %v2021 = vunpack.c.l.b16 %v582
        %v2022 = vunpack.c.h.b16 %v582
        %v2023 = vunpack.c.l.b16 %v583
        %v2024 = vunpack.c.h.b16 %v583
        %v2025 = vunpack.c.l.b16 %v584
        %v2026 = vunpack.c.h.b16 %v584
        %v2027 = vunpack.c.l.b16 %v585
        %v2028 = vunpack.c.h.b16 %v585
        %v2029 = vunpack.c.l.b16 %v586
        %v2030 = vunpack.c.h.b16 %v586
        %v2031 = vunpack.c.l.b16 %v587
        %v2032 = vunpack.c.h.b16 %v587
        %v2033 = vunpack.c.l.b16 %v588
        %v2034 = vunpack.c.h.b16 %v588
        %v2035 = vunpack.c.l.b16 %v589
        %v2036 = vunpack.c.h.b16 %v589
        %v2037 = vunpack.c.l.b16 %v590
        %v2038 = vunpack.c.h.b16 %v590
        %v2039 = vunpack.c.l.b16 %v591
        %v2040 = vunpack.c.h.b16 %v591
        %v2041 = vunpack.c.l.b16 %v592
        %v2042 = vunpack.c.h.b16 %v592
        %v2043 = vunpack.c.l.b16 %v593
        %v2044 = vunpack.c.h.b16 %v593
        %v2045 = vunpack.c.l.b16 %v594
        %v2046 = vunpack.c.h.b16 %v594
        %v2047 = vunpack.c.l.b16 %v595
        %v2048 = vunpack.c.h.b16 %v595
        %v2049 = vunpack.c.l.b16 %v596
        %v2050 = vunpack.c.h.b16 %v596
        %v2051 = vunpack.c.l.b16 %v597
        %v2052 = vunpack.c.h.b16 %v597
        %v2053 = vunpack.c.l.b16 %v598
        %v2054 = vunpack.c.h.b16 %v598
        %v2055 = vunpack.c.l.b16 %v599
        %v2056 = vunpack.c.h.b16 %v599
        %v2057 = vunpack.c.l.b16 %v600
        %v2058 = vunpack.c.h.b16 %v600
        %v2059 = vunpack.c.l.b16 %v601
        %v2060 = vunpack.c.h.b16 %v601
        %v2061 = vunpack.c.l.b16 %v602
        %v2062 = vunpack.c.h.b16 %v602
        %v2063 = vunpack.c.l.b16 %v603
        %v2064 = vunpack.c.h.b16 %v603
        %v2065 = vunpack.c.l.b16 %v604
        %v2066 = vunpack.c.h.b16 %v604
        %v2067 = vunpack.c.l.b16 %v605
        %v2068 = vunpack.c.h.b16 %v605
        %v2069 = vunpack.c.l.b16 %v606
        %v2070 = vunpack.c.h.b16 %v606
        %v2071 = vunpack.c.l.b16 %v607
        %v2072 = vunpack.c.h.b16 %v607
        %v2073 = vunpack.c.l.b16 %v608
        %v2074 = vunpack.c.h.b16 %v608
        %v2075 = vunpack.c.l.b16 %v609
        %v2076 = vunpack.c.h.b16 %v609
        %v2077 = vunpack.c.l.b16 %v610
        %v2078 = vunpack.c.h.b16 %v610
        %v2079 = vunpack.c.l.b16 %v611
        %v2080 = vunpack.c.h.b16 %v611
        %v2081 = vunpack.c.l.b16 %v612
        %v2082 = vunpack.c.h.b16 %v612
        %v2083 = vunpack.c.l.b16 %v613
        %v2084 = vunpack.c.h.b16 %v613
        %v2085 = vunpack.c.l.b16 %v614
        %v2086 = vunpack.c.h.b16 %v614
        %v2087 = vunpack.c.l.b16 %v615
        %v2088 = vunpack.c.h.b16 %v615
        %v2089 = vunpack.c.l.b16 %v616
        %v2090 = vunpack.c.h.b16 %v616
        %v2091 = vunpack.c.l.b16 %v617
        %v2092 = vunpack.c.h.b16 %v617
        %v2093 = vunpack.c.l.b16 %v618
        %v2094 = vunpack.c.h.b16 %v618
        %v2095 = vunpack.c.l.b16 %v619
        %v2096 = vunpack.c.h.b16 %v619
        %v2097 = vunpack.c.l.b16 %v620
        %v2098 = vunpack.c.h.b16 %v620
        %v2099 = vunpack.c.l.b16 %v621
        %v2100 = vunpack.c.h.b16 %v621
        %v2101 = vunpack.c.l.b16 %v622
        %v2102 = vunpack.c.h.b16 %v622
        %v2103 = vunpack.c.l.b16 %v623
        %v2104 = vunpack.c.h.b16 %v623
        %v2105 = vunpack.c.l.b16 %v624
        %v2106 = vunpack.c.h.b16 %v624
        %v2107 = vunpack.c.l.b16 %v625
        %v2108 = vunpack.c.h.b16 %v625
        %v2109 = vunpack.c.l.b16 %v626
        %v2110 = vunpack.c.h.b16 %v626
        %v2111 = vunpack.c.l.b16 %v627
        %v2112 = vunpack.c.h.b16 %v627
        %v2113 = vunpack.c.l.b16 %v628
        %v2114 = vunpack.c.h.b16 %v628
        %v2115 = vunpack.c.l.b16 %v629
        %v2116 = vunpack.c.h.b16 %v629
        %v2117 = vunpack.c.l.b16 %v630
        %v2118 = vunpack.c.h.b16 %v630
        %v2119 = vunpack.c.l.b16 %v631
        %v2120 = vunpack.c.h.b16 %v631
        %v2121 = vunpack.c.l.b16 %v632
        %v2122 = vunpack.c.h.b16 %v632
        %v2123 = vunpack.c.l.b16 %v633
        %v2124 = vunpack.c.h.b16 %v633
        %v2125 = vunpack.c.l.b16 %v634
        %v2126 = vunpack.c.h.b16 %v634
        %v2127 = vunpack.c.l.b16 %v635
        %v2128 = vunpack.c.h.b16 %v635
        %v2129 = vunpack.c.l.b16 %v636
        %v2130 = vunpack.c.h.b16 %v636
        %v2131 = vunpack.c.l.b16 %v637
        %v2132 = vunpack.c.h.b16 %v637
        %v2133 = vunpack.c.l.b16 %v638
        %v2134 = vunpack.c.h.b16 %v638
        %v2135 = vunpack.c.l.b16 %v639
        %v2136 = vunpack.c.h.b16 %v639
        %v2137 = vunpack.c.l.b16 %v640
        %v2138 = vunpack.c.h.b16 %v640
        %v2139 = vunpack.c.l.b16 %v641
        %v2140 = vunpack.c.h.b16 %v641
        %v2141 = vunpack.c.l.b16 %v642
        %v2142 = vunpack.c.h.b16 %v642
        %v2143 = vunpack.c.l.b16 %v643
        %v2144 = vunpack.c.h.b16 %v643
        %v2145 = vunpack.c.l.b16 %v644
        %v2146 = vunpack.c.h.b16 %v644
        %v2147 = vunpack.c.l.b16 %v645
        %v2148 = vunpack.c.h.b16 %v645
        %v2149 = vunpack.c.l.b16 %v646
        %v2150 = vunpack.c.h.b16 %v646
        %v2151 = vunpack.c.l.b16 %v647
        %v2152 = vunpack.c.h.b16 %v647
        %v2153 = vunpack.c.l.b16 %v648
        %v2154 = vunpack.c.h.b16 %v648
        %v2155 = vunpack.c.l.b16 %v649
        %v2156 = vunpack.c.h.b16 %v649
        %v2157 = vunpack.c.l.b16 %v650
        %v2158 = vunpack.c.h.b16 %v650
        %v2159 = vunpack.c.l.b16 %v651
        %v2160 = vunpack.c.h.b16 %v651
        %v2161 = vunpack.c.l.b16 %v652
        %v2162 = vunpack.c.h.b16 %v652
        %v2163 = vunpack.c.l.b16 %v653
        %v2164 = vunpack.c.h.b16 %v653
        %v2165 = vunpack.c.l.b16 %v654
        %v2166 = vunpack.c.h.b16 %v654
        %v2167 = vunpack.c.l.b16 %v655
        %v2168 = vunpack.c.h.b16 %v655
        %v2169 = vunpack.c.l.b16 %v656
        %v2170 = vunpack.c.h.b16 %v656
        %v2171 = vunpack.c.l.b16 %v657
        %v2172 = vunpack.c.h.b16 %v657
        %v2173 = vunpack.c.l.b16 %v658
        %v2174 = vunpack.c.h.b16 %v658
        %v2175 = vunpack.c.l.b16 %v659
        %v2176 = vunpack.c.h.b16 %v659
        %v2177 = vunpack.c.l.b16 %v660
        %v2178 = vunpack.c.h.b16 %v660
        %v2179 = vunpack.c.l.b16 %v661
        %v2180 = vunpack.c.h.b16 %v661
        %v2181 = vunpack.c.l.b16 %v662
        %v2182 = vunpack.c.h.b16 %v662
        %v2183 = vunpack.c.l.b16 %v663
        %v2184 = vunpack.c.h.b16 %v663
        %v2185 = vunpack.c.l.b16 %v664
        %v2186 = vunpack.c.h.b16 %v664
        %v2187 = vunpack.c.l.b16 %v665
        %v2188 = vunpack.c.h.b16 %v665
        %v2189 = vunpack.c.l.b16 %v666
        %v2190 = vunpack.c.h.b16 %v666
        %v2191 = vunpack.c.l.b16 %v667
        %v2192 = vunpack.c.h.b16 %v667
        %v2193 = vunpack.c.l.b16 %v668
        %v2194 = vunpack.c.h.b16 %v668
        %v2195 = vunpack.c.l.b16 %v669
        %v2196 = vunpack.c.h.b16 %v669
        %v2197 = vunpack.c.l.b16 %v670
        %v2198 = vunpack.c.h.b16 %v670
        %v2199 = vunpack.c.l.b16 %v671
        %v2200 = vunpack.c.h.b16 %v671
        %v2201 = vunpack.c.l.b16 %v672
        %v2202 = vunpack.c.h.b16 %v672
        %v2203 = vunpack.c.l.b16 %v673
        %v2204 = vunpack.c.h.b16 %v673
        %v2205 = vunpack.c.l.b16 %v674
        %v2206 = vunpack.c.h.b16 %v674
        %v2207 = vunpack.c.l.b16 %v675
        %v2208 = vunpack.c.h.b16 %v675
        %v2209 = vunpack.c.l.b16 %v676
        %v2210 = vunpack.c.h.b16 %v676
        %v2211 = vunpack.c.l.b16 %v677
        %v2212 = vunpack.c.h.b16 %v677
        %v2213 = vunpack.c.l.b16 %v678
        %v2214 = vunpack.c.h.b16 %v678
        %v2215 = vunpack.c.l.b16 %v679
        %v2216 = vunpack.c.h.b16 %v679
        %v2217 = vunpack.c.l.b16 %v680
        %v2218 = vunpack.c.h.b16 %v680
        %v2219 = vunpack.c.l.b16 %v681
        %v2220 = vunpack.c.h.b16 %v681
        %v2221 = vunpack.c.l.b16 %v682
        %v2222 = vunpack.c.h.b16 %v682
        %v2223 = vunpack.c.l.b16 %v683
        %v2224 = vunpack.c.h.b16 %v683
        %v2225 = vunpack.c.l.b16 %v684
        %v2226 = vunpack.c.h.b16 %v684
        %v2227 = vunpack.c.l.b16 %v685
        %v2228 = vunpack.c.h.b16 %v685
        %v2229 = vunpack.c.l.b16 %v686
        %v2230 = vunpack.c.h.b16 %v686
        %v2231 = vunpack.c.l.b16 %v687
        %v2232 = vunpack.c.h.b16 %v687
        %v2233 = vunpack.c.l.b16 %v688
        %v2234 = vunpack.c.h.b16 %v688
        %v2235 = vunpack.c.l.b16 %v689
        %v2236 = vunpack.c.h.b16 %v689
        %v2237 = vunpack.c.l.b16 %v690
        %v2238 = vunpack.c.h.b16 %v690
        %v2239 = vunpack.c.l.b16 %v691
        %v2240 = vunpack.c.h.b16 %v691
        %v2241 = vunpack.c.l.b16 %v692
        %v2242 = vunpack.c.h.b16 %v692
        %v2243 = vunpack.c.l.b16 %v693
        %v2244 = vunpack.c.h.b16 %v693
        %v2245 = vunpack.c.l.b16 %v694
        %v2246 = vunpack.c.h.b16 %v694
        %v2247 = vunpack.c.l.b16 %v695
        %v2248 = vunpack.c.h.b16 %v695
        %v2249 = vunpack.c.l.b16 %v696
        %v2250 = vunpack.c.h.b16 %v696
        %v2251 = vunpack.c.l.b16 %v697
        %v2252 = vunpack.c.h.b16 %v697
        %v2253 = vunpack.c.l.b16 %v698
        %v2254 = vunpack.c.h.b16 %v698
        %v2255 = vunpack.c.l.b16 %v699
        %v2256 = vunpack.c.h.b16 %v699
        %v2257 = vunpack.c.l.b16 %v700
        %v2258 = vunpack.c.h.b16 %v700
        %v2259 = vunpack.c.l.b16 %v701
        %v2260 = vunpack.c.h.b16 %v701
        %v2261 = vunpack.c.l.b16 %v702
        %v2262 = vunpack.c.h.b16 %v702
        %v2263 = vunpack.c.l.b16 %v703
        %v2264 = vunpack.c.h.b16 %v703
        %v2265 = vunpack.c.l.b16 %v704
        %v2266 = vunpack.c.h.b16 %v704
        %v2267 = vunpack.c.l.b16 %v705
        %v2268 = vunpack.c.h.b16 %v705
        %v2269 = vunpack.c.l.b16 %v706
        %v2270 = vunpack.c.h.b16 %v706
        %v2271 = vunpack.c.l.b16 %v707
        %v2272 = vunpack.c.h.b16 %v707
        %v2273 = vunpack.c.l.b16 %v708
        %v2274 = vunpack.c.h.b16 %v708
        %v2275 = vunpack.c.l.b16 %v709
        %v2276 = vunpack.c.h.b16 %v709
        %v2277 = vunpack.c.l.b16 %v710
        %v2278 = vunpack.c.h.b16 %v710
        %v2279 = vunpack.c.l.b16 %v711
        %v2280 = vunpack.c.h.b16 %v711
        %v2281 = vunpack.c.l.b16 %v712
        %v2282 = vunpack.c.h.b16 %v712
        %v2283 = vunpack.c.l.b16 %v713
        %v2284 = vunpack.c.h.b16 %v713
        %v2285 = vunpack.c.l.b16 %v714
        %v2286 = vunpack.c.h.b16 %v714
        %v2287 = vunpack.c.l.b16 %v715
        %v2288 = vunpack.c.h.b16 %v715
        %v2289 = vunpack.c.l.b16 %v716
        %v2290 = vunpack.c.h.b16 %v716
        %v2291 = vunpack.c.l.b16 %v717
        %v2292 = vunpack.c.h.b16 %v717
        %v2293 = vunpack.c.l.b16 %v718
        %v2294 = vunpack.c.h.b16 %v718
        %v2295 = vunpack.c.l.b16 %v719
        %v2296 = vunpack.c.h.b16 %v719
        %v2297 = vunpack.c.l.b16 %v720
        %v2298 = vunpack.c.h.b16 %v720
        %v2299 = vunpack.c.l.b16 %v721
        %v2300 = vunpack.c.h.b16 %v721
        %v2301 = vunpack.c.l.b16 %v722
        %v2302 = vunpack.c.h.b16 %v722
        %v2303 = vunpack.c.l.b16 %v723
        %v2304 = vunpack.c.h.b16 %v723
        %v2305 = vunpack.c.l.b16 %v724
        %v2306 = vunpack.c.h.b16 %v724
        %v2307 = vunpack.c.l.b16 %v725
        %v2308 = vunpack.c.h.b16 %v725
        %v2309 = vunpack.c.l.b16 %v726
        %v2310 = vunpack.c.h.b16 %v726
        %v2311 = vunpack.c.l.b16 %v727
        %v2312 = vunpack.c.h.b16 %v727
        %v2313 = vunpack.c.l.b16 %v728
        %v2314 = vunpack.c.h.b16 %v728
        %v2315 = vunpack.c.l.b16 %v729
        %v2316 = vunpack.c.h.b16 %v729
        %v2317 = vunpack.c.l.b16 %v730
        %v2318 = vunpack.c.h.b16 %v730
        %v2319 = vunpack.c.l.b16 %v731
        %v2320 = vunpack.c.h.b16 %v731
        %v2321 = vunpack.c.l.b16 %v732
        %v2322 = vunpack.c.h.b16 %v732
        %v2323 = vunpack.c.l.b16 %v733
        %v2324 = vunpack.c.h.b16 %v733
        %v2325 = vunpack.c.l.b16 %v734
        %v2326 = vunpack.c.h.b16 %v734
        %v2327 = vunpack.c.l.b16 %v735
        %v2328 = vunpack.c.h.b16 %v735
        %v2329 = vunpack.c.l.b16 %v736
        %v2330 = vunpack.c.h.b16 %v736
        %v2331 = vunpack.c.l.b16 %v737
        %v2332 = vunpack.c.h.b16 %v737
        %v2333 = vunpack.c.l.b16 %v738
        %v2334 = vunpack.c.h.b16 %v738
        %v2335 = vunpack.c.l.b16 %v739
        %v2336 = vunpack.c.h.b16 %v739
        %v2337 = vunpack.c.l.b16 %v740
        %v2338 = vunpack.c.h.b16 %v740
        %v2339 = vunpack.c.l.b16 %v741
        %v2340 = vunpack.c.h.b16 %v741
        %v2341 = vunpack.c.l.b16 %v742
        %v2342 = vunpack.c.h.b16 %v742
        %v2343 = vunpack.c.l.b16 %v743
        %v2344 = vunpack.c.h.b16 %v743
        %v2345 = vunpack.c.l.b16 %v744
        %v2346 = vunpack.c.h.b16 %v744
        %v2347 = vunpack.c.l.b16 %v745
        %v2348 = vunpack.c.h.b16 %v745
        %v2349 = vunpack.c.l.b16 %v746
        %v2350 = vunpack.c.h.b16 %v746
        %v2351 = vunpack.c.l.b16 %v747
        %v2352 = vunpack.c.h.b16 %v747
        %v2353 = vunpack.c.l.b16 %v748
        %v2354 = vunpack.c.h.b16 %v748
        %v2355 = vunpack.c.l.b16 %v749
        %v2356 = vunpack.c.h.b16 %v749
        %v2357 = vunpack.c.l.b16 %v750
        %v2358 = vunpack.c.h.b16 %v750
        %v2359 = vunpack.c.l.b16 %v751
        %v2360 = vunpack.c.h.b16 %v751
        %v2361 = vunpack.c.l.b16 %v752
        %v2362 = vunpack.c.h.b16 %v752
        %v2363 = vunpack.c.l.b16 %v753
        %v2364 = vunpack.c.h.b16 %v753
        %v2365 = vunpack.c.l.b16 %v754
        %v2366 = vunpack.c.h.b16 %v754
        %v2367 = vunpack.c.l.b16 %v755
        %v2368 = vunpack.c.h.b16 %v755
        %v2369 = vunpack.c.l.b16 %v756
        %v2370 = vunpack.c.h.b16 %v756
        %v2371 = vunpack.c.l.b16 %v757
        %v2372 = vunpack.c.h.b16 %v757
        %v2373 = vunpack.c.l.b16 %v758
        %v2374 = vunpack.c.h.b16 %v758
        %v2375 = vunpack.c.l.b16 %v759
        %v2376 = vunpack.c.h.b16 %v759
        %v2377 = vunpack.c.l.b16 %v760
        %v2378 = vunpack.c.h.b16 %v760
        %v2379 = vunpack.c.l.b16 %v761
        %v2380 = vunpack.c.h.b16 %v761
        %v2381 = vunpack.c.l.b16 %v762
        %v2382 = vunpack.c.h.b16 %v762
        %v2383 = vunpack.c.l.b16 %v763
        %v2384 = vunpack.c.h.b16 %v763
        %v2385 = vunpack.c.l.b16 %v764
        %v2386 = vunpack.c.h.b16 %v764
        %v2387 = vunpack.c.l.b16 %v765
        %v2388 = vunpack.c.h.b16 %v765
        %v2389 = vunpack.c.l.b16 %v766
        %v2390 = vunpack.c.h.b16 %v766
        %v2391 = vunpack.c.l.b16 %v767
        %v2392 = vunpack.c.h.b16 %v767
        %v2393 = vunpack.c.l.b16 %v768
        %v2394 = vunpack.c.h.b16 %v768
        %v2395 = vunpack.c.l.b16 %v769
        %v2396 = vunpack.c.h.b16 %v769
        %v2397 = vunpack.c.l.b16 %v770
        %v2398 = vunpack.c.h.b16 %v770
        %v2399 = vunpack.c.l.b16 %v771
        %v2400 = vunpack.c.h.b16 %v771
        %v2401 = vunpack.c.l.b16 %v772
        %v2402 = vunpack.c.h.b16 %v772
        %v2403 = vunpack.c.l.b16 %v773
        %v2404 = vunpack.c.h.b16 %v773
        %v2405 = vunpack.c.l.b16 %v774
        %v2406 = vunpack.c.h.b16 %v774
        %v2407 = vunpack.c.l.b16 %v775
        %v2408 = vunpack.c.h.b16 %v775
        %v2409 = vunpack.c.l.b16 %v776
        %v2410 = vunpack.c.h.b16 %v776
        %v2411 = vunpack.c.l.b16 %v777
        %v2412 = vunpack.c.h.b16 %v777
        %v2413 = vunpack.c.l.b16 %v778
        %v2414 = vunpack.c.h.b16 %v778
        %v2415 = vunpack.c.l.b16 %v779
        %v2416 = vunpack.c.h.b16 %v779
        %v2417 = vunpack.c.l.b16 %v780
        %v2418 = vunpack.c.h.b16 %v780
        %v2419 = vunpack.c.l.b16 %v781
        %v2420 = vunpack.c.h.b16 %v781
        %v2421 = vunpack.c.l.b16 %v782
        %v2422 = vunpack.c.h.b16 %v782
        %v2423 = vunpack.c.l.b16 %v783
        %v2424 = vunpack.c.h.b16 %v783
        %v2425 = vunpack.c.l.b16 %v784
        %v2426 = vunpack.c.h.b16 %v784
        %v2427 = vunpack.c.l.b16 %v785
        %v2428 = vunpack.c.h.b16 %v785
        %v2429 = vunpack.c.l.b16 %v786
        %v2430 = vunpack.c.h.b16 %v786
        %v2431 = vunpack.c.l.b16 %v787
        %v2432 = vunpack.c.h.b16 %v787
        %v2433 = vunpack.c.l.b16 %v788
        %v2434 = vunpack.c.h.b16 %v788
        %v2435 = vunpack.c.l.b16 %v789
        %v2436 = vunpack.c.h.b16 %v789
        %v2437 = vunpack.c.l.b16 %v790
        %v2438 = vunpack.c.h.b16 %v790
        %v2439 = vpack.c.b16 %v1417, %v1415
        %v2440 = vpack.c.b16 %v1418, %v1416
        %v2441 = vpack.c.b16 %v1421, %v1419
        %v2442 = vpack.c.b16 %v1422, %v1420
        %v2443 = vpack.c.b16 %v1425, %v1423
        %v2444 = vpack.c.b16 %v1426, %v1424
        %v2445 = vpack.c.b16 %v1429, %v1427
        %v2446 = vpack.c.b16 %v1430, %v1428
        %v2447 = vpack.c.b16 %v1433, %v1431
        %v2448 = vpack.c.b16 %v1434, %v1432
        %v2449 = vpack.c.b16 %v1437, %v1435
        %v2450 = vpack.c.b16 %v1438, %v1436
        %v2451 = vpack.c.b16 %v1441, %v1439
        %v2452 = vpack.c.b16 %v1442, %v1440
        %v2453 = vpack.c.b16 %v1445, %v1443
        %v2454 = vpack.c.b16 %v1446, %v1444
        %v2455 = vpack.c.b16 %v1449, %v1447
        %v2456 = vpack.c.b16 %v1450, %v1448
        %v2457 = vpack.c.b16 %v1453, %v1451
        %v2458 = vpack.c.b16 %v1454, %v1452
        %v2459 = vpack.c.b16 %v1457, %v1455
        %v2460 = vpack.c.b16 %v1458, %v1456
        %v2461 = vpack.c.b16 %v1461, %v1459
        %v2462 = vpack.c.b16 %v1462, %v1460
        %v2463 = vpack.c.b16 %v1465, %v1463
        %v2464 = vpack.c.b16 %v1466, %v1464
        %v2465 = vpack.c.b16 %v1469, %v1467
        %v2466 = vpack.c.b16 %v1470, %v1468
        %v2467 = vpack.c.b16 %v1473, %v1471
        %v2468 = vpack.c.b16 %v1474, %v1472
        %v2469 = vpack.c.b16 %v1477, %v1475
        %v2470 = vpack.c.b16 %v1478, %v1476
        %v2471 = vpack.c.b16 %v1481, %v1479
        %v2472 = vpack.c.b16 %v1482, %v1480
        %v2473 = vpack.c.b16 %v1485, %v1483
        %v2474 = vpack.c.b16 %v1486, %v1484
        %v2475 = vpack.c.b16 %v1489, %v1487
        %v2476 = vpack.c.b16 %v1490, %v1488
        %v2477 = vpack.c.b16 %v1493, %v1491
        %v2478 = vpack.c.b16 %v1494, %v1492
        %v2479 = vpack.c.b16 %v1497, %v1495
        %v2480 = vpack.c.b16 %v1498, %v1496
        %v2481 = vpack.c.b16 %v1501, %v1499
        %v2482 = vpack.c.b16 %v1502, %v1500
        %v2483 = vpack.c.b16 %v1505, %v1503
        %v2484 = vpack.c.b16 %v1506, %v1504
        %v2485 = vpack.c.b16 %v1509, %v1507
        %v2486 = vpack.c.b16 %v1510, %v1508
        %v2487 = vpack.c.b16 %v1513, %v1511
        %v2488 = vpack.c.b16 %v1514, %v1512
        %v2489 = vpack.c.b16 %v1517, %v1515
        %v2490 = vpack.c.b16 %v1518, %v1516
        %v2491 = vpack.c.b16 %v1521, %v1519
        %v2492 = vpack.c.b16 %v1522, %v1520
        %v2493 = vpack.c.b16 %v1525, %v1523
        %v2494 = vpack.c.b16 %v1526, %v1524
        %v2495 = vpack.c.b16 %v1529, %v1527
        %v2496 = vpack.c.b16 %v1530, %v1528
        %v2497 = vpack.c.b16 %v1533, %v1531
        %v2498 = vpack.c.b16 %v1534, %v1532
        %v2499 = vpack.c.b16 %v1537, %v1535
        %v2500 = vpack.c.b16 %v1538, %v1536
        %v2501 = vpack.c.b16 %v1541, %v1539
        %v2502 = vpack.c.b16 %v1542, %v1540
        %v2503 = vpack.c.b16 %v1545, %v1543
        %v2504 = vpack.c.b16 %v1546, %v1544
        %v2505 = vpack.c.b16 %v1549, %v1547
        %v2506 = vpack.c.b16 %v1550, %v1548
        %v2507 = vpack.c.b16 %v1553, %v1551
        %v2508 = vpack.c.b16 %v1554, %v1552
        %v2509 = vpack.c.b16 %v1557, %v1555
        %v2510 = vpack.c.b16 %v1558, %v1556
        %v2511 = vpack.c.b16 %v1561, %v1559
        %v2512 = vpack.c.b16 %v1562, %v1560
        %v2513 = vpack.c.b16 %v1565, %v1563
        %v2514 = vpack.c.b16 %v1566, %v1564
        %v2515 = vpack.c.b16 %v1569, %v1567
        %v2516 = vpack.c.b16 %v1570, %v1568
        %v2517 = vpack.c.b16 %v1573, %v1571
        %v2518 = vpack.c.b16 %v1574, %v1572
        %v2519 = vpack.c.b16 %v1577, %v1575
        %v2520 = vpack.c.b16 %v1578, %v1576
        %v2521 = vpack.c.b16 %v1581, %v1579
        %v2522 = vpack.c.b16 %v1582, %v1580
        %v2523 = vpack.c.b16 %v1585, %v1583
        %v2524 = vpack.c.b16 %v1586, %v1584
        %v2525 = vpack.c.b16 %v1589, %v1587
        %v2526 = vpack.c.b16 %v1590, %v1588
        %v2527 = vpack.c.b16 %v1593, %v1591
        %v2528 = vpack.c.b16 %v1594, %v1592
        %v2529 = vpack.c.b16 %v1597, %v1595
        %v2530 = vpack.c.b16 %v1598, %v1596
        %v2531 = vpack.c.b16 %v1601, %v1599
        %v2532 = vpack.c.b16 %v1602, %v1600
        %v2533 = vpack.c.b16 %v1605, %v1603
        %v2534 = vpack.c.b16 %v1606, %v1604
        %v2535 = vpack.c.b16 %v1609, %v1607
        %v2536 = vpack.c.b16 %v1610, %v1608
        %v2537 = vpack.c.b16 %v1613, %v1611
        %v2538 = vpack.c.b16 %v1614, %v1612
        %v2539 = vpack.c.b16 %v1617, %v1615
        %v2540 = vpack.c.b16 %v1618, %v1616
        %v2541 = vpack.c.b16 %v1621, %v1619
        %v2542 = vpack.c.b16 %v1622, %v1620
        %v2543 = vpack.c.b16 %v1625, %v1623
        %v2544 = vpack.c.b16 %v1626, %v1624
        %v2545 = vpack.c.b16 %v1629, %v1627
        %v2546 = vpack.c.b16 %v1630, %v1628
        %v2547 = vpack.c.b16 %v1633, %v1631
        %v2548 = vpack.c.b16 %v1634, %v1632
        %v2549 = vpack.c.b16 %v1637, %v1635
        %v2550 = vpack.c.b16 %v1638, %v1636
        %v2551 = vpack.c.b16 %v1641, %v1639
        %v2552 = vpack.c.b16 %v1642, %v1640
        %v2553 = vpack.c.b16 %v1645, %v1643
        %v2554 = vpack.c.b16 %v1646, %v1644
        %v2555 = vpack.c.b16 %v1649, %v1647
        %v2556 = vpack.c.b16 %v1650, %v1648
        %v2557 = vpack.c.b16 %v1653, %v1651
        %v2558 = vpack.c.b16 %v1654, %v1652
        %v2559 = vpack.c.b16 %v1657, %v1655
        %v2560 = vpack.c.b16 %v1658, %v1656
        %v2561 = vpack.c.b16 %v1661, %v1659
        %v2562 = vpack.c.b16 %v1662, %v1660
        %v2563 = vpack.c.b16 %v1665, %v1663
        %v2564 = vpack.c.b16 %v1666, %v1664
        %v2565 = vpack.c.b16 %v1669, %v1667
        %v2566 = vpack.c.b16 %v1670, %v1668
        %v2567 = vpack.c.b16 %v1673, %v1671
        %v2568 = vpack.c.b16 %v1674, %v1672
        %v2569 = vpack.c.b16 %v1677, %v1675
        %v2570 = vpack.c.b16 %v1678, %v1676
        %v2571 = vpack.c.b16 %v1681, %v1679
        %v2572 = vpack.c.b16 %v1682, %v1680
        %v2573 = vpack.c.b16 %v1685, %v1683
        %v2574 = vpack.c.b16 %v1686, %v1684
        %v2575 = vpack.c.b16 %v1689, %v1687
        %v2576 = vpack.c.b16 %v1690, %v1688
        %v2577 = vpack.c.b16 %v1693, %v1691
        %v2578 = vpack.c.b16 %v1694, %v1692
        %v2579 = vpack.c.b16 %v1697, %v1695
        %v2580 = vpack.c.b16 %v1698, %v1696
        %v2581 = vpack.c.b16 %v1701, %v1699
        %v2582 = vpack.c.b16 %v1702, %v1700
        %v2583 = vpack.c.b16 %v1705, %v1703
        %v2584 = vpack.c.b16 %v1706, %v1704
        %v2585 = vpack.c.b16 %v1709, %v1707
        %v2586 = vpack.c.b16 %v1710, %v1708
        %v2587 = vpack.c.b16 %v1713, %v1711
        %v2588 = vpack.c.b16 %v1714, %v1712
        %v2589 = vpack.c.b16 %v1717, %v1715
        %v2590 = vpack.c.b16 %v1718, %v1716
        %v2591 = vpack.c.b16 %v1721, %v1719
        %v2592 = vpack.c.b16 %v1722, %v1720
        %v2593 = vpack.c.b16 %v1725, %v1723
        %v2594 = vpack.c.b16 %v1726, %v1724
        %v2595 = vpack.c.b16 %v1729, %v1727
        %v2596 = vpack.c.b16 %v1730, %v1728
        %v2597 = vpack.c.b16 %v1733, %v1731
        %v2598 = vpack.c.b16 %v1734, %v1732
        %v2599 = vpack.c.b16 %v1737, %v1735
        %v2600 = vpack.c.b16 %v1738, %v1736
        %v2601 = vpack.c.b16 %v1741, %v1739
        %v2602 = vpack.c.b16 %v1742, %v1740
        %v2603 = vpack.c.b16 %v1745, %v1743
        %v2604 = vpack.c.b16 %v1746, %v1744
        %v2605 = vpack.c.b16 %v1749, %v1747
        %v2606 = vpack.c.b16 %v1750, %v1748
        %v2607 = vpack.c.b16 %v1753, %v1751
        %v2608 = vpack.c.b16 %v1754, %v1752
        %v2609 = vpack.c.b16 %v1757, %v1755
        %v2610 = vpack.c.b16 %v1758, %v1756
        %v2611 = vpack.c.b16 %v1761, %v1759
        %v2612 = vpack.c.b16 %v1762, %v1760
        %v2613 = vpack.c.b16 %v1765, %v1763
        %v2614 = vpack.c.b16 %v1766, %v1764
        %v2615 = vpack.c.b16 %v1769, %v1767
        %v2616 = vpack.c.b16 %v1770, %v1768
        %v2617 = vpack.c.b16 %v1773, %v1771
        %v2618 = vpack.c.b16 %v1774, %v1772
        %v2619 = vpack.c.b16 %v1777, %v1775
        %v2620 = vpack.c.b16 %v1778, %v1776
        %v2621 = vpack.c.b16 %v1781, %v1779
        %v2622 = vpack.c.b16 %v1782, %v1780
        %v2623 = vpack.c.b16 %v1785, %v1783
        %v2624 = vpack.c.b16 %v1786, %v1784
        %v2625 = vpack.c.b16 %v1789, %v1787
        %v2626 = vpack.c.b16 %v1790, %v1788
        %v2627 = vpack.c.b16 %v1793, %v1791
        %v2628 = vpack.c.b16 %v1794, %v1792
        %v2629 = vpack.c.b16 %v1797, %v1795
        %v2630 = vpack.c.b16 %v1798, %v1796
        %v2631 = vpack.c.b16 %v1801, %v1799
        %v2632 = vpack.c.b16 %v1802, %v1800
        %v2633 = vpack.c.b16 %v1805, %v1803
        %v2634 = vpack.c.b16 %v1806, %v1804
        %v2635 = vpack.c.b16 %v1809, %v1807
        %v2636 = vpack.c.b16 %v1810, %v1808
        %v2637 = vpack.c.b16 %v1813, %v1811
        %v2638 = vpack.c.b16 %v1814, %v1812
        %v2639 = vpack.c.b16 %v1817, %v1815
        %v2640 = vpack.c.b16 %v1818, %v1816
        %v2641 = vpack.c.b16 %v1821, %v1819
        %v2642 = vpack.c.b16 %v1822, %v1820
        %v2643 = vpack.c.b16 %v1825, %v1823
        %v2644 = vpack.c.b16 %v1826, %v1824
        %v2645 = vpack.c.b16 %v1829, %v1827
        %v2646 = vpack.c.b16 %v1830, %v1828
        %v2647 = vpack.c.b16 %v1833, %v1831
        %v2648 = vpack.c.b16 %v1834, %v1832
        %v2649 = vpack.c.b16 %v1837, %v1835
        %v2650 = vpack.c.b16 %v1838, %v1836
        %v2651 = vpack.c.b16 %v1841, %v1839
        %v2652 = vpack.c.b16 %v1842, %v1840
        %v2653 = vpack.c.b16 %v1845, %v1843
        %v2654 = vpack.c.b16 %v1846, %v1844
        %v2655 = vpack.c.b16 %v1849, %v1847
        %v2656 = vpack.c.b16 %v1850, %v1848
        %v2657 = vpack.c.b16 %v1853, %v1851
        %v2658 = vpack.c.b16 %v1854, %v1852
        %v2659 = vpack.c.b16 %v1857, %v1855
        %v2660 = vpack.c.b16 %v1858, %v1856
        %v2661 = vpack.c.b16 %v1861, %v1859
        %v2662 = vpack.c.b16 %v1862, %v1860
        %v2663 = vpack.c.b16 %v1865, %v1863
        %v2664 = vpack.c.b16 %v1866, %v1864
        %v2665 = vpack.c.b16 %v1869, %v1867
        %v2666 = vpack.c.b16 %v1870, %v1868
        %v2667 = vpack.c.b16 %v1873, %v1871
        %v2668 = vpack.c.b16 %v1874, %v1872
        %v2669 = vpack.c.b16 %v1877, %v1875
        %v2670 = vpack.c.b16 %v1878, %v1876
        %v2671 = vpack.c.b16 %v1881, %v1879
        %v2672 = vpack.c.b16 %v1882, %v1880
        %v2673 = vpack.c.b16 %v1885, %v1883
        %v2674 = vpack.c.b16 %v1886, %v1884
        %v2675 = vpack.c.b16 %v1889, %v1887
        %v2676 = vpack.c.b16 %v1890, %v1888
        %v2677 = vpack.c.b16 %v1893, %v1891
        %v2678 = vpack.c.b16 %v1894, %v1892
        %v2679 = vpack.c.b16 %v1897, %v1895
        %v2680 = vpack.c.b16 %v1898, %v1896
        %v2681 = vpack.c.b16 %v1901, %v1899
        %v2682 = vpack.c.b16 %v1902, %v1900
        %v2683 = vpack.c.b16 %v1905, %v1903
        %v2684 = vpack.c.b16 %v1906, %v1904
        %v2685 = vpack.c.b16 %v1909, %v1907
        %v2686 = vpack.c.b16 %v1910, %v1908
        %v2687 = vpack.c.b16 %v1913, %v1911
        %v2688 = vpack.c.b16 %v1914, %v1912
        %v2689 = vpack.c.b16 %v1917, %v1915
        %v2690 = vpack.c.b16 %v1918, %v1916
        %v2691 = vpack.c.b16 %v1921, %v1919
        %v2692 = vpack.c.b16 %v1922, %v1920
        %v2693 = vpack.c.b16 %v1925, %v1923
        %v2694 = vpack.c.b16 %v1926, %v1924
        %v2695 = vpack.c.b16 %v1929, %v1927
        %v2696 = vpack.c.b16 %v1930, %v1928
        %v2697 = vpack.c.b16 %v1933, %v1931
        %v2698 = vpack.c.b16 %v1934, %v1932
        %v2699 = vpack.c.b16 %v1937, %v1935
        %v2700 = vpack.c.b16 %v1938, %v1936
        %v2701 = vpack.c.b16 %v1941, %v1939
        %v2702 = vpack.c.b16 %v1942, %v1940
        %v2703 = vpack.c.b16 %v1945, %v1943
        %v2704 = vpack.c.b16 %v1946, %v1944
        %v2705 = vpack.c.b16 %v1949, %v1947
        %v2706 = vpack.c.b16 %v1950, %v1948
        %v2707 = vpack.c.b16 %v1953, %v1951
        %v2708 = vpack.c.b16 %v1954, %v1952
        %v2709 = vpack.c.b16 %v1957, %v1955
        %v2710 = vpack.c.b16 %v1958, %v1956
        %v2711 = vpack.c.b16 %v1961, %v1959
        %v2712 = vpack.c.b16 %v1962, %v1960
        %v2713 = vpack.c.b16 %v1965, %v1963
        %v2714 = vpack.c.b16 %v1966, %v1964
        %v2715 = vpack.c.b16 %v1969, %v1967
        %v2716 = vpack.c.b16 %v1970, %v1968
        %v2717 = vpack.c.b16 %v1973, %v1971
        %v2718 = vpack.c.b16 %v1974, %v1972
        %v2719 = vpack.c.b16 %v1977, %v1975
        %v2720 = vpack.c.b16 %v1978, %v1976
        %v2721 = vpack.c.b16 %v1981, %v1979
        %v2722 = vpack.c.b16 %v1982, %v1980
        %v2723 = vpack.c.b16 %v1985, %v1983
        %v2724 = vpack.c.b16 %v1986, %v1984
        %v2725 = vpack.c.b16 %v1989, %v1987
        %v2726 = vpack.c.b16 %v1990, %v1988
        %v2727 = vpack.c.b16 %v1993, %v1991
        %v2728 = vpack.c.b16 %v1994, %v1992
        %v2729 = vpack.c.b16 %v1997, %v1995
        %v2730 = vpack.c.b16 %v1998, %v1996
        %v2731 = vpack.c.b16 %v2001, %v1999
        %v2732 = vpack.c.b16 %v2002, %v2000
        %v2733 = vpack.c.b16 %v2005, %v2003
        %v2734 = vpack.c.b16 %v2006, %v2004
        %v2735 = vpack.c.b16 %v2009, %v2007
        %v2736 = vpack.c.b16 %v2010, %v2008
        %v2737 = vpack.c.b16 %v2013, %v2011
        %v2738 = vpack.c.b16 %v2014, %v2012
        %v2739 = vpack.c.b16 %v2017, %v2015
        %v2740 = vpack.c.b16 %v2018, %v2016
        %v2741 = vpack.c.b16 %v2021, %v2019
        %v2742 = vpack.c.b16 %v2022, %v2020
        %v2743 = vpack.c.b16 %v2025, %v2023
        %v2744 = vpack.c.b16 %v2026, %v2024
        %v2745 = vpack.c.b16 %v2029, %v2027
        %v2746 = vpack.c.b16 %v2030, %v2028
        %v2747 = vpack.c.b16 %v2033, %v2031
        %v2748 = vpack.c.b16 %v2034, %v2032
        %v2749 = vpack.c.b16 %v2037, %v2035
        %v2750 = vpack.c.b16 %v2038, %v2036
        %v2751 = vpack.c.b16 %v2041, %v2039
        %v2752 = vpack.c.b16 %v2042, %v2040
        %v2753 = vpack.c.b16 %v2045, %v2043
        %v2754 = vpack.c.b16 %v2046, %v2044
        %v2755 = vpack.c.b16 %v2049, %v2047
        %v2756 = vpack.c.b16 %v2050, %v2048
        %v2757 = vpack.c.b16 %v2053, %v2051
        %v2758 = vpack.c.b16 %v2054, %v2052
        %v2759 = vpack.c.b16 %v2057, %v2055
        %v2760 = vpack.c.b16 %v2058, %v2056
        %v2761 = vpack.c.b16 %v2061, %v2059
        %v2762 = vpack.c.b16 %v2062, %v2060
        %v2763 = vpack.c.b16 %v2065, %v2063
        %v2764 = vpack.c.b16 %v2066, %v2064
        %v2765 = vpack.c.b16 %v2069, %v2067
        %v2766 = vpack.c.b16 %v2070, %v2068
        %v2767 = vpack.c.b16 %v2073, %v2071
        %v2768 = vpack.c.b16 %v2074, %v2072
        %v2769 = vpack.c.b16 %v2077, %v2075
        %v2770 = vpack.c.b16 %v2078, %v2076
        %v2771 = vpack.c.b16 %v2081, %v2079
        %v2772 = vpack.c.b16 %v2082, %v2080
        %v2773 = vpack.c.b16 %v2085, %v2083
        %v2774 = vpack.c.b16 %v2086, %v2084
        %v2775 = vpack.c.b16 %v2089, %v2087
        %v2776 = vpack.c.b16 %v2090, %v2088
        %v2777 = vpack.c.b16 %v2093, %v2091
        %v2778 = vpack.c.b16 %v2094, %v2092
        %v2779 = vpack.c.b16 %v2097, %v2095
        %v2780 = vpack.c.b16 %v2098, %v2096
        %v2781 = vpack.c.b16 %v2101, %v2099
        %v2782 = vpack.c.b16 %v2102, %v2100
        %v2783 = vpack.c.b16 %v2105, %v2103
        %v2784 = vpack.c.b16 %v2106, %v2104
        %v2785 = vpack.c.b16 %v2109, %v2107
        %v2786 = vpack.c.b16 %v2110, %v2108
        %v2787 = vpack.c.b16 %v2113, %v2111
        %v2788 = vpack.c.b16 %v2114, %v2112
        %v2789 = vpack.c.b16 %v2117, %v2115
        %v2790 = vpack.c.b16 %v2118, %v2116
        %v2791 = vpack.c.b16 %v2121, %v2119
        %v2792 = vpack.c.b16 %v2122, %v2120
        %v2793 = vpack.c.b16 %v2125, %v2123
        %v2794 = vpack.c.b16 %v2126, %v2124
        %v2795 = vpack.c.b16 %v2129, %v2127
        %v2796 = vpack.c.b16 %v2130, %v2128
        %v2797 = vpack.c.b16 %v2133, %v2131
        %v2798 = vpack.c.b16 %v2134, %v2132
        %v2799 = vpack.c.b16 %v2137, %v2135
        %v2800 = vpack.c.b16 %v2138, %v2136
        %v2801 = vpack.c.b16 %v2141, %v2139
        %v2802 = vpack.c.b16 %v2142, %v2140
        %v2803 = vpack.c.b16 %v2145, %v2143
        %v2804 = vpack.c.b16 %v2146, %v2144
        %v2805 = vpack.c.b16 %v2149, %v2147
        %v2806 = vpack.c.b16 %v2150, %v2148
        %v2807 = vpack.c.b16 %v2153, %v2151
        %v2808 = vpack.c.b16 %v2154, %v2152
        %v2809 = vpack.c.b16 %v2157, %v2155
        %v2810 = vpack.c.b16 %v2158, %v2156
        %v2811 = vpack.c.b16 %v2161, %v2159
        %v2812 = vpack.c.b16 %v2162, %v2160
        %v2813 = vpack.c.b16 %v2165, %v2163
        %v2814 = vpack.c.b16 %v2166, %v2164
        %v2815 = vpack.c.b16 %v2169, %v2167
        %v2816 = vpack.c.b16 %v2170, %v2168
        %v2817 = vpack.c.b16 %v2173, %v2171
        %v2818 = vpack.c.b16 %v2174, %v2172
        %v2819 = vpack.c.b16 %v2177, %v2175
        %v2820 = vpack.c.b16 %v2178, %v2176
        %v2821 = vpack.c.b16 %v2181, %v2179
        %v2822 = vpack.c.b16 %v2182, %v2180
        %v2823 = vpack.c.b16 %v2185, %v2183
        %v2824 = vpack.c.b16 %v2186, %v2184
        %v2825 = vpack.c.b16 %v2189, %v2187
        %v2826 = vpack.c.b16 %v2190, %v2188
        %v2827 = vpack.c.b16 %v2193, %v2191
        %v2828 = vpack.c.b16 %v2194, %v2192
        %v2829 = vpack.c.b16 %v2197, %v2195
        %v2830 = vpack.c.b16 %v2198, %v2196
        %v2831 = vpack.c.b16 %v2201, %v2199
        %v2832 = vpack.c.b16 %v2202, %v2200
        %v2833 = vpack.c.b16 %v2205, %v2203
        %v2834 = vpack.c.b16 %v2206, %v2204
        %v2835 = vpack.c.b16 %v2209, %v2207
        %v2836 = vpack.c.b16 %v2210, %v2208
        %v2837 = vpack.c.b16 %v2213, %v2211
        %v2838 = vpack.c.b16 %v2214, %v2212
        %v2839 = vpack.c.b16 %v2217, %v2215
        %v2840 = vpack.c.b16 %v2218, %v2216
        %v2841 = vpack.c.b16 %v2221, %v2219
        %v2842 = vpack.c.b16 %v2222, %v2220
        %v2843 = vpack.c.b16 %v2225, %v2223
        %v2844 = vpack.c.b16 %v2226, %v2224
        %v2845 = vpack.c.b16 %v2229, %v2227
        %v2846 = vpack.c.b16 %v2230, %v2228
        %v2847 = vpack.c.b16 %v2233, %v2231
        %v2848 = vpack.c.b16 %v2234, %v2232
        %v2849 = vpack.c.b16 %v2237, %v2235
        %v2850 = vpack.c.b16 %v2238, %v2236
        %v2851 = vpack.c.b16 %v2241, %v2239
        %v2852 = vpack.c.b16 %v2242, %v2240
        %v2853 = vpack.c.b16 %v2245, %v2243
        %v2854 = vpack.c.b16 %v2246, %v2244
        %v2855 = vpack.c.b16 %v2249, %v2247
        %v2856 = vpack.c.b16 %v2250, %v2248
        %v2857 = vpack.c.b16 %v2253, %v2251
        %v2858 = vpack.c.b16 %v2254, %v2252
        %v2859 = vpack.c.b16 %v2257, %v2255
        %v2860 = vpack.c.b16 %v2258, %v2256
        %v2861 = vpack.c.b16 %v2261, %v2259
        %v2862 = vpack.c.b16 %v2262, %v2260
        %v2863 = vpack.c.b16 %v2265, %v2263
        %v2864 = vpack.c.b16 %v2266, %v2264
        %v2865 = vpack.c.b16 %v2269, %v2267
        %v2866 = vpack.c.b16 %v2270, %v2268
        %v2867 = vpack.c.b16 %v2273, %v2271
        %v2868 = vpack.c.b16 %v2274, %v2272
        %v2869 = vpack.c.b16 %v2277, %v2275
        %v2870 = vpack.c.b16 %v2278, %v2276
        %v2871 = vpack.c.b16 %v2281, %v2279
        %v2872 = vpack.c.b16 %v2282, %v2280
        %v2873 = vpack.c.b16 %v2285, %v2283
        %v2874 = vpack.c.b16 %v2286, %v2284
        %v2875 = vpack.c.b16 %v2289, %v2287
        %v2876 = vpack.c.b16 %v2290, %v2288
        %v2877 = vpack.c.b16 %v2293, %v2291
        %v2878 = vpack.c.b16 %v2294, %v2292
        %v2879 = vpack.c.b16 %v2297, %v2295
        %v2880 = vpack.c.b16 %v2298, %v2296
        %v2881 = vpack.c.b16 %v2301, %v2299
        %v2882 = vpack.c.b16 %v2302, %v2300
        %v2883 = vpack.c.b16 %v2305, %v2303
        %v2884 = vpack.c.b16 %v2306, %v2304
        %v2885 = vpack.c.b16 %v2309, %v2307
        %v2886 = vpack.c.b16 %v2310, %v2308
        %v2887 = vpack.c.b16 %v2313, %v2311
        %v2888 = vpack.c.b16 %v2314, %v2312
        %v2889 = vpack.c.b16 %v2317, %v2315
        %v2890 = vpack.c.b16 %v2318, %v2316
        %v2891 = vpack.c.b16 %v2321, %v2319
        %v2892 = vpack.c.b16 %v2322, %v2320
        %v2893 = vpack.c.b16 %v2325, %v2323
        %v2894 = vpack.c.b16 %v2326, %v2324
        %v2895 = vpack.c.b16 %v2329, %v2327
        %v2896 = vpack.c.b16 %v2330, %v2328
        %v2897 = vpack.c.b16 %v2333, %v2331
        %v2898 = vpack.c.b16 %v2334, %v2332
        %v2899 = vpack.c.b16 %v2337, %v2335
        %v2900 = vpack.c.b16 %v2338, %v2336
        %v2901 = vpack.c.b16 %v2341, %v2339
        %v2902 = vpack.c.b16 %v2342, %v2340
        %v2903 = vpack.c.b16 %v2345, %v2343
        %v2904 = vpack.c.b16 %v2346, %v2344
        %v2905 = vpack.c.b16 %v2349, %v2347
        %v2906 = vpack.c.b16 %v2350, %v2348
        %v2907 = vpack.c.b16 %v2353, %v2351
        %v2908 = vpack.c.b16 %v2354, %v2352
        %v2909 = vpack.c.b16 %v2357, %v2355
        %v2910 = vpack.c.b16 %v2358, %v2356
        %v2911 = vpack.c.b16 %v2361, %v2359
        %v2912 = vpack.c.b16 %v2362, %v2360
        %v2913 = vpack.c.b16 %v2365, %v2363
        %v2914 = vpack.c.b16 %v2366, %v2364
        %v2915 = vpack.c.b16 %v2369, %v2367
        %v2916 = vpack.c.b16 %v2370, %v2368
        %v2917 = vpack.c.b16 %v2373, %v2371
        %v2918 = vpack.c.b16 %v2374, %v2372
        %v2919 = vpack.c.b16 %v2377, %v2375
        %v2920 = vpack.c.b16 %v2378, %v2376
        %v2921 = vpack.c.b16 %v2381, %v2379
        %v2922 = vpack.c.b16 %v2382, %v2380
        %v2923 = vpack.c.b16 %v2385, %v2383
        %v2924 = vpack.c.b16 %v2386, %v2384
        %v2925 = vpack.c.b16 %v2389, %v2387
        %v2926 = vpack.c.b16 %v2390, %v2388
        %v2927 = vpack.c.b16 %v2393, %v2391
        %v2928 = vpack.c.b16 %v2394, %v2392
        %v2929 = vpack.c.b16 %v2397, %v2395
        %v2930 = vpack.c.b16 %v2398, %v2396
        %v2931 = vpack.c.b16 %v2401, %v2399
        %v2932 = vpack.c.b16 %v2402, %v2400
        %v2933 = vpack.c.b16 %v2405, %v2403
        %v2934 = vpack.c.b16 %v2406, %v2404
        %v2935 = vpack.c.b16 %v2409, %v2407
        %v2936 = vpack.c.b16 %v2410, %v2408
        %v2937 = vpack.c.b16 %v2413, %v2411
        %v2938 = vpack.c.b16 %v2414, %v2412
        %v2939 = vpack.c.b16 %v2417, %v2415
        %v2940 = vpack.c.b16 %v2418, %v2416
        %v2941 = vpack.c.b16 %v2421, %v2419
        %v2942 = vpack.c.b16 %v2422, %v2420
        %v2943 = vpack.c.b16 %v2425, %v2423
        %v2944 = vpack.c.b16 %v2426, %v2424
        %v2945 = vpack.c.b16 %v2429, %v2427
        %v2946 = vpack.c.b16 %v2430, %v2428
        %v2947 = vpack.c.b16 %v2433, %v2431
        %v2948 = vpack.c.b16 %v2434, %v2432
        %v2949 = vpack.c.b16 %v2437, %v2435
        %v2950 = vpack.c.b16 %v2438, %v2436
        %3463 = vmatprep.subr.bf16.mxu0 %v2440
        %3464 = vmatpush1.bf16.msra.mxu0 %v2439
        %3465 = vmatprep.subr.bf16.mxu0 %v2442
        %3466 = vmatpush1.bf16.msra.mxu0 %v2441
        %3467 = vmatprep.subr.bf16.mxu0 %v2444
        %3468 = vmatpush1.bf16.msra.mxu0 %v2443
        %3469 = vmatprep.subr.bf16.mxu0 %v2446
        %3470 = vmatpush1.bf16.msra.mxu0 %v2445
        %3471 = vmatprep.subr.bf16.mxu0 %v2448
        %3472 = vmatpush1.bf16.msra.mxu0 %v2447
        %3473 = vmatprep.subr.bf16.mxu0 %v2450
        %3474 = vmatpush1.bf16.msra.mxu0 %v2449
        %3475 = vmatprep.subr.bf16.mxu0 %v2452
        %3476 = vmatpush1.bf16.msra.mxu0 %v2451
        %3477 = vmatprep.subr.bf16.mxu0 %v2454
        %3478 = vmatpush1.bf16.msra.mxu0 %v2453
        %3479 = vmatprep.subr.bf16.mxu0 %v2456
        %3480 = vmatpush1.bf16.msra.mxu0 %v2455
        %3481 = vmatprep.subr.bf16.mxu0 %v2458
        %3482 = vmatpush1.bf16.msra.mxu0 %v2457
        %3483 = vmatprep.subr.bf16.mxu0 %v2460
        %3484 = vmatpush1.bf16.msra.mxu0 %v2459
        %3485 = vmatprep.subr.bf16.mxu0 %v2462
        %3486 = vmatpush1.bf16.msra.mxu0 %v2461
        %3487 = vmatprep.subr.bf16.mxu0 %v2464
        %3488 = vmatpush1.bf16.msra.mxu0 %v2463
        %3489 = vmatprep.subr.bf16.mxu0 %v2466
        %3490 = vmatpush1.bf16.msra.mxu0 %v2465
        %3491 = vmatprep.subr.bf16.mxu0 %v2468
        %3492 = vmatpush1.bf16.msra.mxu0 %v2467
        %3493 = vmatprep.subr.bf16.mxu0 %v2470
        %3494 = vmatpush1.bf16.msra.mxu0 %v2469
        %3495 = vmatprep.mubr.bf16.mxu0 %v840
        %3496 = vmatmul.mubr.bf16.gmra.mrb[0].mxu0 %v839
        %v3497 = vpop.f32.mrb[0].mxu0
        %v3498 = vadd.f32 0.0, %v3497
        %v3499 = vpop.f32.mrb[0].mxu0
        %v3500 = vadd.f32 0.0, %v3499
        %v3501 = vpop.f32.mrb[0].mxu0
        %v3502 = vpop.f32.mrb[0].mxu0
        %3503 = vdwg.mxu0
        %3504 = vmatprep.subr.bf16.mxu0 %v2472
        %3505 = vmatpush1.bf16.msra.mxu0 %v2471
        %3506 = vmatprep.subr.bf16.mxu0 %v2474
        %3507 = vmatpush1.bf16.msra.mxu0 %v2473
        %3508 = vmatprep.subr.bf16.mxu0 %v2476
        %3509 = vmatpush1.bf16.msra.mxu0 %v2475
        %3510 = vmatprep.subr.bf16.mxu0 %v2478
        %3511 = vmatpush1.bf16.msra.mxu0 %v2477
        %3512 = vmatprep.subr.bf16.mxu0 %v2480
        %3513 = vmatpush1.bf16.msra.mxu0 %v2479
        %3514 = vmatprep.subr.bf16.mxu0 %v2482
        %3515 = vmatpush1.bf16.msra.mxu0 %v2481
        %3516 = vmatprep.subr.bf16.mxu0 %v2484
        %3517 = vmatpush1.bf16.msra.mxu0 %v2483
        %3518 = vmatprep.subr.bf16.mxu0 %v2486
        %3519 = vmatpush1.bf16.msra.mxu0 %v2485
        %3520 = vmatprep.subr.bf16.mxu0 %v2488
        %3521 = vmatpush1.bf16.msra.mxu0 %v2487
        %3522 = vmatprep.subr.bf16.mxu0 %v2490
        %3523 = vmatpush1.bf16.msra.mxu0 %v2489
        %3524 = vmatprep.subr.bf16.mxu0 %v2492
        %3525 = vmatpush1.bf16.msra.mxu0 %v2491
        %3526 = vmatprep.subr.bf16.mxu0 %v2494
        %3527 = vmatpush1.bf16.msra.mxu0 %v2493
        %3528 = vmatprep.subr.bf16.mxu0 %v2496
        %3529 = vmatpush1.bf16.msra.mxu0 %v2495
        %3530 = vmatprep.subr.bf16.mxu0 %v2498
        %3531 = vmatpush1.bf16.msra.mxu0 %v2497
        %3532 = vmatprep.subr.bf16.mxu0 %v2500
        %3533 = vmatpush1.bf16.msra.mxu0 %v2499
        %3534 = vmatprep.subr.bf16.mxu0 %v2502
        %3535 = vmatpush1.bf16.msra.mxu0 %v2501
        %3536 = vmatprep.mubr.bf16.mxu0 %v842
        %3537 = vmatmul.mubr.bf16.gmra.mrb[0].mxu0 %v841
        %v3538 = vpop.f32.mrb[0].mxu0
        %v3539 = vadd.f32 %v3498, %v3538
        %v3540 = vpop.f32.mrb[0].mxu0
        %v3541 = vadd.f32 %v3500, %v3540
        %v3542 = vpop.f32.mrb[0].mxu0
        %v3543 = vpop.f32.mrb[0].mxu0
        %3544 = vdwg.mxu0
        %3545 = vmatprep.subr.bf16.mxu0 %v2504
        %3546 = vmatpush1.bf16.msra.mxu0 %v2503
        %3547 = vmatprep.subr.bf16.mxu0 %v2506
        %3548 = vmatpush1.bf16.msra.mxu0 %v2505
        %3549 = vmatprep.subr.bf16.mxu0 %v2508
        %3550 = vmatpush1.bf16.msra.mxu0 %v2507
        %3551 = vmatprep.subr.bf16.mxu0 %v2510
        %3552 = vmatpush1.bf16.msra.mxu0 %v2509
        %3553 = vmatprep.subr.bf16.mxu0 %v2512
        %3554 = vmatpush1.bf16.msra.mxu0 %v2511
        %3555 = vmatprep.subr.bf16.mxu0 %v2514
        %3556 = vmatpush1.bf16.msra.mxu0 %v2513
        %3557 = vmatprep.subr.bf16.mxu0 %v2516
        %3558 = vmatpush1.bf16.msra.mxu0 %v2515
        %3559 = vmatprep.subr.bf16.mxu0 %v2518
        %3560 = vmatpush1.bf16.msra.mxu0 %v2517
        %3561 = vmatprep.subr.bf16.mxu0 %v2520
        %3562 = vmatpush1.bf16.msra.mxu0 %v2519
        %3563 = vmatprep.subr.bf16.mxu0 %v2522
        %3564 = vmatpush1.bf16.msra.mxu0 %v2521
        %3565 = vmatprep.subr.bf16.mxu0 %v2524
        %3566 = vmatpush1.bf16.msra.mxu0 %v2523
        %3567 = vmatprep.subr.bf16.mxu0 %v2526
        %3568 = vmatpush1.bf16.msra.mxu0 %v2525
        %3569 = vmatprep.subr.bf16.mxu0 %v2528
        %3570 = vmatpush1.bf16.msra.mxu0 %v2527
        %3571 = vmatprep.subr.bf16.mxu0 %v2530
        %3572 = vmatpush1.bf16.msra.mxu0 %v2529
        %3573 = vmatprep.subr.bf16.mxu0 %v2532
        %3574 = vmatpush1.bf16.msra.mxu0 %v2531
        %3575 = vmatprep.subr.bf16.mxu0 %v2534
        %3576 = vmatpush1.bf16.msra.mxu0 %v2533
        %3577 = vmatprep.mubr.bf16.mxu0 %v844
        %3578 = vmatmul.mubr.bf16.gmra.mrb[0].mxu0 %v843
        %v3579 = vpop.f32.mrb[0].mxu0
        %v3580 = vadd.f32 %v3539, %v3579
        %v3581 = vpop.f32.mrb[0].mxu0
        %v3582 = vadd.f32 %v3541, %v3581
        %v3583 = vpop.f32.mrb[0].mxu0
        %v3584 = vpop.f32.mrb[0].mxu0
        %3585 = vdwg.mxu0
        %3586 = vmatprep.subr.bf16.mxu0 %v2536
        %3587 = vmatpush1.bf16.msra.mxu0 %v2535
        %3588 = vmatprep.subr.bf16.mxu0 %v2538
        %3589 = vmatpush1.bf16.msra.mxu0 %v2537
        %3590 = vmatprep.subr.bf16.mxu0 %v2540
        %3591 = vmatpush1.bf16.msra.mxu0 %v2539
        %3592 = vmatprep.subr.bf16.mxu0 %v2542
        %3593 = vmatpush1.bf16.msra.mxu0 %v2541
        %3594 = vmatprep.subr.bf16.mxu0 %v2544
        %3595 = vmatpush1.bf16.msra.mxu0 %v2543
        %3596 = vmatprep.subr.bf16.mxu0 %v2546
        %3597 = vmatpush1.bf16.msra.mxu0 %v2545
        %3598 = vmatprep.subr.bf16.mxu0 %v2548
        %3599 = vmatpush1.bf16.msra.mxu0 %v2547
        %3600 = vmatprep.subr.bf16.mxu0 %v2550
        %3601 = vmatpush1.bf16.msra.mxu0 %v2549
        %3602 = vmatprep.subr.bf16.mxu0 %v2552
        %3603 = vmatpush1.bf16.msra.mxu0 %v2551
        %3604 = vmatprep.subr.bf16.mxu0 %v2554
        %3605 = vmatpush1.bf16.msra.mxu0 %v2553
        %3606 = vmatprep.subr.bf16.mxu0 %v2556
        %3607 = vmatpush1.bf16.msra.mxu0 %v2555
        %3608 = vmatprep.subr.bf16.mxu0 %v2558
        %3609 = vmatpush1.bf16.msra.mxu0 %v2557
        %3610 = vmatprep.subr.bf16.mxu0 %v2560
        %3611 = vmatpush1.bf16.msra.mxu0 %v2559
        %3612 = vmatprep.subr.bf16.mxu0 %v2562
        %3613 = vmatpush1.bf16.msra.mxu0 %v2561
        %3614 = vmatprep.subr.bf16.mxu0 %v2564
        %3615 = vmatpush1.bf16.msra.mxu0 %v2563
        %3616 = vmatprep.subr.bf16.mxu0 %v2566
        %3617 = vmatpush1.bf16.msra.mxu0 %v2565
        %3618 = vmatprep.mubr.bf16.mxu0 %v846
        %3619 = vmatmul.mubr.bf16.gmra.mrb[0].mxu0 %v845
        %v3620 = vpop.f32.mrb[0].mxu0
        %v3621 = vadd.f32 %v3580, %v3620
        %v3622 = vpop.f32.mrb[0].mxu0
        %v3623 = vadd.f32 %v3582, %v3622
        %v3624 = vpop.f32.mrb[0].mxu0
        %v3625 = vpop.f32.mrb[0].mxu0
        %3626 = vdwg.mxu0
        %3627 = vmatprep.subr.bf16.mxu0 %v2568
        %3628 = vmatpush1.bf16.msra.mxu0 %v2567
        %3629 = vmatprep.subr.bf16.mxu0 %v2570
        %3630 = vmatpush1.bf16.msra.mxu0 %v2569
        %3631 = vmatprep.subr.bf16.mxu0 %v2572
        %3632 = vmatpush1.bf16.msra.mxu0 %v2571
        %3633 = vmatprep.subr.bf16.mxu0 %v2574
        %3634 = vmatpush1.bf16.msra.mxu0 %v2573
        %3635 = vmatprep.subr.bf16.mxu0 %v2576
        %3636 = vmatpush1.bf16.msra.mxu0 %v2575
        %3637 = vmatprep.subr.bf16.mxu0 %v2578
        %3638 = vmatpush1.bf16.msra.mxu0 %v2577
        %3639 = vmatprep.subr.bf16.mxu0 %v2580
        %3640 = vmatpush1.bf16.msra.mxu0 %v2579
        %3641 = vmatprep.subr.bf16.mxu0 %v2582
        %3642 = vmatpush1.bf16.msra.mxu0 %v2581
        %3643 = vmatprep.subr.bf16.mxu0 %v2584
        %3644 = vmatpush1.bf16.msra.mxu0 %v2583
        %3645 = vmatprep.subr.bf16.mxu0 %v2586
        %3646 = vmatpush1.bf16.msra.mxu0 %v2585
        %3647 = vmatprep.subr.bf16.mxu0 %v2588
        %3648 = vmatpush1.bf16.msra.mxu0 %v2587
        %3649 = vmatprep.subr.bf16.mxu0 %v2590
        %3650 = vmatpush1.bf16.msra.mxu0 %v2589
        %3651 = vmatprep.subr.bf16.mxu0 %v2592
        %3652 = vmatpush1.bf16.msra.mxu0 %v2591
        %3653 = vmatprep.subr.bf16.mxu0 %v2594
        %3654 = vmatpush1.bf16.msra.mxu0 %v2593
        %3655 = vmatprep.subr.bf16.mxu0 %v2596
        %3656 = vmatpush1.bf16.msra.mxu0 %v2595
        %3657 = vmatprep.subr.bf16.mxu0 %v2598
        %3658 = vmatpush1.bf16.msra.mxu0 %v2597
        %3659 = vmatprep.mubr.bf16.mxu0 %v848
        %3660 = vmatmul.mubr.bf16.gmra.mrb[0].mxu0 %v847
        %v3661 = vpop.f32.mrb[0].mxu0
        %v3662 = vadd.f32 %v3621, %v3661
        %v3663 = vpop.f32.mrb[0].mxu0
        %v3664 = vadd.f32 %v3623, %v3663
        %v3665 = vpop.f32.mrb[0].mxu0
        %v3666 = vpop.f32.mrb[0].mxu0
        %3667 = vdwg.mxu0
        %3668 = vmatprep.subr.bf16.mxu0 %v2600
        %3669 = vmatpush1.bf16.msra.mxu0 %v2599
        %3670 = vmatprep.subr.bf16.mxu0 %v2602
        %3671 = vmatpush1.bf16.msra.mxu0 %v2601
        %3672 = vmatprep.subr.bf16.mxu0 %v2604
        %3673 = vmatpush1.bf16.msra.mxu0 %v2603
        %3674 = vmatprep.subr.bf16.mxu0 %v2606
        %3675 = vmatpush1.bf16.msra.mxu0 %v2605
        %3676 = vmatprep.subr.bf16.mxu0 %v2608
        %3677 = vmatpush1.bf16.msra.mxu0 %v2607
        %3678 = vmatprep.subr.bf16.mxu0 %v2610
        %3679 = vmatpush1.bf16.msra.mxu0 %v2609
        %3680 = vmatprep.subr.bf16.mxu0 %v2612
        %3681 = vmatpush1.bf16.msra.mxu0 %v2611
        %3682 = vmatprep.subr.bf16.mxu0 %v2614
        %3683 = vmatpush1.bf16.msra.mxu0 %v2613
        %3684 = vmatprep.subr.bf16.mxu0 %v2616
        %3685 = vmatpush1.bf16.msra.mxu0 %v2615
        %3686 = vmatprep.subr.bf16.mxu0 %v2618
        %3687 = vmatpush1.bf16.msra.mxu0 %v2617
        %3688 = vmatprep.subr.bf16.mxu0 %v2620
        %3689 = vmatpush1.bf16.msra.mxu0 %v2619
        %3690 = vmatprep.subr.bf16.mxu0 %v2622
        %3691 = vmatpush1.bf16.msra.mxu0 %v2621
        %3692 = vmatprep.subr.bf16.mxu0 %v2624
        %3693 = vmatpush1.bf16.msra.mxu0 %v2623
        %3694 = vmatprep.subr.bf16.mxu0 %v2626
        %3695 = vmatpush1.bf16.msra.mxu0 %v2625
        %3696 = vmatprep.subr.bf16.mxu0 %v2628
        %3697 = vmatpush1.bf16.msra.mxu0 %v2627
        %3698 = vmatprep.subr.bf16.mxu0 %v2630
        %3699 = vmatpush1.bf16.msra.mxu0 %v2629
        %3700 = vmatprep.mubr.bf16.mxu0 %v850
        %3701 = vmatmul.mubr.bf16.gmra.mrb[0].mxu0 %v849
        %v3702 = vpop.f32.mrb[0].mxu0
        %v3703 = vadd.f32 %v3662, %v3702
        %v3704 = vpop.f32.mrb[0].mxu0
        %v3705 = vadd.f32 %v3664, %v3704
        %v3706 = vpop.f32.mrb[0].mxu0
        %v3707 = vpop.f32.mrb[0].mxu0
        %3708 = vdwg.mxu0
        %3709 = vmatprep.subr.bf16.mxu0 %v2632
        %3710 = vmatpush1.bf16.msra.mxu0 %v2631
        %3711 = vmatprep.subr.bf16.mxu0 %v2634
        %3712 = vmatpush1.bf16.msra.mxu0 %v2633
        %3713 = vmatprep.subr.bf16.mxu0 %v2636
        %3714 = vmatpush1.bf16.msra.mxu0 %v2635
        %3715 = vmatprep.subr.bf16.mxu0 %v2638
        %3716 = vmatpush1.bf16.msra.mxu0 %v2637
        %3717 = vmatprep.subr.bf16.mxu0 %v2640
        %3718 = vmatpush1.bf16.msra.mxu0 %v2639
        %3719 = vmatprep.subr.bf16.mxu0 %v2642
        %3720 = vmatpush1.bf16.msra.mxu0 %v2641
        %3721 = vmatprep.subr.bf16.mxu0 %v2644
        %3722 = vmatpush1.bf16.msra.mxu0 %v2643
        %3723 = vmatprep.subr.bf16.mxu0 %v2646
        %3724 = vmatpush1.bf16.msra.mxu0 %v2645
        %3725 = vmatprep.subr.bf16.mxu0 %v2648
        %3726 = vmatpush1.bf16.msra.mxu0 %v2647
        %3727 = vmatprep.subr.bf16.mxu0 %v2650
        %3728 = vmatpush1.bf16.msra.mxu0 %v2649
        %3729 = vmatprep.subr.bf16.mxu0 %v2652
        %3730 = vmatpush1.bf16.msra.mxu0 %v2651
        %3731 = vmatprep.subr.bf16.mxu0 %v2654
        %3732 = vmatpush1.bf16.msra.mxu0 %v2653
        %3733 = vmatprep.subr.bf16.mxu0 %v2656
        %3734 = vmatpush1.bf16.msra.mxu0 %v2655
        %3735 = vmatprep.subr.bf16.mxu0 %v2658
        %3736 = vmatpush1.bf16.msra.mxu0 %v2657
        %3737 = vmatprep.subr.bf16.mxu0 %v2660
        %3738 = vmatpush1.bf16.msra.mxu0 %v2659
        %3739 = vmatprep.subr.bf16.mxu0 %v2662
        %3740 = vmatpush1.bf16.msra.mxu0 %v2661
        %3741 = vmatprep.mubr.bf16.mxu0 %v852
        %3742 = vmatmul.mubr.bf16.gmra.mrb[0].mxu0 %v851
        %v3743 = vpop.f32.mrb[0].mxu0
        %v3744 = vadd.f32 %v3703, %v3743
        %v3745 = vpop.f32.mrb[0].mxu0
        %v3746 = vadd.f32 %v3705, %v3745
        %v3747 = vpop.f32.mrb[0].mxu0
        %v3748 = vpop.f32.mrb[0].mxu0
        %3749 = vdwg.mxu0
        %3750 = vmatprep.subr.bf16.mxu0 %v2664
        %3751 = vmatpush1.bf16.msra.mxu0 %v2663
        %3752 = vmatprep.subr.bf16.mxu0 %v2666
        %3753 = vmatpush1.bf16.msra.mxu0 %v2665
        %3754 = vmatprep.subr.bf16.mxu0 %v2668
        %3755 = vmatpush1.bf16.msra.mxu0 %v2667
        %3756 = vmatprep.subr.bf16.mxu0 %v2670
        %3757 = vmatpush1.bf16.msra.mxu0 %v2669
        %3758 = vmatprep.subr.bf16.mxu0 %v2672
        %3759 = vmatpush1.bf16.msra.mxu0 %v2671
        %3760 = vmatprep.subr.bf16.mxu0 %v2674
        %3761 = vmatpush1.bf16.msra.mxu0 %v2673
        %3762 = vmatprep.subr.bf16.mxu0 %v2676
        %3763 = vmatpush1.bf16.msra.mxu0 %v2675
        %3764 = vmatprep.subr.bf16.mxu0 %v2678
        %3765 = vmatpush1.bf16.msra.mxu0 %v2677
        %3766 = vmatprep.subr.bf16.mxu0 %v2680
        %3767 = vmatpush1.bf16.msra.mxu0 %v2679
        %3768 = vmatprep.subr.bf16.mxu0 %v2682
        %3769 = vmatpush1.bf16.msra.mxu0 %v2681
        %3770 = vmatprep.subr.bf16.mxu0 %v2684
        %3771 = vmatpush1.bf16.msra.mxu0 %v2683
        %3772 = vmatprep.subr.bf16.mxu0 %v2686
        %3773 = vmatpush1.bf16.msra.mxu0 %v2685
        %3774 = vmatprep.subr.bf16.mxu0 %v2688
        %3775 = vmatpush1.bf16.msra.mxu0 %v2687
        %3776 = vmatprep.subr.bf16.mxu0 %v2690
        %3777 = vmatpush1.bf16.msra.mxu0 %v2689
        %3778 = vmatprep.subr.bf16.mxu0 %v2692
        %3779 = vmatpush1.bf16.msra.mxu0 %v2691
        %3780 = vmatprep.subr.bf16.mxu0 %v2694
        %3781 = vmatpush1.bf16.msra.mxu0 %v2693
        %3782 = vmatprep.mubr.bf16.mxu0 %v854
        %3783 = vmatmul.mubr.bf16.gmra.mrb[0].mxu0 %v853
        %v3784 = vpop.f32.mrb[0].mxu0
        %v3785 = vadd.f32 %v3744, %v3784
        %v3786 = vpop.f32.mrb[0].mxu0
        %v3787 = vadd.f32 %v3746, %v3786
        %v3788 = vpop.f32.mrb[0].mxu0
        %v3789 = vpop.f32.mrb[0].mxu0
        %3790 = vdwg.mxu0
        %3791 = vmatprep.subr.bf16.mxu0 %v2696
        %3792 = vmatpush1.bf16.msra.mxu0 %v2695
        %3793 = vmatprep.subr.bf16.mxu0 %v2698
        %3794 = vmatpush1.bf16.msra.mxu0 %v2697
        %3795 = vmatprep.subr.bf16.mxu0 %v2700
        %3796 = vmatpush1.bf16.msra.mxu0 %v2699
        %3797 = vmatprep.subr.bf16.mxu0 %v2702
        %3798 = vmatpush1.bf16.msra.mxu0 %v2701
        %3799 = vmatprep.subr.bf16.mxu0 %v2704
        %3800 = vmatpush1.bf16.msra.mxu0 %v2703
        %3801 = vmatprep.subr.bf16.mxu0 %v2706
        %3802 = vmatpush1.bf16.msra.mxu0 %v2705
        %3803 = vmatprep.subr.bf16.mxu0 %v2708
        %3804 = vmatpush1.bf16.msra.mxu0 %v2707
        %3805 = vmatprep.subr.bf16.mxu0 %v2710
        %3806 = vmatpush1.bf16.msra.mxu0 %v2709
        %3807 = vmatprep.subr.bf16.mxu0 %v2712
        %3808 = vmatpush1.bf16.msra.mxu0 %v2711
        %3809 = vmatprep.subr.bf16.mxu0 %v2714
        %3810 = vmatpush1.bf16.msra.mxu0 %v2713
        %3811 = vmatprep.subr.bf16.mxu0 %v2716
        %3812 = vmatpush1.bf16.msra.mxu0 %v2715
        %3813 = vmatprep.subr.bf16.mxu0 %v2718
        %3814 = vmatpush1.bf16.msra.mxu0 %v2717
        %3815 = vmatprep.subr.bf16.mxu0 %v2720
        %3816 = vmatpush1.bf16.msra.mxu0 %v2719
        %3817 = vmatprep.subr.bf16.mxu0 %v2722
        %3818 = vmatpush1.bf16.msra.mxu0 %v2721
        %3819 = vmatprep.subr.bf16.mxu0 %v2724
        %3820 = vmatpush1.bf16.msra.mxu0 %v2723
        %3821 = vmatprep.subr.bf16.mxu0 %v2726
        %3822 = vmatpush1.bf16.msra.mxu0 %v2725
        %3823 = vmatprep.mubr.bf16.mxu0 %v856
        %3824 = vmatmul.mubr.bf16.gmra.mrb[0].mxu0 %v855
        %v3825 = vpop.f32.mrb[0].mxu0
        %v3826 = vadd.f32 %v3785, %v3825
        %v3827 = vpop.f32.mrb[0].mxu0
        %v3828 = vadd.f32 %v3787, %v3827
        %v3829 = vpop.f32.mrb[0].mxu0
        %v3830 = vpop.f32.mrb[0].mxu0
        %3831 = vdwg.mxu0
        %3832 = vmatprep.subr.bf16.mxu0 %v2728
        %3833 = vmatpush1.bf16.msra.mxu0 %v2727
        %3834 = vmatprep.subr.bf16.mxu0 %v2730
        %3835 = vmatpush1.bf16.msra.mxu0 %v2729
        %3836 = vmatprep.subr.bf16.mxu0 %v2732
        %3837 = vmatpush1.bf16.msra.mxu0 %v2731
        %3838 = vmatprep.subr.bf16.mxu0 %v2734
        %3839 = vmatpush1.bf16.msra.mxu0 %v2733
        %3840 = vmatprep.subr.bf16.mxu0 %v2736
        %3841 = vmatpush1.bf16.msra.mxu0 %v2735
        %3842 = vmatprep.subr.bf16.mxu0 %v2738
        %3843 = vmatpush1.bf16.msra.mxu0 %v2737
        %3844 = vmatprep.subr.bf16.mxu0 %v2740
        %3845 = vmatpush1.bf16.msra.mxu0 %v2739
        %3846 = vmatprep.subr.bf16.mxu0 %v2742
        %3847 = vmatpush1.bf16.msra.mxu0 %v2741
        %3848 = vmatprep.subr.bf16.mxu0 %v2744
        %3849 = vmatpush1.bf16.msra.mxu0 %v2743
        %3850 = vmatprep.subr.bf16.mxu0 %v2746
        %3851 = vmatpush1.bf16.msra.mxu0 %v2745
        %3852 = vmatprep.subr.bf16.mxu0 %v2748
        %3853 = vmatpush1.bf16.msra.mxu0 %v2747
        %3854 = vmatprep.subr.bf16.mxu0 %v2750
        %3855 = vmatpush1.bf16.msra.mxu0 %v2749
        %3856 = vmatprep.subr.bf16.mxu0 %v2752
        %3857 = vmatpush1.bf16.msra.mxu0 %v2751
        %3858 = vmatprep.subr.bf16.mxu0 %v2754
        %3859 = vmatpush1.bf16.msra.mxu0 %v2753
        %3860 = vmatprep.subr.bf16.mxu0 %v2756
        %3861 = vmatpush1.bf16.msra.mxu0 %v2755
        %3862 = vmatprep.subr.bf16.mxu0 %v2758
        %3863 = vmatpush1.bf16.msra.mxu0 %v2757
        %3864 = vmatprep.mubr.bf16.mxu0 %v858
        %3865 = vmatmul.mubr.bf16.gmra.mrb[0].mxu0 %v857
        %v3866 = vpop.f32.mrb[0].mxu0
        %v3867 = vadd.f32 %v3826, %v3866
        %v3868 = vpop.f32.mrb[0].mxu0
        %v3869 = vadd.f32 %v3828, %v3868
        %v3870 = vpop.f32.mrb[0].mxu0
        %v3871 = vpop.f32.mrb[0].mxu0
        %3872 = vdwg.mxu0
        %3873 = vmatprep.subr.bf16.mxu0 %v2760
        %3874 = vmatpush1.bf16.msra.mxu0 %v2759
        %3875 = vmatprep.subr.bf16.mxu0 %v2762
        %3876 = vmatpush1.bf16.msra.mxu0 %v2761
        %3877 = vmatprep.subr.bf16.mxu0 %v2764
        %3878 = vmatpush1.bf16.msra.mxu0 %v2763
        %3879 = vmatprep.subr.bf16.mxu0 %v2766
        %3880 = vmatpush1.bf16.msra.mxu0 %v2765
        %3881 = vmatprep.subr.bf16.mxu0 %v2768
        %3882 = vmatpush1.bf16.msra.mxu0 %v2767
        %3883 = vmatprep.subr.bf16.mxu0 %v2770
        %3884 = vmatpush1.bf16.msra.mxu0 %v2769
        %3885 = vmatprep.subr.bf16.mxu0 %v2772
        %3886 = vmatpush1.bf16.msra.mxu0 %v2771
        %3887 = vmatprep.subr.bf16.mxu0 %v2774
        %3888 = vmatpush1.bf16.msra.mxu0 %v2773
        %3889 = vmatprep.subr.bf16.mxu0 %v2776
        %3890 = vmatpush1.bf16.msra.mxu0 %v2775
        %3891 = vmatprep.subr.bf16.mxu0 %v2778
        %3892 = vmatpush1.bf16.msra.mxu0 %v2777
        %3893 = vmatprep.subr.bf16.mxu0 %v2780
        %3894 = vmatpush1.bf16.msra.mxu0 %v2779
        %3895 = vmatprep.subr.bf16.mxu0 %v2782
        %3896 = vmatpush1.bf16.msra.mxu0 %v2781
        %3897 = vmatprep.subr.bf16.mxu0 %v2784
        %3898 = vmatpush1.bf16.msra.mxu0 %v2783
        %3899 = vmatprep.subr.bf16.mxu0 %v2786
        %3900 = vmatpush1.bf16.msra.mxu0 %v2785
        %3901 = vmatprep.subr.bf16.mxu0 %v2788
        %3902 = vmatpush1.bf16.msra.mxu0 %v2787
        %3903 = vmatprep.subr.bf16.mxu0 %v2790
        %3904 = vmatpush1.bf16.msra.mxu0 %v2789
        %3905 = vmatprep.mubr.bf16.mxu0 %v860
        %3906 = vmatmul.mubr.bf16.gmra.mrb[0].mxu0 %v859
        %v3907 = vpop.f32.mrb[0].mxu0
        %v3908 = vadd.f32 %v3867, %v3907
        %v3909 = vpop.f32.mrb[0].mxu0
        %v3910 = vadd.f32 %v3869, %v3909
        %v3911 = vpop.f32.mrb[0].mxu0
        %v3912 = vpop.f32.mrb[0].mxu0
        %3913 = vdwg.mxu0
        %3914 = vmatprep.subr.bf16.mxu0 %v2792
        %3915 = vmatpush1.bf16.msra.mxu0 %v2791
        %3916 = vmatprep.subr.bf16.mxu0 %v2794
        %3917 = vmatpush1.bf16.msra.mxu0 %v2793
        %3918 = vmatprep.subr.bf16.mxu0 %v2796
        %3919 = vmatpush1.bf16.msra.mxu0 %v2795
        %3920 = vmatprep.subr.bf16.mxu0 %v2798
        %3921 = vmatpush1.bf16.msra.mxu0 %v2797
        %3922 = vmatprep.subr.bf16.mxu0 %v2800
        %3923 = vmatpush1.bf16.msra.mxu0 %v2799
        %3924 = vmatprep.subr.bf16.mxu0 %v2802
        %3925 = vmatpush1.bf16.msra.mxu0 %v2801
        %3926 = vmatprep.subr.bf16.mxu0 %v2804
        %3927 = vmatpush1.bf16.msra.mxu0 %v2803
        %3928 = vmatprep.subr.bf16.mxu0 %v2806
        %3929 = vmatpush1.bf16.msra.mxu0 %v2805
        %3930 = vmatprep.subr.bf16.mxu0 %v2808
        %3931 = vmatpush1.bf16.msra.mxu0 %v2807
        %3932 = vmatprep.subr.bf16.mxu0 %v2810
        %3933 = vmatpush1.bf16.msra.mxu0 %v2809
        %3934 = vmatprep.subr.bf16.mxu0 %v2812
        %3935 = vmatpush1.bf16.msra.mxu0 %v2811
        %3936 = vmatprep.subr.bf16.mxu0 %v2814
        %3937 = vmatpush1.bf16.msra.mxu0 %v2813
        %3938 = vmatprep.subr.bf16.mxu0 %v2816
        %3939 = vmatpush1.bf16.msra.mxu0 %v2815
        %3940 = vmatprep.subr.bf16.mxu0 %v2818
        %3941 = vmatpush1.bf16.msra.mxu0 %v2817
        %3942 = vmatprep.subr.bf16.mxu0 %v2820
        %3943 = vmatpush1.bf16.msra.mxu0 %v2819
        %3944 = vmatprep.subr.bf16.mxu0 %v2822
        %3945 = vmatpush1.bf16.msra.mxu0 %v2821
        %3946 = vmatprep.mubr.bf16.mxu0 %v862
        %3947 = vmatmul.mubr.bf16.gmra.mrb[0].mxu0 %v861
        %v3948 = vpop.f32.mrb[0].mxu0
        %v3949 = vadd.f32 %v3908, %v3948
        %v3950 = vpop.f32.mrb[0].mxu0
        %v3951 = vadd.f32 %v3910, %v3950
        %v3952 = vpop.f32.mrb[0].mxu0
        %v3953 = vpop.f32.mrb[0].mxu0
        %3954 = vdwg.mxu0
        %3955 = vmatprep.subr.bf16.mxu0 %v2824
        %3956 = vmatpush1.bf16.msra.mxu0 %v2823
        %3957 = vmatprep.subr.bf16.mxu0 %v2826
        %3958 = vmatpush1.bf16.msra.mxu0 %v2825
        %3959 = vmatprep.subr.bf16.mxu0 %v2828
        %3960 = vmatpush1.bf16.msra.mxu0 %v2827
        %3961 = vmatprep.subr.bf16.mxu0 %v2830
        %3962 = vmatpush1.bf16.msra.mxu0 %v2829
        %3963 = vmatprep.subr.bf16.mxu0 %v2832
        %3964 = vmatpush1.bf16.msra.mxu0 %v2831
        %3965 = vmatprep.subr.bf16.mxu0 %v2834
        %3966 = vmatpush1.bf16.msra.mxu0 %v2833
        %3967 = vmatprep.subr.bf16.mxu0 %v2836
        %3968 = vmatpush1.bf16.msra.mxu0 %v2835
        %3969 = vmatprep.subr.bf16.mxu0 %v2838
        %3970 = vmatpush1.bf16.msra.mxu0 %v2837
        %3971 = vmatprep.subr.bf16.mxu0 %v2840
        %3972 = vmatpush1.bf16.msra.mxu0 %v2839
        %3973 = vmatprep.subr.bf16.mxu0 %v2842
        %3974 = vmatpush1.bf16.msra.mxu0 %v2841
        %3975 = vmatprep.subr.bf16.mxu0 %v2844
        %3976 = vmatpush1.bf16.msra.mxu0 %v2843
        %3977 = vmatprep.subr.bf16.mxu0 %v2846
        %3978 = vmatpush1.bf16.msra.mxu0 %v2845
        %3979 = vmatprep.subr.bf16.mxu0 %v2848
        %3980 = vmatpush1.bf16.msra.mxu0 %v2847
        %3981 = vmatprep.subr.bf16.mxu0 %v2850
        %3982 = vmatpush1.bf16.msra.mxu0 %v2849
        %3983 = vmatprep.subr.bf16.mxu0 %v2852
        %3984 = vmatpush1.bf16.msra.mxu0 %v2851
        %3985 = vmatprep.subr.bf16.mxu0 %v2854
        %3986 = vmatpush1.bf16.msra.mxu0 %v2853
        %3987 = vmatprep.mubr.bf16.mxu0 %v864
        %3988 = vmatmul.mubr.bf16.gmra.mrb[0].mxu0 %v863
        %v3989 = vpop.f32.mrb[0].mxu0
        %v3990 = vadd.f32 %v3949, %v3989
        %v3991 = vpop.f32.mrb[0].mxu0
        %v3992 = vadd.f32 %v3951, %v3991
        %v3993 = vpop.f32.mrb[0].mxu0
        %v3994 = vpop.f32.mrb[0].mxu0
        %3995 = vdwg.mxu0
        %3996 = vmatprep.subr.bf16.mxu0 %v2856
        %3997 = vmatpush1.bf16.msra.mxu0 %v2855
        %3998 = vmatprep.subr.bf16.mxu0 %v2858
        %3999 = vmatpush1.bf16.msra.mxu0 %v2857
        %4000 = vmatprep.subr.bf16.mxu0 %v2860
        %4001 = vmatpush1.bf16.msra.mxu0 %v2859
        %4002 = vmatprep.subr.bf16.mxu0 %v2862
        %4003 = vmatpush1.bf16.msra.mxu0 %v2861
        %4004 = vmatprep.subr.bf16.mxu0 %v2864
        %4005 = vmatpush1.bf16.msra.mxu0 %v2863
        %4006 = vmatprep.subr.bf16.mxu0 %v2866
        %4007 = vmatpush1.bf16.msra.mxu0 %v2865
        %4008 = vmatprep.subr.bf16.mxu0 %v2868
        %4009 = vmatpush1.bf16.msra.mxu0 %v2867
        %4010 = vmatprep.subr.bf16.mxu0 %v2870
        %4011 = vmatpush1.bf16.msra.mxu0 %v2869
        %4012 = vmatprep.subr.bf16.mxu0 %v2872
        %4013 = vmatpush1.bf16.msra.mxu0 %v2871
        %4014 = vmatprep.subr.bf16.mxu0 %v2874
        %4015 = vmatpush1.bf16.msra.mxu0 %v2873
        %4016 = vmatprep.subr.bf16.mxu0 %v2876
        %4017 = vmatpush1.bf16.msra.mxu0 %v2875
        %4018 = vmatprep.subr.bf16.mxu0 %v2878
        %4019 = vmatpush1.bf16.msra.mxu0 %v2877
        %4020 = vmatprep.subr.bf16.mxu0 %v2880
        %4021 = vmatpush1.bf16.msra.mxu0 %v2879
        %4022 = vmatprep.subr.bf16.mxu0 %v2882
        %4023 = vmatpush1.bf16.msra.mxu0 %v2881
        %4024 = vmatprep.subr.bf16.mxu0 %v2884
        %4025 = vmatpush1.bf16.msra.mxu0 %v2883
        %4026 = vmatprep.subr.bf16.mxu0 %v2886
        %4027 = vmatpush1.bf16.msra.mxu0 %v2885
        %4028 = vmatprep.mubr.bf16.mxu0 %v866
        %4029 = vmatmul.mubr.bf16.gmra.mrb[0].mxu0 %v865
        %v4030 = vpop.f32.mrb[0].mxu0
        %v4031 = vadd.f32 %v3990, %v4030
        %v4032 = vpop.f32.mrb[0].mxu0
        %v4033 = vadd.f32 %v3992, %v4032
        %v4034 = vpop.f32.mrb[0].mxu0
        %v4035 = vpop.f32.mrb[0].mxu0
        %4036 = vdwg.mxu0
        %4037 = vmatprep.subr.bf16.mxu0 %v2888
        %4038 = vmatpush1.bf16.msra.mxu0 %v2887
        %4039 = vmatprep.subr.bf16.mxu0 %v2890
        %4040 = vmatpush1.bf16.msra.mxu0 %v2889
        %4041 = vmatprep.subr.bf16.mxu0 %v2892
        %4042 = vmatpush1.bf16.msra.mxu0 %v2891
        %4043 = vmatprep.subr.bf16.mxu0 %v2894
        %4044 = vmatpush1.bf16.msra.mxu0 %v2893
        %4045 = vmatprep.subr.bf16.mxu0 %v2896
        %4046 = vmatpush1.bf16.msra.mxu0 %v2895
        %4047 = vmatprep.subr.bf16.mxu0 %v2898
        %4048 = vmatpush1.bf16.msra.mxu0 %v2897
        %4049 = vmatprep.subr.bf16.mxu0 %v2900
        %4050 = vmatpush1.bf16.msra.mxu0 %v2899
        %4051 = vmatprep.subr.bf16.mxu0 %v2902
        %4052 = vmatpush1.bf16.msra.mxu0 %v2901
        %4053 = vmatprep.subr.bf16.mxu0 %v2904
        %4054 = vmatpush1.bf16.msra.mxu0 %v2903
        %4055 = vmatprep.subr.bf16.mxu0 %v2906
        %4056 = vmatpush1.bf16.msra.mxu0 %v2905
        %4057 = vmatprep.subr.bf16.mxu0 %v2908
        %4058 = vmatpush1.bf16.msra.mxu0 %v2907
        %4059 = vmatprep.subr.bf16.mxu0 %v2910
        %4060 = vmatpush1.bf16.msra.mxu0 %v2909
        %4061 = vmatprep.subr.bf16.mxu0 %v2912
        %4062 = vmatpush1.bf16.msra.mxu0 %v2911
        %4063 = vmatprep.subr.bf16.mxu0 %v2914
        %4064 = vmatpush1.bf16.msra.mxu0 %v2913
        %4065 = vmatprep.subr.bf16.mxu0 %v2916
        %4066 = vmatpush1.bf16.msra.mxu0 %v2915
        %4067 = vmatprep.subr.bf16.mxu0 %v2918
        %4068 = vmatpush1.bf16.msra.mxu0 %v2917
        %4069 = vmatprep.mubr.bf16.mxu0 %v868
        %4070 = vmatmul.mubr.bf16.gmra.mrb[0].mxu0 %v867
        %v4071 = vpop.f32.mrb[0].mxu0
        %v4072 = vadd.f32 %v4031, %v4071
        %v4073 = vpop.f32.mrb[0].mxu0
        %v4074 = vadd.f32 %v4033, %v4073
        %v4075 = vpop.f32.mrb[0].mxu0
        %v4076 = vpop.f32.mrb[0].mxu0
        %4077 = vdwg.mxu0
        %4078 = vmatprep.subr.bf16.mxu0 %v2920
        %4079 = vmatpush1.bf16.msra.mxu0 %v2919
        %4080 = vmatprep.subr.bf16.mxu0 %v2922
        %4081 = vmatpush1.bf16.msra.mxu0 %v2921
        %4082 = vmatprep.subr.bf16.mxu0 %v2924
        %4083 = vmatpush1.bf16.msra.mxu0 %v2923
        %4084 = vmatprep.subr.bf16.mxu0 %v2926
        %4085 = vmatpush1.bf16.msra.mxu0 %v2925
        %4086 = vmatprep.subr.bf16.mxu0 %v2928
        %4087 = vmatpush1.bf16.msra.mxu0 %v2927
        %4088 = vmatprep.subr.bf16.mxu0 %v2930
        %4089 = vmatpush1.bf16.msra.mxu0 %v2929
        %4090 = vmatprep.subr.bf16.mxu0 %v2932
        %4091 = vmatpush1.bf16.msra.mxu0 %v2931
        %4092 = vmatprep.subr.bf16.mxu0 %v2934
        %4093 = vmatpush1.bf16.msra.mxu0 %v2933
        %4094 = vmatprep.subr.bf16.mxu0 %v2936
        %4095 = vmatpush1.bf16.msra.mxu0 %v2935
        %4096 = vmatprep.subr.bf16.mxu0 %v2938
        %4097 = vmatpush1.bf16.msra.mxu0 %v2937
        %4098 = vmatprep.subr.bf16.mxu0 %v2940
        %4099 = vmatpush1.bf16.msra.mxu0 %v2939
        %4100 = vmatprep.subr.bf16.mxu0 %v2942
        %4101 = vmatpush1.bf16.msra.mxu0 %v2941
        %4102 = vmatprep.subr.bf16.mxu0 %v2944
        %4103 = vmatpush1.bf16.msra.mxu0 %v2943
        %4104 = vmatprep.subr.bf16.mxu0 %v2946
        %4105 = vmatpush1.bf16.msra.mxu0 %v2945
        %4106 = vmatprep.subr.bf16.mxu0 %v2948
        %4107 = vmatpush1.bf16.msra.mxu0 %v2947
        %4108 = vmatprep.subr.bf16.mxu0 %v2950
        %4109 = vmatpush1.bf16.msra.mxu0 %v2949
        %4110 = vmatprep.mubr.bf16.mxu0 %v870
        %4111 = vmatmul.mubr.bf16.gmra.mrb[0].mxu0 %v869
        %v4112 = vpop.f32.mrb[0].mxu0
        %v4113 = vadd.f32 %v4072, %v4112
        %v4114 = vpop.f32.mrb[0].mxu0
        %v4115 = vadd.f32 %v4074, %v4114
        %v4116 = vpop.f32.mrb[0].mxu0
        %v4117 = vpop.f32.mrb[0].mxu0
        %4118 = vdwg.mxu0
        %v4119 = vadd.f32 %v261, %v4113
        %v4120 = vadd.f32 %v262, %v4115
        %4121 = vst [vmem:[#allocation2] sm:$0xff] %v4119
        %4122 = vst [vmem:[#allocation2 + $0x8] sm:$0xff] %v4120
        %p4123 = scmp.eq.s32.totalorder %s22, 2
        // Predicated region
        $region41: #{encoder_decoder_forward.3} parent=31 // pred_check
          %p4124 = pneg %p4123
        $region42: #{encoder_decoder_forward.3} parent=31 // pred_check_branch
          %4126 = sbr.rel (%p4124) target = $region44
        $region43: #{encoder_decoder_forward.3} parent=31 // pred_region
          %v4127 = vld [vmem:[#allocation2] sm:$0xff]
          %v4128 = vld [vmem:[#allocation2 + $0x8] sm:$0xff]
          %v4129 = vld [vmem:[%s247] sm:$0xff]
          %v4130 = vld [vmem:[%s247 + $0x8] sm:$0xff]
          %v4131 = vadd.f32 %v4127, %v4129
          %v4132 = vadd.f32 %v4128, %v4130
          %v4133 = vmax.f32 %v4131, 0.0
          %v4134 = vmax.f32 %v4132, 0.0
          %v4135 = vpack.c.bf16 %v4133, %v4133
          %v4136 = vpack.c.bf16 %v4134, %v4134
          %v4139 = vunpack.c.l.b16 %v4135
          %v4140 = vunpack.c.l.b16 %v4136
          %v4141 = vpack.c.b16 %v4140, %v4139
          %4143 = vst [vmem:[%s253] sm:$0xff] %v4141
        $region44: #{encoder_decoder_forward.3} parent=31 // pred_fallthru
          _
        %s4144 = smul.u32 2, %s21
        %p4145 = scmp.lt.s32.totalorder %s4144, 3
        %s4146 = scalar_select %p4145, %s4144, 3
        %s4147 = smul.addr %s4146, 4
        %s4148 = scalar_lea.vmem %s3, %s4147
        // Predicated region
        $region45: #{encoder_decoder_forward.3} parent=31 // pred_check
          %p4149 = pneg %p127
        $region46: #{encoder_decoder_forward.3} parent=31 // pred_check_branch
          %4151 = sbr.rel (%p4149) target = $region48
        $region47: #{encoder_decoder_forward.3} parent=31 // pred_region
          %s4152 = smul.u32 2, %s21
        $region48: #{encoder_decoder_forward.3} parent=31 // pred_fallthru
          _
      $region32: #{encoder_decoder_forward.3} parent=5 // pred_fallthru
        _
      %p4153 = scmp.le.s32.totalorder 2, %s12
      // Predicated region
      $region49: #{encoder_decoder_forward.3} parent=5 // pred_check
        %p4154 = pneg %p4153
      $region50: #{encoder_decoder_forward.3} parent=5 // pred_check_branch
        %4156 = sbr.rel (%p4154) target = $region52
      $region51: #{encoder_decoder_forward.3} parent=5 // pred_region
        %s4157 = ssub.s32 %s12, 2
        // Predicated region
        $region53: #{encoder_decoder_forward.3} parent=51 // pred_check
          %p4158 = pneg %p133
        $region54: #{encoder_decoder_forward.3} parent=51 // pred_check_branch
          %4160 = sbr.rel (%p4158) target = $region56
        $region55: #{encoder_decoder_forward.3} parent=51 // pred_region
          %s4161 = smul.u32 2, %s23
          %p4162 = scmp.lt.s32.totalorder %s4161, 3
          %s4163 = scalar_select %p4162, %s4161, 3
          %s4164 = smul.addr %s4163, 4
          %s4165 = scalar_lea.vmem %s3, %s4164
        $region56: #{encoder_decoder_forward.3} parent=51 // pred_fallthru
          _
      $region52: #{encoder_decoder_forward.3} parent=5 // pred_fallthru
        _
    $region6: #{encoder_decoder_forward.3} parent=1 // loop_footer
      %s16 = sadd.s32 1, %s12
    $region7: #{encoder_decoder_forward.3} parent=1 // loop_footer_branch
      %11 = sbr.rel target = $region3
    $region8: #{encoder_decoder_forward.3} parent=1 // loop_exit
      _
    %4166 = vsyncpa [#allocation4], 1
    %s4167 = scalar_lea.sflag [#allocation4], 1
    %4168 = vsyncpa %s4167, 1

// kernel: encoder_decoder_forward.5
$region0: #{encoder_decoder_forward.5}
  #allocation0 [shape = 'u32[]', space=smem, size = 0x4, offset = 0x4, fixed_abs, tag = 'smem constant byte address 0x4 - core index']
  #allocation1 [shape = 'u32[144,128]{1,0:T(1,128)}', space=vmem, size = 0x12000, scoped, tag = 'internal scratch']
  %s0 = inlined_call_operand.vmem [shape: bf16[8,512], index: 0, kind: input, shape index: {}]
  %s1 = inlined_call_operand.vmem [shape: bf16[512,12288], index: 1, kind: input, shape index: {}]
  %s2 = inlined_call_operand.vmem [shape: f32[1,12288], index: 2, kind: input, shape index: {}]
  %s3 = inlined_call_operand.vmem [shape: f32[8,12288], index: 3, kind: output, shape index: {}]
  %s4 = sld [smem:[#allocation0]]
  $region68: #{encoder_decoder_forward.5} parent=0
    _
  %s6 = ssub.s32 1, %s4
  %s7 = scalar_select 0, %s6, %s4
  $region1: #{encoder_decoder_forward.5} parent=0
    #allocation2 [shape = 'u8[4194304]{0}', space=vmem, size = 0x400000, scoped, tag = 'input window, operand 1']
    loop: start=0, step=1, limit=8
    $region2: #{encoder_decoder_forward.5} parent=1 // loop_pre_header
      _
    $region3: #{encoder_decoder_forward.5} parent=1 // loop_header
      %s9 = sphi 0, %s13
      %p10 = scmp.ge.s32.totalorder %s9, 8
      %s17 = sphi 0, %s17
      %s19 = sphi 0, %s17
      %s20 = sphi 0, %s19
      %s34 = sphi 0, %s20
      %s40 = sphi 0, %s42
      %s43 = sphi 0, %s40
      %s44 = sphi 0, %s43
      %s60 = sphi 0, %s44
      %s66 = sphi 0, %s68
      %s69 = sphi 0, %s66
      %s70 = sphi 0, %s69
      %s86 = sphi 0, %s70
      %s92 = sphi 0, %s94
      %s95 = sphi 0, %s92
      %s96 = sphi 0, %s95
      %s112 = sphi 0, %s96
    $region4: #{encoder_decoder_forward.5} parent=1 // loop_header_branch
      %12 = sbr.rel (%p10) target = $region8
    $region5: #{encoder_decoder_forward.5} parent=1 // loop_body
      %s14 = ssub.s32 %s9, 1
      %s15 = ssub.s32 %s9, 2
      %s16 = sadd.s32 %s9, 1
      %s18 = sadd.s32 %s17, 1
      %p21 = scmp.eq.s32.totalorder %s9, 5
      %p22 = scmp.ne.s32.totalorder %s17, %s19
      %p23 = scmp.eq.s32.totalorder %s9, 0
      %p24 = por %p22, %p23
      %p25 = scmp.ne.s32.totalorder %s17, %s19
      %p26 = scmp.eq.s32.totalorder %s14, 5
      %p27 = por %p25, %p26
      %p28 = scmp.ne.s32.totalorder %s19, %s20
      %p29 = scmp.eq.s32.totalorder %s14, 0
      %p30 = por %p28, %p29
      %p31 = scmp.ne.s32.totalorder %s19, %s20
      %p32 = scmp.eq.s32.totalorder %s15, 5
      %p33 = por %p31, %p32
      %p35 = scmp.ne.s32.totalorder %s20, %s34
      %p36 = scmp.eq.s32.totalorder %s15, 0
      %p37 = por %p35, %p36
      %s38 = ssub.s32 %s9, %s16
      %p39 = scmp.eq.s32.totalorder %s38, 0
      %s41 = sadd.s32 %s40, 1
      %s42 = scalar_select %p39, %s40, %s41
      %p45 = pneg %p39
      %p46 = scmp.eq.s32.totalorder %s9, 5
      %p47 = por %p45, %p46
      %p48 = scmp.ne.s32.totalorder %s40, %s43
      %p49 = scmp.eq.s32.totalorder %s9, 0
      %p50 = por %p48, %p49
      %p51 = scmp.ne.s32.totalorder %s40, %s43
      %p52 = scmp.eq.s32.totalorder %s14, 5
      %p53 = por %p51, %p52
      %p54 = scmp.ne.s32.totalorder %s43, %s44
      %p55 = scmp.eq.s32.totalorder %s14, 0
      %p56 = por %p54, %p55
      %p57 = scmp.ne.s32.totalorder %s43, %s44
      %p58 = scmp.eq.s32.totalorder %s15, 5
      %p59 = por %p57, %p58
      %p61 = scmp.ne.s32.totalorder %s44, %s60
      %p62 = scmp.eq.s32.totalorder %s15, 0
      %p63 = por %p61, %p62
      %s64 = ssub.s32 %s9, %s16
      %p65 = scmp.eq.s32.totalorder %s64, 0
      %s67 = sadd.s32 %s66, 1
      %s68 = scalar_select %p65, %s66, %s67
      %p71 = pneg %p65
      %p72 = scmp.eq.s32.totalorder %s9, 5
      %p73 = por %p71, %p72
      %p74 = scmp.ne.s32.totalorder %s66, %s69
      %p75 = scmp.eq.s32.totalorder %s9, 0
      %p76 = por %p74, %p75
      %p77 = scmp.ne.s32.totalorder %s66, %s69
      %p78 = scmp.eq.s32.totalorder %s14, 5
      %p79 = por %p77, %p78
      %p80 = scmp.ne.s32.totalorder %s69, %s70
      %p81 = scmp.eq.s32.totalorder %s14, 0
      %p82 = por %p80, %p81
      %p83 = scmp.ne.s32.totalorder %s69, %s70
      %p84 = scmp.eq.s32.totalorder %s15, 5
      %p85 = por %p83, %p84
      %p87 = scmp.ne.s32.totalorder %s70, %s86
      %p88 = scmp.eq.s32.totalorder %s15, 0
      %p89 = por %p87, %p88
      %s90 = ssub.s32 %s9, %s16
      %p91 = scmp.eq.s32.totalorder %s90, 0
      %s93 = sadd.s32 %s92, 1
      %s94 = scalar_select %p91, %s92, %s93
      %p97 = pneg %p91
      %p98 = scmp.eq.s32.totalorder %s9, 5
      %p99 = por %p97, %p98
      %p100 = scmp.ne.s32.totalorder %s92, %s95
      %p101 = scmp.eq.s32.totalorder %s9, 0
      %p102 = por %p100, %p101
      %p103 = scmp.ne.s32.totalorder %s92, %s95
      %p104 = scmp.eq.s32.totalorder %s14, 5
      %p105 = por %p103, %p104
      %p106 = scmp.ne.s32.totalorder %s95, %s96
      %p107 = scmp.eq.s32.totalorder %s14, 0
      %p108 = por %p106, %p107
      %p109 = scmp.ne.s32.totalorder %s95, %s96
      %p110 = scmp.eq.s32.totalorder %s15, 5
      %p111 = por %p109, %p110
      %p113 = scmp.ne.s32.totalorder %s96, %s112
      %p114 = scmp.eq.s32.totalorder %s15, 0
      %p115 = por %p113, %p114
      %p116 = scmp.le.s32.totalorder 1, %s9
      %p117 = scmp.lt.s32.totalorder %s9, 7
      %p118 = pnand %p116, %p117
      %p119 = pneg %p118
      // Predicated region
      $region9: #{encoder_decoder_forward.5} parent=5 // pred_check
        _
      $region10: #{encoder_decoder_forward.5} parent=5 // pred_check_branch
        %121 = sbr.rel (%p118) target = $region12
      $region11: #{encoder_decoder_forward.5} parent=5 // pred_region
        %s122 = ssub.s32 %s9, 1
        // Predicated region
        $region13: #{encoder_decoder_forward.5} parent=11 // pred_check
          %p123 = pneg %p30
        $region14: #{encoder_decoder_forward.5} parent=11 // pred_check_branch
          %125 = sbr.rel (%p123) target = $region16
        $region15: #{encoder_decoder_forward.5} parent=11 // pred_region
          _
        $region16: #{encoder_decoder_forward.5} parent=11 // pred_fallthru
          _
      $region12: #{encoder_decoder_forward.5} parent=5 // pred_fallthru
        _
      %p126 = scmp.lt.s32.totalorder %s9, 6
      // Predicated region
      $region17: #{encoder_decoder_forward.5} parent=5 // pred_check
        %p127 = pneg %p126
      $region18: #{encoder_decoder_forward.5} parent=5 // pred_check_branch
        %129 = sbr.rel (%p127) target = $region20
      $region19: #{encoder_decoder_forward.5} parent=5 // pred_region
        // Predicated region
        $region21: #{encoder_decoder_forward.5} parent=19 // pred_check
          %p130 = pneg %p50
        $region22: #{encoder_decoder_forward.5} parent=19 // pred_check_branch
          %132 = sbr.rel (%p130) target = $region24
        $region23: #{encoder_decoder_forward.5} parent=19 // pred_region
          %s133 = sand.u32 %s40, 1
          %s134 = sand.u32 %s40, 1
          %s135 = smul.addr %s134, 4096
          %s136 = scalar_lea.vmem [#allocation2], %s135
          %s137 = smul.u32 16, %s9
          %s138 = smul.addr %s137, 4
          %s139 = scalar_lea.vmem %s1, %s138
          // Predicated region
          $region25: #{encoder_decoder_forward.5} parent=23 // pred_check
            _
          $region26: #{encoder_decoder_forward.5} parent=23 // pred_check_branch
            %141 = sbr.rel (0) target = $region28
          $region27: #{encoder_decoder_forward.5} parent=23 // pred_region
            // Predicated region
            $region29: #{encoder_decoder_forward.5} parent=27 // pred_check
              _
            $region30: #{encoder_decoder_forward.5} parent=27 // pred_check_branch
              %143 = sbr.rel (0) target = $region32
            $region31: #{encoder_decoder_forward.5} parent=27 // pred_region
              loop: start=0, step=1, limit=1
              $region33: #{encoder_decoder_forward.5} parent=31 // loop_pre_header
                _
              $region34: #{encoder_decoder_forward.5} parent=31 // loop_header
                %s145 = sphi 0, %s149
                %p146 = scmp.ge.s32.totalorder %s145, 1
                %s150 = sphi %s139, %s139
                %s151 = sphi %s136, %s136
              $region35: #{encoder_decoder_forward.5} parent=31 // loop_header_branch
                %148 = sbr.rel (%p146) target = $region39
              $region36: #{encoder_decoder_forward.5} parent=31 // loop_body
                %v152 = vld [vmem:[%s150] sm:$0xff]
                %153 = vst [vmem:[%s151] sm:$0xff] %v152
                %v154 = vld [vmem:[%s150 + $0x8] sm:$0xff]
                %155 = vst [vmem:[%s151 + $0x8] sm:$0xff] %v154
                %v156 = vld [vmem:[%s150 + $0x10] sm:$0xff]
                %157 = vst [vmem:[%s151 + $0x10] sm:$0xff] %v156
                %v158 = vld [vmem:[%s150 + $0x18] sm:$0xff]
                %159 = vst [vmem:[%s151 + $0x18] sm:$0xff] %v158
                %v160 = vld [vmem:[%s150 + $0x20] sm:$0xff]
                %161 = vst [vmem:[%s151 + $0x20] sm:$0xff] %v160
                %v162 = vld [vmem:[%s150 + $0x28] sm:$0xff]
                %163 = vst [vmem:[%s151 + $0x28] sm:$0xff] %v162
                %v164 = vld [vmem:[%s150 + $0x30] sm:$0xff]
                %165 = vst [vmem:[%s151 + $0x30] sm:$0xff] %v164
                %v166 = vld [vmem:[%s150 + $0x38] sm:$0xff]
                %167 = vst [vmem:[%s151 + $0x38] sm:$0xff] %v166
                %v168 = vld [vmem:[%s150 + $0x180] sm:$0xff]
                %169 = vst [vmem:[%s151 + $0x40] sm:$0xff] %v168
                %v170 = vld [vmem:[%s150 + $0x188] sm:$0xff]
                %171 = vst [vmem:[%s151 + $0x48] sm:$0xff] %v170
                %v172 = vld [vmem:[%s150 + $0x190] sm:$0xff]
                %173 = vst [vmem:[%s151 + $0x50] sm:$0xff] %v172
                %v174 = vld [vmem:[%s150 + $0x198] sm:$0xff]
                %175 = vst [vmem:[%s151 + $0x58] sm:$0xff] %v174
                %v176 = vld [vmem:[%s150 + $0x1a0] sm:$0xff]
                %177 = vst [vmem:[%s151 + $0x60] sm:$0xff] %v176
                %v178 = vld [vmem:[%s150 + $0x1a8] sm:$0xff]
                %179 = vst [vmem:[%s151 + $0x68] sm:$0xff] %v178
                %v180 = vld [vmem:[%s150 + $0x1b0] sm:$0xff]
                %181 = vst [vmem:[%s151 + $0x70] sm:$0xff] %v180
                %v182 = vld [vmem:[%s150 + $0x1b8] sm:$0xff]
                %183 = vst [vmem:[%s151 + $0x78] sm:$0xff] %v182
                %v184 = vld [vmem:[%s150 + $0x300] sm:$0xff]
                %185 = vst [vmem:[%s151 + $0x80] sm:$0xff] %v184
                %v186 = vld [vmem:[%s150 + $0x308] sm:$0xff]
                %187 = vst [vmem:[%s151 + $0x88] sm:$0xff] %v186
                %v188 = vld [vmem:[%s150 + $0x310] sm:$0xff]
                %189 = vst [vmem:[%s151 + $0x90] sm:$0xff] %v188
                %v190 = vld [vmem:[%s150 + $0x318] sm:$0xff]
                %191 = vst [vmem:[%s151 + $0x98] sm:$0xff] %v190
                %v192 = vld [vmem:[%s150 + $0x320] sm:$0xff]
                %193 = vst [vmem:[%s151 + $0xa0] sm:$0xff] %v192
                %v194 = vld [vmem:[%s150 + $0x328] sm:$0xff]
                %195 = vst [vmem:[%s151 + $0xa8] sm:$0xff] %v194
                %v196 = vld [vmem:[%s150 + $0x330] sm:$0xff]
                %197 = vst [vmem:[%s151 + $0xb0] sm:$0xff] %v196
                %v198 = vld [vmem:[%s150 + $0x338] sm:$0xff]
                %199 = vst [vmem:[%s151 + $0xb8] sm:$0xff] %v198
                %v200 = vld [vmem:[%s150 + $0x480] sm:$0xff]
                %201 = vst [vmem:[%s151 + $0xc0] sm:$0xff] %v200
                %v202 = vld [vmem:[%s150 + $0x488] sm:$0xff]
                %203 = vst [vmem:[%s151 + $0xc8] sm:$0xff] %v202
                %v204 = vld [vmem:[%s150 + $0x490] sm:$0xff]
                %205 = vst [vmem:[%s151 + $0xd0] sm:$0xff] %v204
                %v206 = vld [vmem:[%s150 + $0x498] sm:$0xff]
                %207 = vst [vmem:[%s151 + $0xd8] sm:$0xff] %v206
                %v208 = vld [vmem:[%s150 + $0x4a0] sm:$0xff]
                %209 = vst [vmem:[%s151 + $0xe0] sm:$0xff] %v208
                %v210 = vld [vmem:[%s150 + $0x4a8] sm:$0xff]
                %211 = vst [vmem:[%s151 + $0xe8] sm:$0xff] %v210
                %v212 = vld [vmem:[%s150 + $0x4b0] sm:$0xff]
                %213 = vst [vmem:[%s151 + $0xf0] sm:$0xff] %v212
                %v214 = vld [vmem:[%s150 + $0x4b8] sm:$0xff]
                %215 = vst [vmem:[%s151 + $0xf8] sm:$0xff] %v214
                %v216 = vld [vmem:[%s150 + $0x600] sm:$0xff]
                %217 = vst [vmem:[%s151 + $0x100] sm:$0xff] %v216
                %v218 = vld [vmem:[%s150 + $0x608] sm:$0xff]
                %219 = vst [vmem:[%s151 + $0x108] sm:$0xff] %v218
                %v220 = vld [vmem:[%s150 + $0x610] sm:$0xff]
                %221 = vst [vmem:[%s151 + $0x110] sm:$0xff] %v220
                %v222 = vld [vmem:[%s150 + $0x618] sm:$0xff]
                %223 = vst [vmem:[%s151 + $0x118] sm:$0xff] %v222
                %v224 = vld [vmem:[%s150 + $0x620] sm:$0xff]
                %225 = vst [vmem:[%s151 + $0x120] sm:$0xff] %v224
                %v226 = vld [vmem:[%s150 + $0x628] sm:$0xff]
                %227 = vst [vmem:[%s151 + $0x128] sm:$0xff] %v226
                %v228 = vld [vmem:[%s150 + $0x630] sm:$0xff]
                %229 = vst [vmem:[%s151 + $0x130] sm:$0xff] %v228
                %v230 = vld [vmem:[%s150 + $0x638] sm:$0xff]
                %231 = vst [vmem:[%s151 + $0x138] sm:$0xff] %v230
                %v232 = vld [vmem:[%s150 + $0x780] sm:$0xff]
                %233 = vst [vmem:[%s151 + $0x140] sm:$0xff] %v232
                %v234 = vld [vmem:[%s150 + $0x788] sm:$0xff]
                %235 = vst [vmem:[%s151 + $0x148] sm:$0xff] %v234
                %v236 = vld [vmem:[%s150 + $0x790] sm:$0xff]
                %237 = vst [vmem:[%s151 + $0x150] sm:$0xff] %v236
                %v238 = vld [vmem:[%s150 + $0x798] sm:$0xff]
                %239 = vst [vmem:[%s151 + $0x158] sm:$0xff] %v238
                %v240 = vld [vmem:[%s150 + $0x7a0] sm:$0xff]
                %241 = vst [vmem:[%s151 + $0x160] sm:$0xff] %v240
                %v242 = vld [vmem:[%s150 + $0x7a8] sm:$0xff]
                %243 = vst [vmem:[%s151 + $0x168] sm:$0xff] %v242
                %v244 = vld [vmem:[%s150 + $0x7b0] sm:$0xff]
                %245 = vst [vmem:[%s151 + $0x170] sm:$0xff] %v244
                %v246 = vld [vmem:[%s150 + $0x7b8] sm:$0xff]
                %247 = vst [vmem:[%s151 + $0x178] sm:$0xff] %v246
                %v248 = vld [vmem:[%s150 + $0x900] sm:$0xff]
                %249 = vst [vmem:[%s151 + $0x180] sm:$0xff] %v248
                %v250 = vld [vmem:[%s150 + $0x908] sm:$0xff]
                %251 = vst [vmem:[%s151 + $0x188] sm:$0xff] %v250
                %v252 = vld [vmem:[%s150 + $0x910] sm:$0xff]
                %253 = vst [vmem:[%s151 + $0x190] sm:$0xff] %v252
                %v254 = vld [vmem:[%s150 + $0x918] sm:$0xff]
                %255 = vst [vmem:[%s151 + $0x198] sm:$0xff] %v254
                %v256 = vld [vmem:[%s150 + $0x920] sm:$0xff]
                %257 = vst [vmem:[%s151 + $0x1a0] sm:$0xff] %v256
                %v258 = vld [vmem:[%s150 + $0x928] sm:$0xff]
                %259 = vst [vmem:[%s151 + $0x1a8] sm:$0xff] %v258
                %v260 = vld [vmem:[%s150 + $0x930] sm:$0xff]
                %261 = vst [vmem:[%s151 + $0x1b0] sm:$0xff] %v260
                %v262 = vld [vmem:[%s150 + $0x938] sm:$0xff]
                %263 = vst [vmem:[%s151 + $0x1b8] sm:$0xff] %v262
                %v264 = vld [vmem:[%s150 + $0xa80] sm:$0xff]
                %265 = vst [vmem:[%s151 + $0x1c0] sm:$0xff] %v264
                %v266 = vld [vmem:[%s150 + $0xa88] sm:$0xff]
                %267 = vst [vmem:[%s151 + $0x1c8] sm:$0xff] %v266
                %v268 = vld [vmem:[%s150 + $0xa90] sm:$0xff]
                %269 = vst [vmem:[%s151 + $0x1d0] sm:$0xff] %v268
                %v270 = vld [vmem:[%s150 + $0xa98] sm:$0xff]
                %271 = vst [vmem:[%s151 + $0x1d8] sm:$0xff] %v270
                %v272 = vld [vmem:[%s150 + $0xaa0] sm:$0xff]
                %273 = vst [vmem:[%s151 + $0x1e0] sm:$0xff] %v272
                %v274 = vld [vmem:[%s150 + $0xaa8] sm:$0xff]
                %275 = vst [vmem:[%s151 + $0x1e8] sm:$0xff] %v274
                %v276 = vld [vmem:[%s150 + $0xab0] sm:$0xff]
                %277 = vst [vmem:[%s151 + $0x1f0] sm:$0xff] %v276
                %v278 = vld [vmem:[%s150 + $0xab8] sm:$0xff]
                %279 = vst [vmem:[%s151 + $0x1f8] sm:$0xff] %v278
                %v280 = vld [vmem:[%s150 + $0xc00] sm:$0xff]
                %281 = vst [vmem:[%s151 + $0x200] sm:$0xff] %v280
                %v282 = vld [vmem:[%s150 + $0xc08] sm:$0xff]
                %283 = vst [vmem:[%s151 + $0x208] sm:$0xff] %v282
                %v284 = vld [vmem:[%s150 + $0xc10] sm:$0xff]
                %285 = vst [vmem:[%s151 + $0x210] sm:$0xff] %v284
                %v286 = vld [vmem:[%s150 + $0xc18] sm:$0xff]
                %287 = vst [vmem:[%s151 + $0x218] sm:$0xff] %v286
                %v288 = vld [vmem:[%s150 + $0xc20] sm:$0xff]
                %289 = vst [vmem:[%s151 + $0x220] sm:$0xff] %v288
                %v290 = vld [vmem:[%s150 + $0xc28] sm:$0xff]
                %291 = vst [vmem:[%s151 + $0x228] sm:$0xff] %v290
                %v292 = vld [vmem:[%s150 + $0xc30] sm:$0xff]
                %293 = vst [vmem:[%s151 + $0x230] sm:$0xff] %v292
                %v294 = vld [vmem:[%s150 + $0xc38] sm:$0xff]
                %295 = vst [vmem:[%s151 + $0x238] sm:$0xff] %v294
                %v296 = vld [vmem:[%s150 + $0xd80] sm:$0xff]
                %297 = vst [vmem:[%s151 + $0x240] sm:$0xff] %v296
                %v298 = vld [vmem:[%s150 + $0xd88] sm:$0xff]
                %299 = vst [vmem:[%s151 + $0x248] sm:$0xff] %v298
                %v300 = vld [vmem:[%s150 + $0xd90] sm:$0xff]
                %301 = vst [vmem:[%s151 + $0x250] sm:$0xff] %v300
                %v302 = vld [vmem:[%s150 + $0xd98] sm:$0xff]
                %303 = vst [vmem:[%s151 + $0x258] sm:$0xff] %v302
                %v304 = vld [vmem:[%s150 + $0xda0] sm:$0xff]
                %305 = vst [vmem:[%s151 + $0x260] sm:$0xff] %v304
                %v306 = vld [vmem:[%s150 + $0xda8] sm:$0xff]
                %307 = vst [vmem:[%s151 + $0x268] sm:$0xff] %v306
                %v308 = vld [vmem:[%s150 + $0xdb0] sm:$0xff]
                %309 = vst [vmem:[%s151 + $0x270] sm:$0xff] %v308
                %v310 = vld [vmem:[%s150 + $0xdb8] sm:$0xff]
                %311 = vst [vmem:[%s151 + $0x278] sm:$0xff] %v310
                %v312 = vld [vmem:[%s150 + $0xf00] sm:$0xff]
                %313 = vst [vmem:[%s151 + $0x280] sm:$0xff] %v312
                %v314 = vld [vmem:[%s150 + $0xf08] sm:$0xff]
                %315 = vst [vmem:[%s151 + $0x288] sm:$0xff] %v314
                %v316 = vld [vmem:[%s150 + $0xf10] sm:$0xff]
                %317 = vst [vmem:[%s151 + $0x290] sm:$0xff] %v316
                %v318 = vld [vmem:[%s150 + $0xf18] sm:$0xff]
                %319 = vst [vmem:[%s151 + $0x298] sm:$0xff] %v318
                %v320 = vld [vmem:[%s150 + $0xf20] sm:$0xff]
                %321 = vst [vmem:[%s151 + $0x2a0] sm:$0xff] %v320
                %v322 = vld [vmem:[%s150 + $0xf28] sm:$0xff]
                %323 = vst [vmem:[%s151 + $0x2a8] sm:$0xff] %v322
                %v324 = vld [vmem:[%s150 + $0xf30] sm:$0xff]
                %325 = vst [vmem:[%s151 + $0x2b0] sm:$0xff] %v324
                %v326 = vld [vmem:[%s150 + $0xf38] sm:$0xff]
                %327 = vst [vmem:[%s151 + $0x2b8] sm:$0xff] %v326
                %v328 = vld [vmem:[%s150 + $0x1080] sm:$0xff]
                %329 = vst [vmem:[%s151 + $0x2c0] sm:$0xff] %v328
                %v330 = vld [vmem:[%s150 + $0x1088] sm:$0xff]
                %331 = vst [vmem:[%s151 + $0x2c8] sm:$0xff] %v330
                %v332 = vld [vmem:[%s150 + $0x1090] sm:$0xff]
                %333 = vst [vmem:[%s151 + $0x2d0] sm:$0xff] %v332
                %v334 = vld [vmem:[%s150 + $0x1098] sm:$0xff]
                %335 = vst [vmem:[%s151 + $0x2d8] sm:$0xff] %v334
                %v336 = vld [vmem:[%s150 + $0x10a0] sm:$0xff]
                %337 = vst [vmem:[%s151 + $0x2e0] sm:$0xff] %v336
                %v338 = vld [vmem:[%s150 + $0x10a8] sm:$0xff]
                %339 = vst [vmem:[%s151 + $0x2e8] sm:$0xff] %v338
                %v340 = vld [vmem:[%s150 + $0x10b0] sm:$0xff]
                %341 = vst [vmem:[%s151 + $0x2f0] sm:$0xff] %v340
                %v342 = vld [vmem:[%s150 + $0x10b8] sm:$0xff]
                %343 = vst [vmem:[%s151 + $0x2f8] sm:$0xff] %v342
                %v344 = vld [vmem:[%s150 + $0x1200] sm:$0xff]
                %345 = vst [vmem:[%s151 + $0x300] sm:$0xff] %v344
                %v346 = vld [vmem:[%s150 + $0x1208] sm:$0xff]
                %347 = vst [vmem:[%s151 + $0x308] sm:$0xff] %v346
                %v348 = vld [vmem:[%s150 + $0x1210] sm:$0xff]
                %349 = vst [vmem:[%s151 + $0x310] sm:$0xff] %v348
                %v350 = vld [vmem:[%s150 + $0x1218] sm:$0xff]
                %351 = vst [vmem:[%s151 + $0x318] sm:$0xff] %v350
                %v352 = vld [vmem:[%s150 + $0x1220] sm:$0xff]
                %353 = vst [vmem:[%s151 + $0x320] sm:$0xff] %v352
                %v354 = vld [vmem:[%s150 + $0x1228] sm:$0xff]
                %355 = vst [vmem:[%s151 + $0x328] sm:$0xff] %v354
                %v356 = vld [vmem:[%s150 + $0x1230] sm:$0xff]
                %357 = vst [vmem:[%s151 + $0x330] sm:$0xff] %v356
                %v358 = vld [vmem:[%s150 + $0x1238] sm:$0xff]
                %359 = vst [vmem:[%s151 + $0x338] sm:$0xff] %v358
                %v360 = vld [vmem:[%s150 + $0x1380] sm:$0xff]
                %361 = vst [vmem:[%s151 + $0x340] sm:$0xff] %v360
                %v362 = vld [vmem:[%s150 + $0x1388] sm:$0xff]
                %363 = vst [vmem:[%s151 + $0x348] sm:$0xff] %v362
                %v364 = vld [vmem:[%s150 + $0x1390] sm:$0xff]
                %365 = vst [vmem:[%s151 + $0x350] sm:$0xff] %v364
                %v366 = vld [vmem:[%s150 + $0x1398] sm:$0xff]
                %367 = vst [vmem:[%s151 + $0x358] sm:$0xff] %v366
                %v368 = vld [vmem:[%s150 + $0x13a0] sm:$0xff]
                %369 = vst [vmem:[%s151 + $0x360] sm:$0xff] %v368
                %v370 = vld [vmem:[%s150 + $0x13a8] sm:$0xff]
                %371 = vst [vmem:[%s151 + $0x368] sm:$0xff] %v370
                %v372 = vld [vmem:[%s150 + $0x13b0] sm:$0xff]
                %373 = vst [vmem:[%s151 + $0x370] sm:$0xff] %v372
                %v374 = vld [vmem:[%s150 + $0x13b8] sm:$0xff]
                %375 = vst [vmem:[%s151 + $0x378] sm:$0xff] %v374
                %v376 = vld [vmem:[%s150 + $0x1500] sm:$0xff]
                %377 = vst [vmem:[%s151 + $0x380] sm:$0xff] %v376
                %v378 = vld [vmem:[%s150 + $0x1508] sm:$0xff]
                %379 = vst [vmem:[%s151 + $0x388] sm:$0xff] %v378
                %v380 = vld [vmem:[%s150 + $0x1510] sm:$0xff]
                %381 = vst [vmem:[%s151 + $0x390] sm:$0xff] %v380
                %v382 = vld [vmem:[%s150 + $0x1518] sm:$0xff]
                %383 = vst [vmem:[%s151 + $0x398] sm:$0xff] %v382
                %v384 = vld [vmem:[%s150 + $0x1520] sm:$0xff]
                %385 = vst [vmem:[%s151 + $0x3a0] sm:$0xff] %v384
                %v386 = vld [vmem:[%s150 + $0x1528] sm:$0xff]
                %387 = vst [vmem:[%s151 + $0x3a8] sm:$0xff] %v386
                %v388 = vld [vmem:[%s150 + $0x1530] sm:$0xff]
                %389 = vst [vmem:[%s151 + $0x3b0] sm:$0xff] %v388
                %v390 = vld [vmem:[%s150 + $0x1538] sm:$0xff]
                %391 = vst [vmem:[%s151 + $0x3b8] sm:$0xff] %v390
                %v392 = vld [vmem:[%s150 + $0x1680] sm:$0xff]
                %393 = vst [vmem:[%s151 + $0x3c0] sm:$0xff] %v392
                %v394 = vld [vmem:[%s150 + $0x1688] sm:$0xff]
                %395 = vst [vmem:[%s151 + $0x3c8] sm:$0xff] %v394
                %v396 = vld [vmem:[%s150 + $0x1690] sm:$0xff]
                %397 = vst [vmem:[%s151 + $0x3d0] sm:$0xff] %v396
                %v398 = vld [vmem:[%s150 + $0x1698] sm:$0xff]
                %399 = vst [vmem:[%s151 + $0x3d8] sm:$0xff] %v398
                %v400 = vld [vmem:[%s150 + $0x16a0] sm:$0xff]
                %401 = vst [vmem:[%s151 + $0x3e0] sm:$0xff] %v400
                %v402 = vld [vmem:[%s150 + $0x16a8] sm:$0xff]
                %403 = vst [vmem:[%s151 + $0x3e8] sm:$0xff] %v402
                %v404 = vld [vmem:[%s150 + $0x16b0] sm:$0xff]
                %405 = vst [vmem:[%s151 + $0x3f0] sm:$0xff] %v404
                %v406 = vld [vmem:[%s150 + $0x16b8] sm:$0xff]
                %407 = vst [vmem:[%s151 + $0x3f8] sm:$0xff] %v406
                %v408 = vld [vmem:[%s150 + $0x1800] sm:$0xff]
                %409 = vst [vmem:[%s151 + $0x400] sm:$0xff] %v408
                %v410 = vld [vmem:[%s150 + $0x1808] sm:$0xff]
                %411 = vst [vmem:[%s151 + $0x408] sm:$0xff] %v410
                %v412 = vld [vmem:[%s150 + $0x1810] sm:$0xff]
                %413 = vst [vmem:[%s151 + $0x410] sm:$0xff] %v412
                %v414 = vld [vmem:[%s150 + $0x1818] sm:$0xff]
                %415 = vst [vmem:[%s151 + $0x418] sm:$0xff] %v414
                %v416 = vld [vmem:[%s150 + $0x1820] sm:$0xff]
                %417 = vst [vmem:[%s151 + $0x420] sm:$0xff] %v416
                %v418 = vld [vmem:[%s150 + $0x1828] sm:$0xff]
                %419 = vst [vmem:[%s151 + $0x428] sm:$0xff] %v418
                %v420 = vld [vmem:[%s150 + $0x1830] sm:$0xff]
                %421 = vst [vmem:[%s151 + $0x430] sm:$0xff] %v420
                %v422 = vld [vmem:[%s150 + $0x1838] sm:$0xff]
                %423 = vst [vmem:[%s151 + $0x438] sm:$0xff] %v422
                %v424 = vld [vmem:[%s150 + $0x1980] sm:$0xff]
                %425 = vst [vmem:[%s151 + $0x440] sm:$0xff] %v424
                %v426 = vld [vmem:[%s150 + $0x1988] sm:$0xff]
                %427 = vst [vmem:[%s151 + $0x448] sm:$0xff] %v426
                %v428 = vld [vmem:[%s150 + $0x1990] sm:$0xff]
                %429 = vst [vmem:[%s151 + $0x450] sm:$0xff] %v428
                %v430 = vld [vmem:[%s150 + $0x1998] sm:$0xff]
                %431 = vst [vmem:[%s151 + $0x458] sm:$0xff] %v430
                %v432 = vld [vmem:[%s150 + $0x19a0] sm:$0xff]
                %433 = vst [vmem:[%s151 + $0x460] sm:$0xff] %v432
                %v434 = vld [vmem:[%s150 + $0x19a8] sm:$0xff]
                %435 = vst [vmem:[%s151 + $0x468] sm:$0xff] %v434
                %v436 = vld [vmem:[%s150 + $0x19b0] sm:$0xff]
                %437 = vst [vmem:[%s151 + $0x470] sm:$0xff] %v436
                %v438 = vld [vmem:[%s150 + $0x19b8] sm:$0xff]
                %439 = vst [vmem:[%s151 + $0x478] sm:$0xff] %v438
                %v440 = vld [vmem:[%s150 + $0x1b00] sm:$0xff]
                %441 = vst [vmem:[%s151 + $0x480] sm:$0xff] %v440
                %v442 = vld [vmem:[%s150 + $0x1b08] sm:$0xff]
                %443 = vst [vmem:[%s151 + $0x488] sm:$0xff] %v442
                %v444 = vld [vmem:[%s150 + $0x1b10] sm:$0xff]
                %445 = vst [vmem:[%s151 + $0x490] sm:$0xff] %v444
                %v446 = vld [vmem:[%s150 + $0x1b18] sm:$0xff]
                %447 = vst [vmem:[%s151 + $0x498] sm:$0xff] %v446
                %v448 = vld [vmem:[%s150 + $0x1b20] sm:$0xff]
                %449 = vst [vmem:[%s151 + $0x4a0] sm:$0xff] %v448
                %v450 = vld [vmem:[%s150 + $0x1b28] sm:$0xff]
                %451 = vst [vmem:[%s151 + $0x4a8] sm:$0xff] %v450
                %v452 = vld [vmem:[%s150 + $0x1b30] sm:$0xff]
                %453 = vst [vmem:[%s151 + $0x4b0] sm:$0xff] %v452
                %v454 = vld [vmem:[%s150 + $0x1b38] sm:$0xff]
                %455 = vst [vmem:[%s151 + $0x4b8] sm:$0xff] %v454
                %v456 = vld [vmem:[%s150 + $0x1c80] sm:$0xff]
                %457 = vst [vmem:[%s151 + $0x4c0] sm:$0xff] %v456
                %v458 = vld [vmem:[%s150 + $0x1c88] sm:$0xff]
                %459 = vst [vmem:[%s151 + $0x4c8] sm:$0xff] %v458
                %v460 = vld [vmem:[%s150 + $0x1c90] sm:$0xff]
                %461 = vst [vmem:[%s151 + $0x4d0] sm:$0xff] %v460
                %v462 = vld [vmem:[%s150 + $0x1c98] sm:$0xff]
                %463 = vst [vmem:[%s151 + $0x4d8] sm:$0xff] %v462
                %v464 = vld [vmem:[%s150 + $0x1ca0] sm:$0xff]
                %465 = vst [vmem:[%s151 + $0x4e0] sm:$0xff] %v464
                %v466 = vld [vmem:[%s150 + $0x1ca8] sm:$0xff]
                %467 = vst [vmem:[%s151 + $0x4e8] sm:$0xff] %v466
                %v468 = vld [vmem:[%s150 + $0x1cb0] sm:$0xff]
                %469 = vst [vmem:[%s151 + $0x4f0] sm:$0xff] %v468
                %v470 = vld [vmem:[%s150 + $0x1cb8] sm:$0xff]
                %471 = vst [vmem:[%s151 + $0x4f8] sm:$0xff] %v470
                %v472 = vld [vmem:[%s150 + $0x1e00] sm:$0xff]
                %473 = vst [vmem:[%s151 + $0x500] sm:$0xff] %v472
                %v474 = vld [vmem:[%s150 + $0x1e08] sm:$0xff]
                %475 = vst [vmem:[%s151 + $0x508] sm:$0xff] %v474
                %v476 = vld [vmem:[%s150 + $0x1e10] sm:$0xff]
                %477 = vst [vmem:[%s151 + $0x510] sm:$0xff] %v476
                %v478 = vld [vmem:[%s150 + $0x1e18] sm:$0xff]
                %479 = vst [vmem:[%s151 + $0x518] sm:$0xff] %v478
                %v480 = vld [vmem:[%s150 + $0x1e20] sm:$0xff]
                %481 = vst [vmem:[%s151 + $0x520] sm:$0xff] %v480
                %v482 = vld [vmem:[%s150 + $0x1e28] sm:$0xff]
                %483 = vst [vmem:[%s151 + $0x528] sm:$0xff] %v482
                %v484 = vld [vmem:[%s150 + $0x1e30] sm:$0xff]
                %485 = vst [vmem:[%s151 + $0x530] sm:$0xff] %v484
                %v486 = vld [vmem:[%s150 + $0x1e38] sm:$0xff]
                %487 = vst [vmem:[%s151 + $0x538] sm:$0xff] %v486
                %v488 = vld [vmem:[%s150 + $0x1f80] sm:$0xff]
                %489 = vst [vmem:[%s151 + $0x540] sm:$0xff] %v488
                %v490 = vld [vmem:[%s150 + $0x1f88] sm:$0xff]
                %491 = vst [vmem:[%s151 + $0x548] sm:$0xff] %v490
                %v492 = vld [vmem:[%s150 + $0x1f90] sm:$0xff]
                %493 = vst [vmem:[%s151 + $0x550] sm:$0xff] %v492
                %v494 = vld [vmem:[%s150 + $0x1f98] sm:$0xff]
                %495 = vst [vmem:[%s151 + $0x558] sm:$0xff] %v494
                %v496 = vld [vmem:[%s150 + $0x1fa0] sm:$0xff]
                %497 = vst [vmem:[%s151 + $0x560] sm:$0xff] %v496
                %v498 = vld [vmem:[%s150 + $0x1fa8] sm:$0xff]
                %499 = vst [vmem:[%s151 + $0x568] sm:$0xff] %v498
                %v500 = vld [vmem:[%s150 + $0x1fb0] sm:$0xff]
                %501 = vst [vmem:[%s151 + $0x570] sm:$0xff] %v500
                %v502 = vld [vmem:[%s150 + $0x1fb8] sm:$0xff]
                %503 = vst [vmem:[%s151 + $0x578] sm:$0xff] %v502
                %v504 = vld [vmem:[%s150 + $0x2100] sm:$0xff]
                %505 = vst [vmem:[%s151 + $0x580] sm:$0xff] %v504
                %v506 = vld [vmem:[%s150 + $0x2108] sm:$0xff]
                %507 = vst [vmem:[%s151 + $0x588] sm:$0xff] %v506
                %v508 = vld [vmem:[%s150 + $0x2110] sm:$0xff]
                %509 = vst [vmem:[%s151 + $0x590] sm:$0xff] %v508
                %v510 = vld [vmem:[%s150 + $0x2118] sm:$0xff]
                %511 = vst [vmem:[%s151 + $0x598] sm:$0xff] %v510
                %v512 = vld [vmem:[%s150 + $0x2120] sm:$0xff]
                %513 = vst [vmem:[%s151 + $0x5a0] sm:$0xff] %v512
                %v514 = vld [vmem:[%s150 + $0x2128] sm:$0xff]
                %515 = vst [vmem:[%s151 + $0x5a8] sm:$0xff] %v514
                %v516 = vld [vmem:[%s150 + $0x2130] sm:$0xff]
                %517 = vst [vmem:[%s151 + $0x5b0] sm:$0xff] %v516
                %v518 = vld [vmem:[%s150 + $0x2138] sm:$0xff]
                %519 = vst [vmem:[%s151 + $0x5b8] sm:$0xff] %v518
                %v520 = vld [vmem:[%s150 + $0x2280] sm:$0xff]
                %521 = vst [vmem:[%s151 + $0x5c0] sm:$0xff] %v520
                %v522 = vld [vmem:[%s150 + $0x2288] sm:$0xff]
                %523 = vst [vmem:[%s151 + $0x5c8] sm:$0xff] %v522
                %v524 = vld [vmem:[%s150 + $0x2290] sm:$0xff]
                %525 = vst [vmem:[%s151 + $0x5d0] sm:$0xff] %v524
                %v526 = vld [vmem:[%s150 + $0x2298] sm:$0xff]
                %527 = vst [vmem:[%s151 + $0x5d8] sm:$0xff] %v526
                %v528 = vld [vmem:[%s150 + $0x22a0] sm:$0xff]
                %529 = vst [vmem:[%s151 + $0x5e0] sm:$0xff] %v528
                %v530 = vld [vmem:[%s150 + $0x22a8] sm:$0xff]
                %531 = vst [vmem:[%s151 + $0x5e8] sm:$0xff] %v530
                %v532 = vld [vmem:[%s150 + $0x22b0] sm:$0xff]
                %533 = vst [vmem:[%s151 + $0x5f0] sm:$0xff] %v532
                %v534 = vld [vmem:[%s150 + $0x22b8] sm:$0xff]
                %535 = vst [vmem:[%s151 + $0x5f8] sm:$0xff] %v534
                %v536 = vld [vmem:[%s150 + $0x2400] sm:$0xff]
                %537 = vst [vmem:[%s151 + $0x600] sm:$0xff] %v536
                %v538 = vld [vmem:[%s150 + $0x2408] sm:$0xff]
                %539 = vst [vmem:[%s151 + $0x608] sm:$0xff] %v538
                %v540 = vld [vmem:[%s150 + $0x2410] sm:$0xff]
                %541 = vst [vmem:[%s151 + $0x610] sm:$0xff] %v540
                %v542 = vld [vmem:[%s150 + $0x2418] sm:$0xff]
                %543 = vst [vmem:[%s151 + $0x618] sm:$0xff] %v542
                %v544 = vld [vmem:[%s150 + $0x2420] sm:$0xff]
                %545 = vst [vmem:[%s151 + $0x620] sm:$0xff] %v544
                %v546 = vld [vmem:[%s150 + $0x2428] sm:$0xff]
                %547 = vst [vmem:[%s151 + $0x628] sm:$0xff] %v546
                %v548 = vld [vmem:[%s150 + $0x2430] sm:$0xff]
                %549 = vst [vmem:[%s151 + $0x630] sm:$0xff] %v548
                %v550 = vld [vmem:[%s150 + $0x2438] sm:$0xff]
                %551 = vst [vmem:[%s151 + $0x638] sm:$0xff] %v550
                %v552 = vld [vmem:[%s150 + $0x2580] sm:$0xff]
                %553 = vst [vmem:[%s151 + $0x640] sm:$0xff] %v552
                %v554 = vld [vmem:[%s150 + $0x2588] sm:$0xff]
                %555 = vst [vmem:[%s151 + $0x648] sm:$0xff] %v554
                %v556 = vld [vmem:[%s150 + $0x2590] sm:$0xff]
                %557 = vst [vmem:[%s151 + $0x650] sm:$0xff] %v556
                %v558 = vld [vmem:[%s150 + $0x2598] sm:$0xff]
                %559 = vst [vmem:[%s151 + $0x658] sm:$0xff] %v558
                %v560 = vld [vmem:[%s150 + $0x25a0] sm:$0xff]
                %561 = vst [vmem:[%s151 + $0x660] sm:$0xff] %v560
                %v562 = vld [vmem:[%s150 + $0x25a8] sm:$0xff]
                %563 = vst [vmem:[%s151 + $0x668] sm:$0xff] %v562
                %v564 = vld [vmem:[%s150 + $0x25b0] sm:$0xff]
                %565 = vst [vmem:[%s151 + $0x670] sm:$0xff] %v564
                %v566 = vld [vmem:[%s150 + $0x25b8] sm:$0xff]
                %567 = vst [vmem:[%s151 + $0x678] sm:$0xff] %v566
                %v568 = vld [vmem:[%s150 + $0x2700] sm:$0xff]
                %569 = vst [vmem:[%s151 + $0x680] sm:$0xff] %v568
                %v570 = vld [vmem:[%s150 + $0x2708] sm:$0xff]
                %571 = vst [vmem:[%s151 + $0x688] sm:$0xff] %v570
                %v572 = vld [vmem:[%s150 + $0x2710] sm:$0xff]
                %573 = vst [vmem:[%s151 + $0x690] sm:$0xff] %v572
                %v574 = vld [vmem:[%s150 + $0x2718] sm:$0xff]
                %575 = vst [vmem:[%s151 + $0x698] sm:$0xff] %v574
                %v576 = vld [vmem:[%s150 + $0x2720] sm:$0xff]
                %577 = vst [vmem:[%s151 + $0x6a0] sm:$0xff] %v576
                %v578 = vld [vmem:[%s150 + $0x2728] sm:$0xff]
                %579 = vst [vmem:[%s151 + $0x6a8] sm:$0xff] %v578
                %v580 = vld [vmem:[%s150 + $0x2730] sm:$0xff]
                %581 = vst [vmem:[%s151 + $0x6b0] sm:$0xff] %v580
                %v582 = vld [vmem:[%s150 + $0x2738] sm:$0xff]
                %583 = vst [vmem:[%s151 + $0x6b8] sm:$0xff] %v582
                %v584 = vld [vmem:[%s150 + $0x2880] sm:$0xff]
                %585 = vst [vmem:[%s151 + $0x6c0] sm:$0xff] %v584
                %v586 = vld [vmem:[%s150 + $0x2888] sm:$0xff]
                %587 = vst [vmem:[%s151 + $0x6c8] sm:$0xff] %v586
                %v588 = vld [vmem:[%s150 + $0x2890] sm:$0xff]
                %589 = vst [vmem:[%s151 + $0x6d0] sm:$0xff] %v588
                %v590 = vld [vmem:[%s150 + $0x2898] sm:$0xff]
                %591 = vst [vmem:[%s151 + $0x6d8] sm:$0xff] %v590
                %v592 = vld [vmem:[%s150 + $0x28a0] sm:$0xff]
                %593 = vst [vmem:[%s151 + $0x6e0] sm:$0xff] %v592
                %v594 = vld [vmem:[%s150 + $0x28a8] sm:$0xff]
                %595 = vst [vmem:[%s151 + $0x6e8] sm:$0xff] %v594
                %v596 = vld [vmem:[%s150 + $0x28b0] sm:$0xff]
                %597 = vst [vmem:[%s151 + $0x6f0] sm:$0xff] %v596
                %v598 = vld [vmem:[%s150 + $0x28b8] sm:$0xff]
                %599 = vst [vmem:[%s151 + $0x6f8] sm:$0xff] %v598
                %v600 = vld [vmem:[%s150 + $0x2a00] sm:$0xff]
                %601 = vst [vmem:[%s151 + $0x700] sm:$0xff] %v600
                %v602 = vld [vmem:[%s150 + $0x2a08] sm:$0xff]
                %603 = vst [vmem:[%s151 + $0x708] sm:$0xff] %v602
                %v604 = vld [vmem:[%s150 + $0x2a10] sm:$0xff]
                %605 = vst [vmem:[%s151 + $0x710] sm:$0xff] %v604
                %v606 = vld [vmem:[%s150 + $0x2a18] sm:$0xff]
                %607 = vst [vmem:[%s151 + $0x718] sm:$0xff] %v606
                %v608 = vld [vmem:[%s150 + $0x2a20] sm:$0xff]
                %609 = vst [vmem:[%s151 + $0x720] sm:$0xff] %v608
                %v610 = vld [vmem:[%s150 + $0x2a28] sm:$0xff]
                %611 = vst [vmem:[%s151 + $0x728] sm:$0xff] %v610
                %v612 = vld [vmem:[%s150 + $0x2a30] sm:$0xff]
                %613 = vst [vmem:[%s151 + $0x730] sm:$0xff] %v612
                %v614 = vld [vmem:[%s150 + $0x2a38] sm:$0xff]
                %615 = vst [vmem:[%s151 + $0x738] sm:$0xff] %v614
                %v616 = vld [vmem:[%s150 + $0x2b80] sm:$0xff]
                %617 = vst [vmem:[%s151 + $0x740] sm:$0xff] %v616
                %v618 = vld [vmem:[%s150 + $0x2b88] sm:$0xff]
                %619 = vst [vmem:[%s151 + $0x748] sm:$0xff] %v618
                %v620 = vld [vmem:[%s150 + $0x2b90] sm:$0xff]
                %621 = vst [vmem:[%s151 + $0x750] sm:$0xff] %v620
                %v622 = vld [vmem:[%s150 + $0x2b98] sm:$0xff]
                %623 = vst [vmem:[%s151 + $0x758] sm:$0xff] %v622
                %v624 = vld [vmem:[%s150 + $0x2ba0] sm:$0xff]
                %625 = vst [vmem:[%s151 + $0x760] sm:$0xff] %v624
                %v626 = vld [vmem:[%s150 + $0x2ba8] sm:$0xff]
                %627 = vst [vmem:[%s151 + $0x768] sm:$0xff] %v626
                %v628 = vld [vmem:[%s150 + $0x2bb0] sm:$0xff]
                %629 = vst [vmem:[%s151 + $0x770] sm:$0xff] %v628
                %v630 = vld [vmem:[%s150 + $0x2bb8] sm:$0xff]
                %631 = vst [vmem:[%s151 + $0x778] sm:$0xff] %v630
                %v632 = vld [vmem:[%s150 + $0x2d00] sm:$0xff]
                %633 = vst [vmem:[%s151 + $0x780] sm:$0xff] %v632
                %v634 = vld [vmem:[%s150 + $0x2d08] sm:$0xff]
                %635 = vst [vmem:[%s151 + $0x788] sm:$0xff] %v634
                %v636 = vld [vmem:[%s150 + $0x2d10] sm:$0xff]
                %637 = vst [vmem:[%s151 + $0x790] sm:$0xff] %v636
                %v638 = vld [vmem:[%s150 + $0x2d18] sm:$0xff]
                %639 = vst [vmem:[%s151 + $0x798] sm:$0xff] %v638
                %v640 = vld [vmem:[%s150 + $0x2d20] sm:$0xff]
                %641 = vst [vmem:[%s151 + $0x7a0] sm:$0xff] %v640
                %v642 = vld [vmem:[%s150 + $0x2d28] sm:$0xff]
                %643 = vst [vmem:[%s151 + $0x7a8] sm:$0xff] %v642
                %v644 = vld [vmem:[%s150 + $0x2d30] sm:$0xff]
                %645 = vst [vmem:[%s151 + $0x7b0] sm:$0xff] %v644
                %v646 = vld [vmem:[%s150 + $0x2d38] sm:$0xff]
                %647 = vst [vmem:[%s151 + $0x7b8] sm:$0xff] %v646
                %v648 = vld [vmem:[%s150 + $0x2e80] sm:$0xff]
                %649 = vst [vmem:[%s151 + $0x7c0] sm:$0xff] %v648
                %v650 = vld [vmem:[%s150 + $0x2e88] sm:$0xff]
                %651 = vst [vmem:[%s151 + $0x7c8] sm:$0xff] %v650
                %v652 = vld [vmem:[%s150 + $0x2e90] sm:$0xff]
                %653 = vst [vmem:[%s151 + $0x7d0] sm:$0xff] %v652
                %v654 = vld [vmem:[%s150 + $0x2e98] sm:$0xff]
                %655 = vst [vmem:[%s151 + $0x7d8] sm:$0xff] %v654
                %v656 = vld [vmem:[%s150 + $0x2ea0] sm:$0xff]
                %657 = vst [vmem:[%s151 + $0x7e0] sm:$0xff] %v656
                %v658 = vld [vmem:[%s150 + $0x2ea8] sm:$0xff]
                %659 = vst [vmem:[%s151 + $0x7e8] sm:$0xff] %v658
                %v660 = vld [vmem:[%s150 + $0x2eb0] sm:$0xff]
                %661 = vst [vmem:[%s151 + $0x7f0] sm:$0xff] %v660
                %v662 = vld [vmem:[%s150 + $0x2eb8] sm:$0xff]
                %663 = vst [vmem:[%s151 + $0x7f8] sm:$0xff] %v662
                %v664 = vld [vmem:[%s150 + $0x3000] sm:$0xff]
                %665 = vst [vmem:[%s151 + $0x800] sm:$0xff] %v664
                %v666 = vld [vmem:[%s150 + $0x3008] sm:$0xff]
                %667 = vst [vmem:[%s151 + $0x808] sm:$0xff] %v666
                %v668 = vld [vmem:[%s150 + $0x3010] sm:$0xff]
                %669 = vst [vmem:[%s151 + $0x810] sm:$0xff] %v668
                %v670 = vld [vmem:[%s150 + $0x3018] sm:$0xff]
                %671 = vst [vmem:[%s151 + $0x818] sm:$0xff] %v670
                %v672 = vld [vmem:[%s150 + $0x3020] sm:$0xff]
                %673 = vst [vmem:[%s151 + $0x820] sm:$0xff] %v672
                %v674 = vld [vmem:[%s150 + $0x3028] sm:$0xff]
                %675 = vst [vmem:[%s151 + $0x828] sm:$0xff] %v674
                %v676 = vld [vmem:[%s150 + $0x3030] sm:$0xff]
                %677 = vst [vmem:[%s151 + $0x830] sm:$0xff] %v676
                %v678 = vld [vmem:[%s150 + $0x3038] sm:$0xff]
                %679 = vst [vmem:[%s151 + $0x838] sm:$0xff] %v678
                %v680 = vld [vmem:[%s150 + $0x3180] sm:$0xff]
                %681 = vst [vmem:[%s151 + $0x840] sm:$0xff] %v680
                %v682 = vld [vmem:[%s150 + $0x3188] sm:$0xff]
                %683 = vst [vmem:[%s151 + $0x848] sm:$0xff] %v682
                %v684 = vld [vmem:[%s150 + $0x3190] sm:$0xff]
                %685 = vst [vmem:[%s151 + $0x850] sm:$0xff] %v684
                %v686 = vld [vmem:[%s150 + $0x3198] sm:$0xff]
                %687 = vst [vmem:[%s151 + $0x858] sm:$0xff] %v686
                %v688 = vld [vmem:[%s150 + $0x31a0] sm:$0xff]
                %689 = vst [vmem:[%s151 + $0x860] sm:$0xff] %v688
                %v690 = vld [vmem:[%s150 + $0x31a8] sm:$0xff]
                %691 = vst [vmem:[%s151 + $0x868] sm:$0xff] %v690
                %v692 = vld [vmem:[%s150 + $0x31b0] sm:$0xff]
                %693 = vst [vmem:[%s151 + $0x870] sm:$0xff] %v692
                %v694 = vld [vmem:[%s150 + $0x31b8] sm:$0xff]
                %695 = vst [vmem:[%s151 + $0x878] sm:$0xff] %v694
                %v696 = vld [vmem:[%s150 + $0x3300] sm:$0xff]
                %697 = vst [vmem:[%s151 + $0x880] sm:$0xff] %v696
                %v698 = vld [vmem:[%s150 + $0x3308] sm:$0xff]
                %699 = vst [vmem:[%s151 + $0x888] sm:$0xff] %v698
                %v700 = vld [vmem:[%s150 + $0x3310] sm:$0xff]
                %701 = vst [vmem:[%s151 + $0x890] sm:$0xff] %v700
                %v702 = vld [vmem:[%s150 + $0x3318] sm:$0xff]
                %703 = vst [vmem:[%s151 + $0x898] sm:$0xff] %v702
                %v704 = vld [vmem:[%s150 + $0x3320] sm:$0xff]
                %705 = vst [vmem:[%s151 + $0x8a0] sm:$0xff] %v704
                %v706 = vld [vmem:[%s150 + $0x3328] sm:$0xff]
                %707 = vst [vmem:[%s151 + $0x8a8] sm:$0xff] %v706
                %v708 = vld [vmem:[%s150 + $0x3330] sm:$0xff]
                %709 = vst [vmem:[%s151 + $0x8b0] sm:$0xff] %v708
                %v710 = vld [vmem:[%s150 + $0x3338] sm:$0xff]
                %711 = vst [vmem:[%s151 + $0x8b8] sm:$0xff] %v710
                %v712 = vld [vmem:[%s150 + $0x3480] sm:$0xff]
                %713 = vst [vmem:[%s151 + $0x8c0] sm:$0xff] %v712
                %v714 = vld [vmem:[%s150 + $0x3488] sm:$0xff]
                %715 = vst [vmem:[%s151 + $0x8c8] sm:$0xff] %v714
                %v716 = vld [vmem:[%s150 + $0x3490] sm:$0xff]
                %717 = vst [vmem:[%s151 + $0x8d0] sm:$0xff] %v716
                %v718 = vld [vmem:[%s150 + $0x3498] sm:$0xff]
                %719 = vst [vmem:[%s151 + $0x8d8] sm:$0xff] %v718
                %v720 = vld [vmem:[%s150 + $0x34a0] sm:$0xff]
                %721 = vst [vmem:[%s151 + $0x8e0] sm:$0xff] %v720
                %v722 = vld [vmem:[%s150 + $0x34a8] sm:$0xff]
                %723 = vst [vmem:[%s151 + $0x8e8] sm:$0xff] %v722
                %v724 = vld [vmem:[%s150 + $0x34b0] sm:$0xff]
                %725 = vst [vmem:[%s151 + $0x8f0] sm:$0xff] %v724
                %v726 = vld [vmem:[%s150 + $0x34b8] sm:$0xff]
                %727 = vst [vmem:[%s151 + $0x8f8] sm:$0xff] %v726
                %v728 = vld [vmem:[%s150 + $0x3600] sm:$0xff]
                %729 = vst [vmem:[%s151 + $0x900] sm:$0xff] %v728
                %v730 = vld [vmem:[%s150 + $0x3608] sm:$0xff]
                %731 = vst [vmem:[%s151 + $0x908] sm:$0xff] %v730
                %v732 = vld [vmem:[%s150 + $0x3610] sm:$0xff]
                %733 = vst [vmem:[%s151 + $0x910] sm:$0xff] %v732
                %v734 = vld [vmem:[%s150 + $0x3618] sm:$0xff]
                %735 = vst [vmem:[%s151 + $0x918] sm:$0xff] %v734
                %v736 = vld [vmem:[%s150 + $0x3620] sm:$0xff]
                %737 = vst [vmem:[%s151 + $0x920] sm:$0xff] %v736
                %v738 = vld [vmem:[%s150 + $0x3628] sm:$0xff]
                %739 = vst [vmem:[%s151 + $0x928] sm:$0xff] %v738
                %v740 = vld [vmem:[%s150 + $0x3630] sm:$0xff]
                %741 = vst [vmem:[%s151 + $0x930] sm:$0xff] %v740
                %v742 = vld [vmem:[%s150 + $0x3638] sm:$0xff]
                %743 = vst [vmem:[%s151 + $0x938] sm:$0xff] %v742
                %v744 = vld [vmem:[%s150 + $0x3780] sm:$0xff]
                %745 = vst [vmem:[%s151 + $0x940] sm:$0xff] %v744
                %v746 = vld [vmem:[%s150 + $0x3788] sm:$0xff]
                %747 = vst [vmem:[%s151 + $0x948] sm:$0xff] %v746
                %v748 = vld [vmem:[%s150 + $0x3790] sm:$0xff]
                %749 = vst [vmem:[%s151 + $0x950] sm:$0xff] %v748
                %v750 = vld [vmem:[%s150 + $0x3798] sm:$0xff]
                %751 = vst [vmem:[%s151 + $0x958] sm:$0xff] %v750
                %v752 = vld [vmem:[%s150 + $0x37a0] sm:$0xff]
                %753 = vst [vmem:[%s151 + $0x960] sm:$0xff] %v752
                %v754 = vld [vmem:[%s150 + $0x37a8] sm:$0xff]
                %755 = vst [vmem:[%s151 + $0x968] sm:$0xff] %v754
                %v756 = vld [vmem:[%s150 + $0x37b0] sm:$0xff]
                %757 = vst [vmem:[%s151 + $0x970] sm:$0xff] %v756
                %v758 = vld [vmem:[%s150 + $0x37b8] sm:$0xff]
                %759 = vst [vmem:[%s151 + $0x978] sm:$0xff] %v758
                %v760 = vld [vmem:[%s150 + $0x3900] sm:$0xff]
                %761 = vst [vmem:[%s151 + $0x980] sm:$0xff] %v760
                %v762 = vld [vmem:[%s150 + $0x3908] sm:$0xff]
                %763 = vst [vmem:[%s151 + $0x988] sm:$0xff] %v762
                %v764 = vld [vmem:[%s150 + $0x3910] sm:$0xff]
                %765 = vst [vmem:[%s151 + $0x990] sm:$0xff] %v764
                %v766 = vld [vmem:[%s150 + $0x3918] sm:$0xff]
                %767 = vst [vmem:[%s151 + $0x998] sm:$0xff] %v766
                %v768 = vld [vmem:[%s150 + $0x3920] sm:$0xff]
                %769 = vst [vmem:[%s151 + $0x9a0] sm:$0xff] %v768
                %v770 = vld [vmem:[%s150 + $0x3928] sm:$0xff]
                %771 = vst [vmem:[%s151 + $0x9a8] sm:$0xff] %v770
                %v772 = vld [vmem:[%s150 + $0x3930] sm:$0xff]
                %773 = vst [vmem:[%s151 + $0x9b0] sm:$0xff] %v772
                %v774 = vld [vmem:[%s150 + $0x3938] sm:$0xff]
                %775 = vst [vmem:[%s151 + $0x9b8] sm:$0xff] %v774
                %v776 = vld [vmem:[%s150 + $0x3a80] sm:$0xff]
                %777 = vst [vmem:[%s151 + $0x9c0] sm:$0xff] %v776
                %v778 = vld [vmem:[%s150 + $0x3a88] sm:$0xff]
                %779 = vst [vmem:[%s151 + $0x9c8] sm:$0xff] %v778
                %v780 = vld [vmem:[%s150 + $0x3a90] sm:$0xff]
                %781 = vst [vmem:[%s151 + $0x9d0] sm:$0xff] %v780
                %v782 = vld [vmem:[%s150 + $0x3a98] sm:$0xff]
                %783 = vst [vmem:[%s151 + $0x9d8] sm:$0xff] %v782
                %v784 = vld [vmem:[%s150 + $0x3aa0] sm:$0xff]
                %785 = vst [vmem:[%s151 + $0x9e0] sm:$0xff] %v784
                %v786 = vld [vmem:[%s150 + $0x3aa8] sm:$0xff]
                %787 = vst [vmem:[%s151 + $0x9e8] sm:$0xff] %v786
                %v788 = vld [vmem:[%s150 + $0x3ab0] sm:$0xff]
                %789 = vst [vmem:[%s151 + $0x9f0] sm:$0xff] %v788
                %v790 = vld [vmem:[%s150 + $0x3ab8] sm:$0xff]
                %791 = vst [vmem:[%s151 + $0x9f8] sm:$0xff] %v790
                %v792 = vld [vmem:[%s150 + $0x3c00] sm:$0xff]
                %793 = vst [vmem:[%s151 + $0xa00] sm:$0xff] %v792
                %v794 = vld [vmem:[%s150 + $0x3c08] sm:$0xff]
                %795 = vst [vmem:[%s151 + $0xa08] sm:$0xff] %v794
                %v796 = vld [vmem:[%s150 + $0x3c10] sm:$0xff]
                %797 = vst [vmem:[%s151 + $0xa10] sm:$0xff] %v796
                %v798 = vld [vmem:[%s150 + $0x3c18] sm:$0xff]
                %799 = vst [vmem:[%s151 + $0xa18] sm:$0xff] %v798
                %v800 = vld [vmem:[%s150 + $0x3c20] sm:$0xff]
                %801 = vst [vmem:[%s151 + $0xa20] sm:$0xff] %v800
                %v802 = vld [vmem:[%s150 + $0x3c28] sm:$0xff]
                %803 = vst [vmem:[%s151 + $0xa28] sm:$0xff] %v802
                %v804 = vld [vmem:[%s150 + $0x3c30] sm:$0xff]
                %805 = vst [vmem:[%s151 + $0xa30] sm:$0xff] %v804
                %v806 = vld [vmem:[%s150 + $0x3c38] sm:$0xff]
                %807 = vst [vmem:[%s151 + $0xa38] sm:$0xff] %v806
                %v808 = vld [vmem:[%s150 + $0x3d80] sm:$0xff]
                %809 = vst [vmem:[%s151 + $0xa40] sm:$0xff] %v808
                %v810 = vld [vmem:[%s150 + $0x3d88] sm:$0xff]
                %811 = vst [vmem:[%s151 + $0xa48] sm:$0xff] %v810
                %v812 = vld [vmem:[%s150 + $0x3d90] sm:$0xff]
                %813 = vst [vmem:[%s151 + $0xa50] sm:$0xff] %v812
                %v814 = vld [vmem:[%s150 + $0x3d98] sm:$0xff]
                %815 = vst [vmem:[%s151 + $0xa58] sm:$0xff] %v814
                %v816 = vld [vmem:[%s150 + $0x3da0] sm:$0xff]
                %817 = vst [vmem:[%s151 + $0xa60] sm:$0xff] %v816
                %v818 = vld [vmem:[%s150 + $0x3da8] sm:$0xff]
                %819 = vst [vmem:[%s151 + $0xa68] sm:$0xff] %v818
                %v820 = vld [vmem:[%s150 + $0x3db0] sm:$0xff]
                %821 = vst [vmem:[%s151 + $0xa70] sm:$0xff] %v820
                %v822 = vld [vmem:[%s150 + $0x3db8] sm:$0xff]
                %823 = vst [vmem:[%s151 + $0xa78] sm:$0xff] %v822
                %v824 = vld [vmem:[%s150 + $0x3f00] sm:$0xff]
                %825 = vst [vmem:[%s151 + $0xa80] sm:$0xff] %v824
                %v826 = vld [vmem:[%s150 + $0x3f08] sm:$0xff]
                %827 = vst [vmem:[%s151 + $0xa88] sm:$0xff] %v826
                %v828 = vld [vmem:[%s150 + $0x3f10] sm:$0xff]
                %829 = vst [vmem:[%s151 + $0xa90] sm:$0xff] %v828
                %v830 = vld [vmem:[%s150 + $0x3f18] sm:$0xff]
                %831 = vst [vmem:[%s151 + $0xa98] sm:$0xff] %v830
                %v832 = vld [vmem:[%s150 + $0x3f20] sm:$0xff]
                %833 = vst [vmem:[%s151 + $0xaa0] sm:$0xff] %v832
                %v834 = vld [vmem:[%s150 + $0x3f28] sm:$0xff]
                %835 = vst [vmem:[%s151 + $0xaa8] sm:$0xff] %v834
                %v836 = vld [vmem:[%s150 + $0x3f30] sm:$0xff]
                %837 = vst [vmem:[%s151 + $0xab0] sm:$0xff] %v836
                %v838 = vld [vmem:[%s150 + $0x3f38] sm:$0xff]
                %839 = vst [vmem:[%s151 + $0xab8] sm:$0xff] %v838
                %v840 = vld [vmem:[%s150 + $0x4080] sm:$0xff]
                %841 = vst [vmem:[%s151 + $0xac0] sm:$0xff] %v840
                %v842 = vld [vmem:[%s150 + $0x4088] sm:$0xff]
                %843 = vst [vmem:[%s151 + $0xac8] sm:$0xff] %v842
                %v844 = vld [vmem:[%s150 + $0x4090] sm:$0xff]
                %845 = vst [vmem:[%s151 + $0xad0] sm:$0xff] %v844
                %v846 = vld [vmem:[%s150 + $0x4098] sm:$0xff]
                %847 = vst [vmem:[%s151 + $0xad8] sm:$0xff] %v846
                %v848 = vld [vmem:[%s150 + $0x40a0] sm:$0xff]
                %849 = vst [vmem:[%s151 + $0xae0] sm:$0xff] %v848
                %v850 = vld [vmem:[%s150 + $0x40a8] sm:$0xff]
                %851 = vst [vmem:[%s151 + $0xae8] sm:$0xff] %v850
                %v852 = vld [vmem:[%s150 + $0x40b0] sm:$0xff]
                %853 = vst [vmem:[%s151 + $0xaf0] sm:$0xff] %v852
                %v854 = vld [vmem:[%s150 + $0x40b8] sm:$0xff]
                %855 = vst [vmem:[%s151 + $0xaf8] sm:$0xff] %v854
                %v856 = vld [vmem:[%s150 + $0x4200] sm:$0xff]
                %857 = vst [vmem:[%s151 + $0xb00] sm:$0xff] %v856
                %v858 = vld [vmem:[%s150 + $0x4208] sm:$0xff]
                %859 = vst [vmem:[%s151 + $0xb08] sm:$0xff] %v858
                %v860 = vld [vmem:[%s150 + $0x4210] sm:$0xff]
                %861 = vst [vmem:[%s151 + $0xb10] sm:$0xff] %v860
                %v862 = vld [vmem:[%s150 + $0x4218] sm:$0xff]
                %863 = vst [vmem:[%s151 + $0xb18] sm:$0xff] %v862
                %v864 = vld [vmem:[%s150 + $0x4220] sm:$0xff]
                %865 = vst [vmem:[%s151 + $0xb20] sm:$0xff] %v864
                %v866 = vld [vmem:[%s150 + $0x4228] sm:$0xff]
                %867 = vst [vmem:[%s151 + $0xb28] sm:$0xff] %v866
                %v868 = vld [vmem:[%s150 + $0x4230] sm:$0xff]
                %869 = vst [vmem:[%s151 + $0xb30] sm:$0xff] %v868
                %v870 = vld [vmem:[%s150 + $0x4238] sm:$0xff]
                %871 = vst [vmem:[%s151 + $0xb38] sm:$0xff] %v870
                %v872 = vld [vmem:[%s150 + $0x4380] sm:$0xff]
                %873 = vst [vmem:[%s151 + $0xb40] sm:$0xff] %v872
                %v874 = vld [vmem:[%s150 + $0x4388] sm:$0xff]
                %875 = vst [vmem:[%s151 + $0xb48] sm:$0xff] %v874
                %v876 = vld [vmem:[%s150 + $0x4390] sm:$0xff]
                %877 = vst [vmem:[%s151 + $0xb50] sm:$0xff] %v876
                %v878 = vld [vmem:[%s150 + $0x4398] sm:$0xff]
                %879 = vst [vmem:[%s151 + $0xb58] sm:$0xff] %v878
                %v880 = vld [vmem:[%s150 + $0x43a0] sm:$0xff]
                %881 = vst [vmem:[%s151 + $0xb60] sm:$0xff] %v880
                %v882 = vld [vmem:[%s150 + $0x43a8] sm:$0xff]
                %883 = vst [vmem:[%s151 + $0xb68] sm:$0xff] %v882
                %v884 = vld [vmem:[%s150 + $0x43b0] sm:$0xff]
                %885 = vst [vmem:[%s151 + $0xb70] sm:$0xff] %v884
                %v886 = vld [vmem:[%s150 + $0x43b8] sm:$0xff]
                %887 = vst [vmem:[%s151 + $0xb78] sm:$0xff] %v886
                %v888 = vld [vmem:[%s150 + $0x4500] sm:$0xff]
                %889 = vst [vmem:[%s151 + $0xb80] sm:$0xff] %v888
                %v890 = vld [vmem:[%s150 + $0x4508] sm:$0xff]
                %891 = vst [vmem:[%s151 + $0xb88] sm:$0xff] %v890
                %v892 = vld [vmem:[%s150 + $0x4510] sm:$0xff]
                %893 = vst [vmem:[%s151 + $0xb90] sm:$0xff] %v892
                %v894 = vld [vmem:[%s150 + $0x4518] sm:$0xff]
                %895 = vst [vmem:[%s151 + $0xb98] sm:$0xff] %v894
                %v896 = vld [vmem:[%s150 + $0x4520] sm:$0xff]
                %897 = vst [vmem:[%s151 + $0xba0] sm:$0xff] %v896
                %v898 = vld [vmem:[%s150 + $0x4528] sm:$0xff]
                %899 = vst [vmem:[%s151 + $0xba8] sm:$0xff] %v898
                %v900 = vld [vmem:[%s150 + $0x4530] sm:$0xff]
                %901 = vst [vmem:[%s151 + $0xbb0] sm:$0xff] %v900
                %v902 = vld [vmem:[%s150 + $0x4538] sm:$0xff]
                %903 = vst [vmem:[%s151 + $0xbb8] sm:$0xff] %v902
                %v904 = vld [vmem:[%s150 + $0x4680] sm:$0xff]
                %905 = vst [vmem:[%s151 + $0xbc0] sm:$0xff] %v904
                %v906 = vld [vmem:[%s150 + $0x4688] sm:$0xff]
                %907 = vst [vmem:[%s151 + $0xbc8] sm:$0xff] %v906
                %v908 = vld [vmem:[%s150 + $0x4690] sm:$0xff]
                %909 = vst [vmem:[%s151 + $0xbd0] sm:$0xff] %v908
                %v910 = vld [vmem:[%s150 + $0x4698] sm:$0xff]
                %911 = vst [vmem:[%s151 + $0xbd8] sm:$0xff] %v910
                %v912 = vld [vmem:[%s150 + $0x46a0] sm:$0xff]
                %913 = vst [vmem:[%s151 + $0xbe0] sm:$0xff] %v912
                %v914 = vld [vmem:[%s150 + $0x46a8] sm:$0xff]
                %915 = vst [vmem:[%s151 + $0xbe8] sm:$0xff] %v914
                %v916 = vld [vmem:[%s150 + $0x46b0] sm:$0xff]
                %917 = vst [vmem:[%s151 + $0xbf0] sm:$0xff] %v916
                %v918 = vld [vmem:[%s150 + $0x46b8] sm:$0xff]
                %919 = vst [vmem:[%s151 + $0xbf8] sm:$0xff] %v918
                %v920 = vld [vmem:[%s150 + $0x4800] sm:$0xff]
                %921 = vst [vmem:[%s151 + $0xc00] sm:$0xff] %v920
                %v922 = vld [vmem:[%s150 + $0x4808] sm:$0xff]
                %923 = vst [vmem:[%s151 + $0xc08] sm:$0xff] %v922
                %v924 = vld [vmem:[%s150 + $0x4810] sm:$0xff]
                %925 = vst [vmem:[%s151 + $0xc10] sm:$0xff] %v924
                %v926 = vld [vmem:[%s150 + $0x4818] sm:$0xff]
                %927 = vst [vmem:[%s151 + $0xc18] sm:$0xff] %v926
                %v928 = vld [vmem:[%s150 + $0x4820] sm:$0xff]
                %929 = vst [vmem:[%s151 + $0xc20] sm:$0xff] %v928
                %v930 = vld [vmem:[%s150 + $0x4828] sm:$0xff]
                %931 = vst [vmem:[%s151 + $0xc28] sm:$0xff] %v930
                %v932 = vld [vmem:[%s150 + $0x4830] sm:$0xff]
                %933 = vst [vmem:[%s151 + $0xc30] sm:$0xff] %v932
                %v934 = vld [vmem:[%s150 + $0x4838] sm:$0xff]
                %935 = vst [vmem:[%s151 + $0xc38] sm:$0xff] %v934
                %v936 = vld [vmem:[%s150 + $0x4980] sm:$0xff]
                %937 = vst [vmem:[%s151 + $0xc40] sm:$0xff] %v936
                %v938 = vld [vmem:[%s150 + $0x4988] sm:$0xff]
                %939 = vst [vmem:[%s151 + $0xc48] sm:$0xff] %v938
                %v940 = vld [vmem:[%s150 + $0x4990] sm:$0xff]
                %941 = vst [vmem:[%s151 + $0xc50] sm:$0xff] %v940
                %v942 = vld [vmem:[%s150 + $0x4998] sm:$0xff]
                %943 = vst [vmem:[%s151 + $0xc58] sm:$0xff] %v942
                %v944 = vld [vmem:[%s150 + $0x49a0] sm:$0xff]
                %945 = vst [vmem:[%s151 + $0xc60] sm:$0xff] %v944
                %v946 = vld [vmem:[%s150 + $0x49a8] sm:$0xff]
                %947 = vst [vmem:[%s151 + $0xc68] sm:$0xff] %v946
                %v948 = vld [vmem:[%s150 + $0x49b0] sm:$0xff]
                %949 = vst [vmem:[%s151 + $0xc70] sm:$0xff] %v948
                %v950 = vld [vmem:[%s150 + $0x49b8] sm:$0xff]
                %951 = vst [vmem:[%s151 + $0xc78] sm:$0xff] %v950
                %v952 = vld [vmem:[%s150 + $0x4b00] sm:$0xff]
                %953 = vst [vmem:[%s151 + $0xc80] sm:$0xff] %v952
                %v954 = vld [vmem:[%s150 + $0x4b08] sm:$0xff]
                %955 = vst [vmem:[%s151 + $0xc88] sm:$0xff] %v954
                %v956 = vld [vmem:[%s150 + $0x4b10] sm:$0xff]
                %957 = vst [vmem:[%s151 + $0xc90] sm:$0xff] %v956
                %v958 = vld [vmem:[%s150 + $0x4b18] sm:$0xff]
                %959 = vst [vmem:[%s151 + $0xc98] sm:$0xff] %v958
                %v960 = vld [vmem:[%s150 + $0x4b20] sm:$0xff]
                %961 = vst [vmem:[%s151 + $0xca0] sm:$0xff] %v960
                %v962 = vld [vmem:[%s150 + $0x4b28] sm:$0xff]
                %963 = vst [vmem:[%s151 + $0xca8] sm:$0xff] %v962
                %v964 = vld [vmem:[%s150 + $0x4b30] sm:$0xff]
                %965 = vst [vmem:[%s151 + $0xcb0] sm:$0xff] %v964
                %v966 = vld [vmem:[%s150 + $0x4b38] sm:$0xff]
                %967 = vst [vmem:[%s151 + $0xcb8] sm:$0xff] %v966
                %v968 = vld [vmem:[%s150 + $0x4c80] sm:$0xff]
                %969 = vst [vmem:[%s151 + $0xcc0] sm:$0xff] %v968
                %v970 = vld [vmem:[%s150 + $0x4c88] sm:$0xff]
                %971 = vst [vmem:[%s151 + $0xcc8] sm:$0xff] %v970
                %v972 = vld [vmem:[%s150 + $0x4c90] sm:$0xff]
                %973 = vst [vmem:[%s151 + $0xcd0] sm:$0xff] %v972
                %v974 = vld [vmem:[%s150 + $0x4c98] sm:$0xff]
                %975 = vst [vmem:[%s151 + $0xcd8] sm:$0xff] %v974
                %v976 = vld [vmem:[%s150 + $0x4ca0] sm:$0xff]
                %977 = vst [vmem:[%s151 + $0xce0] sm:$0xff] %v976
                %v978 = vld [vmem:[%s150 + $0x4ca8] sm:$0xff]
                %979 = vst [vmem:[%s151 + $0xce8] sm:$0xff] %v978
                %v980 = vld [vmem:[%s150 + $0x4cb0] sm:$0xff]
                %981 = vst [vmem:[%s151 + $0xcf0] sm:$0xff] %v980
                %v982 = vld [vmem:[%s150 + $0x4cb8] sm:$0xff]
                %983 = vst [vmem:[%s151 + $0xcf8] sm:$0xff] %v982
                %v984 = vld [vmem:[%s150 + $0x4e00] sm:$0xff]
                %985 = vst [vmem:[%s151 + $0xd00] sm:$0xff] %v984
                %v986 = vld [vmem:[%s150 + $0x4e08] sm:$0xff]
                %987 = vst [vmem:[%s151 + $0xd08] sm:$0xff] %v986
                %v988 = vld [vmem:[%s150 + $0x4e10] sm:$0xff]
                %989 = vst [vmem:[%s151 + $0xd10] sm:$0xff] %v988
                %v990 = vld [vmem:[%s150 + $0x4e18] sm:$0xff]
                %991 = vst [vmem:[%s151 + $0xd18] sm:$0xff] %v990
                %v992 = vld [vmem:[%s150 + $0x4e20] sm:$0xff]
                %993 = vst [vmem:[%s151 + $0xd20] sm:$0xff] %v992
                %v994 = vld [vmem:[%s150 + $0x4e28] sm:$0xff]
                %995 = vst [vmem:[%s151 + $0xd28] sm:$0xff] %v994
                %v996 = vld [vmem:[%s150 + $0x4e30] sm:$0xff]
                %997 = vst [vmem:[%s151 + $0xd30] sm:$0xff] %v996
                %v998 = vld [vmem:[%s150 + $0x4e38] sm:$0xff]
                %999 = vst [vmem:[%s151 + $0xd38] sm:$0xff] %v998
                %v1000 = vld [vmem:[%s150 + $0x4f80] sm:$0xff]
                %1001 = vst [vmem:[%s151 + $0xd40] sm:$0xff] %v1000
                %v1002 = vld [vmem:[%s150 + $0x4f88] sm:$0xff]
                %1003 = vst [vmem:[%s151 + $0xd48] sm:$0xff] %v1002
                %v1004 = vld [vmem:[%s150 + $0x4f90] sm:$0xff]
                %1005 = vst [vmem:[%s151 + $0xd50] sm:$0xff] %v1004
                %v1006 = vld [vmem:[%s150 + $0x4f98] sm:$0xff]
                %1007 = vst [vmem:[%s151 + $0xd58] sm:$0xff] %v1006
                %v1008 = vld [vmem:[%s150 + $0x4fa0] sm:$0xff]
                %1009 = vst [vmem:[%s151 + $0xd60] sm:$0xff] %v1008
                %v1010 = vld [vmem:[%s150 + $0x4fa8] sm:$0xff]
                %1011 = vst [vmem:[%s151 + $0xd68] sm:$0xff] %v1010
                %v1012 = vld [vmem:[%s150 + $0x4fb0] sm:$0xff]
                %1013 = vst [vmem:[%s151 + $0xd70] sm:$0xff] %v1012
                %v1014 = vld [vmem:[%s150 + $0x4fb8] sm:$0xff]
                %1015 = vst [vmem:[%s151 + $0xd78] sm:$0xff] %v1014
                %v1016 = vld [vmem:[%s150 + $0x5100] sm:$0xff]
                %1017 = vst [vmem:[%s151 + $0xd80] sm:$0xff] %v1016
                %v1018 = vld [vmem:[%s150 + $0x5108] sm:$0xff]
                %1019 = vst [vmem:[%s151 + $0xd88] sm:$0xff] %v1018
                %v1020 = vld [vmem:[%s150 + $0x5110] sm:$0xff]
                %1021 = vst [vmem:[%s151 + $0xd90] sm:$0xff] %v1020
                %v1022 = vld [vmem:[%s150 + $0x5118] sm:$0xff]
                %1023 = vst [vmem:[%s151 + $0xd98] sm:$0xff] %v1022
                %v1024 = vld [vmem:[%s150 + $0x5120] sm:$0xff]
                %1025 = vst [vmem:[%s151 + $0xda0] sm:$0xff] %v1024
                %v1026 = vld [vmem:[%s150 + $0x5128] sm:$0xff]
                %1027 = vst [vmem:[%s151 + $0xda8] sm:$0xff] %v1026
                %v1028 = vld [vmem:[%s150 + $0x5130] sm:$0xff]
                %1029 = vst [vmem:[%s151 + $0xdb0] sm:$0xff] %v1028
                %v1030 = vld [vmem:[%s150 + $0x5138] sm:$0xff]
                %1031 = vst [vmem:[%s151 + $0xdb8] sm:$0xff] %v1030
                %v1032 = vld [vmem:[%s150 + $0x5280] sm:$0xff]
                %1033 = vst [vmem:[%s151 + $0xdc0] sm:$0xff] %v1032
                %v1034 = vld [vmem:[%s150 + $0x5288] sm:$0xff]
                %1035 = vst [vmem:[%s151 + $0xdc8] sm:$0xff] %v1034
                %v1036 = vld [vmem:[%s150 + $0x5290] sm:$0xff]
                %1037 = vst [vmem:[%s151 + $0xdd0] sm:$0xff] %v1036
                %v1038 = vld [vmem:[%s150 + $0x5298] sm:$0xff]
                %1039 = vst [vmem:[%s151 + $0xdd8] sm:$0xff] %v1038
                %v1040 = vld [vmem:[%s150 + $0x52a0] sm:$0xff]
                %1041 = vst [vmem:[%s151 + $0xde0] sm:$0xff] %v1040
                %v1042 = vld [vmem:[%s150 + $0x52a8] sm:$0xff]
                %1043 = vst [vmem:[%s151 + $0xde8] sm:$0xff] %v1042
                %v1044 = vld [vmem:[%s150 + $0x52b0] sm:$0xff]
                %1045 = vst [vmem:[%s151 + $0xdf0] sm:$0xff] %v1044
                %v1046 = vld [vmem:[%s150 + $0x52b8] sm:$0xff]
                %1047 = vst [vmem:[%s151 + $0xdf8] sm:$0xff] %v1046
                %v1048 = vld [vmem:[%s150 + $0x5400] sm:$0xff]
                %1049 = vst [vmem:[%s151 + $0xe00] sm:$0xff] %v1048
                %v1050 = vld [vmem:[%s150 + $0x5408] sm:$0xff]
                %1051 = vst [vmem:[%s151 + $0xe08] sm:$0xff] %v1050
                %v1052 = vld [vmem:[%s150 + $0x5410] sm:$0xff]
                %1053 = vst [vmem:[%s151 + $0xe10] sm:$0xff] %v1052
                %v1054 = vld [vmem:[%s150 + $0x5418] sm:$0xff]
                %1055 = vst [vmem:[%s151 + $0xe18] sm:$0xff] %v1054
                %v1056 = vld [vmem:[%s150 + $0x5420] sm:$0xff]
                %1057 = vst [vmem:[%s151 + $0xe20] sm:$0xff] %v1056
                %v1058 = vld [vmem:[%s150 + $0x5428] sm:$0xff]
                %1059 = vst [vmem:[%s151 + $0xe28] sm:$0xff] %v1058
                %v1060 = vld [vmem:[%s150 + $0x5430] sm:$0xff]
                %1061 = vst [vmem:[%s151 + $0xe30] sm:$0xff] %v1060
                %v1062 = vld [vmem:[%s150 + $0x5438] sm:$0xff]
                %1063 = vst [vmem:[%s151 + $0xe38] sm:$0xff] %v1062
                %v1064 = vld [vmem:[%s150 + $0x5580] sm:$0xff]
                %1065 = vst [vmem:[%s151 + $0xe40] sm:$0xff] %v1064
                %v1066 = vld [vmem:[%s150 + $0x5588] sm:$0xff]
                %1067 = vst [vmem:[%s151 + $0xe48] sm:$0xff] %v1066
                %v1068 = vld [vmem:[%s150 + $0x5590] sm:$0xff]
                %1069 = vst [vmem:[%s151 + $0xe50] sm:$0xff] %v1068
                %v1070 = vld [vmem:[%s150 + $0x5598] sm:$0xff]
                %1071 = vst [vmem:[%s151 + $0xe58] sm:$0xff] %v1070
                %v1072 = vld [vmem:[%s150 + $0x55a0] sm:$0xff]
                %1073 = vst [vmem:[%s151 + $0xe60] sm:$0xff] %v1072
                %v1074 = vld [vmem:[%s150 + $0x55a8] sm:$0xff]
                %1075 = vst [vmem:[%s151 + $0xe68] sm:$0xff] %v1074
                %v1076 = vld [vmem:[%s150 + $0x55b0] sm:$0xff]
                %1077 = vst [vmem:[%s151 + $0xe70] sm:$0xff] %v1076
                %v1078 = vld [vmem:[%s150 + $0x55b8] sm:$0xff]
                %1079 = vst [vmem:[%s151 + $0xe78] sm:$0xff] %v1078
                %v1080 = vld [vmem:[%s150 + $0x5700] sm:$0xff]
                %1081 = vst [vmem:[%s151 + $0xe80] sm:$0xff] %v1080
                %v1082 = vld [vmem:[%s150 + $0x5708] sm:$0xff]
                %1083 = vst [vmem:[%s151 + $0xe88] sm:$0xff] %v1082
                %v1084 = vld [vmem:[%s150 + $0x5710] sm:$0xff]
                %1085 = vst [vmem:[%s151 + $0xe90] sm:$0xff] %v1084
                %v1086 = vld [vmem:[%s150 + $0x5718] sm:$0xff]
                %1087 = vst [vmem:[%s151 + $0xe98] sm:$0xff] %v1086
                %v1088 = vld [vmem:[%s150 + $0x5720] sm:$0xff]
                %1089 = vst [vmem:[%s151 + $0xea0] sm:$0xff] %v1088
                %v1090 = vld [vmem:[%s150 + $0x5728] sm:$0xff]
                %1091 = vst [vmem:[%s151 + $0xea8] sm:$0xff] %v1090
                %v1092 = vld [vmem:[%s150 + $0x5730] sm:$0xff]
                %1093 = vst [vmem:[%s151 + $0xeb0] sm:$0xff] %v1092
                %v1094 = vld [vmem:[%s150 + $0x5738] sm:$0xff]
                %1095 = vst [vmem:[%s151 + $0xeb8] sm:$0xff] %v1094
                %v1096 = vld [vmem:[%s150 + $0x5880] sm:$0xff]
                %1097 = vst [vmem:[%s151 + $0xec0] sm:$0xff] %v1096
                %v1098 = vld [vmem:[%s150 + $0x5888] sm:$0xff]
                %1099 = vst [vmem:[%s151 + $0xec8] sm:$0xff] %v1098
                %v1100 = vld [vmem:[%s150 + $0x5890] sm:$0xff]
                %1101 = vst [vmem:[%s151 + $0xed0] sm:$0xff] %v1100
                %v1102 = vld [vmem:[%s150 + $0x5898] sm:$0xff]
                %1103 = vst [vmem:[%s151 + $0xed8] sm:$0xff] %v1102
                %v1104 = vld [vmem:[%s150 + $0x58a0] sm:$0xff]
                %1105 = vst [vmem:[%s151 + $0xee0] sm:$0xff] %v1104
                %v1106 = vld [vmem:[%s150 + $0x58a8] sm:$0xff]
                %1107 = vst [vmem:[%s151 + $0xee8] sm:$0xff] %v1106
                %v1108 = vld [vmem:[%s150 + $0x58b0] sm:$0xff]
                %1109 = vst [vmem:[%s151 + $0xef0] sm:$0xff] %v1108
                %v1110 = vld [vmem:[%s150 + $0x58b8] sm:$0xff]
                %1111 = vst [vmem:[%s151 + $0xef8] sm:$0xff] %v1110
                %v1112 = vld [vmem:[%s150 + $0x5a00] sm:$0xff]
                %1113 = vst [vmem:[%s151 + $0xf00] sm:$0xff] %v1112
                %v1114 = vld [vmem:[%s150 + $0x5a08] sm:$0xff]
                %1115 = vst [vmem:[%s151 + $0xf08] sm:$0xff] %v1114
                %v1116 = vld [vmem:[%s150 + $0x5a10] sm:$0xff]
                %1117 = vst [vmem:[%s151 + $0xf10] sm:$0xff] %v1116
                %v1118 = vld [vmem:[%s150 + $0x5a18] sm:$0xff]
                %1119 = vst [vmem:[%s151 + $0xf18] sm:$0xff] %v1118
                %v1120 = vld [vmem:[%s150 + $0x5a20] sm:$0xff]
                %1121 = vst [vmem:[%s151 + $0xf20] sm:$0xff] %v1120
                %v1122 = vld [vmem:[%s150 + $0x5a28] sm:$0xff]
                %1123 = vst [vmem:[%s151 + $0xf28] sm:$0xff] %v1122
                %v1124 = vld [vmem:[%s150 + $0x5a30] sm:$0xff]
                %1125 = vst [vmem:[%s151 + $0xf30] sm:$0xff] %v1124
                %v1126 = vld [vmem:[%s150 + $0x5a38] sm:$0xff]
                %1127 = vst [vmem:[%s151 + $0xf38] sm:$0xff] %v1126
                %v1128 = vld [vmem:[%s150 + $0x5b80] sm:$0xff]
                %1129 = vst [vmem:[%s151 + $0xf40] sm:$0xff] %v1128
                %v1130 = vld [vmem:[%s150 + $0x5b88] sm:$0xff]
                %1131 = vst [vmem:[%s151 + $0xf48] sm:$0xff] %v1130
                %v1132 = vld [vmem:[%s150 + $0x5b90] sm:$0xff]
                %1133 = vst [vmem:[%s151 + $0xf50] sm:$0xff] %v1132
                %v1134 = vld [vmem:[%s150 + $0x5b98] sm:$0xff]
                %1135 = vst [vmem:[%s151 + $0xf58] sm:$0xff] %v1134
                %v1136 = vld [vmem:[%s150 + $0x5ba0] sm:$0xff]
                %1137 = vst [vmem:[%s151 + $0xf60] sm:$0xff] %v1136
                %v1138 = vld [vmem:[%s150 + $0x5ba8] sm:$0xff]
                %1139 = vst [vmem:[%s151 + $0xf68] sm:$0xff] %v1138
                %v1140 = vld [vmem:[%s150 + $0x5bb0] sm:$0xff]
                %1141 = vst [vmem:[%s151 + $0xf70] sm:$0xff] %v1140
                %v1142 = vld [vmem:[%s150 + $0x5bb8] sm:$0xff]
                %1143 = vst [vmem:[%s151 + $0xf78] sm:$0xff] %v1142
                %v1144 = vld [vmem:[%s150 + $0x5d00] sm:$0xff]
                %1145 = vst [vmem:[%s151 + $0xf80] sm:$0xff] %v1144
                %v1146 = vld [vmem:[%s150 + $0x5d08] sm:$0xff]
                %1147 = vst [vmem:[%s151 + $0xf88] sm:$0xff] %v1146
                %v1148 = vld [vmem:[%s150 + $0x5d10] sm:$0xff]
                %1149 = vst [vmem:[%s151 + $0xf90] sm:$0xff] %v1148
                %v1150 = vld [vmem:[%s150 + $0x5d18] sm:$0xff]
                %1151 = vst [vmem:[%s151 + $0xf98] sm:$0xff] %v1150
                %v1152 = vld [vmem:[%s150 + $0x5d20] sm:$0xff]
                %1153 = vst [vmem:[%s151 + $0xfa0] sm:$0xff] %v1152
                %v1154 = vld [vmem:[%s150 + $0x5d28] sm:$0xff]
                %1155 = vst [vmem:[%s151 + $0xfa8] sm:$0xff] %v1154
                %v1156 = vld [vmem:[%s150 + $0x5d30] sm:$0xff]
                %1157 = vst [vmem:[%s151 + $0xfb0] sm:$0xff] %v1156
                %v1158 = vld [vmem:[%s150 + $0x5d38] sm:$0xff]
                %1159 = vst [vmem:[%s151 + $0xfb8] sm:$0xff] %v1158
                %v1160 = vld [vmem:[%s150 + $0x5e80] sm:$0xff]
                %1161 = vst [vmem:[%s151 + $0xfc0] sm:$0xff] %v1160
                %v1162 = vld [vmem:[%s150 + $0x5e88] sm:$0xff]
                %1163 = vst [vmem:[%s151 + $0xfc8] sm:$0xff] %v1162
                %v1164 = vld [vmem:[%s150 + $0x5e90] sm:$0xff]
                %1165 = vst [vmem:[%s151 + $0xfd0] sm:$0xff] %v1164
                %v1166 = vld [vmem:[%s150 + $0x5e98] sm:$0xff]
                %1167 = vst [vmem:[%s151 + $0xfd8] sm:$0xff] %v1166
                %v1168 = vld [vmem:[%s150 + $0x5ea0] sm:$0xff]
                %1169 = vst [vmem:[%s151 + $0xfe0] sm:$0xff] %v1168
                %v1170 = vld [vmem:[%s150 + $0x5ea8] sm:$0xff]
                %1171 = vst [vmem:[%s151 + $0xfe8] sm:$0xff] %v1170
                %v1172 = vld [vmem:[%s150 + $0x5eb0] sm:$0xff]
                %1173 = vst [vmem:[%s151 + $0xff0] sm:$0xff] %v1172
                %v1174 = vld [vmem:[%s150 + $0x5eb8] sm:$0xff]
                %1175 = vst [vmem:[%s151 + $0xff8] sm:$0xff] %v1174
              $region37: #{encoder_decoder_forward.5} parent=31 // loop_footer
                %s149 = sadd.s32 1, %s145
              $region38: #{encoder_decoder_forward.5} parent=31 // loop_footer_branch
                %144 = sbr.rel target = $region34
              $region39: #{encoder_decoder_forward.5} parent=31 // loop_exit
                _
            $region32: #{encoder_decoder_forward.5} parent=27 // pred_fallthru
              _
            // Predicated region
            $region40: #{encoder_decoder_forward.5} parent=27 // pred_check
              _
            $region41: #{encoder_decoder_forward.5} parent=27 // pred_check_branch
              %1177 = sbr.rel target = $region43
            $region42: #{encoder_decoder_forward.5} parent=27 // pred_region
              _
            $region43: #{encoder_decoder_forward.5} parent=27 // pred_fallthru
              _
          $region28: #{encoder_decoder_forward.5} parent=23 // pred_fallthru
            _
          %1178 = vnop
        $region24: #{encoder_decoder_forward.5} parent=19 // pred_fallthru
          _
        // Predicated region
        $region44: #{encoder_decoder_forward.5} parent=19 // pred_check
          %p1179 = pneg %p76
        $region45: #{encoder_decoder_forward.5} parent=19 // pred_check_branch
          %1181 = sbr.rel (%p1179) target = $region47
        $region46: #{encoder_decoder_forward.5} parent=19 // pred_region
          %s1182 = smul.u32 16, %s9
          %p1183 = scmp.lt.s32.totalorder %s1182, 95
          %s1184 = scalar_select %p1183, %s1182, 95
          %s1185 = scalar_lea.vmem %s2, %s1184
          %s1186 = smul.u32 16, %s9
        $region47: #{encoder_decoder_forward.5} parent=19 // pred_fallthru
          _
      $region20: #{encoder_decoder_forward.5} parent=5 // pred_fallthru
        _
      %p1187 = scmp.le.s32.totalorder 1, %s9
      %p1188 = scmp.lt.s32.totalorder %s9, 7
      %p1189 = pnand %p1187, %p1188
      %p1190 = pneg %p1189
      // Predicated region
      $region48: #{encoder_decoder_forward.5} parent=5 // pred_check
        _
      $region49: #{encoder_decoder_forward.5} parent=5 // pred_check_branch
        %1192 = sbr.rel (%p1189) target = $region51
      $region50: #{encoder_decoder_forward.5} parent=5 // pred_region
        %s1193 = ssub.s32 %s9, 1
        %s1194 = sand.u32 %s43, 1
        %s1195 = sand.u32 %s43, 1
        %s1196 = smul.addr %s1195, 4096
        %s1197 = scalar_lea.vmem [#allocation2], %s1196
        // Predicated region
        $region52: #{encoder_decoder_forward.5} parent=50 // pred_check
          %p1198 = pneg %p56
        $region53: #{encoder_decoder_forward.5} parent=50 // pred_check_branch
          %1200 = sbr.rel (%p1198) target = $region55
        $region54: #{encoder_decoder_forward.5} parent=50 // pred_region
          _
        $region55: #{encoder_decoder_forward.5} parent=50 // pred_fallthru
          _
        %p1201 = pneg %p30
        %p1202 = pneg %p27
        %s1203 = sand.u32 %s43, 1
        %s1204 = sand.u32 %s43, 1
        %s1205 = smul.addr %s1204, 4096
        %s1206 = scalar_lea.vmem [#allocation2], %s1205
        %p1207 = pneg %p56
        %p1208 = pneg %p53
        %s1209 = smul.u32 16, %s14
        %p1210 = scmp.lt.s32.totalorder %s1209, 95
        %s1211 = scalar_select %p1210, %s1209, 95
        %s1212 = scalar_lea.vmem %s2, %s1211
        %p1213 = pneg %p82
        %p1214 = pneg %p79
        %p1215 = pneg %p108
        %p1216 = pneg %p105
        %s1217 = smul.u32 16, %s14
        %p1218 = scmp.lt.s32.totalorder %s1217, 95
        %s1219 = scalar_select %p1218, %s1217, 95
        %s1220 = smul.addr %s1219, 8
        %s1221 = scalar_lea.vmem %s3, %s1220
        %s1222 = smul.u32 16, %s14
        %s1223 = smul.u32 16, %s14
        %p1224 = scmp.lt.s32.totalorder %s1223, 95
        %s1225 = scalar_select %p1224, %s1223, 95
        %s1226 = scalar_lea.vmem %s2, %s1225
        %s1227 = smul.u32 16, %s14
        %s1228 = smul.u32 16, %s14
        %p1229 = scmp.lt.s32.totalorder %s1228, 95
        %s1230 = scalar_select %p1229, %s1228, 95
        %s1231 = smul.addr %s1230, 8
        %s1232 = scalar_lea.vmem %s3, %s1231
        %s1233 = smul.u32 16, %s14
        %v1234 = vld [vmem:[%s0] sm:$0xff]
        %v1235 = vld [vmem:[%s0 + $0x8] sm:$0xff]
        %v1236 = vld [vmem:[%s1197] sm:$0xff]
        %v1237 = vld [vmem:[%s1197 + $0x8] sm:$0xff]
        %v1238 = vld [vmem:[%s1197 + $0x10] sm:$0xff]
        %v1239 = vld [vmem:[%s1197 + $0x18] sm:$0xff]
        %v1240 = vld [vmem:[%s1197 + $0x20] sm:$0xff]
        %v1241 = vld [vmem:[%s1197 + $0x28] sm:$0xff]
        %v1242 = vld [vmem:[%s1197 + $0x30] sm:$0xff]
        %v1243 = vld [vmem:[%s1197 + $0x38] sm:$0xff]
        %v1244 = vld [vmem:[%s1197 + $0x40] sm:$0xff]
        %v1245 = vld [vmem:[%s1197 + $0x48] sm:$0xff]
        %v1246 = vld [vmem:[%s1197 + $0x50] sm:$0xff]
        %v1247 = vld [vmem:[%s1197 + $0x58] sm:$0xff]
        %v1248 = vld [vmem:[%s1197 + $0x60] sm:$0xff]
        %v1249 = vld [vmem:[%s1197 + $0x68] sm:$0xff]
        %v1250 = vld [vmem:[%s1197 + $0x70] sm:$0xff]
        %v1251 = vld [vmem:[%s1197 + $0x78] sm:$0xff]
        %v1252 = vld [vmem:[%s1197 + $0x80] sm:$0xff]
        %v1253 = vld [vmem:[%s1197 + $0x88] sm:$0xff]
        %v1254 = vld [vmem:[%s1197 + $0x90] sm:$0xff]
        %v1255 = vld [vmem:[%s1197 + $0x98] sm:$0xff]
        %v1256 = vld [vmem:[%s1197 + $0xa0] sm:$0xff]
        %v1257 = vld [vmem:[%s1197 + $0xa8] sm:$0xff]
        %v1258 = vld [vmem:[%s1197 + $0xb0] sm:$0xff]
        %v1259 = vld [vmem:[%s1197 + $0xb8] sm:$0xff]
        %v1260 = vld [vmem:[%s1197 + $0xc0] sm:$0xff]
        %v1261 = vld [vmem:[%s1197 + $0xc8] sm:$0xff]
        %v1262 = vld [vmem:[%s1197 + $0xd0] sm:$0xff]
        %v1263 = vld [vmem:[%s1197 + $0xd8] sm:$0xff]
        %v1264 = vld [vmem:[%s1197 + $0xe0] sm:$0xff]
        %v1265 = vld [vmem:[%s1197 + $0xe8] sm:$0xff]
        %v1266 = vld [vmem:[%s1197 + $0xf0] sm:$0xff]
        %v1267 = vld [vmem:[%s1197 + $0xf8] sm:$0xff]
        %v1268 = vld [vmem:[%s1197 + $0x100] sm:$0xff]
        %v1269 = vld [vmem:[%s1197 + $0x108] sm:$0xff]
        %v1270 = vld [vmem:[%s1197 + $0x110] sm:$0xff]
        %v1271 = vld [vmem:[%s1197 + $0x118] sm:$0xff]
        %v1272 = vld [vmem:[%s1197 + $0x120] sm:$0xff]
        %v1273 = vld [vmem:[%s1197 + $0x128] sm:$0xff]
        %v1274 = vld [vmem:[%s1197 + $0x130] sm:$0xff]
        %v1275 = vld [vmem:[%s1197 + $0x138] sm:$0xff]
        %v1276 = vld [vmem:[%s1197 + $0x140] sm:$0xff]
        %v1277 = vld [vmem:[%s1197 + $0x148] sm:$0xff]
        %v1278 = vld [vmem:[%s1197 + $0x150] sm:$0xff]
        %v1279 = vld [vmem:[%s1197 + $0x158] sm:$0xff]
        %v1280 = vld [vmem:[%s1197 + $0x160] sm:$0xff]
        %v1281 = vld [vmem:[%s1197 + $0x168] sm:$0xff]
        %v1282 = vld [vmem:[%s1197 + $0x170] sm:$0xff]
        %v1283 = vld [vmem:[%s1197 + $0x178] sm:$0xff]
        %v1284 = vld [vmem:[%s1197 + $0x180] sm:$0xff]
        %v1285 = vld [vmem:[%s1197 + $0x188] sm:$0xff]
        %v1286 = vld [vmem:[%s1197 + $0x190] sm:$0xff]
        %v1287 = vld [vmem:[%s1197 + $0x198] sm:$0xff]
        %v1288 = vld [vmem:[%s1197 + $0x1a0] sm:$0xff]
        %v1289 = vld [vmem:[%s1197 + $0x1a8] sm:$0xff]
        %v1290 = vld [vmem:[%s1197 + $0x1b0] sm:$0xff]
        %v1291 = vld [vmem:[%s1197 + $0x1b8] sm:$0xff]
        %v1292 = vld [vmem:[%s1197 + $0x1c0] sm:$0xff]
        %v1293 = vld [vmem:[%s1197 + $0x1c8] sm:$0xff]
        %v1294 = vld [vmem:[%s1197 + $0x1d0] sm:$0xff]
        %v1295 = vld [vmem:[%s1197 + $0x1d8] sm:$0xff]
        %v1296 = vld [vmem:[%s1197 + $0x1e0] sm:$0xff]
        %v1297 = vld [vmem:[%s1197 + $0x1e8] sm:$0xff]
        %v1298 = vld [vmem:[%s1197 + $0x1f0] sm:$0xff]
        %v1299 = vld [vmem:[%s1197 + $0x1f8] sm:$0xff]
        %v1300 = vld [vmem:[%s1197 + $0x200] sm:$0xff]
        %v1301 = vld [vmem:[%s1197 + $0x208] sm:$0xff]
        %v1302 = vld [vmem:[%s1197 + $0x210] sm:$0xff]
        %v1303 = vld [vmem:[%s1197 + $0x218] sm:$0xff]
        %v1304 = vld [vmem:[%s1197 + $0x220] sm:$0xff]
        %v1305 = vld [vmem:[%s1197 + $0x228] sm:$0xff]
        %v1306 = vld [vmem:[%s1197 + $0x230] sm:$0xff]
        %v1307 = vld [vmem:[%s1197 + $0x238] sm:$0xff]
        %v1308 = vld [vmem:[%s1197 + $0x240] sm:$0xff]
        %v1309 = vld [vmem:[%s1197 + $0x248] sm:$0xff]
        %v1310 = vld [vmem:[%s1197 + $0x250] sm:$0xff]
        %v1311 = vld [vmem:[%s1197 + $0x258] sm:$0xff]
        %v1312 = vld [vmem:[%s1197 + $0x260] sm:$0xff]
        %v1313 = vld [vmem:[%s1197 + $0x268] sm:$0xff]
        %v1314 = vld [vmem:[%s1197 + $0x270] sm:$0xff]
        %v1315 = vld [vmem:[%s1197 + $0x278] sm:$0xff]
        %v1316 = vld [vmem:[%s1197 + $0x280] sm:$0xff]
        %v1317 = vld [vmem:[%s1197 + $0x288] sm:$0xff]
        %v1318 = vld [vmem:[%s1197 + $0x290] sm:$0xff]
        %v1319 = vld [vmem:[%s1197 + $0x298] sm:$0xff]
        %v1320 = vld [vmem:[%s1197 + $0x2a0] sm:$0xff]
        %v1321 = vld [vmem:[%s1197 + $0x2a8] sm:$0xff]
        %v1322 = vld [vmem:[%s1197 + $0x2b0] sm:$0xff]
        %v1323 = vld [vmem:[%s1197 + $0x2b8] sm:$0xff]
        %v1324 = vld [vmem:[%s1197 + $0x2c0] sm:$0xff]
        %v1325 = vld [vmem:[%s1197 + $0x2c8] sm:$0xff]
        %v1326 = vld [vmem:[%s1197 + $0x2d0] sm:$0xff]
        %v1327 = vld [vmem:[%s1197 + $0x2d8] sm:$0xff]
        %v1328 = vld [vmem:[%s1197 + $0x2e0] sm:$0xff]
        %v1329 = vld [vmem:[%s1197 + $0x2e8] sm:$0xff]
        %v1330 = vld [vmem:[%s1197 + $0x2f0] sm:$0xff]
        %v1331 = vld [vmem:[%s1197 + $0x2f8] sm:$0xff]
        %v1332 = vld [vmem:[%s1197 + $0x300] sm:$0xff]
        %v1333 = vld [vmem:[%s1197 + $0x308] sm:$0xff]
        %v1334 = vld [vmem:[%s1197 + $0x310] sm:$0xff]
        %v1335 = vld [vmem:[%s1197 + $0x318] sm:$0xff]
        %v1336 = vld [vmem:[%s1197 + $0x320] sm:$0xff]
        %v1337 = vld [vmem:[%s1197 + $0x328] sm:$0xff]
        %v1338 = vld [vmem:[%s1197 + $0x330] sm:$0xff]
        %v1339 = vld [vmem:[%s1197 + $0x338] sm:$0xff]
        %v1340 = vld [vmem:[%s1197 + $0x340] sm:$0xff]
        %v1341 = vld [vmem:[%s1197 + $0x348] sm:$0xff]
        %v1342 = vld [vmem:[%s1197 + $0x350] sm:$0xff]
        %v1343 = vld [vmem:[%s1197 + $0x358] sm:$0xff]
        %v1344 = vld [vmem:[%s1197 + $0x360] sm:$0xff]
        %v1345 = vld [vmem:[%s1197 + $0x368] sm:$0xff]
        %v1346 = vld [vmem:[%s1197 + $0x370] sm:$0xff]
        %v1347 = vld [vmem:[%s1197 + $0x378] sm:$0xff]
        %v1348 = vld [vmem:[%s1197 + $0x380] sm:$0xff]
        %v1349 = vld [vmem:[%s1197 + $0x388] sm:$0xff]
        %v1350 = vld [vmem:[%s1197 + $0x390] sm:$0xff]
        %v1351 = vld [vmem:[%s1197 + $0x398] sm:$0xff]
        %v1352 = vld [vmem:[%s1197 + $0x3a0] sm:$0xff]
        %v1353 = vld [vmem:[%s1197 + $0x3a8] sm:$0xff]
        %v1354 = vld [vmem:[%s1197 + $0x3b0] sm:$0xff]
        %v1355 = vld [vmem:[%s1197 + $0x3b8] sm:$0xff]
        %v1356 = vld [vmem:[%s1197 + $0x3c0] sm:$0xff]
        %v1357 = vld [vmem:[%s1197 + $0x3c8] sm:$0xff]
        %v1358 = vld [vmem:[%s1197 + $0x3d0] sm:$0xff]
        %v1359 = vld [vmem:[%s1197 + $0x3d8] sm:$0xff]
        %v1360 = vld [vmem:[%s1197 + $0x3e0] sm:$0xff]
        %v1361 = vld [vmem:[%s1197 + $0x3e8] sm:$0xff]
        %v1362 = vld [vmem:[%s1197 + $0x3f0] sm:$0xff]
        %v1363 = vld [vmem:[%s1197 + $0x3f8] sm:$0xff]
        %v1364 = vld [vmem:[%s1197 + $0x400] sm:$0xff]
        %v1365 = vld [vmem:[%s1197 + $0x408] sm:$0xff]
        %v1366 = vld [vmem:[%s1197 + $0x410] sm:$0xff]
        %v1367 = vld [vmem:[%s1197 + $0x418] sm:$0xff]
        %v1368 = vld [vmem:[%s1197 + $0x420] sm:$0xff]
        %v1369 = vld [vmem:[%s1197 + $0x428] sm:$0xff]
        %v1370 = vld [vmem:[%s1197 + $0x430] sm:$0xff]
        %v1371 = vld [vmem:[%s1197 + $0x438] sm:$0xff]
        %v1372 = vld [vmem:[%s1197 + $0x440] sm:$0xff]
        %v1373 = vld [vmem:[%s1197 + $0x448] sm:$0xff]
        %v1374 = vld [vmem:[%s1197 + $0x450] sm:$0xff]
        %v1375 = vld [vmem:[%s1197 + $0x458] sm:$0xff]
        %v1376 = vld [vmem:[%s1197 + $0x460] sm:$0xff]
        %v1377 = vld [vmem:[%s1197 + $0x468] sm:$0xff]
        %v1378 = vld [vmem:[%s1197 + $0x470] sm:$0xff]
        %v1379 = vld [vmem:[%s1197 + $0x478] sm:$0xff]
        %v1380 = vld [vmem:[%s1197 + $0x480] sm:$0xff]
        %v1381 = vld [vmem:[%s1197 + $0x488] sm:$0xff]
        %v1382 = vld [vmem:[%s1197 + $0x490] sm:$0xff]
        %v1383 = vld [vmem:[%s1197 + $0x498] sm:$0xff]
        %v1384 = vld [vmem:[%s1197 + $0x4a0] sm:$0xff]
        %v1385 = vld [vmem:[%s1197 + $0x4a8] sm:$0xff]
        %v1386 = vld [vmem:[%s1197 + $0x4b0] sm:$0xff]
        %v1387 = vld [vmem:[%s1197 + $0x4b8] sm:$0xff]
        %v1388 = vld [vmem:[%s1197 + $0x4c0] sm:$0xff]
        %v1389 = vld [vmem:[%s1197 + $0x4c8] sm:$0xff]
        %v1390 = vld [vmem:[%s1197 + $0x4d0] sm:$0xff]
        %v1391 = vld [vmem:[%s1197 + $0x4d8] sm:$0xff]
        %v1392 = vld [vmem:[%s1197 + $0x4e0] sm:$0xff]
        %v1393 = vld [vmem:[%s1197 + $0x4e8] sm:$0xff]
        %v1394 = vld [vmem:[%s1197 + $0x4f0] sm:$0xff]
        %v1395 = vld [vmem:[%s1197 + $0x4f8] sm:$0xff]
        %v1396 = vld [vmem:[%s1197 + $0x500] sm:$0xff]
        %v1397 = vld [vmem:[%s1197 + $0x508] sm:$0xff]
        %v1398 = vld [vmem:[%s1197 + $0x510] sm:$0xff]
        %v1399 = vld [vmem:[%s1197 + $0x518] sm:$0xff]
        %v1400 = vld [vmem:[%s1197 + $0x520] sm:$0xff]
        %v1401 = vld [vmem:[%s1197 + $0x528] sm:$0xff]
        %v1402 = vld [vmem:[%s1197 + $0x530] sm:$0xff]
        %v1403 = vld [vmem:[%s1197 + $0x538] sm:$0xff]
        %v1404 = vld [vmem:[%s1197 + $0x540] sm:$0xff]
        %v1405 = vld [vmem:[%s1197 + $0x548] sm:$0xff]
        %v1406 = vld [vmem:[%s1197 + $0x550] sm:$0xff]
        %v1407 = vld [vmem:[%s1197 + $0x558] sm:$0xff]
        %v1408 = vld [vmem:[%s1197 + $0x560] sm:$0xff]
        %v1409 = vld [vmem:[%s1197 + $0x568] sm:$0xff]
        %v1410 = vld [vmem:[%s1197 + $0x570] sm:$0xff]
        %v1411 = vld [vmem:[%s1197 + $0x578] sm:$0xff]
        %v1412 = vld [vmem:[%s1197 + $0x580] sm:$0xff]
        %v1413 = vld [vmem:[%s1197 + $0x588] sm:$0xff]
        %v1414 = vld [vmem:[%s1197 + $0x590] sm:$0xff]
        %v1415 = vld [vmem:[%s1197 + $0x598] sm:$0xff]
        %v1416 = vld [vmem:[%s1197 + $0x5a0] sm:$0xff]
        %v1417 = vld [vmem:[%s1197 + $0x5a8] sm:$0xff]
        %v1418 = vld [vmem:[%s1197 + $0x5b0] sm:$0xff]
        %v1419 = vld [vmem:[%s1197 + $0x5b8] sm:$0xff]
        %v1420 = vld [vmem:[%s1197 + $0x5c0] sm:$0xff]
        %v1421 = vld [vmem:[%s1197 + $0x5c8] sm:$0xff]
        %v1422 = vld [vmem:[%s1197 + $0x5d0] sm:$0xff]
        %v1423 = vld [vmem:[%s1197 + $0x5d8] sm:$0xff]
        %v1424 = vld [vmem:[%s1197 + $0x5e0] sm:$0xff]
        %v1425 = vld [vmem:[%s1197 + $0x5e8] sm:$0xff]
        %v1426 = vld [vmem:[%s1197 + $0x5f0] sm:$0xff]
        %v1427 = vld [vmem:[%s1197 + $0x5f8] sm:$0xff]
        %v1428 = vld [vmem:[%s1197 + $0x600] sm:$0xff]
        %v1429 = vld [vmem:[%s1197 + $0x608] sm:$0xff]
        %v1430 = vld [vmem:[%s1197 + $0x610] sm:$0xff]
        %v1431 = vld [vmem:[%s1197 + $0x618] sm:$0xff]
        %v1432 = vld [vmem:[%s1197 + $0x620] sm:$0xff]
        %v1433 = vld [vmem:[%s1197 + $0x628] sm:$0xff]
        %v1434 = vld [vmem:[%s1197 + $0x630] sm:$0xff]
        %v1435 = vld [vmem:[%s1197 + $0x638] sm:$0xff]
        %v1436 = vld [vmem:[%s1197 + $0x640] sm:$0xff]
        %v1437 = vld [vmem:[%s1197 + $0x648] sm:$0xff]
        %v1438 = vld [vmem:[%s1197 + $0x650] sm:$0xff]
        %v1439 = vld [vmem:[%s1197 + $0x658] sm:$0xff]
        %v1440 = vld [vmem:[%s1197 + $0x660] sm:$0xff]
        %v1441 = vld [vmem:[%s1197 + $0x668] sm:$0xff]
        %v1442 = vld [vmem:[%s1197 + $0x670] sm:$0xff]
        %v1443 = vld [vmem:[%s1197 + $0x678] sm:$0xff]
        %v1444 = vld [vmem:[%s1197 + $0x680] sm:$0xff]
        %v1445 = vld [vmem:[%s1197 + $0x688] sm:$0xff]
        %v1446 = vld [vmem:[%s1197 + $0x690] sm:$0xff]
        %v1447 = vld [vmem:[%s1197 + $0x698] sm:$0xff]
        %v1448 = vld [vmem:[%s1197 + $0x6a0] sm:$0xff]
        %v1449 = vld [vmem:[%s1197 + $0x6a8] sm:$0xff]
        %v1450 = vld [vmem:[%s1197 + $0x6b0] sm:$0xff]
        %v1451 = vld [vmem:[%s1197 + $0x6b8] sm:$0xff]
        %v1452 = vld [vmem:[%s1197 + $0x6c0] sm:$0xff]
        %v1453 = vld [vmem:[%s1197 + $0x6c8] sm:$0xff]
        %v1454 = vld [vmem:[%s1197 + $0x6d0] sm:$0xff]
        %v1455 = vld [vmem:[%s1197 + $0x6d8] sm:$0xff]
        %v1456 = vld [vmem:[%s1197 + $0x6e0] sm:$0xff]
        %v1457 = vld [vmem:[%s1197 + $0x6e8] sm:$0xff]
        %v1458 = vld [vmem:[%s1197 + $0x6f0] sm:$0xff]
        %v1459 = vld [vmem:[%s1197 + $0x6f8] sm:$0xff]
        %v1460 = vld [vmem:[%s1197 + $0x700] sm:$0xff]
        %v1461 = vld [vmem:[%s1197 + $0x708] sm:$0xff]
        %v1462 = vld [vmem:[%s1197 + $0x710] sm:$0xff]
        %v1463 = vld [vmem:[%s1197 + $0x718] sm:$0xff]
        %v1464 = vld [vmem:[%s1197 + $0x720] sm:$0xff]
        %v1465 = vld [vmem:[%s1197 + $0x728] sm:$0xff]
        %v1466 = vld [vmem:[%s1197 + $0x730] sm:$0xff]
        %v1467 = vld [vmem:[%s1197 + $0x738] sm:$0xff]
        %v1468 = vld [vmem:[%s1197 + $0x740] sm:$0xff]
        %v1469 = vld [vmem:[%s1197 + $0x748] sm:$0xff]
        %v1470 = vld [vmem:[%s1197 + $0x750] sm:$0xff]
        %v1471 = vld [vmem:[%s1197 + $0x758] sm:$0xff]
        %v1472 = vld [vmem:[%s1197 + $0x760] sm:$0xff]
        %v1473 = vld [vmem:[%s1197 + $0x768] sm:$0xff]
        %v1474 = vld [vmem:[%s1197 + $0x770] sm:$0xff]
        %v1475 = vld [vmem:[%s1197 + $0x778] sm:$0xff]
        %v1476 = vld [vmem:[%s1197 + $0x780] sm:$0xff]
        %v1477 = vld [vmem:[%s1197 + $0x788] sm:$0xff]
        %v1478 = vld [vmem:[%s1197 + $0x790] sm:$0xff]
        %v1479 = vld [vmem:[%s1197 + $0x798] sm:$0xff]
        %v1480 = vld [vmem:[%s1197 + $0x7a0] sm:$0xff]
        %v1481 = vld [vmem:[%s1197 + $0x7a8] sm:$0xff]
        %v1482 = vld [vmem:[%s1197 + $0x7b0] sm:$0xff]
        %v1483 = vld [vmem:[%s1197 + $0x7b8] sm:$0xff]
        %v1484 = vld [vmem:[%s1197 + $0x7c0] sm:$0xff]
        %v1485 = vld [vmem:[%s1197 + $0x7c8] sm:$0xff]
        %v1486 = vld [vmem:[%s1197 + $0x7d0] sm:$0xff]
        %v1487 = vld [vmem:[%s1197 + $0x7d8] sm:$0xff]
        %v1488 = vld [vmem:[%s1197 + $0x7e0] sm:$0xff]
        %v1489 = vld [vmem:[%s1197 + $0x7e8] sm:$0xff]
        %v1490 = vld [vmem:[%s1197 + $0x7f0] sm:$0xff]
        %v1491 = vld [vmem:[%s1197 + $0x7f8] sm:$0xff]
        %v1492 = vld [vmem:[%s1197 + $0x800] sm:$0xff]
        %v1493 = vld [vmem:[%s1197 + $0x808] sm:$0xff]
        %v1494 = vld [vmem:[%s1197 + $0x810] sm:$0xff]
        %v1495 = vld [vmem:[%s1197 + $0x818] sm:$0xff]
        %v1496 = vld [vmem:[%s1197 + $0x820] sm:$0xff]
        %v1497 = vld [vmem:[%s1197 + $0x828] sm:$0xff]
        %v1498 = vld [vmem:[%s1197 + $0x830] sm:$0xff]
        %v1499 = vld [vmem:[%s1197 + $0x838] sm:$0xff]
        %v1500 = vld [vmem:[%s1197 + $0x840] sm:$0xff]
        %v1501 = vld [vmem:[%s1197 + $0x848] sm:$0xff]
        %v1502 = vld [vmem:[%s1197 + $0x850] sm:$0xff]
        %v1503 = vld [vmem:[%s1197 + $0x858] sm:$0xff]
        %v1504 = vld [vmem:[%s1197 + $0x860] sm:$0xff]
        %v1505 = vld [vmem:[%s1197 + $0x868] sm:$0xff]
        %v1506 = vld [vmem:[%s1197 + $0x870] sm:$0xff]
        %v1507 = vld [vmem:[%s1197 + $0x878] sm:$0xff]
        %v1508 = vld [vmem:[%s1197 + $0x880] sm:$0xff]
        %v1509 = vld [vmem:[%s1197 + $0x888] sm:$0xff]
        %v1510 = vld [vmem:[%s1197 + $0x890] sm:$0xff]
        %v1511 = vld [vmem:[%s1197 + $0x898] sm:$0xff]
        %v1512 = vld [vmem:[%s1197 + $0x8a0] sm:$0xff]
        %v1513 = vld [vmem:[%s1197 + $0x8a8] sm:$0xff]
        %v1514 = vld [vmem:[%s1197 + $0x8b0] sm:$0xff]
        %v1515 = vld [vmem:[%s1197 + $0x8b8] sm:$0xff]
        %v1516 = vld [vmem:[%s1197 + $0x8c0] sm:$0xff]
        %v1517 = vld [vmem:[%s1197 + $0x8c8] sm:$0xff]
        %v1518 = vld [vmem:[%s1197 + $0x8d0] sm:$0xff]
        %v1519 = vld [vmem:[%s1197 + $0x8d8] sm:$0xff]
        %v1520 = vld [vmem:[%s1197 + $0x8e0] sm:$0xff]
        %v1521 = vld [vmem:[%s1197 + $0x8e8] sm:$0xff]
        %v1522 = vld [vmem:[%s1197 + $0x8f0] sm:$0xff]
        %v1523 = vld [vmem:[%s1197 + $0x8f8] sm:$0xff]
        %v1524 = vld [vmem:[%s1197 + $0x900] sm:$0xff]
        %v1525 = vld [vmem:[%s1197 + $0x908] sm:$0xff]
        %v1526 = vld [vmem:[%s1197 + $0x910] sm:$0xff]
        %v1527 = vld [vmem:[%s1197 + $0x918] sm:$0xff]
        %v1528 = vld [vmem:[%s1197 + $0x920] sm:$0xff]
        %v1529 = vld [vmem:[%s1197 + $0x928] sm:$0xff]
        %v1530 = vld [vmem:[%s1197 + $0x930] sm:$0xff]
        %v1531 = vld [vmem:[%s1197 + $0x938] sm:$0xff]
        %v1532 = vld [vmem:[%s1197 + $0x940] sm:$0xff]
        %v1533 = vld [vmem:[%s1197 + $0x948] sm:$0xff]
        %v1534 = vld [vmem:[%s1197 + $0x950] sm:$0xff]
        %v1535 = vld [vmem:[%s1197 + $0x958] sm:$0xff]
        %v1536 = vld [vmem:[%s1197 + $0x960] sm:$0xff]
        %v1537 = vld [vmem:[%s1197 + $0x968] sm:$0xff]
        %v1538 = vld [vmem:[%s1197 + $0x970] sm:$0xff]
        %v1539 = vld [vmem:[%s1197 + $0x978] sm:$0xff]
        %v1540 = vld [vmem:[%s1197 + $0x980] sm:$0xff]
        %v1541 = vld [vmem:[%s1197 + $0x988] sm:$0xff]
        %v1542 = vld [vmem:[%s1197 + $0x990] sm:$0xff]
        %v1543 = vld [vmem:[%s1197 + $0x998] sm:$0xff]
        %v1544 = vld [vmem:[%s1197 + $0x9a0] sm:$0xff]
        %v1545 = vld [vmem:[%s1197 + $0x9a8] sm:$0xff]
        %v1546 = vld [vmem:[%s1197 + $0x9b0] sm:$0xff]
        %v1547 = vld [vmem:[%s1197 + $0x9b8] sm:$0xff]
        %v1548 = vld [vmem:[%s1197 + $0x9c0] sm:$0xff]
        %v1549 = vld [vmem:[%s1197 + $0x9c8] sm:$0xff]
        %v1550 = vld [vmem:[%s1197 + $0x9d0] sm:$0xff]
        %v1551 = vld [vmem:[%s1197 + $0x9d8] sm:$0xff]
        %v1552 = vld [vmem:[%s1197 + $0x9e0] sm:$0xff]
        %v1553 = vld [vmem:[%s1197 + $0x9e8] sm:$0xff]
        %v1554 = vld [vmem:[%s1197 + $0x9f0] sm:$0xff]
        %v1555 = vld [vmem:[%s1197 + $0x9f8] sm:$0xff]
        %v1556 = vld [vmem:[%s1197 + $0xa00] sm:$0xff]
        %v1557 = vld [vmem:[%s1197 + $0xa08] sm:$0xff]
        %v1558 = vld [vmem:[%s1197 + $0xa10] sm:$0xff]
        %v1559 = vld [vmem:[%s1197 + $0xa18] sm:$0xff]
        %v1560 = vld [vmem:[%s1197 + $0xa20] sm:$0xff]
        %v1561 = vld [vmem:[%s1197 + $0xa28] sm:$0xff]
        %v1562 = vld [vmem:[%s1197 + $0xa30] sm:$0xff]
        %v1563 = vld [vmem:[%s1197 + $0xa38] sm:$0xff]
        %v1564 = vld [vmem:[%s1197 + $0xa40] sm:$0xff]
        %v1565 = vld [vmem:[%s1197 + $0xa48] sm:$0xff]
        %v1566 = vld [vmem:[%s1197 + $0xa50] sm:$0xff]
        %v1567 = vld [vmem:[%s1197 + $0xa58] sm:$0xff]
        %v1568 = vld [vmem:[%s1197 + $0xa60] sm:$0xff]
        %v1569 = vld [vmem:[%s1197 + $0xa68] sm:$0xff]
        %v1570 = vld [vmem:[%s1197 + $0xa70] sm:$0xff]
        %v1571 = vld [vmem:[%s1197 + $0xa78] sm:$0xff]
        %v1572 = vld [vmem:[%s1197 + $0xa80] sm:$0xff]
        %v1573 = vld [vmem:[%s1197 + $0xa88] sm:$0xff]
        %v1574 = vld [vmem:[%s1197 + $0xa90] sm:$0xff]
        %v1575 = vld [vmem:[%s1197 + $0xa98] sm:$0xff]
        %v1576 = vld [vmem:[%s1197 + $0xaa0] sm:$0xff]
        %v1577 = vld [vmem:[%s1197 + $0xaa8] sm:$0xff]
        %v1578 = vld [vmem:[%s1197 + $0xab0] sm:$0xff]
        %v1579 = vld [vmem:[%s1197 + $0xab8] sm:$0xff]
        %v1580 = vld [vmem:[%s1197 + $0xac0] sm:$0xff]
        %v1581 = vld [vmem:[%s1197 + $0xac8] sm:$0xff]
        %v1582 = vld [vmem:[%s1197 + $0xad0] sm:$0xff]
        %v1583 = vld [vmem:[%s1197 + $0xad8] sm:$0xff]
        %v1584 = vld [vmem:[%s1197 + $0xae0] sm:$0xff]
        %v1585 = vld [vmem:[%s1197 + $0xae8] sm:$0xff]
        %v1586 = vld [vmem:[%s1197 + $0xaf0] sm:$0xff]
        %v1587 = vld [vmem:[%s1197 + $0xaf8] sm:$0xff]
        %v1588 = vld [vmem:[%s1197 + $0xb00] sm:$0xff]
        %v1589 = vld [vmem:[%s1197 + $0xb08] sm:$0xff]
        %v1590 = vld [vmem:[%s1197 + $0xb10] sm:$0xff]
        %v1591 = vld [vmem:[%s1197 + $0xb18] sm:$0xff]
        %v1592 = vld [vmem:[%s1197 + $0xb20] sm:$0xff]
        %v1593 = vld [vmem:[%s1197 + $0xb28] sm:$0xff]
        %v1594 = vld [vmem:[%s1197 + $0xb30] sm:$0xff]
        %v1595 = vld [vmem:[%s1197 + $0xb38] sm:$0xff]
        %v1596 = vld [vmem:[%s1197 + $0xb40] sm:$0xff]
        %v1597 = vld [vmem:[%s1197 + $0xb48] sm:$0xff]
        %v1598 = vld [vmem:[%s1197 + $0xb50] sm:$0xff]
        %v1599 = vld [vmem:[%s1197 + $0xb58] sm:$0xff]
        %v1600 = vld [vmem:[%s1197 + $0xb60] sm:$0xff]
        %v1601 = vld [vmem:[%s1197 + $0xb68] sm:$0xff]
        %v1602 = vld [vmem:[%s1197 + $0xb70] sm:$0xff]
        %v1603 = vld [vmem:[%s1197 + $0xb78] sm:$0xff]
        %v1604 = vld [vmem:[%s1197 + $0xb80] sm:$0xff]
        %v1605 = vld [vmem:[%s1197 + $0xb88] sm:$0xff]
        %v1606 = vld [vmem:[%s1197 + $0xb90] sm:$0xff]
        %v1607 = vld [vmem:[%s1197 + $0xb98] sm:$0xff]
        %v1608 = vld [vmem:[%s1197 + $0xba0] sm:$0xff]
        %v1609 = vld [vmem:[%s1197 + $0xba8] sm:$0xff]
        %v1610 = vld [vmem:[%s1197 + $0xbb0] sm:$0xff]
        %v1611 = vld [vmem:[%s1197 + $0xbb8] sm:$0xff]
        %v1612 = vld [vmem:[%s1197 + $0xbc0] sm:$0xff]
        %v1613 = vld [vmem:[%s1197 + $0xbc8] sm:$0xff]
        %v1614 = vld [vmem:[%s1197 + $0xbd0] sm:$0xff]
        %v1615 = vld [vmem:[%s1197 + $0xbd8] sm:$0xff]
        %v1616 = vld [vmem:[%s1197 + $0xbe0] sm:$0xff]
        %v1617 = vld [vmem:[%s1197 + $0xbe8] sm:$0xff]
        %v1618 = vld [vmem:[%s1197 + $0xbf0] sm:$0xff]
        %v1619 = vld [vmem:[%s1197 + $0xbf8] sm:$0xff]
        %v1620 = vld [vmem:[%s1197 + $0xc00] sm:$0xff]
        %v1621 = vld [vmem:[%s1197 + $0xc08] sm:$0xff]
        %v1622 = vld [vmem:[%s1197 + $0xc10] sm:$0xff]
        %v1623 = vld [vmem:[%s1197 + $0xc18] sm:$0xff]
        %v1624 = vld [vmem:[%s1197 + $0xc20] sm:$0xff]
        %v1625 = vld [vmem:[%s1197 + $0xc28] sm:$0xff]
        %v1626 = vld [vmem:[%s1197 + $0xc30] sm:$0xff]
        %v1627 = vld [vmem:[%s1197 + $0xc38] sm:$0xff]
        %v1628 = vld [vmem:[%s1197 + $0xc40] sm:$0xff]
        %v1629 = vld [vmem:[%s1197 + $0xc48] sm:$0xff]
        %v1630 = vld [vmem:[%s1197 + $0xc50] sm:$0xff]
        %v1631 = vld [vmem:[%s1197 + $0xc58] sm:$0xff]
        %v1632 = vld [vmem:[%s1197 + $0xc60] sm:$0xff]
        %v1633 = vld [vmem:[%s1197 + $0xc68] sm:$0xff]
        %v1634 = vld [vmem:[%s1197 + $0xc70] sm:$0xff]
        %v1635 = vld [vmem:[%s1197 + $0xc78] sm:$0xff]
        %v1636 = vld [vmem:[%s1197 + $0xc80] sm:$0xff]
        %v1637 = vld [vmem:[%s1197 + $0xc88] sm:$0xff]
        %v1638 = vld [vmem:[%s1197 + $0xc90] sm:$0xff]
        %v1639 = vld [vmem:[%s1197 + $0xc98] sm:$0xff]
        %v1640 = vld [vmem:[%s1197 + $0xca0] sm:$0xff]
        %v1641 = vld [vmem:[%s1197 + $0xca8] sm:$0xff]
        %v1642 = vld [vmem:[%s1197 + $0xcb0] sm:$0xff]
        %v1643 = vld [vmem:[%s1197 + $0xcb8] sm:$0xff]
        %v1644 = vld [vmem:[%s1197 + $0xcc0] sm:$0xff]
        %v1645 = vld [vmem:[%s1197 + $0xcc8] sm:$0xff]
        %v1646 = vld [vmem:[%s1197 + $0xcd0] sm:$0xff]
        %v1647 = vld [vmem:[%s1197 + $0xcd8] sm:$0xff]
        %v1648 = vld [vmem:[%s1197 + $0xce0] sm:$0xff]
        %v1649 = vld [vmem:[%s1197 + $0xce8] sm:$0xff]
        %v1650 = vld [vmem:[%s1197 + $0xcf0] sm:$0xff]
        %v1651 = vld [vmem:[%s1197 + $0xcf8] sm:$0xff]
        %v1652 = vld [vmem:[%s1197 + $0xd00] sm:$0xff]
        %v1653 = vld [vmem:[%s1197 + $0xd08] sm:$0xff]
        %v1654 = vld [vmem:[%s1197 + $0xd10] sm:$0xff]
        %v1655 = vld [vmem:[%s1197 + $0xd18] sm:$0xff]
        %v1656 = vld [vmem:[%s1197 + $0xd20] sm:$0xff]
        %v1657 = vld [vmem:[%s1197 + $0xd28] sm:$0xff]
        %v1658 = vld [vmem:[%s1197 + $0xd30] sm:$0xff]
        %v1659 = vld [vmem:[%s1197 + $0xd38] sm:$0xff]
        %v1660 = vld [vmem:[%s1197 + $0xd40] sm:$0xff]
        %v1661 = vld [vmem:[%s1197 + $0xd48] sm:$0xff]
        %v1662 = vld [vmem:[%s1197 + $0xd50] sm:$0xff]
        %v1663 = vld [vmem:[%s1197 + $0xd58] sm:$0xff]
        %v1664 = vld [vmem:[%s1197 + $0xd60] sm:$0xff]
        %v1665 = vld [vmem:[%s1197 + $0xd68] sm:$0xff]
        %v1666 = vld [vmem:[%s1197 + $0xd70] sm:$0xff]
        %v1667 = vld [vmem:[%s1197 + $0xd78] sm:$0xff]
        %v1668 = vld [vmem:[%s1197 + $0xd80] sm:$0xff]
        %v1669 = vld [vmem:[%s1197 + $0xd88] sm:$0xff]
        %v1670 = vld [vmem:[%s1197 + $0xd90] sm:$0xff]
        %v1671 = vld [vmem:[%s1197 + $0xd98] sm:$0xff]
        %v1672 = vld [vmem:[%s1197 + $0xda0] sm:$0xff]
        %v1673 = vld [vmem:[%s1197 + $0xda8] sm:$0xff]
        %v1674 = vld [vmem:[%s1197 + $0xdb0] sm:$0xff]
        %v1675 = vld [vmem:[%s1197 + $0xdb8] sm:$0xff]
        %v1676 = vld [vmem:[%s1197 + $0xdc0] sm:$0xff]
        %v1677 = vld [vmem:[%s1197 + $0xdc8] sm:$0xff]
        %v1678 = vld [vmem:[%s1197 + $0xdd0] sm:$0xff]
        %v1679 = vld [vmem:[%s1197 + $0xdd8] sm:$0xff]
        %v1680 = vld [vmem:[%s1197 + $0xde0] sm:$0xff]
        %v1681 = vld [vmem:[%s1197 + $0xde8] sm:$0xff]
        %v1682 = vld [vmem:[%s1197 + $0xdf0] sm:$0xff]
        %v1683 = vld [vmem:[%s1197 + $0xdf8] sm:$0xff]
        %v1684 = vld [vmem:[%s1197 + $0xe00] sm:$0xff]
        %v1685 = vld [vmem:[%s1197 + $0xe08] sm:$0xff]
        %v1686 = vld [vmem:[%s1197 + $0xe10] sm:$0xff]
        %v1687 = vld [vmem:[%s1197 + $0xe18] sm:$0xff]
        %v1688 = vld [vmem:[%s1197 + $0xe20] sm:$0xff]
        %v1689 = vld [vmem:[%s1197 + $0xe28] sm:$0xff]
        %v1690 = vld [vmem:[%s1197 + $0xe30] sm:$0xff]
        %v1691 = vld [vmem:[%s1197 + $0xe38] sm:$0xff]
        %v1692 = vld [vmem:[%s1197 + $0xe40] sm:$0xff]
        %v1693 = vld [vmem:[%s1197 + $0xe48] sm:$0xff]
        %v1694 = vld [vmem:[%s1197 + $0xe50] sm:$0xff]
        %v1695 = vld [vmem:[%s1197 + $0xe58] sm:$0xff]
        %v1696 = vld [vmem:[%s1197 + $0xe60] sm:$0xff]
        %v1697 = vld [vmem:[%s1197 + $0xe68] sm:$0xff]
        %v1698 = vld [vmem:[%s1197 + $0xe70] sm:$0xff]
        %v1699 = vld [vmem:[%s1197 + $0xe78] sm:$0xff]
        %v1700 = vld [vmem:[%s1197 + $0xe80] sm:$0xff]
        %v1701 = vld [vmem:[%s1197 + $0xe88] sm:$0xff]
        %v1702 = vld [vmem:[%s1197 + $0xe90] sm:$0xff]
        %v1703 = vld [vmem:[%s1197 + $0xe98] sm:$0xff]
        %v1704 = vld [vmem:[%s1197 + $0xea0] sm:$0xff]
        %v1705 = vld [vmem:[%s1197 + $0xea8] sm:$0xff]
        %v1706 = vld [vmem:[%s1197 + $0xeb0] sm:$0xff]
        %v1707 = vld [vmem:[%s1197 + $0xeb8] sm:$0xff]
        %v1708 = vld [vmem:[%s1197 + $0xec0] sm:$0xff]
        %v1709 = vld [vmem:[%s1197 + $0xec8] sm:$0xff]
        %v1710 = vld [vmem:[%s1197 + $0xed0] sm:$0xff]
        %v1711 = vld [vmem:[%s1197 + $0xed8] sm:$0xff]
        %v1712 = vld [vmem:[%s1197 + $0xee0] sm:$0xff]
        %v1713 = vld [vmem:[%s1197 + $0xee8] sm:$0xff]
        %v1714 = vld [vmem:[%s1197 + $0xef0] sm:$0xff]
        %v1715 = vld [vmem:[%s1197 + $0xef8] sm:$0xff]
        %v1716 = vld [vmem:[%s1197 + $0xf00] sm:$0xff]
        %v1717 = vld [vmem:[%s1197 + $0xf08] sm:$0xff]
        %v1718 = vld [vmem:[%s1197 + $0xf10] sm:$0xff]
        %v1719 = vld [vmem:[%s1197 + $0xf18] sm:$0xff]
        %v1720 = vld [vmem:[%s1197 + $0xf20] sm:$0xff]
        %v1721 = vld [vmem:[%s1197 + $0xf28] sm:$0xff]
        %v1722 = vld [vmem:[%s1197 + $0xf30] sm:$0xff]
        %v1723 = vld [vmem:[%s1197 + $0xf38] sm:$0xff]
        %v1724 = vld [vmem:[%s1197 + $0xf40] sm:$0xff]
        %v1725 = vld [vmem:[%s1197 + $0xf48] sm:$0xff]
        %v1726 = vld [vmem:[%s1197 + $0xf50] sm:$0xff]
        %v1727 = vld [vmem:[%s1197 + $0xf58] sm:$0xff]
        %v1728 = vld [vmem:[%s1197 + $0xf60] sm:$0xff]
        %v1729 = vld [vmem:[%s1197 + $0xf68] sm:$0xff]
        %v1730 = vld [vmem:[%s1197 + $0xf70] sm:$0xff]
        %v1731 = vld [vmem:[%s1197 + $0xf78] sm:$0xff]
        %v1732 = vld [vmem:[%s1197 + $0xf80] sm:$0xff]
        %v1733 = vld [vmem:[%s1197 + $0xf88] sm:$0xff]
        %v1734 = vld [vmem:[%s1197 + $0xf90] sm:$0xff]
        %v1735 = vld [vmem:[%s1197 + $0xf98] sm:$0xff]
        %v1736 = vld [vmem:[%s1197 + $0xfa0] sm:$0xff]
        %v1737 = vld [vmem:[%s1197 + $0xfa8] sm:$0xff]
        %v1738 = vld [vmem:[%s1197 + $0xfb0] sm:$0xff]
        %v1739 = vld [vmem:[%s1197 + $0xfb8] sm:$0xff]
        %v1740 = vld [vmem:[%s1197 + $0xfc0] sm:$0xff]
        %v1741 = vld [vmem:[%s1197 + $0xfc8] sm:$0xff]
        %v1742 = vld [vmem:[%s1197 + $0xfd0] sm:$0xff]
        %v1743 = vld [vmem:[%s1197 + $0xfd8] sm:$0xff]
        %v1744 = vld [vmem:[%s1197 + $0xfe0] sm:$0xff]
        %v1745 = vld [vmem:[%s1197 + $0xfe8] sm:$0xff]
        %v1746 = vld [vmem:[%s1197 + $0xff0] sm:$0xff]
        %v1747 = vld [vmem:[%s1197 + $0xff8] sm:$0xff]
        %v1748 = vld [vmem:[%s1226] sm:$0xff]
        %v1749 = vld [vmem:[%s1226 + $0x8] sm:$0xff]
        %v1752 = vlaneseq
        %v1753 = vshrl.u32 %v1752, 7
        %v1754 = vsub.s32 0, %v1753
        %v1755 = vrot.slane %v1748, %v1754
        %v1756 = vlaneseq
        %v1757 = vshrl.u32 %v1756, 7
        %v1758 = vsub.s32 1, %v1757
        %v1759 = vrot.slane %v1748, %v1758
        %v1760 = vlaneseq
        %v1761 = vshrl.u32 %v1760, 7
        %v1762 = vsub.s32 2, %v1761
        %v1763 = vrot.slane %v1748, %v1762
        %v1764 = vlaneseq
        %v1765 = vshrl.u32 %v1764, 7
        %v1766 = vsub.s32 3, %v1765
        %v1767 = vrot.slane %v1748, %v1766
        %v1768 = vlaneseq
        %v1769 = vshrl.u32 %v1768, 7
        %v1770 = vsub.s32 4, %v1769
        %v1771 = vrot.slane %v1748, %v1770
        %v1772 = vlaneseq
        %v1773 = vshrl.u32 %v1772, 7
        %v1774 = vsub.s32 5, %v1773
        %v1775 = vrot.slane %v1748, %v1774
        %v1776 = vlaneseq
        %v1777 = vshrl.u32 %v1776, 7
        %v1778 = vsub.s32 6, %v1777
        %v1779 = vrot.slane %v1748, %v1778
        %v1780 = vlaneseq
        %v1781 = vshrl.u32 %v1780, 7
        %v1782 = vsub.s32 7, %v1781
        %v1783 = vrot.slane %v1748, %v1782
        %v1784 = vlaneseq
        %v1785 = vshrl.u32 %v1784, 7
        %v1786 = vsub.s32 0, %v1785
        %v1787 = vrot.slane %v1749, %v1786
        %v1788 = vlaneseq
        %v1789 = vshrl.u32 %v1788, 7
        %v1790 = vsub.s32 1, %v1789
        %v1791 = vrot.slane %v1749, %v1790
        %v1792 = vlaneseq
        %v1793 = vshrl.u32 %v1792, 7
        %v1794 = vsub.s32 2, %v1793
        %v1795 = vrot.slane %v1749, %v1794
        %v1796 = vlaneseq
        %v1797 = vshrl.u32 %v1796, 7
        %v1798 = vsub.s32 3, %v1797
        %v1799 = vrot.slane %v1749, %v1798
        %v1800 = vlaneseq
        %v1801 = vshrl.u32 %v1800, 7
        %v1802 = vsub.s32 4, %v1801
        %v1803 = vrot.slane %v1749, %v1802
        %v1804 = vlaneseq
        %v1805 = vshrl.u32 %v1804, 7
        %v1806 = vsub.s32 5, %v1805
        %v1807 = vrot.slane %v1749, %v1806
        %v1808 = vlaneseq
        %v1809 = vshrl.u32 %v1808, 7
        %v1810 = vsub.s32 6, %v1809
        %v1811 = vrot.slane %v1749, %v1810
        %v1812 = vlaneseq
        %v1813 = vshrl.u32 %v1812, 7
        %v1814 = vsub.s32 7, %v1813
        %v1815 = vrot.slane %v1749, %v1814
        %v1834 = vunpack.c.l.b16 %v1234
        %v1835 = vunpack.c.h.b16 %v1234
        %v1836 = vunpack.c.l.b16 %v1235
        %v1837 = vunpack.c.h.b16 %v1235
        %v1838 = vpack.c.b16 %v1834, %v1834
        %v1839 = vpack.c.b16 %v1835, %v1835
        %v1840 = vpack.c.b16 %v1836, %v1836
        %v1841 = vpack.c.b16 %v1837, %v1837
        %v2358 = vunpack.c.l.b16 %v1236
        %v2359 = vunpack.c.h.b16 %v1236
        %v2360 = vunpack.c.l.b16 %v1237
        %v2361 = vunpack.c.h.b16 %v1237
        %v2362 = vunpack.c.l.b16 %v1238
        %v2363 = vunpack.c.h.b16 %v1238
        %v2364 = vunpack.c.l.b16 %v1239
        %v2365 = vunpack.c.h.b16 %v1239
        %v2366 = vunpack.c.l.b16 %v1240
        %v2367 = vunpack.c.h.b16 %v1240
        %v2368 = vunpack.c.l.b16 %v1241
        %v2369 = vunpack.c.h.b16 %v1241
        %v2370 = vunpack.c.l.b16 %v1242
        %v2371 = vunpack.c.h.b16 %v1242
        %v2372 = vunpack.c.l.b16 %v1243
        %v2373 = vunpack.c.h.b16 %v1243
        %v2374 = vunpack.c.l.b16 %v1244
        %v2375 = vunpack.c.h.b16 %v1244
        %v2376 = vunpack.c.l.b16 %v1245
        %v2377 = vunpack.c.h.b16 %v1245
        %v2378 = vunpack.c.l.b16 %v1246
        %v2379 = vunpack.c.h.b16 %v1246
        %v2380 = vunpack.c.l.b16 %v1247
        %v2381 = vunpack.c.h.b16 %v1247
        %v2382 = vunpack.c.l.b16 %v1248
        %v2383 = vunpack.c.h.b16 %v1248
        %v2384 = vunpack.c.l.b16 %v1249
        %v2385 = vunpack.c.h.b16 %v1249
        %v2386 = vunpack.c.l.b16 %v1250
        %v2387 = vunpack.c.h.b16 %v1250
        %v2388 = vunpack.c.l.b16 %v1251
        %v2389 = vunpack.c.h.b16 %v1251
        %v2390 = vunpack.c.l.b16 %v1252
        %v2391 = vunpack.c.h.b16 %v1252
        %v2392 = vunpack.c.l.b16 %v1253
        %v2393 = vunpack.c.h.b16 %v1253
        %v2394 = vunpack.c.l.b16 %v1254
        %v2395 = vunpack.c.h.b16 %v1254
        %v2396 = vunpack.c.l.b16 %v1255
        %v2397 = vunpack.c.h.b16 %v1255
        %v2398 = vunpack.c.l.b16 %v1256
        %v2399 = vunpack.c.h.b16 %v1256
        %v2400 = vunpack.c.l.b16 %v1257
        %v2401 = vunpack.c.h.b16 %v1257
        %v2402 = vunpack.c.l.b16 %v1258
        %v2403 = vunpack.c.h.b16 %v1258
        %v2404 = vunpack.c.l.b16 %v1259
        %v2405 = vunpack.c.h.b16 %v1259
        %v2406 = vunpack.c.l.b16 %v1260
        %v2407 = vunpack.c.h.b16 %v1260
        %v2408 = vunpack.c.l.b16 %v1261
        %v2409 = vunpack.c.h.b16 %v1261
        %v2410 = vunpack.c.l.b16 %v1262
        %v2411 = vunpack.c.h.b16 %v1262
        %v2412 = vunpack.c.l.b16 %v1263
        %v2413 = vunpack.c.h.b16 %v1263
        %v2414 = vunpack.c.l.b16 %v1264
        %v2415 = vunpack.c.h.b16 %v1264
        %v2416 = vunpack.c.l.b16 %v1265
        %v2417 = vunpack.c.h.b16 %v1265
        %v2418 = vunpack.c.l.b16 %v1266
        %v2419 = vunpack.c.h.b16 %v1266
        %v2420 = vunpack.c.l.b16 %v1267
        %v2421 = vunpack.c.h.b16 %v1267
        %v2422 = vunpack.c.l.b16 %v1268
        %v2423 = vunpack.c.h.b16 %v1268
        %v2424 = vunpack.c.l.b16 %v1269
        %v2425 = vunpack.c.h.b16 %v1269
        %v2426 = vunpack.c.l.b16 %v1270
        %v2427 = vunpack.c.h.b16 %v1270
        %v2428 = vunpack.c.l.b16 %v1271
        %v2429 = vunpack.c.h.b16 %v1271
        %v2430 = vunpack.c.l.b16 %v1272
        %v2431 = vunpack.c.h.b16 %v1272
        %v2432 = vunpack.c.l.b16 %v1273
        %v2433 = vunpack.c.h.b16 %v1273
        %v2434 = vunpack.c.l.b16 %v1274
        %v2435 = vunpack.c.h.b16 %v1274
        %v2436 = vunpack.c.l.b16 %v1275
        %v2437 = vunpack.c.h.b16 %v1275
        %v2438 = vunpack.c.l.b16 %v1276
        %v2439 = vunpack.c.h.b16 %v1276
        %v2440 = vunpack.c.l.b16 %v1277
        %v2441 = vunpack.c.h.b16 %v1277
        %v2442 = vunpack.c.l.b16 %v1278
        %v2443 = vunpack.c.h.b16 %v1278
        %v2444 = vunpack.c.l.b16 %v1279
        %v2445 = vunpack.c.h.b16 %v1279
        %v2446 = vunpack.c.l.b16 %v1280
        %v2447 = vunpack.c.h.b16 %v1280
        %v2448 = vunpack.c.l.b16 %v1281
        %v2449 = vunpack.c.h.b16 %v1281
        %v2450 = vunpack.c.l.b16 %v1282
        %v2451 = vunpack.c.h.b16 %v1282
        %v2452 = vunpack.c.l.b16 %v1283
        %v2453 = vunpack.c.h.b16 %v1283
        %v2454 = vunpack.c.l.b16 %v1284
        %v2455 = vunpack.c.h.b16 %v1284
        %v2456 = vunpack.c.l.b16 %v1285
        %v2457 = vunpack.c.h.b16 %v1285
        %v2458 = vunpack.c.l.b16 %v1286
        %v2459 = vunpack.c.h.b16 %v1286
        %v2460 = vunpack.c.l.b16 %v1287
        %v2461 = vunpack.c.h.b16 %v1287
        %v2462 = vunpack.c.l.b16 %v1288
        %v2463 = vunpack.c.h.b16 %v1288
        %v2464 = vunpack.c.l.b16 %v1289
        %v2465 = vunpack.c.h.b16 %v1289
        %v2466 = vunpack.c.l.b16 %v1290
        %v2467 = vunpack.c.h.b16 %v1290
        %v2468 = vunpack.c.l.b16 %v1291
        %v2469 = vunpack.c.h.b16 %v1291
        %v2470 = vunpack.c.l.b16 %v1292
        %v2471 = vunpack.c.h.b16 %v1292
        %v2472 = vunpack.c.l.b16 %v1293
        %v2473 = vunpack.c.h.b16 %v1293
        %v2474 = vunpack.c.l.b16 %v1294
        %v2475 = vunpack.c.h.b16 %v1294
        %v2476 = vunpack.c.l.b16 %v1295
        %v2477 = vunpack.c.h.b16 %v1295
        %v2478 = vunpack.c.l.b16 %v1296
        %v2479 = vunpack.c.h.b16 %v1296
        %v2480 = vunpack.c.l.b16 %v1297
        %v2481 = vunpack.c.h.b16 %v1297
        %v2482 = vunpack.c.l.b16 %v1298
        %v2483 = vunpack.c.h.b16 %v1298
        %v2484 = vunpack.c.l.b16 %v1299
        %v2485 = vunpack.c.h.b16 %v1299
        %v2486 = vunpack.c.l.b16 %v1300
        %v2487 = vunpack.c.h.b16 %v1300
        %v2488 = vunpack.c.l.b16 %v1301
        %v2489 = vunpack.c.h.b16 %v1301
        %v2490 = vunpack.c.l.b16 %v1302
        %v2491 = vunpack.c.h.b16 %v1302
        %v2492 = vunpack.c.l.b16 %v1303
        %v2493 = vunpack.c.h.b16 %v1303
        %v2494 = vunpack.c.l.b16 %v1304
        %v2495 = vunpack.c.h.b16 %v1304
        %v2496 = vunpack.c.l.b16 %v1305
        %v2497 = vunpack.c.h.b16 %v1305
        %v2498 = vunpack.c.l.b16 %v1306
        %v2499 = vunpack.c.h.b16 %v1306
        %v2500 = vunpack.c.l.b16 %v1307
        %v2501 = vunpack.c.h.b16 %v1307
        %v2502 = vunpack.c.l.b16 %v1308
        %v2503 = vunpack.c.h.b16 %v1308
        %v2504 = vunpack.c.l.b16 %v1309
        %v2505 = vunpack.c.h.b16 %v1309
        %v2506 = vunpack.c.l.b16 %v1310
        %v2507 = vunpack.c.h.b16 %v1310
        %v2508 = vunpack.c.l.b16 %v1311
        %v2509 = vunpack.c.h.b16 %v1311
        %v2510 = vunpack.c.l.b16 %v1312
        %v2511 = vunpack.c.h.b16 %v1312
        %v2512 = vunpack.c.l.b16 %v1313
        %v2513 = vunpack.c.h.b16 %v1313
        %v2514 = vunpack.c.l.b16 %v1314
        %v2515 = vunpack.c.h.b16 %v1314
        %v2516 = vunpack.c.l.b16 %v1315
        %v2517 = vunpack.c.h.b16 %v1315
        %v2518 = vunpack.c.l.b16 %v1316
        %v2519 = vunpack.c.h.b16 %v1316
        %v2520 = vunpack.c.l.b16 %v1317
        %v2521 = vunpack.c.h.b16 %v1317
        %v2522 = vunpack.c.l.b16 %v1318
        %v2523 = vunpack.c.h.b16 %v1318
        %v2524 = vunpack.c.l.b16 %v1319
        %v2525 = vunpack.c.h.b16 %v1319
        %v2526 = vunpack.c.l.b16 %v1320
        %v2527 = vunpack.c.h.b16 %v1320
        %v2528 = vunpack.c.l.b16 %v1321
        %v2529 = vunpack.c.h.b16 %v1321
        %v2530 = vunpack.c.l.b16 %v1322
        %v2531 = vunpack.c.h.b16 %v1322
        %v2532 = vunpack.c.l.b16 %v1323
        %v2533 = vunpack.c.h.b16 %v1323
        %v2534 = vunpack.c.l.b16 %v1324
        %v2535 = vunpack.c.h.b16 %v1324
        %v2536 = vunpack.c.l.b16 %v1325
        %v2537 = vunpack.c.h.b16 %v1325
        %v2538 = vunpack.c.l.b16 %v1326
        %v2539 = vunpack.c.h.b16 %v1326
        %v2540 = vunpack.c.l.b16 %v1327
        %v2541 = vunpack.c.h.b16 %v1327
        %v2542 = vunpack.c.l.b16 %v1328
        %v2543 = vunpack.c.h.b16 %v1328
        %v2544 = vunpack.c.l.b16 %v1329
        %v2545 = vunpack.c.h.b16 %v1329
        %v2546 = vunpack.c.l.b16 %v1330
        %v2547 = vunpack.c.h.b16 %v1330
        %v2548 = vunpack.c.l.b16 %v1331
        %v2549 = vunpack.c.h.b16 %v1331
        %v2550 = vunpack.c.l.b16 %v1332
        %v2551 = vunpack.c.h.b16 %v1332
        %v2552 = vunpack.c.l.b16 %v1333
        %v2553 = vunpack.c.h.b16 %v1333
        %v2554 = vunpack.c.l.b16 %v1334
        %v2555 = vunpack.c.h.b16 %v1334
        %v2556 = vunpack.c.l.b16 %v1335
        %v2557 = vunpack.c.h.b16 %v1335
        %v2558 = vunpack.c.l.b16 %v1336
        %v2559 = vunpack.c.h.b16 %v1336
        %v2560 = vunpack.c.l.b16 %v1337
        %v2561 = vunpack.c.h.b16 %v1337
        %v2562 = vunpack.c.l.b16 %v1338
        %v2563 = vunpack.c.h.b16 %v1338
        %v2564 = vunpack.c.l.b16 %v1339
        %v2565 = vunpack.c.h.b16 %v1339
        %v2566 = vunpack.c.l.b16 %v1340
        %v2567 = vunpack.c.h.b16 %v1340
        %v2568 = vunpack.c.l.b16 %v1341
        %v2569 = vunpack.c.h.b16 %v1341
        %v2570 = vunpack.c.l.b16 %v1342
        %v2571 = vunpack.c.h.b16 %v1342
        %v2572 = vunpack.c.l.b16 %v1343
        %v2573 = vunpack.c.h.b16 %v1343
        %v2574 = vunpack.c.l.b16 %v1344
        %v2575 = vunpack.c.h.b16 %v1344
        %v2576 = vunpack.c.l.b16 %v1345
        %v2577 = vunpack.c.h.b16 %v1345
        %v2578 = vunpack.c.l.b16 %v1346
        %v2579 = vunpack.c.h.b16 %v1346
        %v2580 = vunpack.c.l.b16 %v1347
        %v2581 = vunpack.c.h.b16 %v1347
        %v2582 = vunpack.c.l.b16 %v1348
        %v2583 = vunpack.c.h.b16 %v1348
        %v2584 = vunpack.c.l.b16 %v1349
        %v2585 = vunpack.c.h.b16 %v1349
        %v2586 = vunpack.c.l.b16 %v1350
        %v2587 = vunpack.c.h.b16 %v1350
        %v2588 = vunpack.c.l.b16 %v1351
        %v2589 = vunpack.c.h.b16 %v1351
        %v2590 = vunpack.c.l.b16 %v1352
        %v2591 = vunpack.c.h.b16 %v1352
        %v2592 = vunpack.c.l.b16 %v1353
        %v2593 = vunpack.c.h.b16 %v1353
        %v2594 = vunpack.c.l.b16 %v1354
        %v2595 = vunpack.c.h.b16 %v1354
        %v2596 = vunpack.c.l.b16 %v1355
        %v2597 = vunpack.c.h.b16 %v1355
        %v2598 = vunpack.c.l.b16 %v1356
        %v2599 = vunpack.c.h.b16 %v1356
        %v2600 = vunpack.c.l.b16 %v1357
        %v2601 = vunpack.c.h.b16 %v1357
        %v2602 = vunpack.c.l.b16 %v1358
        %v2603 = vunpack.c.h.b16 %v1358
        %v2604 = vunpack.c.l.b16 %v1359
        %v2605 = vunpack.c.h.b16 %v1359
        %v2606 = vunpack.c.l.b16 %v1360
        %v2607 = vunpack.c.h.b16 %v1360
        %v2608 = vunpack.c.l.b16 %v1361
        %v2609 = vunpack.c.h.b16 %v1361
        %v2610 = vunpack.c.l.b16 %v1362
        %v2611 = vunpack.c.h.b16 %v1362
        %v2612 = vunpack.c.l.b16 %v1363
        %v2613 = vunpack.c.h.b16 %v1363
        %v2614 = vunpack.c.l.b16 %v1364
        %v2615 = vunpack.c.h.b16 %v1364
        %v2616 = vunpack.c.l.b16 %v1365
        %v2617 = vunpack.c.h.b16 %v1365
        %v2618 = vunpack.c.l.b16 %v1366
        %v2619 = vunpack.c.h.b16 %v1366
        %v2620 = vunpack.c.l.b16 %v1367
        %v2621 = vunpack.c.h.b16 %v1367
        %v2622 = vunpack.c.l.b16 %v1368
        %v2623 = vunpack.c.h.b16 %v1368
        %v2624 = vunpack.c.l.b16 %v1369
        %v2625 = vunpack.c.h.b16 %v1369
        %v2626 = vunpack.c.l.b16 %v1370
        %v2627 = vunpack.c.h.b16 %v1370
        %v2628 = vunpack.c.l.b16 %v1371
        %v2629 = vunpack.c.h.b16 %v1371
        %v2630 = vunpack.c.l.b16 %v1372
        %v2631 = vunpack.c.h.b16 %v1372
        %v2632 = vunpack.c.l.b16 %v1373
        %v2633 = vunpack.c.h.b16 %v1373
        %v2634 = vunpack.c.l.b16 %v1374
        %v2635 = vunpack.c.h.b16 %v1374
        %v2636 = vunpack.c.l.b16 %v1375
        %v2637 = vunpack.c.h.b16 %v1375
        %v2638 = vunpack.c.l.b16 %v1376
        %v2639 = vunpack.c.h.b16 %v1376
        %v2640 = vunpack.c.l.b16 %v1377
        %v2641 = vunpack.c.h.b16 %v1377
        %v2642 = vunpack.c.l.b16 %v1378
        %v2643 = vunpack.c.h.b16 %v1378
        %v2644 = vunpack.c.l.b16 %v1379
        %v2645 = vunpack.c.h.b16 %v1379
        %v2646 = vunpack.c.l.b16 %v1380
        %v2647 = vunpack.c.h.b16 %v1380
        %v2648 = vunpack.c.l.b16 %v1381
        %v2649 = vunpack.c.h.b16 %v1381
        %v2650 = vunpack.c.l.b16 %v1382
        %v2651 = vunpack.c.h.b16 %v1382
        %v2652 = vunpack.c.l.b16 %v1383
        %v2653 = vunpack.c.h.b16 %v1383
        %v2654 = vunpack.c.l.b16 %v1384
        %v2655 = vunpack.c.h.b16 %v1384
        %v2656 = vunpack.c.l.b16 %v1385
        %v2657 = vunpack.c.h.b16 %v1385
        %v2658 = vunpack.c.l.b16 %v1386
        %v2659 = vunpack.c.h.b16 %v1386
        %v2660 = vunpack.c.l.b16 %v1387
        %v2661 = vunpack.c.h.b16 %v1387
        %v2662 = vunpack.c.l.b16 %v1388
        %v2663 = vunpack.c.h.b16 %v1388
        %v2664 = vunpack.c.l.b16 %v1389
        %v2665 = vunpack.c.h.b16 %v1389
        %v2666 = vunpack.c.l.b16 %v1390
        %v2667 = vunpack.c.h.b16 %v1390
        %v2668 = vunpack.c.l.b16 %v1391
        %v2669 = vunpack.c.h.b16 %v1391
        %v2670 = vunpack.c.l.b16 %v1392
        %v2671 = vunpack.c.h.b16 %v1392
        %v2672 = vunpack.c.l.b16 %v1393
        %v2673 = vunpack.c.h.b16 %v1393
        %v2674 = vunpack.c.l.b16 %v1394
        %v2675 = vunpack.c.h.b16 %v1394
        %v2676 = vunpack.c.l.b16 %v1395
        %v2677 = vunpack.c.h.b16 %v1395
        %v2678 = vunpack.c.l.b16 %v1396
        %v2679 = vunpack.c.h.b16 %v1396
        %v2680 = vunpack.c.l.b16 %v1397
        %v2681 = vunpack.c.h.b16 %v1397
        %v2682 = vunpack.c.l.b16 %v1398
        %v2683 = vunpack.c.h.b16 %v1398
        %v2684 = vunpack.c.l.b16 %v1399
        %v2685 = vunpack.c.h.b16 %v1399
        %v2686 = vunpack.c.l.b16 %v1400
        %v2687 = vunpack.c.h.b16 %v1400
        %v2688 = vunpack.c.l.b16 %v1401
        %v2689 = vunpack.c.h.b16 %v1401
        %v2690 = vunpack.c.l.b16 %v1402
        %v2691 = vunpack.c.h.b16 %v1402
        %v2692 = vunpack.c.l.b16 %v1403
        %v2693 = vunpack.c.h.b16 %v1403
        %v2694 = vunpack.c.l.b16 %v1404
        %v2695 = vunpack.c.h.b16 %v1404
        %v2696 = vunpack.c.l.b16 %v1405
        %v2697 = vunpack.c.h.b16 %v1405
        %v2698 = vunpack.c.l.b16 %v1406
        %v2699 = vunpack.c.h.b16 %v1406
        %v2700 = vunpack.c.l.b16 %v1407
        %v2701 = vunpack.c.h.b16 %v1407
        %v2702 = vunpack.c.l.b16 %v1408
        %v2703 = vunpack.c.h.b16 %v1408
        %v2704 = vunpack.c.l.b16 %v1409
        %v2705 = vunpack.c.h.b16 %v1409
        %v2706 = vunpack.c.l.b16 %v1410
        %v2707 = vunpack.c.h.b16 %v1410
        %v2708 = vunpack.c.l.b16 %v1411
        %v2709 = vunpack.c.h.b16 %v1411
        %v2710 = vunpack.c.l.b16 %v1412
        %v2711 = vunpack.c.h.b16 %v1412
        %v2712 = vunpack.c.l.b16 %v1413
        %v2713 = vunpack.c.h.b16 %v1413
        %v2714 = vunpack.c.l.b16 %v1414
        %v2715 = vunpack.c.h.b16 %v1414
        %v2716 = vunpack.c.l.b16 %v1415
        %v2717 = vunpack.c.h.b16 %v1415
        %v2718 = vunpack.c.l.b16 %v1416
        %v2719 = vunpack.c.h.b16 %v1416
        %v2720 = vunpack.c.l.b16 %v1417
        %v2721 = vunpack.c.h.b16 %v1417
        %v2722 = vunpack.c.l.b16 %v1418
        %v2723 = vunpack.c.h.b16 %v1418
        %v2724 = vunpack.c.l.b16 %v1419
        %v2725 = vunpack.c.h.b16 %v1419
        %v2726 = vunpack.c.l.b16 %v1420
        %v2727 = vunpack.c.h.b16 %v1420
        %v2728 = vunpack.c.l.b16 %v1421
        %v2729 = vunpack.c.h.b16 %v1421
        %v2730 = vunpack.c.l.b16 %v1422
        %v2731 = vunpack.c.h.b16 %v1422
        %v2732 = vunpack.c.l.b16 %v1423
        %v2733 = vunpack.c.h.b16 %v1423
        %v2734 = vunpack.c.l.b16 %v1424
        %v2735 = vunpack.c.h.b16 %v1424
        %v2736 = vunpack.c.l.b16 %v1425
        %v2737 = vunpack.c.h.b16 %v1425
        %v2738 = vunpack.c.l.b16 %v1426
        %v2739 = vunpack.c.h.b16 %v1426
        %v2740 = vunpack.c.l.b16 %v1427
        %v2741 = vunpack.c.h.b16 %v1427
        %v2742 = vunpack.c.l.b16 %v1428
        %v2743 = vunpack.c.h.b16 %v1428
        %v2744 = vunpack.c.l.b16 %v1429
        %v2745 = vunpack.c.h.b16 %v1429
        %v2746 = vunpack.c.l.b16 %v1430
        %v2747 = vunpack.c.h.b16 %v1430
        %v2748 = vunpack.c.l.b16 %v1431
        %v2749 = vunpack.c.h.b16 %v1431
        %v2750 = vunpack.c.l.b16 %v1432
        %v2751 = vunpack.c.h.b16 %v1432
        %v2752 = vunpack.c.l.b16 %v1433
        %v2753 = vunpack.c.h.b16 %v1433
        %v2754 = vunpack.c.l.b16 %v1434
        %v2755 = vunpack.c.h.b16 %v1434
        %v2756 = vunpack.c.l.b16 %v1435
        %v2757 = vunpack.c.h.b16 %v1435
        %v2758 = vunpack.c.l.b16 %v1436
        %v2759 = vunpack.c.h.b16 %v1436
        %v2760 = vunpack.c.l.b16 %v1437
        %v2761 = vunpack.c.h.b16 %v1437
        %v2762 = vunpack.c.l.b16 %v1438
        %v2763 = vunpack.c.h.b16 %v1438
        %v2764 = vunpack.c.l.b16 %v1439
        %v2765 = vunpack.c.h.b16 %v1439
        %v2766 = vunpack.c.l.b16 %v1440
        %v2767 = vunpack.c.h.b16 %v1440
        %v2768 = vunpack.c.l.b16 %v1441
        %v2769 = vunpack.c.h.b16 %v1441
        %v2770 = vunpack.c.l.b16 %v1442
        %v2771 = vunpack.c.h.b16 %v1442
        %v2772 = vunpack.c.l.b16 %v1443
        %v2773 = vunpack.c.h.b16 %v1443
        %v2774 = vunpack.c.l.b16 %v1444
        %v2775 = vunpack.c.h.b16 %v1444
        %v2776 = vunpack.c.l.b16 %v1445
        %v2777 = vunpack.c.h.b16 %v1445
        %v2778 = vunpack.c.l.b16 %v1446
        %v2779 = vunpack.c.h.b16 %v1446
        %v2780 = vunpack.c.l.b16 %v1447
        %v2781 = vunpack.c.h.b16 %v1447
        %v2782 = vunpack.c.l.b16 %v1448
        %v2783 = vunpack.c.h.b16 %v1448
        %v2784 = vunpack.c.l.b16 %v1449
        %v2785 = vunpack.c.h.b16 %v1449
        %v2786 = vunpack.c.l.b16 %v1450
        %v2787 = vunpack.c.h.b16 %v1450
        %v2788 = vunpack.c.l.b16 %v1451
        %v2789 = vunpack.c.h.b16 %v1451
        %v2790 = vunpack.c.l.b16 %v1452
        %v2791 = vunpack.c.h.b16 %v1452
        %v2792 = vunpack.c.l.b16 %v1453
        %v2793 = vunpack.c.h.b16 %v1453
        %v2794 = vunpack.c.l.b16 %v1454
        %v2795 = vunpack.c.h.b16 %v1454
        %v2796 = vunpack.c.l.b16 %v1455
        %v2797 = vunpack.c.h.b16 %v1455
        %v2798 = vunpack.c.l.b16 %v1456
        %v2799 = vunpack.c.h.b16 %v1456
        %v2800 = vunpack.c.l.b16 %v1457
        %v2801 = vunpack.c.h.b16 %v1457
        %v2802 = vunpack.c.l.b16 %v1458
        %v2803 = vunpack.c.h.b16 %v1458
        %v2804 = vunpack.c.l.b16 %v1459
        %v2805 = vunpack.c.h.b16 %v1459
        %v2806 = vunpack.c.l.b16 %v1460
        %v2807 = vunpack.c.h.b16 %v1460
        %v2808 = vunpack.c.l.b16 %v1461
        %v2809 = vunpack.c.h.b16 %v1461
        %v2810 = vunpack.c.l.b16 %v1462
        %v2811 = vunpack.c.h.b16 %v1462
        %v2812 = vunpack.c.l.b16 %v1463
        %v2813 = vunpack.c.h.b16 %v1463
        %v2814 = vunpack.c.l.b16 %v1464
        %v2815 = vunpack.c.h.b16 %v1464
        %v2816 = vunpack.c.l.b16 %v1465
        %v2817 = vunpack.c.h.b16 %v1465
        %v2818 = vunpack.c.l.b16 %v1466
        %v2819 = vunpack.c.h.b16 %v1466
        %v2820 = vunpack.c.l.b16 %v1467
        %v2821 = vunpack.c.h.b16 %v1467
        %v2822 = vunpack.c.l.b16 %v1468
        %v2823 = vunpack.c.h.b16 %v1468
        %v2824 = vunpack.c.l.b16 %v1469
        %v2825 = vunpack.c.h.b16 %v1469
        %v2826 = vunpack.c.l.b16 %v1470
        %v2827 = vunpack.c.h.b16 %v1470
        %v2828 = vunpack.c.l.b16 %v1471
        %v2829 = vunpack.c.h.b16 %v1471
        %v2830 = vunpack.c.l.b16 %v1472
        %v2831 = vunpack.c.h.b16 %v1472
        %v2832 = vunpack.c.l.b16 %v1473
        %v2833 = vunpack.c.h.b16 %v1473
        %v2834 = vunpack.c.l.b16 %v1474
        %v2835 = vunpack.c.h.b16 %v1474
        %v2836 = vunpack.c.l.b16 %v1475
        %v2837 = vunpack.c.h.b16 %v1475
        %v2838 = vunpack.c.l.b16 %v1476
        %v2839 = vunpack.c.h.b16 %v1476
        %v2840 = vunpack.c.l.b16 %v1477
        %v2841 = vunpack.c.h.b16 %v1477
        %v2842 = vunpack.c.l.b16 %v1478
        %v2843 = vunpack.c.h.b16 %v1478
        %v2844 = vunpack.c.l.b16 %v1479
        %v2845 = vunpack.c.h.b16 %v1479
        %v2846 = vunpack.c.l.b16 %v1480
        %v2847 = vunpack.c.h.b16 %v1480
        %v2848 = vunpack.c.l.b16 %v1481
        %v2849 = vunpack.c.h.b16 %v1481
        %v2850 = vunpack.c.l.b16 %v1482
        %v2851 = vunpack.c.h.b16 %v1482
        %v2852 = vunpack.c.l.b16 %v1483
        %v2853 = vunpack.c.h.b16 %v1483
        %v2854 = vunpack.c.l.b16 %v1484
        %v2855 = vunpack.c.h.b16 %v1484
        %v2856 = vunpack.c.l.b16 %v1485
        %v2857 = vunpack.c.h.b16 %v1485
        %v2858 = vunpack.c.l.b16 %v1486
        %v2859 = vunpack.c.h.b16 %v1486
        %v2860 = vunpack.c.l.b16 %v1487
        %v2861 = vunpack.c.h.b16 %v1487
        %v2862 = vunpack.c.l.b16 %v1488
        %v2863 = vunpack.c.h.b16 %v1488
        %v2864 = vunpack.c.l.b16 %v1489
        %v2865 = vunpack.c.h.b16 %v1489
        %v2866 = vunpack.c.l.b16 %v1490
        %v2867 = vunpack.c.h.b16 %v1490
        %v2868 = vunpack.c.l.b16 %v1491
        %v2869 = vunpack.c.h.b16 %v1491
        %v2870 = vunpack.c.l.b16 %v1492
        %v2871 = vunpack.c.h.b16 %v1492
        %v2872 = vunpack.c.l.b16 %v1493
        %v2873 = vunpack.c.h.b16 %v1493
        %v2874 = vunpack.c.l.b16 %v1494
        %v2875 = vunpack.c.h.b16 %v1494
        %v2876 = vunpack.c.l.b16 %v1495
        %v2877 = vunpack.c.h.b16 %v1495
        %v2878 = vunpack.c.l.b16 %v1496
        %v2879 = vunpack.c.h.b16 %v1496
        %v2880 = vunpack.c.l.b16 %v1497
        %v2881 = vunpack.c.h.b16 %v1497
        %v2882 = vunpack.c.l.b16 %v1498
        %v2883 = vunpack.c.h.b16 %v1498
        %v2884 = vunpack.c.l.b16 %v1499
        %v2885 = vunpack.c.h.b16 %v1499
        %v2886 = vunpack.c.l.b16 %v1500
        %v2887 = vunpack.c.h.b16 %v1500
        %v2888 = vunpack.c.l.b16 %v1501
        %v2889 = vunpack.c.h.b16 %v1501
        %v2890 = vunpack.c.l.b16 %v1502
        %v2891 = vunpack.c.h.b16 %v1502
        %v2892 = vunpack.c.l.b16 %v1503
        %v2893 = vunpack.c.h.b16 %v1503
        %v2894 = vunpack.c.l.b16 %v1504
        %v2895 = vunpack.c.h.b16 %v1504
        %v2896 = vunpack.c.l.b16 %v1505
        %v2897 = vunpack.c.h.b16 %v1505
        %v2898 = vunpack.c.l.b16 %v1506
        %v2899 = vunpack.c.h.b16 %v1506
        %v2900 = vunpack.c.l.b16 %v1507
        %v2901 = vunpack.c.h.b16 %v1507
        %v2902 = vunpack.c.l.b16 %v1508
        %v2903 = vunpack.c.h.b16 %v1508
        %v2904 = vunpack.c.l.b16 %v1509
        %v2905 = vunpack.c.h.b16 %v1509
        %v2906 = vunpack.c.l.b16 %v1510
        %v2907 = vunpack.c.h.b16 %v1510
        %v2908 = vunpack.c.l.b16 %v1511
        %v2909 = vunpack.c.h.b16 %v1511
        %v2910 = vunpack.c.l.b16 %v1512
        %v2911 = vunpack.c.h.b16 %v1512
        %v2912 = vunpack.c.l.b16 %v1513
        %v2913 = vunpack.c.h.b16 %v1513
        %v2914 = vunpack.c.l.b16 %v1514
        %v2915 = vunpack.c.h.b16 %v1514
        %v2916 = vunpack.c.l.b16 %v1515
        %v2917 = vunpack.c.h.b16 %v1515
        %v2918 = vunpack.c.l.b16 %v1516
        %v2919 = vunpack.c.h.b16 %v1516
        %v2920 = vunpack.c.l.b16 %v1517
        %v2921 = vunpack.c.h.b16 %v1517
        %v2922 = vunpack.c.l.b16 %v1518
        %v2923 = vunpack.c.h.b16 %v1518
        %v2924 = vunpack.c.l.b16 %v1519
        %v2925 = vunpack.c.h.b16 %v1519
        %v2926 = vunpack.c.l.b16 %v1520
        %v2927 = vunpack.c.h.b16 %v1520
        %v2928 = vunpack.c.l.b16 %v1521
        %v2929 = vunpack.c.h.b16 %v1521
        %v2930 = vunpack.c.l.b16 %v1522
        %v2931 = vunpack.c.h.b16 %v1522
        %v2932 = vunpack.c.l.b16 %v1523
        %v2933 = vunpack.c.h.b16 %v1523
        %v2934 = vunpack.c.l.b16 %v1524
        %v2935 = vunpack.c.h.b16 %v1524
        %v2936 = vunpack.c.l.b16 %v1525
        %v2937 = vunpack.c.h.b16 %v1525
        %v2938 = vunpack.c.l.b16 %v1526
        %v2939 = vunpack.c.h.b16 %v1526
        %v2940 = vunpack.c.l.b16 %v1527
        %v2941 = vunpack.c.h.b16 %v1527
        %v2942 = vunpack.c.l.b16 %v1528
        %v2943 = vunpack.c.h.b16 %v1528
        %v2944 = vunpack.c.l.b16 %v1529
        %v2945 = vunpack.c.h.b16 %v1529
        %v2946 = vunpack.c.l.b16 %v1530
        %v2947 = vunpack.c.h.b16 %v1530
        %v2948 = vunpack.c.l.b16 %v1531
        %v2949 = vunpack.c.h.b16 %v1531
        %v2950 = vunpack.c.l.b16 %v1532
        %v2951 = vunpack.c.h.b16 %v1532
        %v2952 = vunpack.c.l.b16 %v1533
        %v2953 = vunpack.c.h.b16 %v1533
        %v2954 = vunpack.c.l.b16 %v1534
        %v2955 = vunpack.c.h.b16 %v1534
        %v2956 = vunpack.c.l.b16 %v1535
        %v2957 = vunpack.c.h.b16 %v1535
        %v2958 = vunpack.c.l.b16 %v1536
        %v2959 = vunpack.c.h.b16 %v1536
        %v2960 = vunpack.c.l.b16 %v1537
        %v2961 = vunpack.c.h.b16 %v1537
        %v2962 = vunpack.c.l.b16 %v1538
        %v2963 = vunpack.c.h.b16 %v1538
        %v2964 = vunpack.c.l.b16 %v1539
        %v2965 = vunpack.c.h.b16 %v1539
        %v2966 = vunpack.c.l.b16 %v1540
        %v2967 = vunpack.c.h.b16 %v1540
        %v2968 = vunpack.c.l.b16 %v1541
        %v2969 = vunpack.c.h.b16 %v1541
        %v2970 = vunpack.c.l.b16 %v1542
        %v2971 = vunpack.c.h.b16 %v1542
        %v2972 = vunpack.c.l.b16 %v1543
        %v2973 = vunpack.c.h.b16 %v1543
        %v2974 = vunpack.c.l.b16 %v1544
        %v2975 = vunpack.c.h.b16 %v1544
        %v2976 = vunpack.c.l.b16 %v1545
        %v2977 = vunpack.c.h.b16 %v1545
        %v2978 = vunpack.c.l.b16 %v1546
        %v2979 = vunpack.c.h.b16 %v1546
        %v2980 = vunpack.c.l.b16 %v1547
        %v2981 = vunpack.c.h.b16 %v1547
        %v2982 = vunpack.c.l.b16 %v1548
        %v2983 = vunpack.c.h.b16 %v1548
        %v2984 = vunpack.c.l.b16 %v1549
        %v2985 = vunpack.c.h.b16 %v1549
        %v2986 = vunpack.c.l.b16 %v1550
        %v2987 = vunpack.c.h.b16 %v1550
        %v2988 = vunpack.c.l.b16 %v1551
        %v2989 = vunpack.c.h.b16 %v1551
        %v2990 = vunpack.c.l.b16 %v1552
        %v2991 = vunpack.c.h.b16 %v1552
        %v2992 = vunpack.c.l.b16 %v1553
        %v2993 = vunpack.c.h.b16 %v1553
        %v2994 = vunpack.c.l.b16 %v1554
        %v2995 = vunpack.c.h.b16 %v1554
        %v2996 = vunpack.c.l.b16 %v1555
        %v2997 = vunpack.c.h.b16 %v1555
        %v2998 = vunpack.c.l.b16 %v1556
        %v2999 = vunpack.c.h.b16 %v1556
        %v3000 = vunpack.c.l.b16 %v1557
        %v3001 = vunpack.c.h.b16 %v1557
        %v3002 = vunpack.c.l.b16 %v1558
        %v3003 = vunpack.c.h.b16 %v1558
        %v3004 = vunpack.c.l.b16 %v1559
        %v3005 = vunpack.c.h.b16 %v1559
        %v3006 = vunpack.c.l.b16 %v1560
        %v3007 = vunpack.c.h.b16 %v1560
        %v3008 = vunpack.c.l.b16 %v1561
        %v3009 = vunpack.c.h.b16 %v1561
        %v3010 = vunpack.c.l.b16 %v1562
        %v3011 = vunpack.c.h.b16 %v1562
        %v3012 = vunpack.c.l.b16 %v1563
        %v3013 = vunpack.c.h.b16 %v1563
        %v3014 = vunpack.c.l.b16 %v1564
        %v3015 = vunpack.c.h.b16 %v1564
        %v3016 = vunpack.c.l.b16 %v1565
        %v3017 = vunpack.c.h.b16 %v1565
        %v3018 = vunpack.c.l.b16 %v1566
        %v3019 = vunpack.c.h.b16 %v1566
        %v3020 = vunpack.c.l.b16 %v1567
        %v3021 = vunpack.c.h.b16 %v1567
        %v3022 = vunpack.c.l.b16 %v1568
        %v3023 = vunpack.c.h.b16 %v1568
        %v3024 = vunpack.c.l.b16 %v1569
        %v3025 = vunpack.c.h.b16 %v1569
        %v3026 = vunpack.c.l.b16 %v1570
        %v3027 = vunpack.c.h.b16 %v1570
        %v3028 = vunpack.c.l.b16 %v1571
        %v3029 = vunpack.c.h.b16 %v1571
        %v3030 = vunpack.c.l.b16 %v1572
        %v3031 = vunpack.c.h.b16 %v1572
        %v3032 = vunpack.c.l.b16 %v1573
        %v3033 = vunpack.c.h.b16 %v1573
        %v3034 = vunpack.c.l.b16 %v1574
        %v3035 = vunpack.c.h.b16 %v1574
        %v3036 = vunpack.c.l.b16 %v1575
        %v3037 = vunpack.c.h.b16 %v1575
        %v3038 = vunpack.c.l.b16 %v1576
        %v3039 = vunpack.c.h.b16 %v1576
        %v3040 = vunpack.c.l.b16 %v1577
        %v3041 = vunpack.c.h.b16 %v1577
        %v3042 = vunpack.c.l.b16 %v1578
        %v3043 = vunpack.c.h.b16 %v1578
        %v3044 = vunpack.c.l.b16 %v1579
        %v3045 = vunpack.c.h.b16 %v1579
        %v3046 = vunpack.c.l.b16 %v1580
        %v3047 = vunpack.c.h.b16 %v1580
        %v3048 = vunpack.c.l.b16 %v1581
        %v3049 = vunpack.c.h.b16 %v1581
        %v3050 = vunpack.c.l.b16 %v1582
        %v3051 = vunpack.c.h.b16 %v1582
        %v3052 = vunpack.c.l.b16 %v1583
        %v3053 = vunpack.c.h.b16 %v1583
        %v3054 = vunpack.c.l.b16 %v1584
        %v3055 = vunpack.c.h.b16 %v1584
        %v3056 = vunpack.c.l.b16 %v1585
        %v3057 = vunpack.c.h.b16 %v1585
        %v3058 = vunpack.c.l.b16 %v1586
        %v3059 = vunpack.c.h.b16 %v1586
        %v3060 = vunpack.c.l.b16 %v1587
        %v3061 = vunpack.c.h.b16 %v1587
        %v3062 = vunpack.c.l.b16 %v1588
        %v3063 = vunpack.c.h.b16 %v1588
        %v3064 = vunpack.c.l.b16 %v1589
        %v3065 = vunpack.c.h.b16 %v1589
        %v3066 = vunpack.c.l.b16 %v1590
        %v3067 = vunpack.c.h.b16 %v1590
        %v3068 = vunpack.c.l.b16 %v1591
        %v3069 = vunpack.c.h.b16 %v1591
        %v3070 = vunpack.c.l.b16 %v1592
        %v3071 = vunpack.c.h.b16 %v1592
        %v3072 = vunpack.c.l.b16 %v1593
        %v3073 = vunpack.c.h.b16 %v1593
        %v3074 = vunpack.c.l.b16 %v1594
        %v3075 = vunpack.c.h.b16 %v1594
        %v3076 = vunpack.c.l.b16 %v1595
        %v3077 = vunpack.c.h.b16 %v1595
        %v3078 = vunpack.c.l.b16 %v1596
        %v3079 = vunpack.c.h.b16 %v1596
        %v3080 = vunpack.c.l.b16 %v1597
        %v3081 = vunpack.c.h.b16 %v1597
        %v3082 = vunpack.c.l.b16 %v1598
        %v3083 = vunpack.c.h.b16 %v1598
        %v3084 = vunpack.c.l.b16 %v1599
        %v3085 = vunpack.c.h.b16 %v1599
        %v3086 = vunpack.c.l.b16 %v1600
        %v3087 = vunpack.c.h.b16 %v1600
        %v3088 = vunpack.c.l.b16 %v1601
        %v3089 = vunpack.c.h.b16 %v1601
        %v3090 = vunpack.c.l.b16 %v1602
        %v3091 = vunpack.c.h.b16 %v1602
        %v3092 = vunpack.c.l.b16 %v1603
        %v3093 = vunpack.c.h.b16 %v1603
        %v3094 = vunpack.c.l.b16 %v1604
        %v3095 = vunpack.c.h.b16 %v1604
        %v3096 = vunpack.c.l.b16 %v1605
        %v3097 = vunpack.c.h.b16 %v1605
        %v3098 = vunpack.c.l.b16 %v1606
        %v3099 = vunpack.c.h.b16 %v1606
        %v3100 = vunpack.c.l.b16 %v1607
        %v3101 = vunpack.c.h.b16 %v1607
        %v3102 = vunpack.c.l.b16 %v1608
        %v3103 = vunpack.c.h.b16 %v1608
        %v3104 = vunpack.c.l.b16 %v1609
        %v3105 = vunpack.c.h.b16 %v1609
        %v3106 = vunpack.c.l.b16 %v1610
        %v3107 = vunpack.c.h.b16 %v1610
        %v3108 = vunpack.c.l.b16 %v1611
        %v3109 = vunpack.c.h.b16 %v1611
        %v3110 = vunpack.c.l.b16 %v1612
        %v3111 = vunpack.c.h.b16 %v1612
        %v3112 = vunpack.c.l.b16 %v1613
        %v3113 = vunpack.c.h.b16 %v1613
        %v3114 = vunpack.c.l.b16 %v1614
        %v3115 = vunpack.c.h.b16 %v1614
        %v3116 = vunpack.c.l.b16 %v1615
        %v3117 = vunpack.c.h.b16 %v1615
        %v3118 = vunpack.c.l.b16 %v1616
        %v3119 = vunpack.c.h.b16 %v1616
        %v3120 = vunpack.c.l.b16 %v1617
        %v3121 = vunpack.c.h.b16 %v1617
        %v3122 = vunpack.c.l.b16 %v1618
        %v3123 = vunpack.c.h.b16 %v1618
        %v3124 = vunpack.c.l.b16 %v1619
        %v3125 = vunpack.c.h.b16 %v1619
        %v3126 = vunpack.c.l.b16 %v1620
        %v3127 = vunpack.c.h.b16 %v1620
        %v3128 = vunpack.c.l.b16 %v1621
        %v3129 = vunpack.c.h.b16 %v1621
        %v3130 = vunpack.c.l.b16 %v1622
        %v3131 = vunpack.c.h.b16 %v1622
        %v3132 = vunpack.c.l.b16 %v1623
        %v3133 = vunpack.c.h.b16 %v1623
        %v3134 = vunpack.c.l.b16 %v1624
        %v3135 = vunpack.c.h.b16 %v1624
        %v3136 = vunpack.c.l.b16 %v1625
        %v3137 = vunpack.c.h.b16 %v1625
        %v3138 = vunpack.c.l.b16 %v1626
        %v3139 = vunpack.c.h.b16 %v1626
        %v3140 = vunpack.c.l.b16 %v1627
        %v3141 = vunpack.c.h.b16 %v1627
        %v3142 = vunpack.c.l.b16 %v1628
        %v3143 = vunpack.c.h.b16 %v1628
        %v3144 = vunpack.c.l.b16 %v1629
        %v3145 = vunpack.c.h.b16 %v1629
        %v3146 = vunpack.c.l.b16 %v1630
        %v3147 = vunpack.c.h.b16 %v1630
        %v3148 = vunpack.c.l.b16 %v1631
        %v3149 = vunpack.c.h.b16 %v1631
        %v3150 = vunpack.c.l.b16 %v1632
        %v3151 = vunpack.c.h.b16 %v1632
        %v3152 = vunpack.c.l.b16 %v1633
        %v3153 = vunpack.c.h.b16 %v1633
        %v3154 = vunpack.c.l.b16 %v1634
        %v3155 = vunpack.c.h.b16 %v1634
        %v3156 = vunpack.c.l.b16 %v1635
        %v3157 = vunpack.c.h.b16 %v1635
        %v3158 = vunpack.c.l.b16 %v1636
        %v3159 = vunpack.c.h.b16 %v1636
        %v3160 = vunpack.c.l.b16 %v1637
        %v3161 = vunpack.c.h.b16 %v1637
        %v3162 = vunpack.c.l.b16 %v1638
        %v3163 = vunpack.c.h.b16 %v1638
        %v3164 = vunpack.c.l.b16 %v1639
        %v3165 = vunpack.c.h.b16 %v1639
        %v3166 = vunpack.c.l.b16 %v1640
        %v3167 = vunpack.c.h.b16 %v1640
        %v3168 = vunpack.c.l.b16 %v1641
        %v3169 = vunpack.c.h.b16 %v1641
        %v3170 = vunpack.c.l.b16 %v1642
        %v3171 = vunpack.c.h.b16 %v1642
        %v3172 = vunpack.c.l.b16 %v1643
        %v3173 = vunpack.c.h.b16 %v1643
        %v3174 = vunpack.c.l.b16 %v1644
        %v3175 = vunpack.c.h.b16 %v1644
        %v3176 = vunpack.c.l.b16 %v1645
        %v3177 = vunpack.c.h.b16 %v1645
        %v3178 = vunpack.c.l.b16 %v1646
        %v3179 = vunpack.c.h.b16 %v1646
        %v3180 = vunpack.c.l.b16 %v1647
        %v3181 = vunpack.c.h.b16 %v1647
        %v3182 = vunpack.c.l.b16 %v1648
        %v3183 = vunpack.c.h.b16 %v1648
        %v3184 = vunpack.c.l.b16 %v1649
        %v3185 = vunpack.c.h.b16 %v1649
        %v3186 = vunpack.c.l.b16 %v1650
        %v3187 = vunpack.c.h.b16 %v1650
        %v3188 = vunpack.c.l.b16 %v1651
        %v3189 = vunpack.c.h.b16 %v1651
        %v3190 = vunpack.c.l.b16 %v1652
        %v3191 = vunpack.c.h.b16 %v1652
        %v3192 = vunpack.c.l.b16 %v1653
        %v3193 = vunpack.c.h.b16 %v1653
        %v3194 = vunpack.c.l.b16 %v1654
        %v3195 = vunpack.c.h.b16 %v1654
        %v3196 = vunpack.c.l.b16 %v1655
        %v3197 = vunpack.c.h.b16 %v1655
        %v3198 = vunpack.c.l.b16 %v1656
        %v3199 = vunpack.c.h.b16 %v1656
        %v3200 = vunpack.c.l.b16 %v1657
        %v3201 = vunpack.c.h.b16 %v1657
        %v3202 = vunpack.c.l.b16 %v1658
        %v3203 = vunpack.c.h.b16 %v1658
        %v3204 = vunpack.c.l.b16 %v1659
        %v3205 = vunpack.c.h.b16 %v1659
        %v3206 = vunpack.c.l.b16 %v1660
        %v3207 = vunpack.c.h.b16 %v1660
        %v3208 = vunpack.c.l.b16 %v1661
        %v3209 = vunpack.c.h.b16 %v1661
        %v3210 = vunpack.c.l.b16 %v1662
        %v3211 = vunpack.c.h.b16 %v1662
        %v3212 = vunpack.c.l.b16 %v1663
        %v3213 = vunpack.c.h.b16 %v1663
        %v3214 = vunpack.c.l.b16 %v1664
        %v3215 = vunpack.c.h.b16 %v1664
        %v3216 = vunpack.c.l.b16 %v1665
        %v3217 = vunpack.c.h.b16 %v1665
        %v3218 = vunpack.c.l.b16 %v1666
        %v3219 = vunpack.c.h.b16 %v1666
        %v3220 = vunpack.c.l.b16 %v1667
        %v3221 = vunpack.c.h.b16 %v1667
        %v3222 = vunpack.c.l.b16 %v1668
        %v3223 = vunpack.c.h.b16 %v1668
        %v3224 = vunpack.c.l.b16 %v1669
        %v3225 = vunpack.c.h.b16 %v1669
        %v3226 = vunpack.c.l.b16 %v1670
        %v3227 = vunpack.c.h.b16 %v1670
        %v3228 = vunpack.c.l.b16 %v1671
        %v3229 = vunpack.c.h.b16 %v1671
        %v3230 = vunpack.c.l.b16 %v1672
        %v3231 = vunpack.c.h.b16 %v1672
        %v3232 = vunpack.c.l.b16 %v1673
        %v3233 = vunpack.c.h.b16 %v1673
        %v3234 = vunpack.c.l.b16 %v1674
        %v3235 = vunpack.c.h.b16 %v1674
        %v3236 = vunpack.c.l.b16 %v1675
        %v3237 = vunpack.c.h.b16 %v1675
        %v3238 = vunpack.c.l.b16 %v1676
        %v3239 = vunpack.c.h.b16 %v1676
        %v3240 = vunpack.c.l.b16 %v1677
        %v3241 = vunpack.c.h.b16 %v1677
        %v3242 = vunpack.c.l.b16 %v1678
        %v3243 = vunpack.c.h.b16 %v1678
        %v3244 = vunpack.c.l.b16 %v1679
        %v3245 = vunpack.c.h.b16 %v1679
        %v3246 = vunpack.c.l.b16 %v1680
        %v3247 = vunpack.c.h.b16 %v1680
        %v3248 = vunpack.c.l.b16 %v1681
        %v3249 = vunpack.c.h.b16 %v1681
        %v3250 = vunpack.c.l.b16 %v1682
        %v3251 = vunpack.c.h.b16 %v1682
        %v3252 = vunpack.c.l.b16 %v1683
        %v3253 = vunpack.c.h.b16 %v1683
        %v3254 = vunpack.c.l.b16 %v1684
        %v3255 = vunpack.c.h.b16 %v1684
        %v3256 = vunpack.c.l.b16 %v1685
        %v3257 = vunpack.c.h.b16 %v1685
        %v3258 = vunpack.c.l.b16 %v1686
        %v3259 = vunpack.c.h.b16 %v1686
        %v3260 = vunpack.c.l.b16 %v1687
        %v3261 = vunpack.c.h.b16 %v1687
        %v3262 = vunpack.c.l.b16 %v1688
        %v3263 = vunpack.c.h.b16 %v1688
        %v3264 = vunpack.c.l.b16 %v1689
        %v3265 = vunpack.c.h.b16 %v1689
        %v3266 = vunpack.c.l.b16 %v1690
        %v3267 = vunpack.c.h.b16 %v1690
        %v3268 = vunpack.c.l.b16 %v1691
        %v3269 = vunpack.c.h.b16 %v1691
        %v3270 = vunpack.c.l.b16 %v1692
        %v3271 = vunpack.c.h.b16 %v1692
        %v3272 = vunpack.c.l.b16 %v1693
        %v3273 = vunpack.c.h.b16 %v1693
        %v3274 = vunpack.c.l.b16 %v1694
        %v3275 = vunpack.c.h.b16 %v1694
        %v3276 = vunpack.c.l.b16 %v1695
        %v3277 = vunpack.c.h.b16 %v1695
        %v3278 = vunpack.c.l.b16 %v1696
        %v3279 = vunpack.c.h.b16 %v1696
        %v3280 = vunpack.c.l.b16 %v1697
        %v3281 = vunpack.c.h.b16 %v1697
        %v3282 = vunpack.c.l.b16 %v1698
        %v3283 = vunpack.c.h.b16 %v1698
        %v3284 = vunpack.c.l.b16 %v1699
        %v3285 = vunpack.c.h.b16 %v1699
        %v3286 = vunpack.c.l.b16 %v1700
        %v3287 = vunpack.c.h.b16 %v1700
        %v3288 = vunpack.c.l.b16 %v1701
        %v3289 = vunpack.c.h.b16 %v1701
        %v3290 = vunpack.c.l.b16 %v1702
        %v3291 = vunpack.c.h.b16 %v1702
        %v3292 = vunpack.c.l.b16 %v1703
        %v3293 = vunpack.c.h.b16 %v1703
        %v3294 = vunpack.c.l.b16 %v1704
        %v3295 = vunpack.c.h.b16 %v1704
        %v3296 = vunpack.c.l.b16 %v1705
        %v3297 = vunpack.c.h.b16 %v1705
        %v3298 = vunpack.c.l.b16 %v1706
        %v3299 = vunpack.c.h.b16 %v1706
        %v3300 = vunpack.c.l.b16 %v1707
        %v3301 = vunpack.c.h.b16 %v1707
        %v3302 = vunpack.c.l.b16 %v1708
        %v3303 = vunpack.c.h.b16 %v1708
        %v3304 = vunpack.c.l.b16 %v1709
        %v3305 = vunpack.c.h.b16 %v1709
        %v3306 = vunpack.c.l.b16 %v1710
        %v3307 = vunpack.c.h.b16 %v1710
        %v3308 = vunpack.c.l.b16 %v1711
        %v3309 = vunpack.c.h.b16 %v1711
        %v3310 = vunpack.c.l.b16 %v1712
        %v3311 = vunpack.c.h.b16 %v1712
        %v3312 = vunpack.c.l.b16 %v1713
        %v3313 = vunpack.c.h.b16 %v1713
        %v3314 = vunpack.c.l.b16 %v1714
        %v3315 = vunpack.c.h.b16 %v1714
        %v3316 = vunpack.c.l.b16 %v1715
        %v3317 = vunpack.c.h.b16 %v1715
        %v3318 = vunpack.c.l.b16 %v1716
        %v3319 = vunpack.c.h.b16 %v1716
        %v3320 = vunpack.c.l.b16 %v1717
        %v3321 = vunpack.c.h.b16 %v1717
        %v3322 = vunpack.c.l.b16 %v1718
        %v3323 = vunpack.c.h.b16 %v1718
        %v3324 = vunpack.c.l.b16 %v1719
        %v3325 = vunpack.c.h.b16 %v1719
        %v3326 = vunpack.c.l.b16 %v1720
        %v3327 = vunpack.c.h.b16 %v1720
        %v3328 = vunpack.c.l.b16 %v1721
        %v3329 = vunpack.c.h.b16 %v1721
        %v3330 = vunpack.c.l.b16 %v1722
        %v3331 = vunpack.c.h.b16 %v1722
        %v3332 = vunpack.c.l.b16 %v1723
        %v3333 = vunpack.c.h.b16 %v1723
        %v3334 = vunpack.c.l.b16 %v1724
        %v3335 = vunpack.c.h.b16 %v1724
        %v3336 = vunpack.c.l.b16 %v1725
        %v3337 = vunpack.c.h.b16 %v1725
        %v3338 = vunpack.c.l.b16 %v1726
        %v3339 = vunpack.c.h.b16 %v1726
        %v3340 = vunpack.c.l.b16 %v1727
        %v3341 = vunpack.c.h.b16 %v1727
        %v3342 = vunpack.c.l.b16 %v1728
        %v3343 = vunpack.c.h.b16 %v1728
        %v3344 = vunpack.c.l.b16 %v1729
        %v3345 = vunpack.c.h.b16 %v1729
        %v3346 = vunpack.c.l.b16 %v1730
        %v3347 = vunpack.c.h.b16 %v1730
        %v3348 = vunpack.c.l.b16 %v1731
        %v3349 = vunpack.c.h.b16 %v1731
        %v3350 = vunpack.c.l.b16 %v1732
        %v3351 = vunpack.c.h.b16 %v1732
        %v3352 = vunpack.c.l.b16 %v1733
        %v3353 = vunpack.c.h.b16 %v1733
        %v3354 = vunpack.c.l.b16 %v1734
        %v3355 = vunpack.c.h.b16 %v1734
        %v3356 = vunpack.c.l.b16 %v1735
        %v3357 = vunpack.c.h.b16 %v1735
        %v3358 = vunpack.c.l.b16 %v1736
        %v3359 = vunpack.c.h.b16 %v1736
        %v3360 = vunpack.c.l.b16 %v1737
        %v3361 = vunpack.c.h.b16 %v1737
        %v3362 = vunpack.c.l.b16 %v1738
        %v3363 = vunpack.c.h.b16 %v1738
        %v3364 = vunpack.c.l.b16 %v1739
        %v3365 = vunpack.c.h.b16 %v1739
        %v3366 = vunpack.c.l.b16 %v1740
        %v3367 = vunpack.c.h.b16 %v1740
        %v3368 = vunpack.c.l.b16 %v1741
        %v3369 = vunpack.c.h.b16 %v1741
        %v3370 = vunpack.c.l.b16 %v1742
        %v3371 = vunpack.c.h.b16 %v1742
        %v3372 = vunpack.c.l.b16 %v1743
        %v3373 = vunpack.c.h.b16 %v1743
        %v3374 = vunpack.c.l.b16 %v1744
        %v3375 = vunpack.c.h.b16 %v1744
        %v3376 = vunpack.c.l.b16 %v1745
        %v3377 = vunpack.c.h.b16 %v1745
        %v3378 = vunpack.c.l.b16 %v1746
        %v3379 = vunpack.c.h.b16 %v1746
        %v3380 = vunpack.c.l.b16 %v1747
        %v3381 = vunpack.c.h.b16 %v1747
        %v3382 = vpack.c.b16 %v2374, %v2358
        %v3383 = vpack.c.b16 %v2375, %v2359
        %v3384 = vpack.c.b16 %v2376, %v2360
        %v3385 = vpack.c.b16 %v2377, %v2361
        %v3386 = vpack.c.b16 %v2378, %v2362
        %v3387 = vpack.c.b16 %v2379, %v2363
        %v3388 = vpack.c.b16 %v2380, %v2364
        %v3389 = vpack.c.b16 %v2381, %v2365
        %v3390 = vpack.c.b16 %v2382, %v2366
        %v3391 = vpack.c.b16 %v2383, %v2367
        %v3392 = vpack.c.b16 %v2384, %v2368
        %v3393 = vpack.c.b16 %v2385, %v2369
        %v3394 = vpack.c.b16 %v2386, %v2370
        %v3395 = vpack.c.b16 %v2387, %v2371
        %v3396 = vpack.c.b16 %v2388, %v2372
        %v3397 = vpack.c.b16 %v2389, %v2373
        %v3398 = vpack.c.b16 %v2406, %v2390
        %v3399 = vpack.c.b16 %v2407, %v2391
        %v3400 = vpack.c.b16 %v2408, %v2392
        %v3401 = vpack.c.b16 %v2409, %v2393
        %v3402 = vpack.c.b16 %v2410, %v2394
        %v3403 = vpack.c.b16 %v2411, %v2395
        %v3404 = vpack.c.b16 %v2412, %v2396
        %v3405 = vpack.c.b16 %v2413, %v2397
        %v3406 = vpack.c.b16 %v2414, %v2398
        %v3407 = vpack.c.b16 %v2415, %v2399
        %v3408 = vpack.c.b16 %v2416, %v2400
        %v3409 = vpack.c.b16 %v2417, %v2401
        %v3410 = vpack.c.b16 %v2418, %v2402
        %v3411 = vpack.c.b16 %v2419, %v2403
        %v3412 = vpack.c.b16 %v2420, %v2404
        %v3413 = vpack.c.b16 %v2421, %v2405
        %v3414 = vpack.c.b16 %v2438, %v2422
        %v3415 = vpack.c.b16 %v2439, %v2423
        %v3416 = vpack.c.b16 %v2440, %v2424
        %v3417 = vpack.c.b16 %v2441, %v2425
        %v3418 = vpack.c.b16 %v2442, %v2426
        %v3419 = vpack.c.b16 %v2443, %v2427
        %v3420 = vpack.c.b16 %v2444, %v2428
        %v3421 = vpack.c.b16 %v2445, %v2429
        %v3422 = vpack.c.b16 %v2446, %v2430
        %v3423 = vpack.c.b16 %v2447, %v2431
        %v3424 = vpack.c.b16 %v2448, %v2432
        %v3425 = vpack.c.b16 %v2449, %v2433
        %v3426 = vpack.c.b16 %v2450, %v2434
        %v3427 = vpack.c.b16 %v2451, %v2435
        %v3428 = vpack.c.b16 %v2452, %v2436
        %v3429 = vpack.c.b16 %v2453, %v2437
        %v3430 = vpack.c.b16 %v2470, %v2454
        %v3431 = vpack.c.b16 %v2471, %v2455
        %v3432 = vpack.c.b16 %v2472, %v2456
        %v3433 = vpack.c.b16 %v2473, %v2457
        %v3434 = vpack.c.b16 %v2474, %v2458
        %v3435 = vpack.c.b16 %v2475, %v2459
        %v3436 = vpack.c.b16 %v2476, %v2460
        %v3437 = vpack.c.b16 %v2477, %v2461
        %v3438 = vpack.c.b16 %v2478, %v2462
        %v3439 = vpack.c.b16 %v2479, %v2463
        %v3440 = vpack.c.b16 %v2480, %v2464
        %v3441 = vpack.c.b16 %v2481, %v2465
        %v3442 = vpack.c.b16 %v2482, %v2466
        %v3443 = vpack.c.b16 %v2483, %v2467
        %v3444 = vpack.c.b16 %v2484, %v2468
        %v3445 = vpack.c.b16 %v2485, %v2469
        %v3446 = vpack.c.b16 %v2502, %v2486
        %v3447 = vpack.c.b16 %v2503, %v2487
        %v3448 = vpack.c.b16 %v2504, %v2488
        %v3449 = vpack.c.b16 %v2505, %v2489
        %v3450 = vpack.c.b16 %v2506, %v2490
        %v3451 = vpack.c.b16 %v2507, %v2491
        %v3452 = vpack.c.b16 %v2508, %v2492
        %v3453 = vpack.c.b16 %v2509, %v2493
        %v3454 = vpack.c.b16 %v2510, %v2494
        %v3455 = vpack.c.b16 %v2511, %v2495
        %v3456 = vpack.c.b16 %v2512, %v2496
        %v3457 = vpack.c.b16 %v2513, %v2497
        %v3458 = vpack.c.b16 %v2514, %v2498
        %v3459 = vpack.c.b16 %v2515, %v2499
        %v3460 = vpack.c.b16 %v2516, %v2500
        %v3461 = vpack.c.b16 %v2517, %v2501
        %v3462 = vpack.c.b16 %v2534, %v2518
        %v3463 = vpack.c.b16 %v2535, %v2519
        %v3464 = vpack.c.b16 %v2536, %v2520
        %v3465 = vpack.c.b16 %v2537, %v2521
        %v3466 = vpack.c.b16 %v2538, %v2522
        %v3467 = vpack.c.b16 %v2539, %v2523
        %v3468 = vpack.c.b16 %v2540, %v2524
        %v3469 = vpack.c.b16 %v2541, %v2525
        %v3470 = vpack.c.b16 %v2542, %v2526
        %v3471 = vpack.c.b16 %v2543, %v2527
        %v3472 = vpack.c.b16 %v2544, %v2528
        %v3473 = vpack.c.b16 %v2545, %v2529
        %v3474 = vpack.c.b16 %v2546, %v2530
        %v3475 = vpack.c.b16 %v2547, %v2531
        %v3476 = vpack.c.b16 %v2548, %v2532
        %v3477 = vpack.c.b16 %v2549, %v2533
        %v3478 = vpack.c.b16 %v2566, %v2550
        %v3479 = vpack.c.b16 %v2567, %v2551
        %v3480 = vpack.c.b16 %v2568, %v2552
        %v3481 = vpack.c.b16 %v2569, %v2553
        %v3482 = vpack.c.b16 %v2570, %v2554
        %v3483 = vpack.c.b16 %v2571, %v2555
        %v3484 = vpack.c.b16 %v2572, %v2556
        %v3485 = vpack.c.b16 %v2573, %v2557
        %v3486 = vpack.c.b16 %v2574, %v2558
        %v3487 = vpack.c.b16 %v2575, %v2559
        %v3488 = vpack.c.b16 %v2576, %v2560
        %v3489 = vpack.c.b16 %v2577, %v2561
        %v3490 = vpack.c.b16 %v2578, %v2562
        %v3491 = vpack.c.b16 %v2579, %v2563
        %v3492 = vpack.c.b16 %v2580, %v2564
        %v3493 = vpack.c.b16 %v2581, %v2565
        %v3494 = vpack.c.b16 %v2598, %v2582
        %v3495 = vpack.c.b16 %v2599, %v2583
        %v3496 = vpack.c.b16 %v2600, %v2584
        %v3497 = vpack.c.b16 %v2601, %v2585
        %v3498 = vpack.c.b16 %v2602, %v2586
        %v3499 = vpack.c.b16 %v2603, %v2587
        %v3500 = vpack.c.b16 %v2604, %v2588
        %v3501 = vpack.c.b16 %v2605, %v2589
        %v3502 = vpack.c.b16 %v2606, %v2590
        %v3503 = vpack.c.b16 %v2607, %v2591
        %v3504 = vpack.c.b16 %v2608, %v2592
        %v3505 = vpack.c.b16 %v2609, %v2593
        %v3506 = vpack.c.b16 %v2610, %v2594
        %v3507 = vpack.c.b16 %v2611, %v2595
        %v3508 = vpack.c.b16 %v2612, %v2596
        %v3509 = vpack.c.b16 %v2613, %v2597
        %v3510 = vpack.c.b16 %v2630, %v2614
        %v3511 = vpack.c.b16 %v2631, %v2615
        %v3512 = vpack.c.b16 %v2632, %v2616
        %v3513 = vpack.c.b16 %v2633, %v2617
        %v3514 = vpack.c.b16 %v2634, %v2618
        %v3515 = vpack.c.b16 %v2635, %v2619
        %v3516 = vpack.c.b16 %v2636, %v2620
        %v3517 = vpack.c.b16 %v2637, %v2621
        %v3518 = vpack.c.b16 %v2638, %v2622
        %v3519 = vpack.c.b16 %v2639, %v2623
        %v3520 = vpack.c.b16 %v2640, %v2624
        %v3521 = vpack.c.b16 %v2641, %v2625
        %v3522 = vpack.c.b16 %v2642, %v2626
        %v3523 = vpack.c.b16 %v2643, %v2627
        %v3524 = vpack.c.b16 %v2644, %v2628
        %v3525 = vpack.c.b16 %v2645, %v2629
        %v3526 = vpack.c.b16 %v2662, %v2646
        %v3527 = vpack.c.b16 %v2663, %v2647
        %v3528 = vpack.c.b16 %v2664, %v2648
        %v3529 = vpack.c.b16 %v2665, %v2649
        %v3530 = vpack.c.b16 %v2666, %v2650
        %v3531 = vpack.c.b16 %v2667, %v2651
        %v3532 = vpack.c.b16 %v2668, %v2652
        %v3533 = vpack.c.b16 %v2669, %v2653
        %v3534 = vpack.c.b16 %v2670, %v2654
        %v3535 = vpack.c.b16 %v2671, %v2655
        %v3536 = vpack.c.b16 %v2672, %v2656
        %v3537 = vpack.c.b16 %v2673, %v2657
        %v3538 = vpack.c.b16 %v2674, %v2658
        %v3539 = vpack.c.b16 %v2675, %v2659
        %v3540 = vpack.c.b16 %v2676, %v2660
        %v3541 = vpack.c.b16 %v2677, %v2661
        %v3542 = vpack.c.b16 %v2694, %v2678
        %v3543 = vpack.c.b16 %v2695, %v2679
        %v3544 = vpack.c.b16 %v2696, %v2680
        %v3545 = vpack.c.b16 %v2697, %v2681
        %v3546 = vpack.c.b16 %v2698, %v2682
        %v3547 = vpack.c.b16 %v2699, %v2683
        %v3548 = vpack.c.b16 %v2700, %v2684
        %v3549 = vpack.c.b16 %v2701, %v2685
        %v3550 = vpack.c.b16 %v2702, %v2686
        %v3551 = vpack.c.b16 %v2703, %v2687
        %v3552 = vpack.c.b16 %v2704, %v2688
        %v3553 = vpack.c.b16 %v2705, %v2689
        %v3554 = vpack.c.b16 %v2706, %v2690
        %v3555 = vpack.c.b16 %v2707, %v2691
        %v3556 = vpack.c.b16 %v2708, %v2692
        %v3557 = vpack.c.b16 %v2709, %v2693
        %v3558 = vpack.c.b16 %v2726, %v2710
        %v3559 = vpack.c.b16 %v2727, %v2711
        %v3560 = vpack.c.b16 %v2728, %v2712
        %v3561 = vpack.c.b16 %v2729, %v2713
        %v3562 = vpack.c.b16 %v2730, %v2714
        %v3563 = vpack.c.b16 %v2731, %v2715
        %v3564 = vpack.c.b16 %v2732, %v2716
        %v3565 = vpack.c.b16 %v2733, %v2717
        %v3566 = vpack.c.b16 %v2734, %v2718
        %v3567 = vpack.c.b16 %v2735, %v2719
        %v3568 = vpack.c.b16 %v2736, %v2720
        %v3569 = vpack.c.b16 %v2737, %v2721
        %v3570 = vpack.c.b16 %v2738, %v2722
        %v3571 = vpack.c.b16 %v2739, %v2723
        %v3572 = vpack.c.b16 %v2740, %v2724
        %v3573 = vpack.c.b16 %v2741, %v2725
        %v3574 = vpack.c.b16 %v2758, %v2742
        %v3575 = vpack.c.b16 %v2759, %v2743
        %v3576 = vpack.c.b16 %v2760, %v2744
        %v3577 = vpack.c.b16 %v2761, %v2745
        %v3578 = vpack.c.b16 %v2762, %v2746
        %v3579 = vpack.c.b16 %v2763, %v2747
        %v3580 = vpack.c.b16 %v2764, %v2748
        %v3581 = vpack.c.b16 %v2765, %v2749
        %v3582 = vpack.c.b16 %v2766, %v2750
        %v3583 = vpack.c.b16 %v2767, %v2751
        %v3584 = vpack.c.b16 %v2768, %v2752
        %v3585 = vpack.c.b16 %v2769, %v2753
        %v3586 = vpack.c.b16 %v2770, %v2754
        %v3587 = vpack.c.b16 %v2771, %v2755
        %v3588 = vpack.c.b16 %v2772, %v2756
        %v3589 = vpack.c.b16 %v2773, %v2757
        %v3590 = vpack.c.b16 %v2790, %v2774
        %v3591 = vpack.c.b16 %v2791, %v2775
        %v3592 = vpack.c.b16 %v2792, %v2776
        %v3593 = vpack.c.b16 %v2793, %v2777
        %v3594 = vpack.c.b16 %v2794, %v2778
        %v3595 = vpack.c.b16 %v2795, %v2779
        %v3596 = vpack.c.b16 %v2796, %v2780
        %v3597 = vpack.c.b16 %v2797, %v2781
        %v3598 = vpack.c.b16 %v2798, %v2782
        %v3599 = vpack.c.b16 %v2799, %v2783
        %v3600 = vpack.c.b16 %v2800, %v2784
        %v3601 = vpack.c.b16 %v2801, %v2785
        %v3602 = vpack.c.b16 %v2802, %v2786
        %v3603 = vpack.c.b16 %v2803, %v2787
        %v3604 = vpack.c.b16 %v2804, %v2788
        %v3605 = vpack.c.b16 %v2805, %v2789
        %v3606 = vpack.c.b16 %v2822, %v2806
        %v3607 = vpack.c.b16 %v2823, %v2807
        %v3608 = vpack.c.b16 %v2824, %v2808
        %v3609 = vpack.c.b16 %v2825, %v2809
        %v3610 = vpack.c.b16 %v2826, %v2810
        %v3611 = vpack.c.b16 %v2827, %v2811
        %v3612 = vpack.c.b16 %v2828, %v2812
        %v3613 = vpack.c.b16 %v2829, %v2813
        %v3614 = vpack.c.b16 %v2830, %v2814
        %v3615 = vpack.c.b16 %v2831, %v2815
        %v3616 = vpack.c.b16 %v2832, %v2816
        %v3617 = vpack.c.b16 %v2833, %v2817
        %v3618 = vpack.c.b16 %v2834, %v2818
        %v3619 = vpack.c.b16 %v2835, %v2819
        %v3620 = vpack.c.b16 %v2836, %v2820
        %v3621 = vpack.c.b16 %v2837, %v2821
        %v3622 = vpack.c.b16 %v2854, %v2838
        %v3623 = vpack.c.b16 %v2855, %v2839
        %v3624 = vpack.c.b16 %v2856, %v2840
        %v3625 = vpack.c.b16 %v2857, %v2841
        %v3626 = vpack.c.b16 %v2858, %v2842
        %v3627 = vpack.c.b16 %v2859, %v2843
        %v3628 = vpack.c.b16 %v2860, %v2844
        %v3629 = vpack.c.b16 %v2861, %v2845
        %v3630 = vpack.c.b16 %v2862, %v2846
        %v3631 = vpack.c.b16 %v2863, %v2847
        %v3632 = vpack.c.b16 %v2864, %v2848
        %v3633 = vpack.c.b16 %v2865, %v2849
        %v3634 = vpack.c.b16 %v2866, %v2850
        %v3635 = vpack.c.b16 %v2867, %v2851
        %v3636 = vpack.c.b16 %v2868, %v2852
        %v3637 = vpack.c.b16 %v2869, %v2853
        %v3638 = vpack.c.b16 %v2886, %v2870
        %v3639 = vpack.c.b16 %v2887, %v2871
        %v3640 = vpack.c.b16 %v2888, %v2872
        %v3641 = vpack.c.b16 %v2889, %v2873
        %v3642 = vpack.c.b16 %v2890, %v2874
        %v3643 = vpack.c.b16 %v2891, %v2875
        %v3644 = vpack.c.b16 %v2892, %v2876
        %v3645 = vpack.c.b16 %v2893, %v2877
        %v3646 = vpack.c.b16 %v2894, %v2878
        %v3647 = vpack.c.b16 %v2895, %v2879
        %v3648 = vpack.c.b16 %v2896, %v2880
        %v3649 = vpack.c.b16 %v2897, %v2881
        %v3650 = vpack.c.b16 %v2898, %v2882
        %v3651 = vpack.c.b16 %v2899, %v2883
        %v3652 = vpack.c.b16 %v2900, %v2884
        %v3653 = vpack.c.b16 %v2901, %v2885
        %v3654 = vpack.c.b16 %v2918, %v2902
        %v3655 = vpack.c.b16 %v2919, %v2903
        %v3656 = vpack.c.b16 %v2920, %v2904
        %v3657 = vpack.c.b16 %v2921, %v2905
        %v3658 = vpack.c.b16 %v2922, %v2906
        %v3659 = vpack.c.b16 %v2923, %v2907
        %v3660 = vpack.c.b16 %v2924, %v2908
        %v3661 = vpack.c.b16 %v2925, %v2909
        %v3662 = vpack.c.b16 %v2926, %v2910
        %v3663 = vpack.c.b16 %v2927, %v2911
        %v3664 = vpack.c.b16 %v2928, %v2912
        %v3665 = vpack.c.b16 %v2929, %v2913
        %v3666 = vpack.c.b16 %v2930, %v2914
        %v3667 = vpack.c.b16 %v2931, %v2915
        %v3668 = vpack.c.b16 %v2932, %v2916
        %v3669 = vpack.c.b16 %v2933, %v2917
        %v3670 = vpack.c.b16 %v2950, %v2934
        %v3671 = vpack.c.b16 %v2951, %v2935
        %v3672 = vpack.c.b16 %v2952, %v2936
        %v3673 = vpack.c.b16 %v2953, %v2937
        %v3674 = vpack.c.b16 %v2954, %v2938
        %v3675 = vpack.c.b16 %v2955, %v2939
        %v3676 = vpack.c.b16 %v2956, %v2940
        %v3677 = vpack.c.b16 %v2957, %v2941
        %v3678 = vpack.c.b16 %v2958, %v2942
        %v3679 = vpack.c.b16 %v2959, %v2943
        %v3680 = vpack.c.b16 %v2960, %v2944
        %v3681 = vpack.c.b16 %v2961, %v2945
        %v3682 = vpack.c.b16 %v2962, %v2946
        %v3683 = vpack.c.b16 %v2963, %v2947
        %v3684 = vpack.c.b16 %v2964, %v2948
        %v3685 = vpack.c.b16 %v2965, %v2949
        %v3686 = vpack.c.b16 %v2982, %v2966
        %v3687 = vpack.c.b16 %v2983, %v2967
        %v3688 = vpack.c.b16 %v2984, %v2968
        %v3689 = vpack.c.b16 %v2985, %v2969
        %v3690 = vpack.c.b16 %v2986, %v2970
        %v3691 = vpack.c.b16 %v2987, %v2971
        %v3692 = vpack.c.b16 %v2988, %v2972
        %v3693 = vpack.c.b16 %v2989, %v2973
        %v3694 = vpack.c.b16 %v2990, %v2974
        %v3695 = vpack.c.b16 %v2991, %v2975
        %v3696 = vpack.c.b16 %v2992, %v2976
        %v3697 = vpack.c.b16 %v2993, %v2977
        %v3698 = vpack.c.b16 %v2994, %v2978
        %v3699 = vpack.c.b16 %v2995, %v2979
        %v3700 = vpack.c.b16 %v2996, %v2980
        %v3701 = vpack.c.b16 %v2997, %v2981
        %v3702 = vpack.c.b16 %v3014, %v2998
        %v3703 = vpack.c.b16 %v3015, %v2999
        %v3704 = vpack.c.b16 %v3016, %v3000
        %v3705 = vpack.c.b16 %v3017, %v3001
        %v3706 = vpack.c.b16 %v3018, %v3002
        %v3707 = vpack.c.b16 %v3019, %v3003
        %v3708 = vpack.c.b16 %v3020, %v3004
        %v3709 = vpack.c.b16 %v3021, %v3005
        %v3710 = vpack.c.b16 %v3022, %v3006
        %v3711 = vpack.c.b16 %v3023, %v3007
        %v3712 = vpack.c.b16 %v3024, %v3008
        %v3713 = vpack.c.b16 %v3025, %v3009
        %v3714 = vpack.c.b16 %v3026, %v3010
        %v3715 = vpack.c.b16 %v3027, %v3011
        %v3716 = vpack.c.b16 %v3028, %v3012
        %v3717 = vpack.c.b16 %v3029, %v3013
        %v3718 = vpack.c.b16 %v3046, %v3030
        %v3719 = vpack.c.b16 %v3047, %v3031
        %v3720 = vpack.c.b16 %v3048, %v3032
        %v3721 = vpack.c.b16 %v3049, %v3033
        %v3722 = vpack.c.b16 %v3050, %v3034
        %v3723 = vpack.c.b16 %v3051, %v3035
        %v3724 = vpack.c.b16 %v3052, %v3036
        %v3725 = vpack.c.b16 %v3053, %v3037
        %v3726 = vpack.c.b16 %v3054, %v3038
        %v3727 = vpack.c.b16 %v3055, %v3039
        %v3728 = vpack.c.b16 %v3056, %v3040
        %v3729 = vpack.c.b16 %v3057, %v3041
        %v3730 = vpack.c.b16 %v3058, %v3042
        %v3731 = vpack.c.b16 %v3059, %v3043
        %v3732 = vpack.c.b16 %v3060, %v3044
        %v3733 = vpack.c.b16 %v3061, %v3045
        %v3734 = vpack.c.b16 %v3078, %v3062
        %v3735 = vpack.c.b16 %v3079, %v3063
        %v3736 = vpack.c.b16 %v3080, %v3064
        %v3737 = vpack.c.b16 %v3081, %v3065
        %v3738 = vpack.c.b16 %v3082, %v3066
        %v3739 = vpack.c.b16 %v3083, %v3067
        %v3740 = vpack.c.b16 %v3084, %v3068
        %v3741 = vpack.c.b16 %v3085, %v3069
        %v3742 = vpack.c.b16 %v3086, %v3070
        %v3743 = vpack.c.b16 %v3087, %v3071
        %v3744 = vpack.c.b16 %v3088, %v3072
        %v3745 = vpack.c.b16 %v3089, %v3073
        %v3746 = vpack.c.b16 %v3090, %v3074
        %v3747 = vpack.c.b16 %v3091, %v3075
        %v3748 = vpack.c.b16 %v3092, %v3076
        %v3749 = vpack.c.b16 %v3093, %v3077
        %v3750 = vpack.c.b16 %v3110, %v3094
        %v3751 = vpack.c.b16 %v3111, %v3095
        %v3752 = vpack.c.b16 %v3112, %v3096
        %v3753 = vpack.c.b16 %v3113, %v3097
        %v3754 = vpack.c.b16 %v3114, %v3098
        %v3755 = vpack.c.b16 %v3115, %v3099
        %v3756 = vpack.c.b16 %v3116, %v3100
        %v3757 = vpack.c.b16 %v3117, %v3101
        %v3758 = vpack.c.b16 %v3118, %v3102
        %v3759 = vpack.c.b16 %v3119, %v3103
        %v3760 = vpack.c.b16 %v3120, %v3104
        %v3761 = vpack.c.b16 %v3121, %v3105
        %v3762 = vpack.c.b16 %v3122, %v3106
        %v3763 = vpack.c.b16 %v3123, %v3107
        %v3764 = vpack.c.b16 %v3124, %v3108
        %v3765 = vpack.c.b16 %v3125, %v3109
        %v3766 = vpack.c.b16 %v3142, %v3126
        %v3767 = vpack.c.b16 %v3143, %v3127
        %v3768 = vpack.c.b16 %v3144, %v3128
        %v3769 = vpack.c.b16 %v3145, %v3129
        %v3770 = vpack.c.b16 %v3146, %v3130
        %v3771 = vpack.c.b16 %v3147, %v3131
        %v3772 = vpack.c.b16 %v3148, %v3132
        %v3773 = vpack.c.b16 %v3149, %v3133
        %v3774 = vpack.c.b16 %v3150, %v3134
        %v3775 = vpack.c.b16 %v3151, %v3135
        %v3776 = vpack.c.b16 %v3152, %v3136
        %v3777 = vpack.c.b16 %v3153, %v3137
        %v3778 = vpack.c.b16 %v3154, %v3138
        %v3779 = vpack.c.b16 %v3155, %v3139
        %v3780 = vpack.c.b16 %v3156, %v3140
        %v3781 = vpack.c.b16 %v3157, %v3141
        %v3782 = vpack.c.b16 %v3174, %v3158
        %v3783 = vpack.c.b16 %v3175, %v3159
        %v3784 = vpack.c.b16 %v3176, %v3160
        %v3785 = vpack.c.b16 %v3177, %v3161
        %v3786 = vpack.c.b16 %v3178, %v3162
        %v3787 = vpack.c.b16 %v3179, %v3163
        %v3788 = vpack.c.b16 %v3180, %v3164
        %v3789 = vpack.c.b16 %v3181, %v3165
        %v3790 = vpack.c.b16 %v3182, %v3166
        %v3791 = vpack.c.b16 %v3183, %v3167
        %v3792 = vpack.c.b16 %v3184, %v3168
        %v3793 = vpack.c.b16 %v3185, %v3169
        %v3794 = vpack.c.b16 %v3186, %v3170
        %v3795 = vpack.c.b16 %v3187, %v3171
        %v3796 = vpack.c.b16 %v3188, %v3172
        %v3797 = vpack.c.b16 %v3189, %v3173
        %v3798 = vpack.c.b16 %v3206, %v3190
        %v3799 = vpack.c.b16 %v3207, %v3191
        %v3800 = vpack.c.b16 %v3208, %v3192
        %v3801 = vpack.c.b16 %v3209, %v3193
        %v3802 = vpack.c.b16 %v3210, %v3194
        %v3803 = vpack.c.b16 %v3211, %v3195
        %v3804 = vpack.c.b16 %v3212, %v3196
        %v3805 = vpack.c.b16 %v3213, %v3197
        %v3806 = vpack.c.b16 %v3214, %v3198
        %v3807 = vpack.c.b16 %v3215, %v3199
        %v3808 = vpack.c.b16 %v3216, %v3200
        %v3809 = vpack.c.b16 %v3217, %v3201
        %v3810 = vpack.c.b16 %v3218, %v3202
        %v3811 = vpack.c.b16 %v3219, %v3203
        %v3812 = vpack.c.b16 %v3220, %v3204
        %v3813 = vpack.c.b16 %v3221, %v3205
        %v3814 = vpack.c.b16 %v3238, %v3222
        %v3815 = vpack.c.b16 %v3239, %v3223
        %v3816 = vpack.c.b16 %v3240, %v3224
        %v3817 = vpack.c.b16 %v3241, %v3225
        %v3818 = vpack.c.b16 %v3242, %v3226
        %v3819 = vpack.c.b16 %v3243, %v3227
        %v3820 = vpack.c.b16 %v3244, %v3228
        %v3821 = vpack.c.b16 %v3245, %v3229
        %v3822 = vpack.c.b16 %v3246, %v3230
        %v3823 = vpack.c.b16 %v3247, %v3231
        %v3824 = vpack.c.b16 %v3248, %v3232
        %v3825 = vpack.c.b16 %v3249, %v3233
        %v3826 = vpack.c.b16 %v3250, %v3234
        %v3827 = vpack.c.b16 %v3251, %v3235
        %v3828 = vpack.c.b16 %v3252, %v3236
        %v3829 = vpack.c.b16 %v3253, %v3237
        %v3830 = vpack.c.b16 %v3270, %v3254
        %v3831 = vpack.c.b16 %v3271, %v3255
        %v3832 = vpack.c.b16 %v3272, %v3256
        %v3833 = vpack.c.b16 %v3273, %v3257
        %v3834 = vpack.c.b16 %v3274, %v3258
        %v3835 = vpack.c.b16 %v3275, %v3259
        %v3836 = vpack.c.b16 %v3276, %v3260
        %v3837 = vpack.c.b16 %v3277, %v3261
        %v3838 = vpack.c.b16 %v3278, %v3262
        %v3839 = vpack.c.b16 %v3279, %v3263
        %v3840 = vpack.c.b16 %v3280, %v3264
        %v3841 = vpack.c.b16 %v3281, %v3265
        %v3842 = vpack.c.b16 %v3282, %v3266
        %v3843 = vpack.c.b16 %v3283, %v3267
        %v3844 = vpack.c.b16 %v3284, %v3268
        %v3845 = vpack.c.b16 %v3285, %v3269
        %v3846 = vpack.c.b16 %v3302, %v3286
        %v3847 = vpack.c.b16 %v3303, %v3287
        %v3848 = vpack.c.b16 %v3304, %v3288
        %v3849 = vpack.c.b16 %v3305, %v3289
        %v3850 = vpack.c.b16 %v3306, %v3290
        %v3851 = vpack.c.b16 %v3307, %v3291
        %v3852 = vpack.c.b16 %v3308, %v3292
        %v3853 = vpack.c.b16 %v3309, %v3293
        %v3854 = vpack.c.b16 %v3310, %v3294
        %v3855 = vpack.c.b16 %v3311, %v3295
        %v3856 = vpack.c.b16 %v3312, %v3296
        %v3857 = vpack.c.b16 %v3313, %v3297
        %v3858 = vpack.c.b16 %v3314, %v3298
        %v3859 = vpack.c.b16 %v3315, %v3299
        %v3860 = vpack.c.b16 %v3316, %v3300
        %v3861 = vpack.c.b16 %v3317, %v3301
        %v3862 = vpack.c.b16 %v3334, %v3318
        %v3863 = vpack.c.b16 %v3335, %v3319
        %v3864 = vpack.c.b16 %v3336, %v3320
        %v3865 = vpack.c.b16 %v3337, %v3321
        %v3866 = vpack.c.b16 %v3338, %v3322
        %v3867 = vpack.c.b16 %v3339, %v3323
        %v3868 = vpack.c.b16 %v3340, %v3324
        %v3869 = vpack.c.b16 %v3341, %v3325
        %v3870 = vpack.c.b16 %v3342, %v3326
        %v3871 = vpack.c.b16 %v3343, %v3327
        %v3872 = vpack.c.b16 %v3344, %v3328
        %v3873 = vpack.c.b16 %v3345, %v3329
        %v3874 = vpack.c.b16 %v3346, %v3330
        %v3875 = vpack.c.b16 %v3347, %v3331
        %v3876 = vpack.c.b16 %v3348, %v3332
        %v3877 = vpack.c.b16 %v3349, %v3333
        %v3878 = vpack.c.b16 %v3366, %v3350
        %v3879 = vpack.c.b16 %v3367, %v3351
        %v3880 = vpack.c.b16 %v3368, %v3352
        %v3881 = vpack.c.b16 %v3369, %v3353
        %v3882 = vpack.c.b16 %v3370, %v3354
        %v3883 = vpack.c.b16 %v3371, %v3355
        %v3884 = vpack.c.b16 %v3372, %v3356
        %v3885 = vpack.c.b16 %v3373, %v3357
        %v3886 = vpack.c.b16 %v3374, %v3358
        %v3887 = vpack.c.b16 %v3375, %v3359
        %v3888 = vpack.c.b16 %v3376, %v3360
        %v3889 = vpack.c.b16 %v3377, %v3361
        %v3890 = vpack.c.b16 %v3378, %v3362
        %v3891 = vpack.c.b16 %v3379, %v3363
        %v3892 = vpack.c.b16 %v3380, %v3364
        %v3893 = vpack.c.b16 %v3381, %v3365
        %4406 = vmatprep.subr.bf16.mxu0 %v3383
        %4407 = vmatpush1.bf16.msra.mxu0 %v3382
        %4408 = vmatprep.subr.bf16.mxu0 %v3399
        %4409 = vmatpush1.bf16.msra.mxu0 %v3398
        %4410 = vmatprep.subr.bf16.mxu0 %v3415
        %4411 = vmatpush1.bf16.msra.mxu0 %v3414
        %4412 = vmatprep.subr.bf16.mxu0 %v3431
        %4413 = vmatpush1.bf16.msra.mxu0 %v3430
        %4414 = vmatprep.subr.bf16.mxu0 %v3447
        %4415 = vmatpush1.bf16.msra.mxu0 %v3446
        %4416 = vmatprep.subr.bf16.mxu0 %v3463
        %4417 = vmatpush1.bf16.msra.mxu0 %v3462
        %4418 = vmatprep.subr.bf16.mxu0 %v3479
        %4419 = vmatpush1.bf16.msra.mxu0 %v3478
        %4420 = vmatprep.subr.bf16.mxu0 %v3495
        %4421 = vmatpush1.bf16.msra.mxu0 %v3494
        %4422 = vmatprep.subr.bf16.mxu0 %v3511
        %4423 = vmatpush1.bf16.msra.mxu0 %v3510
        %4424 = vmatprep.subr.bf16.mxu0 %v3527
        %4425 = vmatpush1.bf16.msra.mxu0 %v3526
        %4426 = vmatprep.subr.bf16.mxu0 %v3543
        %4427 = vmatpush1.bf16.msra.mxu0 %v3542
        %4428 = vmatprep.subr.bf16.mxu0 %v3559
        %4429 = vmatpush1.bf16.msra.mxu0 %v3558
        %4430 = vmatprep.subr.bf16.mxu0 %v3575
        %4431 = vmatpush1.bf16.msra.mxu0 %v3574
        %4432 = vmatprep.subr.bf16.mxu0 %v3591
        %4433 = vmatpush1.bf16.msra.mxu0 %v3590
        %4434 = vmatprep.subr.bf16.mxu0 %v3607
        %4435 = vmatpush1.bf16.msra.mxu0 %v3606
        %4436 = vmatprep.subr.bf16.mxu0 %v3623
        %4437 = vmatpush1.bf16.msra.mxu0 %v3622
        %4438 = vmatprep.mubr.bf16.mxu0 %v1839
        %4439 = vmatmul.mubr.bf16.gmra.mrb[0].mxu0 %v1838
        %v4440 = vpop.f32.mrb[0].mxu0
        %v4441 = vadd.f32 %v1755, %v4440
        %v4442 = vpop.f32.mrb[0].mxu0
        %v4443 = vadd.f32 %v1759, %v4442
        %v4444 = vpop.f32.mrb[0].mxu0
        %v4445 = vpop.f32.mrb[0].mxu0
        %4446 = vdwg.mxu0
        %4447 = vmatprep.subr.bf16.mxu0 %v3639
        %4448 = vmatpush1.bf16.msra.mxu0 %v3638
        %4449 = vmatprep.subr.bf16.mxu0 %v3655
        %4450 = vmatpush1.bf16.msra.mxu0 %v3654
        %4451 = vmatprep.subr.bf16.mxu0 %v3671
        %4452 = vmatpush1.bf16.msra.mxu0 %v3670
        %4453 = vmatprep.subr.bf16.mxu0 %v3687
        %4454 = vmatpush1.bf16.msra.mxu0 %v3686
        %4455 = vmatprep.subr.bf16.mxu0 %v3703
        %4456 = vmatpush1.bf16.msra.mxu0 %v3702
        %4457 = vmatprep.subr.bf16.mxu0 %v3719
        %4458 = vmatpush1.bf16.msra.mxu0 %v3718
        %4459 = vmatprep.subr.bf16.mxu0 %v3735
        %4460 = vmatpush1.bf16.msra.mxu0 %v3734
        %4461 = vmatprep.subr.bf16.mxu0 %v3751
        %4462 = vmatpush1.bf16.msra.mxu0 %v3750
        %4463 = vmatprep.subr.bf16.mxu0 %v3767
        %4464 = vmatpush1.bf16.msra.mxu0 %v3766
        %4465 = vmatprep.subr.bf16.mxu0 %v3783
        %4466 = vmatpush1.bf16.msra.mxu0 %v3782
        %4467 = vmatprep.subr.bf16.mxu0 %v3799
        %4468 = vmatpush1.bf16.msra.mxu0 %v3798
        %4469 = vmatprep.subr.bf16.mxu0 %v3815
        %4470 = vmatpush1.bf16.msra.mxu0 %v3814
        %4471 = vmatprep.subr.bf16.mxu0 %v3831
        %4472 = vmatpush1.bf16.msra.mxu0 %v3830
        %4473 = vmatprep.subr.bf16.mxu0 %v3847
        %4474 = vmatpush1.bf16.msra.mxu0 %v3846
        %4475 = vmatprep.subr.bf16.mxu0 %v3863
        %4476 = vmatpush1.bf16.msra.mxu0 %v3862
        %4477 = vmatprep.subr.bf16.mxu0 %v3879
        %4478 = vmatpush1.bf16.msra.mxu0 %v3878
        %4479 = vmatprep.mubr.bf16.mxu0 %v1841
        %4480 = vmatmul.mubr.bf16.gmra.mrb[0].mxu0 %v1840
        %v4481 = vpop.f32.mrb[0].mxu0
        %v4482 = vadd.f32 %v4441, %v4481
        %v4483 = vpop.f32.mrb[0].mxu0
        %v4484 = vadd.f32 %v4443, %v4483
        %v4485 = vpop.f32.mrb[0].mxu0
        %v4486 = vpop.f32.mrb[0].mxu0
        %4487 = vdwg.mxu0
        %4488 = vmatprep.subr.bf16.mxu0 %v3385
        %4489 = vmatpush1.bf16.msra.mxu0 %v3384
        %4490 = vmatprep.subr.bf16.mxu0 %v3401
        %4491 = vmatpush1.bf16.msra.mxu0 %v3400
        %4492 = vmatprep.subr.bf16.mxu0 %v3417
        %4493 = vmatpush1.bf16.msra.mxu0 %v3416
        %4494 = vmatprep.subr.bf16.mxu0 %v3433
        %4495 = vmatpush1.bf16.msra.mxu0 %v3432
        %4496 = vmatprep.subr.bf16.mxu0 %v3449
        %4497 = vmatpush1.bf16.msra.mxu0 %v3448
        %4498 = vmatprep.subr.bf16.mxu0 %v3465
        %4499 = vmatpush1.bf16.msra.mxu0 %v3464
        %4500 = vmatprep.subr.bf16.mxu0 %v3481
        %4501 = vmatpush1.bf16.msra.mxu0 %v3480
        %4502 = vmatprep.subr.bf16.mxu0 %v3497
        %4503 = vmatpush1.bf16.msra.mxu0 %v3496
        %4504 = vmatprep.subr.bf16.mxu0 %v3513
        %4505 = vmatpush1.bf16.msra.mxu0 %v3512
        %4506 = vmatprep.subr.bf16.mxu0 %v3529
        %4507 = vmatpush1.bf16.msra.mxu0 %v3528
        %4508 = vmatprep.subr.bf16.mxu0 %v3545
        %4509 = vmatpush1.bf16.msra.mxu0 %v3544
        %4510 = vmatprep.subr.bf16.mxu0 %v3561
        %4511 = vmatpush1.bf16.msra.mxu0 %v3560
        %4512 = vmatprep.subr.bf16.mxu0 %v3577
        %4513 = vmatpush1.bf16.msra.mxu0 %v3576
        %4514 = vmatprep.subr.bf16.mxu0 %v3593
        %4515 = vmatpush1.bf16.msra.mxu0 %v3592
        %4516 = vmatprep.subr.bf16.mxu0 %v3609
        %4517 = vmatpush1.bf16.msra.mxu0 %v3608
        %4518 = vmatprep.subr.bf16.mxu0 %v3625
        %4519 = vmatpush1.bf16.msra.mxu0 %v3624
        %4520 = vmatprep.mubr.bf16.mxu0 %v1839
        %4521 = vmatmul.mubr.bf16.gmra.mrb[0].mxu0 %v1838
        %v4522 = vpop.f32.mrb[0].mxu0
        %v4523 = vadd.f32 %v1763, %v4522
        %v4524 = vpop.f32.mrb[0].mxu0
        %v4525 = vadd.f32 %v1767, %v4524
        %v4526 = vpop.f32.mrb[0].mxu0
        %v4527 = vpop.f32.mrb[0].mxu0
        %4528 = vdwg.mxu0
        %4529 = vmatprep.subr.bf16.mxu0 %v3641
        %4530 = vmatpush1.bf16.msra.mxu0 %v3640
        %4531 = vmatprep.subr.bf16.mxu0 %v3657
        %4532 = vmatpush1.bf16.msra.mxu0 %v3656
        %4533 = vmatprep.subr.bf16.mxu0 %v3673
        %4534 = vmatpush1.bf16.msra.mxu0 %v3672
        %4535 = vmatprep.subr.bf16.mxu0 %v3689
        %4536 = vmatpush1.bf16.msra.mxu0 %v3688
        %4537 = vmatprep.subr.bf16.mxu0 %v3705
        %4538 = vmatpush1.bf16.msra.mxu0 %v3704
        %4539 = vmatprep.subr.bf16.mxu0 %v3721
        %4540 = vmatpush1.bf16.msra.mxu0 %v3720
        %4541 = vmatprep.subr.bf16.mxu0 %v3737
        %4542 = vmatpush1.bf16.msra.mxu0 %v3736
        %4543 = vmatprep.subr.bf16.mxu0 %v3753
        %4544 = vmatpush1.bf16.msra.mxu0 %v3752
        %4545 = vmatprep.subr.bf16.mxu0 %v3769
        %4546 = vmatpush1.bf16.msra.mxu0 %v3768
        %4547 = vmatprep.subr.bf16.mxu0 %v3785
        %4548 = vmatpush1.bf16.msra.mxu0 %v3784
        %4549 = vmatprep.subr.bf16.mxu0 %v3801
        %4550 = vmatpush1.bf16.msra.mxu0 %v3800
        %4551 = vmatprep.subr.bf16.mxu0 %v3817
        %4552 = vmatpush1.bf16.msra.mxu0 %v3816
        %4553 = vmatprep.subr.bf16.mxu0 %v3833
        %4554 = vmatpush1.bf16.msra.mxu0 %v3832
        %4555 = vmatprep.subr.bf16.mxu0 %v3849
        %4556 = vmatpush1.bf16.msra.mxu0 %v3848
        %4557 = vmatprep.subr.bf16.mxu0 %v3865
        %4558 = vmatpush1.bf16.msra.mxu0 %v3864
        %4559 = vmatprep.subr.bf16.mxu0 %v3881
        %4560 = vmatpush1.bf16.msra.mxu0 %v3880
        %4561 = vmatprep.mubr.bf16.mxu0 %v1841
        %4562 = vmatmul.mubr.bf16.gmra.mrb[0].mxu0 %v1840
        %v4563 = vpop.f32.mrb[0].mxu0
        %v4564 = vadd.f32 %v4523, %v4563
        %v4565 = vpop.f32.mrb[0].mxu0
        %v4566 = vadd.f32 %v4525, %v4565
        %v4567 = vpop.f32.mrb[0].mxu0
        %v4568 = vpop.f32.mrb[0].mxu0
        %4569 = vdwg.mxu0
        %4570 = vmatprep.subr.bf16.mxu0 %v3387
        %4571 = vmatpush1.bf16.msra.mxu0 %v3386
        %4572 = vmatprep.subr.bf16.mxu0 %v3403
        %4573 = vmatpush1.bf16.msra.mxu0 %v3402
        %4574 = vmatprep.subr.bf16.mxu0 %v3419
        %4575 = vmatpush1.bf16.msra.mxu0 %v3418
        %4576 = vmatprep.subr.bf16.mxu0 %v3435
        %4577 = vmatpush1.bf16.msra.mxu0 %v3434
        %4578 = vmatprep.subr.bf16.mxu0 %v3451
        %4579 = vmatpush1.bf16.msra.mxu0 %v3450
        %4580 = vmatprep.subr.bf16.mxu0 %v3467
        %4581 = vmatpush1.bf16.msra.mxu0 %v3466
        %4582 = vmatprep.subr.bf16.mxu0 %v3483
        %4583 = vmatpush1.bf16.msra.mxu0 %v3482
        %4584 = vmatprep.subr.bf16.mxu0 %v3499
        %4585 = vmatpush1.bf16.msra.mxu0 %v3498
        %4586 = vmatprep.subr.bf16.mxu0 %v3515
        %4587 = vmatpush1.bf16.msra.mxu0 %v3514
        %4588 = vmatprep.subr.bf16.mxu0 %v3531
        %4589 = vmatpush1.bf16.msra.mxu0 %v3530
        %4590 = vmatprep.subr.bf16.mxu0 %v3547
        %4591 = vmatpush1.bf16.msra.mxu0 %v3546
        %4592 = vmatprep.subr.bf16.mxu0 %v3563
        %4593 = vmatpush1.bf16.msra.mxu0 %v3562
        %4594 = vmatprep.subr.bf16.mxu0 %v3579
        %4595 = vmatpush1.bf16.msra.mxu0 %v3578
        %4596 = vmatprep.subr.bf16.mxu0 %v3595
        %4597 = vmatpush1.bf16.msra.mxu0 %v3594
        %4598 = vmatprep.subr.bf16.mxu0 %v3611
        %4599 = vmatpush1.bf16.msra.mxu0 %v3610
        %4600 = vmatprep.subr.bf16.mxu0 %v3627
        %4601 = vmatpush1.bf16.msra.mxu0 %v3626
        %4602 = vmatprep.mubr.bf16.mxu0 %v1839
        %4603 = vmatmul.mubr.bf16.gmra.mrb[0].mxu0 %v1838
        %v4604 = vpop.f32.mrb[0].mxu0
        %v4605 = vadd.f32 %v1771, %v4604
        %v4606 = vpop.f32.mrb[0].mxu0
        %v4607 = vadd.f32 %v1775, %v4606
        %v4608 = vpop.f32.mrb[0].mxu0
        %v4609 = vpop.f32.mrb[0].mxu0
        %4610 = vdwg.mxu0
        %4611 = vmatprep.subr.bf16.mxu0 %v3643
        %4612 = vmatpush1.bf16.msra.mxu0 %v3642
        %4613 = vmatprep.subr.bf16.mxu0 %v3659
        %4614 = vmatpush1.bf16.msra.mxu0 %v3658
        %4615 = vmatprep.subr.bf16.mxu0 %v3675
        %4616 = vmatpush1.bf16.msra.mxu0 %v3674
        %4617 = vmatprep.subr.bf16.mxu0 %v3691
        %4618 = vmatpush1.bf16.msra.mxu0 %v3690
        %4619 = vmatprep.subr.bf16.mxu0 %v3707
        %4620 = vmatpush1.bf16.msra.mxu0 %v3706
        %4621 = vmatprep.subr.bf16.mxu0 %v3723
        %4622 = vmatpush1.bf16.msra.mxu0 %v3722
        %4623 = vmatprep.subr.bf16.mxu0 %v3739
        %4624 = vmatpush1.bf16.msra.mxu0 %v3738
        %4625 = vmatprep.subr.bf16.mxu0 %v3755
        %4626 = vmatpush1.bf16.msra.mxu0 %v3754
        %4627 = vmatprep.subr.bf16.mxu0 %v3771
        %4628 = vmatpush1.bf16.msra.mxu0 %v3770
        %4629 = vmatprep.subr.bf16.mxu0 %v3787
        %4630 = vmatpush1.bf16.msra.mxu0 %v3786
        %4631 = vmatprep.subr.bf16.mxu0 %v3803
        %4632 = vmatpush1.bf16.msra.mxu0 %v3802
        %4633 = vmatprep.subr.bf16.mxu0 %v3819
        %4634 = vmatpush1.bf16.msra.mxu0 %v3818
        %4635 = vmatprep.subr.bf16.mxu0 %v3835
        %4636 = vmatpush1.bf16.msra.mxu0 %v3834
        %4637 = vmatprep.subr.bf16.mxu0 %v3851
        %4638 = vmatpush1.bf16.msra.mxu0 %v3850
        %4639 = vmatprep.subr.bf16.mxu0 %v3867
        %4640 = vmatpush1.bf16.msra.mxu0 %v3866
        %4641 = vmatprep.subr.bf16.mxu0 %v3883
        %4642 = vmatpush1.bf16.msra.mxu0 %v3882
        %4643 = vmatprep.mubr.bf16.mxu0 %v1841
        %4644 = vmatmul.mubr.bf16.gmra.mrb[0].mxu0 %v1840
        %v4645 = vpop.f32.mrb[0].mxu0
        %v4646 = vadd.f32 %v4605, %v4645
        %v4647 = vpop.f32.mrb[0].mxu0
        %v4648 = vadd.f32 %v4607, %v4647
        %v4649 = vpop.f32.mrb[0].mxu0
        %v4650 = vpop.f32.mrb[0].mxu0
        %4651 = vdwg.mxu0
        %4652 = vmatprep.subr.bf16.mxu0 %v3389
        %4653 = vmatpush1.bf16.msra.mxu0 %v3388
        %4654 = vmatprep.subr.bf16.mxu0 %v3405
        %4655 = vmatpush1.bf16.msra.mxu0 %v3404
        %4656 = vmatprep.subr.bf16.mxu0 %v3421
        %4657 = vmatpush1.bf16.msra.mxu0 %v3420
        %4658 = vmatprep.subr.bf16.mxu0 %v3437
        %4659 = vmatpush1.bf16.msra.mxu0 %v3436
        %4660 = vmatprep.subr.bf16.mxu0 %v3453
        %4661 = vmatpush1.bf16.msra.mxu0 %v3452
        %4662 = vmatprep.subr.bf16.mxu0 %v3469
        %4663 = vmatpush1.bf16.msra.mxu0 %v3468
        %4664 = vmatprep.subr.bf16.mxu0 %v3485
        %4665 = vmatpush1.bf16.msra.mxu0 %v3484
        %4666 = vmatprep.subr.bf16.mxu0 %v3501
        %4667 = vmatpush1.bf16.msra.mxu0 %v3500
        %4668 = vmatprep.subr.bf16.mxu0 %v3517
        %4669 = vmatpush1.bf16.msra.mxu0 %v3516
        %4670 = vmatprep.subr.bf16.mxu0 %v3533
        %4671 = vmatpush1.bf16.msra.mxu0 %v3532
        %4672 = vmatprep.subr.bf16.mxu0 %v3549
        %4673 = vmatpush1.bf16.msra.mxu0 %v3548
        %4674 = vmatprep.subr.bf16.mxu0 %v3565
        %4675 = vmatpush1.bf16.msra.mxu0 %v3564
        %4676 = vmatprep.subr.bf16.mxu0 %v3581
        %4677 = vmatpush1.bf16.msra.mxu0 %v3580
        %4678 = vmatprep.subr.bf16.mxu0 %v3597
        %4679 = vmatpush1.bf16.msra.mxu0 %v3596
        %4680 = vmatprep.subr.bf16.mxu0 %v3613
        %4681 = vmatpush1.bf16.msra.mxu0 %v3612
        %4682 = vmatprep.subr.bf16.mxu0 %v3629
        %4683 = vmatpush1.bf16.msra.mxu0 %v3628
        %4684 = vmatprep.mubr.bf16.mxu0 %v1839
        %4685 = vmatmul.mubr.bf16.gmra.mrb[0].mxu0 %v1838
        %v4686 = vpop.f32.mrb[0].mxu0
        %v4687 = vadd.f32 %v1779, %v4686
        %v4688 = vpop.f32.mrb[0].mxu0
        %v4689 = vadd.f32 %v1783, %v4688
        %v4690 = vpop.f32.mrb[0].mxu0
        %v4691 = vpop.f32.mrb[0].mxu0
        %4692 = vdwg.mxu0
        %4693 = vmatprep.subr.bf16.mxu0 %v3645
        %4694 = vmatpush1.bf16.msra.mxu0 %v3644
        %4695 = vmatprep.subr.bf16.mxu0 %v3661
        %4696 = vmatpush1.bf16.msra.mxu0 %v3660
        %4697 = vmatprep.subr.bf16.mxu0 %v3677
        %4698 = vmatpush1.bf16.msra.mxu0 %v3676
        %4699 = vmatprep.subr.bf16.mxu0 %v3693
        %4700 = vmatpush1.bf16.msra.mxu0 %v3692
        %4701 = vmatprep.subr.bf16.mxu0 %v3709
        %4702 = vmatpush1.bf16.msra.mxu0 %v3708
        %4703 = vmatprep.subr.bf16.mxu0 %v3725
        %4704 = vmatpush1.bf16.msra.mxu0 %v3724
        %4705 = vmatprep.subr.bf16.mxu0 %v3741
        %4706 = vmatpush1.bf16.msra.mxu0 %v3740
        %4707 = vmatprep.subr.bf16.mxu0 %v3757
        %4708 = vmatpush1.bf16.msra.mxu0 %v3756
        %4709 = vmatprep.subr.bf16.mxu0 %v3773
        %4710 = vmatpush1.bf16.msra.mxu0 %v3772
        %4711 = vmatprep.subr.bf16.mxu0 %v3789
        %4712 = vmatpush1.bf16.msra.mxu0 %v3788
        %4713 = vmatprep.subr.bf16.mxu0 %v3805
        %4714 = vmatpush1.bf16.msra.mxu0 %v3804
        %4715 = vmatprep.subr.bf16.mxu0 %v3821
        %4716 = vmatpush1.bf16.msra.mxu0 %v3820
        %4717 = vmatprep.subr.bf16.mxu0 %v3837
        %4718 = vmatpush1.bf16.msra.mxu0 %v3836
        %4719 = vmatprep.subr.bf16.mxu0 %v3853
        %4720 = vmatpush1.bf16.msra.mxu0 %v3852
        %4721 = vmatprep.subr.bf16.mxu0 %v3869
        %4722 = vmatpush1.bf16.msra.mxu0 %v3868
        %4723 = vmatprep.subr.bf16.mxu0 %v3885
        %4724 = vmatpush1.bf16.msra.mxu0 %v3884
        %4725 = vmatprep.mubr.bf16.mxu0 %v1841
        %4726 = vmatmul.mubr.bf16.gmra.mrb[0].mxu0 %v1840
        %v4727 = vpop.f32.mrb[0].mxu0
        %v4728 = vadd.f32 %v4687, %v4727
        %v4729 = vpop.f32.mrb[0].mxu0
        %v4730 = vadd.f32 %v4689, %v4729
        %v4731 = vpop.f32.mrb[0].mxu0
        %v4732 = vpop.f32.mrb[0].mxu0
        %4733 = vdwg.mxu0
        %4734 = vmatprep.subr.bf16.mxu0 %v3391
        %4735 = vmatpush1.bf16.msra.mxu0 %v3390
        %4736 = vmatprep.subr.bf16.mxu0 %v3407
        %4737 = vmatpush1.bf16.msra.mxu0 %v3406
        %4738 = vmatprep.subr.bf16.mxu0 %v3423
        %4739 = vmatpush1.bf16.msra.mxu0 %v3422
        %4740 = vmatprep.subr.bf16.mxu0 %v3439
        %4741 = vmatpush1.bf16.msra.mxu0 %v3438
        %4742 = vmatprep.subr.bf16.mxu0 %v3455
        %4743 = vmatpush1.bf16.msra.mxu0 %v3454
        %4744 = vmatprep.subr.bf16.mxu0 %v3471
        %4745 = vmatpush1.bf16.msra.mxu0 %v3470
        %4746 = vmatprep.subr.bf16.mxu0 %v3487
        %4747 = vmatpush1.bf16.msra.mxu0 %v3486
        %4748 = vmatprep.subr.bf16.mxu0 %v3503
        %4749 = vmatpush1.bf16.msra.mxu0 %v3502
        %4750 = vmatprep.subr.bf16.mxu0 %v3519
        %4751 = vmatpush1.bf16.msra.mxu0 %v3518
        %4752 = vmatprep.subr.bf16.mxu0 %v3535
        %4753 = vmatpush1.bf16.msra.mxu0 %v3534
        %4754 = vmatprep.subr.bf16.mxu0 %v3551
        %4755 = vmatpush1.bf16.msra.mxu0 %v3550
        %4756 = vmatprep.subr.bf16.mxu0 %v3567
        %4757 = vmatpush1.bf16.msra.mxu0 %v3566
        %4758 = vmatprep.subr.bf16.mxu0 %v3583
        %4759 = vmatpush1.bf16.msra.mxu0 %v3582
        %4760 = vmatprep.subr.bf16.mxu0 %v3599
        %4761 = vmatpush1.bf16.msra.mxu0 %v3598
        %4762 = vmatprep.subr.bf16.mxu0 %v3615
        %4763 = vmatpush1.bf16.msra.mxu0 %v3614
        %4764 = vmatprep.subr.bf16.mxu0 %v3631
        %4765 = vmatpush1.bf16.msra.mxu0 %v3630
        %4766 = vmatprep.mubr.bf16.mxu0 %v1839
        %4767 = vmatmul.mubr.bf16.gmra.mrb[0].mxu0 %v1838
        %v4768 = vpop.f32.mrb[0].mxu0
        %v4769 = vadd.f32 %v1787, %v4768
        %v4770 = vpop.f32.mrb[0].mxu0
        %v4771 = vadd.f32 %v1791, %v4770
        %v4772 = vpop.f32.mrb[0].mxu0
        %v4773 = vpop.f32.mrb[0].mxu0
        %4774 = vdwg.mxu0
        %4775 = vmatprep.subr.bf16.mxu0 %v3647
        %4776 = vmatpush1.bf16.msra.mxu0 %v3646
        %4777 = vmatprep.subr.bf16.mxu0 %v3663
        %4778 = vmatpush1.bf16.msra.mxu0 %v3662
        %4779 = vmatprep.subr.bf16.mxu0 %v3679
        %4780 = vmatpush1.bf16.msra.mxu0 %v3678
        %4781 = vmatprep.subr.bf16.mxu0 %v3695
        %4782 = vmatpush1.bf16.msra.mxu0 %v3694
        %4783 = vmatprep.subr.bf16.mxu0 %v3711
        %4784 = vmatpush1.bf16.msra.mxu0 %v3710
        %4785 = vmatprep.subr.bf16.mxu0 %v3727
        %4786 = vmatpush1.bf16.msra.mxu0 %v3726
        %4787 = vmatprep.subr.bf16.mxu0 %v3743
        %4788 = vmatpush1.bf16.msra.mxu0 %v3742
        %4789 = vmatprep.subr.bf16.mxu0 %v3759
        %4790 = vmatpush1.bf16.msra.mxu0 %v3758
        %4791 = vmatprep.subr.bf16.mxu0 %v3775
        %4792 = vmatpush1.bf16.msra.mxu0 %v3774
        %4793 = vmatprep.subr.bf16.mxu0 %v3791
        %4794 = vmatpush1.bf16.msra.mxu0 %v3790
        %4795 = vmatprep.subr.bf16.mxu0 %v3807
        %4796 = vmatpush1.bf16.msra.mxu0 %v3806
        %4797 = vmatprep.subr.bf16.mxu0 %v3823
        %4798 = vmatpush1.bf16.msra.mxu0 %v3822
        %4799 = vmatprep.subr.bf16.mxu0 %v3839
        %4800 = vmatpush1.bf16.msra.mxu0 %v3838
        %4801 = vmatprep.subr.bf16.mxu0 %v3855
        %4802 = vmatpush1.bf16.msra.mxu0 %v3854
        %4803 = vmatprep.subr.bf16.mxu0 %v3871
        %4804 = vmatpush1.bf16.msra.mxu0 %v3870
        %4805 = vmatprep.subr.bf16.mxu0 %v3887
        %4806 = vmatpush1.bf16.msra.mxu0 %v3886
        %4807 = vmatprep.mubr.bf16.mxu0 %v1841
        %4808 = vmatmul.mubr.bf16.gmra.mrb[0].mxu0 %v1840
        %v4809 = vpop.f32.mrb[0].mxu0
        %v4810 = vadd.f32 %v4769, %v4809
        %v4811 = vpop.f32.mrb[0].mxu0
        %v4812 = vadd.f32 %v4771, %v4811
        %v4813 = vpop.f32.mrb[0].mxu0
        %v4814 = vpop.f32.mrb[0].mxu0
        %4815 = vdwg.mxu0
        %4816 = vmatprep.subr.bf16.mxu0 %v3393
        %4817 = vmatpush1.bf16.msra.mxu0 %v3392
        %4818 = vmatprep.subr.bf16.mxu0 %v3409
        %4819 = vmatpush1.bf16.msra.mxu0 %v3408
        %4820 = vmatprep.subr.bf16.mxu0 %v3425
        %4821 = vmatpush1.bf16.msra.mxu0 %v3424
        %4822 = vmatprep.subr.bf16.mxu0 %v3441
        %4823 = vmatpush1.bf16.msra.mxu0 %v3440
        %4824 = vmatprep.subr.bf16.mxu0 %v3457
        %4825 = vmatpush1.bf16.msra.mxu0 %v3456
        %4826 = vmatprep.subr.bf16.mxu0 %v3473
        %4827 = vmatpush1.bf16.msra.mxu0 %v3472
        %4828 = vmatprep.subr.bf16.mxu0 %v3489
        %4829 = vmatpush1.bf16.msra.mxu0 %v3488
        %4830 = vmatprep.subr.bf16.mxu0 %v3505
        %4831 = vmatpush1.bf16.msra.mxu0 %v3504
        %4832 = vmatprep.subr.bf16.mxu0 %v3521
        %4833 = vmatpush1.bf16.msra.mxu0 %v3520
        %4834 = vmatprep.subr.bf16.mxu0 %v3537
        %4835 = vmatpush1.bf16.msra.mxu0 %v3536
        %4836 = vmatprep.subr.bf16.mxu0 %v3553
        %4837 = vmatpush1.bf16.msra.mxu0 %v3552
        %4838 = vmatprep.subr.bf16.mxu0 %v3569
        %4839 = vmatpush1.bf16.msra.mxu0 %v3568
        %4840 = vmatprep.subr.bf16.mxu0 %v3585
        %4841 = vmatpush1.bf16.msra.mxu0 %v3584
        %4842 = vmatprep.subr.bf16.mxu0 %v3601
        %4843 = vmatpush1.bf16.msra.mxu0 %v3600
        %4844 = vmatprep.subr.bf16.mxu0 %v3617
        %4845 = vmatpush1.bf16.msra.mxu0 %v3616
        %4846 = vmatprep.subr.bf16.mxu0 %v3633
        %4847 = vmatpush1.bf16.msra.mxu0 %v3632
        %4848 = vmatprep.mubr.bf16.mxu0 %v1839
        %4849 = vmatmul.mubr.bf16.gmra.mrb[0].mxu0 %v1838
        %v4850 = vpop.f32.mrb[0].mxu0
        %v4851 = vadd.f32 %v1795, %v4850
        %v4852 = vpop.f32.mrb[0].mxu0
        %v4853 = vadd.f32 %v1799, %v4852
        %v4854 = vpop.f32.mrb[0].mxu0
        %v4855 = vpop.f32.mrb[0].mxu0
        %4856 = vdwg.mxu0
        %4857 = vmatprep.subr.bf16.mxu0 %v3649
        %4858 = vmatpush1.bf16.msra.mxu0 %v3648
        %4859 = vmatprep.subr.bf16.mxu0 %v3665
        %4860 = vmatpush1.bf16.msra.mxu0 %v3664
        %4861 = vmatprep.subr.bf16.mxu0 %v3681
        %4862 = vmatpush1.bf16.msra.mxu0 %v3680
        %4863 = vmatprep.subr.bf16.mxu0 %v3697
        %4864 = vmatpush1.bf16.msra.mxu0 %v3696
        %4865 = vmatprep.subr.bf16.mxu0 %v3713
        %4866 = vmatpush1.bf16.msra.mxu0 %v3712
        %4867 = vmatprep.subr.bf16.mxu0 %v3729
        %4868 = vmatpush1.bf16.msra.mxu0 %v3728
        %4869 = vmatprep.subr.bf16.mxu0 %v3745
        %4870 = vmatpush1.bf16.msra.mxu0 %v3744
        %4871 = vmatprep.subr.bf16.mxu0 %v3761
        %4872 = vmatpush1.bf16.msra.mxu0 %v3760
        %4873 = vmatprep.subr.bf16.mxu0 %v3777
        %4874 = vmatpush1.bf16.msra.mxu0 %v3776
        %4875 = vmatprep.subr.bf16.mxu0 %v3793
        %4876 = vmatpush1.bf16.msra.mxu0 %v3792
        %4877 = vmatprep.subr.bf16.mxu0 %v3809
        %4878 = vmatpush1.bf16.msra.mxu0 %v3808
        %4879 = vmatprep.subr.bf16.mxu0 %v3825
        %4880 = vmatpush1.bf16.msra.mxu0 %v3824
        %4881 = vmatprep.subr.bf16.mxu0 %v3841
        %4882 = vmatpush1.bf16.msra.mxu0 %v3840
        %4883 = vmatprep.subr.bf16.mxu0 %v3857
        %4884 = vmatpush1.bf16.msra.mxu0 %v3856
        %4885 = vmatprep.subr.bf16.mxu0 %v3873
        %4886 = vmatpush1.bf16.msra.mxu0 %v3872
        %4887 = vmatprep.subr.bf16.mxu0 %v3889
        %4888 = vmatpush1.bf16.msra.mxu0 %v3888
        %4889 = vmatprep.mubr.bf16.mxu0 %v1841
        %4890 = vmatmul.mubr.bf16.gmra.mrb[0].mxu0 %v1840
        %v4891 = vpop.f32.mrb[0].mxu0
        %v4892 = vadd.f32 %v4851, %v4891
        %v4893 = vpop.f32.mrb[0].mxu0
        %v4894 = vadd.f32 %v4853, %v4893
        %v4895 = vpop.f32.mrb[0].mxu0
        %v4896 = vpop.f32.mrb[0].mxu0
        %4897 = vdwg.mxu0
        %4898 = vmatprep.subr.bf16.mxu0 %v3395
        %4899 = vmatpush1.bf16.msra.mxu0 %v3394
        %4900 = vmatprep.subr.bf16.mxu0 %v3411
        %4901 = vmatpush1.bf16.msra.mxu0 %v3410
        %4902 = vmatprep.subr.bf16.mxu0 %v3427
        %4903 = vmatpush1.bf16.msra.mxu0 %v3426
        %4904 = vmatprep.subr.bf16.mxu0 %v3443
        %4905 = vmatpush1.bf16.msra.mxu0 %v3442
        %4906 = vmatprep.subr.bf16.mxu0 %v3459
        %4907 = vmatpush1.bf16.msra.mxu0 %v3458
        %4908 = vmatprep.subr.bf16.mxu0 %v3475
        %4909 = vmatpush1.bf16.msra.mxu0 %v3474
        %4910 = vmatprep.subr.bf16.mxu0 %v3491
        %4911 = vmatpush1.bf16.msra.mxu0 %v3490
        %4912 = vmatprep.subr.bf16.mxu0 %v3507
        %4913 = vmatpush1.bf16.msra.mxu0 %v3506
        %4914 = vmatprep.subr.bf16.mxu0 %v3523
        %4915 = vmatpush1.bf16.msra.mxu0 %v3522
        %4916 = vmatprep.subr.bf16.mxu0 %v3539
        %4917 = vmatpush1.bf16.msra.mxu0 %v3538
        %4918 = vmatprep.subr.bf16.mxu0 %v3555
        %4919 = vmatpush1.bf16.msra.mxu0 %v3554
        %4920 = vmatprep.subr.bf16.mxu0 %v3571
        %4921 = vmatpush1.bf16.msra.mxu0 %v3570
        %4922 = vmatprep.subr.bf16.mxu0 %v3587
        %4923 = vmatpush1.bf16.msra.mxu0 %v3586
        %4924 = vmatprep.subr.bf16.mxu0 %v3603
        %4925 = vmatpush1.bf16.msra.mxu0 %v3602
        %4926 = vmatprep.subr.bf16.mxu0 %v3619
        %4927 = vmatpush1.bf16.msra.mxu0 %v3618
        %4928 = vmatprep.subr.bf16.mxu0 %v3635
        %4929 = vmatpush1.bf16.msra.mxu0 %v3634
        %4930 = vmatprep.mubr.bf16.mxu0 %v1839
        %4931 = vmatmul.mubr.bf16.gmra.mrb[0].mxu0 %v1838
        %v4932 = vpop.f32.mrb[0].mxu0
        %v4933 = vadd.f32 %v1803, %v4932
        %v4934 = vpop.f32.mrb[0].mxu0
        %v4935 = vadd.f32 %v1807, %v4934
        %v4936 = vpop.f32.mrb[0].mxu0
        %v4937 = vpop.f32.mrb[0].mxu0
        %4938 = vdwg.mxu0
        %4939 = vmatprep.subr.bf16.mxu0 %v3651
        %4940 = vmatpush1.bf16.msra.mxu0 %v3650
        %4941 = vmatprep.subr.bf16.mxu0 %v3667
        %4942 = vmatpush1.bf16.msra.mxu0 %v3666
        %4943 = vmatprep.subr.bf16.mxu0 %v3683
        %4944 = vmatpush1.bf16.msra.mxu0 %v3682
        %4945 = vmatprep.subr.bf16.mxu0 %v3699
        %4946 = vmatpush1.bf16.msra.mxu0 %v3698
        %4947 = vmatprep.subr.bf16.mxu0 %v3715
        %4948 = vmatpush1.bf16.msra.mxu0 %v3714
        %4949 = vmatprep.subr.bf16.mxu0 %v3731
        %4950 = vmatpush1.bf16.msra.mxu0 %v3730
        %4951 = vmatprep.subr.bf16.mxu0 %v3747
        %4952 = vmatpush1.bf16.msra.mxu0 %v3746
        %4953 = vmatprep.subr.bf16.mxu0 %v3763
        %4954 = vmatpush1.bf16.msra.mxu0 %v3762
        %4955 = vmatprep.subr.bf16.mxu0 %v3779
        %4956 = vmatpush1.bf16.msra.mxu0 %v3778
        %4957 = vmatprep.subr.bf16.mxu0 %v3795
        %4958 = vmatpush1.bf16.msra.mxu0 %v3794
        %4959 = vmatprep.subr.bf16.mxu0 %v3811
        %4960 = vmatpush1.bf16.msra.mxu0 %v3810
        %4961 = vmatprep.subr.bf16.mxu0 %v3827
        %4962 = vmatpush1.bf16.msra.mxu0 %v3826
        %4963 = vmatprep.subr.bf16.mxu0 %v3843
        %4964 = vmatpush1.bf16.msra.mxu0 %v3842
        %4965 = vmatprep.subr.bf16.mxu0 %v3859
        %4966 = vmatpush1.bf16.msra.mxu0 %v3858
        %4967 = vmatprep.subr.bf16.mxu0 %v3875
        %4968 = vmatpush1.bf16.msra.mxu0 %v3874
        %4969 = vmatprep.subr.bf16.mxu0 %v3891
        %4970 = vmatpush1.bf16.msra.mxu0 %v3890
        %4971 = vmatprep.mubr.bf16.mxu0 %v1841
        %4972 = vmatmul.mubr.bf16.gmra.mrb[0].mxu0 %v1840
        %v4973 = vpop.f32.mrb[0].mxu0
        %v4974 = vadd.f32 %v4933, %v4973
        %v4975 = vpop.f32.mrb[0].mxu0
        %v4976 = vadd.f32 %v4935, %v4975
        %v4977 = vpop.f32.mrb[0].mxu0
        %v4978 = vpop.f32.mrb[0].mxu0
        %4979 = vdwg.mxu0
        %4980 = vmatprep.subr.bf16.mxu0 %v3397
        %4981 = vmatpush1.bf16.msra.mxu0 %v3396
        %4982 = vmatprep.subr.bf16.mxu0 %v3413
        %4983 = vmatpush1.bf16.msra.mxu0 %v3412
        %4984 = vmatprep.subr.bf16.mxu0 %v3429
        %4985 = vmatpush1.bf16.msra.mxu0 %v3428
        %4986 = vmatprep.subr.bf16.mxu0 %v3445
        %4987 = vmatpush1.bf16.msra.mxu0 %v3444
        %4988 = vmatprep.subr.bf16.mxu0 %v3461
        %4989 = vmatpush1.bf16.msra.mxu0 %v3460
        %4990 = vmatprep.subr.bf16.mxu0 %v3477
        %4991 = vmatpush1.bf16.msra.mxu0 %v3476
        %4992 = vmatprep.subr.bf16.mxu0 %v3493
        %4993 = vmatpush1.bf16.msra.mxu0 %v3492
        %4994 = vmatprep.subr.bf16.mxu0 %v3509
        %4995 = vmatpush1.bf16.msra.mxu0 %v3508
        %4996 = vmatprep.subr.bf16.mxu0 %v3525
        %4997 = vmatpush1.bf16.msra.mxu0 %v3524
        %4998 = vmatprep.subr.bf16.mxu0 %v3541
        %4999 = vmatpush1.bf16.msra.mxu0 %v3540
        %5000 = vmatprep.subr.bf16.mxu0 %v3557
        %5001 = vmatpush1.bf16.msra.mxu0 %v3556
        %5002 = vmatprep.subr.bf16.mxu0 %v3573
        %5003 = vmatpush1.bf16.msra.mxu0 %v3572
        %5004 = vmatprep.subr.bf16.mxu0 %v3589
        %5005 = vmatpush1.bf16.msra.mxu0 %v3588
        %5006 = vmatprep.subr.bf16.mxu0 %v3605
        %5007 = vmatpush1.bf16.msra.mxu0 %v3604
        %5008 = vmatprep.subr.bf16.mxu0 %v3621
        %5009 = vmatpush1.bf16.msra.mxu0 %v3620
        %5010 = vmatprep.subr.bf16.mxu0 %v3637
        %5011 = vmatpush1.bf16.msra.mxu0 %v3636
        %5012 = vmatprep.mubr.bf16.mxu0 %v1839
        %5013 = vmatmul.mubr.bf16.gmra.mrb[0].mxu0 %v1838
        %v5014 = vpop.f32.mrb[0].mxu0
        %v5015 = vadd.f32 %v1811, %v5014
        %v5016 = vpop.f32.mrb[0].mxu0
        %v5017 = vadd.f32 %v1815, %v5016
        %v5018 = vpop.f32.mrb[0].mxu0
        %v5019 = vpop.f32.mrb[0].mxu0
        %5020 = vdwg.mxu0
        %5021 = vmatprep.subr.bf16.mxu0 %v3653
        %5022 = vmatpush1.bf16.msra.mxu0 %v3652
        %5023 = vmatprep.subr.bf16.mxu0 %v3669
        %5024 = vmatpush1.bf16.msra.mxu0 %v3668
        %5025 = vmatprep.subr.bf16.mxu0 %v3685
        %5026 = vmatpush1.bf16.msra.mxu0 %v3684
        %5027 = vmatprep.subr.bf16.mxu0 %v3701
        %5028 = vmatpush1.bf16.msra.mxu0 %v3700
        %5029 = vmatprep.subr.bf16.mxu0 %v3717
        %5030 = vmatpush1.bf16.msra.mxu0 %v3716
        %5031 = vmatprep.subr.bf16.mxu0 %v3733
        %5032 = vmatpush1.bf16.msra.mxu0 %v3732
        %5033 = vmatprep.subr.bf16.mxu0 %v3749
        %5034 = vmatpush1.bf16.msra.mxu0 %v3748
        %5035 = vmatprep.subr.bf16.mxu0 %v3765
        %5036 = vmatpush1.bf16.msra.mxu0 %v3764
        %5037 = vmatprep.subr.bf16.mxu0 %v3781
        %5038 = vmatpush1.bf16.msra.mxu0 %v3780
        %5039 = vmatprep.subr.bf16.mxu0 %v3797
        %5040 = vmatpush1.bf16.msra.mxu0 %v3796
        %5041 = vmatprep.subr.bf16.mxu0 %v3813
        %5042 = vmatpush1.bf16.msra.mxu0 %v3812
        %5043 = vmatprep.subr.bf16.mxu0 %v3829
        %5044 = vmatpush1.bf16.msra.mxu0 %v3828
        %5045 = vmatprep.subr.bf16.mxu0 %v3845
        %5046 = vmatpush1.bf16.msra.mxu0 %v3844
        %5047 = vmatprep.subr.bf16.mxu0 %v3861
        %5048 = vmatpush1.bf16.msra.mxu0 %v3860
        %5049 = vmatprep.subr.bf16.mxu0 %v3877
        %5050 = vmatpush1.bf16.msra.mxu0 %v3876
        %5051 = vmatprep.subr.bf16.mxu0 %v3893
        %5052 = vmatpush1.bf16.msra.mxu0 %v3892
        %5053 = vmatprep.mubr.bf16.mxu0 %v1841
        %5054 = vmatmul.mubr.bf16.gmra.mrb[0].mxu0 %v1840
        %v5055 = vpop.f32.mrb[0].mxu0
        %v5056 = vadd.f32 %v5015, %v5055
        %v5057 = vpop.f32.mrb[0].mxu0
        %v5058 = vadd.f32 %v5017, %v5057
        %v5059 = vpop.f32.mrb[0].mxu0
        %v5060 = vpop.f32.mrb[0].mxu0
        %5061 = vdwg.mxu0
        %5062 = vst [vmem:[%s1232] sm:$0xff] %v4482
        %5063 = vst [vmem:[%s1232 + $0x8] sm:$0xff] %v4484
        %5064 = vst [vmem:[%s1232 + $0x10] sm:$0xff] %v4564
        %5065 = vst [vmem:[%s1232 + $0x18] sm:$0xff] %v4566
        %5066 = vst [vmem:[%s1232 + $0x20] sm:$0xff] %v4646
        %5067 = vst [vmem:[%s1232 + $0x28] sm:$0xff] %v4648
        %5068 = vst [vmem:[%s1232 + $0x30] sm:$0xff] %v4728
        %5069 = vst [vmem:[%s1232 + $0x38] sm:$0xff] %v4730
        %5070 = vst [vmem:[%s1232 + $0x40] sm:$0xff] %v4810
        %5071 = vst [vmem:[%s1232 + $0x48] sm:$0xff] %v4812
        %5072 = vst [vmem:[%s1232 + $0x50] sm:$0xff] %v4892
        %5073 = vst [vmem:[%s1232 + $0x58] sm:$0xff] %v4894
        %5074 = vst [vmem:[%s1232 + $0x60] sm:$0xff] %v4974
        %5075 = vst [vmem:[%s1232 + $0x68] sm:$0xff] %v4976
        %5076 = vst [vmem:[%s1232 + $0x70] sm:$0xff] %v5056
        %5077 = vst [vmem:[%s1232 + $0x78] sm:$0xff] %v5058
        %s5078 = smul.u32 16, %s14
        %p5079 = scmp.lt.s32.totalorder %s5078, 95
        %s5080 = scalar_select %p5079, %s5078, 95
        %s5081 = smul.addr %s5080, 8
        %s5082 = scalar_lea.vmem %s3, %s5081
        // Predicated region
        $region56: #{encoder_decoder_forward.5} parent=50 // pred_check
          %p5083 = pneg %p105
        $region57: #{encoder_decoder_forward.5} parent=50 // pred_check_branch
          %5085 = sbr.rel (%p5083) target = $region59
        $region58: #{encoder_decoder_forward.5} parent=50 // pred_region
          %s5086 = smul.u32 16, %s14
        $region59: #{encoder_decoder_forward.5} parent=50 // pred_fallthru
          _
      $region51: #{encoder_decoder_forward.5} parent=5 // pred_fallthru
        _
      %p5087 = scmp.le.s32.totalorder 2, %s9
      // Predicated region
      $region60: #{encoder_decoder_forward.5} parent=5 // pred_check
        %p5088 = pneg %p5087
      $region61: #{encoder_decoder_forward.5} parent=5 // pred_check_branch
        %5090 = sbr.rel (%p5088) target = $region63
      $region62: #{encoder_decoder_forward.5} parent=5 // pred_region
        %s5091 = ssub.s32 %s9, 2
        // Predicated region
        $region64: #{encoder_decoder_forward.5} parent=62 // pred_check
          %p5092 = pneg %p111
        $region65: #{encoder_decoder_forward.5} parent=62 // pred_check_branch
          %5094 = sbr.rel (%p5092) target = $region67
        $region66: #{encoder_decoder_forward.5} parent=62 // pred_region
          %s5095 = smul.u32 16, %s15
          %p5096 = scmp.lt.s32.totalorder %s5095, 95
          %s5097 = scalar_select %p5096, %s5095, 95
          %s5098 = smul.addr %s5097, 8
          %s5099 = scalar_lea.vmem %s3, %s5098
        $region67: #{encoder_decoder_forward.5} parent=62 // pred_fallthru
          _
      $region63: #{encoder_decoder_forward.5} parent=5 // pred_fallthru
        _
    $region6: #{encoder_decoder_forward.5} parent=1 // loop_footer
      %s13 = sadd.s32 1, %s9
    $region7: #{encoder_decoder_forward.5} parent=1 // loop_footer_branch
      %8 = sbr.rel target = $region3
    $region8: #{encoder_decoder_forward.5} parent=1 // loop_exit
      _

</llo_original>
